<compile_context>
chip_gen: v6e
topology: v6e:2x2x1
jax: 0.10.0
libtpu: 0.0.40
codegen_flags: <defaults>
</compile_context>

<pallas_src>
import jax
import jax.numpy as jnp
from jax.experimental import pallas as pl
from jax.experimental.pallas import tpu as pltpu


# ------------------------------ fused kernel -------------------------------

def _fused_cnn_kernel(x_ref, w1_ref, b1_ref, w2_ref, b2_ref, wfc_ref, bfc_ref,
                      out_ref, y1buf_ref, p2buf_ref):
    # x_ref:   (nb, cin, 3, 30, 28*c1)  kw-shifted, channel-repeated input slabs
    # w1_ref:  (9*cin, 28*c1)           conv1 weight rows, lane = w*c1 + co
    # b1_ref:  (1, 28*c1)               conv1 bias row
    # w2_ref:  (9*c1, c2)               conv2 weights, row = (kh*3+kw)*c1 + ci
    # wfc_ref: (49*c2, ncls)            fc weights, row = (h*7+w)*c2 + c
    # out_ref: (1, nb, ncls)            logits for this batch block
    # y1buf:   (nb, 16, 18, c1)         pooled stage-1 activations + zero halo
    # p2buf:   (nb, 14, 16, 9*c1)       conv2 im2col patches
    nb, cin = x_ref.shape[0], x_ref.shape[1]
    lanes1 = w1_ref.shape[1]            # 28 * c1
    c1 = lanes1 // 28
    c2 = w2_ref.shape[1]

    # ---- stage 1: conv1 (3x3, pad 1) as 9*cin lane-dense VPU FMAs ----
    acc = jnp.zeros((nb, 28, lanes1), jnp.float32)
    for kh in range(3):
        for kw in range(3):
            for ci in range(cin):
                row = (kh * 3 + kw) * cin + ci
                tap = x_ref[:, ci, kw, kh:kh + 28, :]          # (nb, 28, 28*c1)
                acc = acc + tap * w1_ref[row]                  # (28*c1,) broadcast
    acc = jnp.maximum(acc + b1_ref[...], 0.0)                  # bias + ReLU

    # ---- pool1 over H (2x2 / stride 2) ----
    accr = acc.reshape(nb, 14, 2, lanes1)
    yh = jnp.maximum(accr[:, :, 0, :], accr[:, :, 1, :])       # (nb, 14, 28*c1)

    # ---- pool1 over W + channel-minor conversion, into a halo-padded scratch ----
    y1buf_ref[...] = jnp.zeros_like(y1buf_ref)                 # zero halo
    for wp in range(14):
        lo = yh[:, :, (2 * wp) * c1:(2 * wp + 1) * c1]         # w = 2*wp
        hi = yh[:, :, (2 * wp + 1) * c1:(2 * wp + 2) * c1]     # w = 2*wp + 1
        y1buf_ref[:, 1:15, wp + 1, :] = jnp.maximum(lo, hi)    # (nb, 14, c1)

    # ---- stage 2: conv2 im2col patches via 9 lane-offset stores ----
    for t in range(9):
        kh, kw = t // 3, t % 3
        p2buf_ref[:, :, :, t * c1:(t + 1) * c1] = \
            y1buf_ref[:, kh:kh + 14, kw:kw + 16, :]            # (nb, 14, 16, c1)

    # second-minor dim is 16 (multiple of 8) -> layout-preserving row merge
    p2 = p2buf_ref[...].reshape(nb * 14 * 16, 9 * c1).astype(w2_ref.dtype)
    hid = jnp.dot(p2, w2_ref[...], preferred_element_type=jnp.float32)
    hid = jnp.maximum(hid + b2_ref[...], 0.0)                  # (nb*224, c2)
    hid = hid.reshape(nb, 14, 16, c2)

    # ---- pool2 (2x2 / stride 2); padded columns 14,15 are dropped below ----
    h4 = hid.reshape(nb, 7, 2, 16, c2)
    h4 = jnp.maximum(h4[:, :, 0], h4[:, :, 1])                 # (nb, 7, 16, c2)
    h5 = h4.reshape(nb, 7, 8, 2, c2)
    y3 = jnp.maximum(h5[:, :, :, 0, :], h5[:, :, :, 1, :])     # (nb, 7, 8, c2)

    # ---- fc: lane-dense feature row + ONE MXU matmul ----
    feats = jnp.concatenate(
        [y3[:, h, w, :] for h in range(7) for w in range(7)], axis=-1)  # (nb, 49*c2)
    feats = feats.astype(wfc_ref.dtype)
    logits = jnp.dot(feats, wfc_ref[...], preferred_element_type=jnp.float32)
    logits = logits + bfc_ref[...]
    out_ref[0] = logits.astype(out_ref.dtype)


# ------------------------------ host wrappers -------------------------------

def _choose_grid(n, max_block=16):
    """block_n up to `max_block`; >= 2 (and even) grid steps whenever N >= 2 so the
    'parallel' batch axis splits evenly across both TensorCores on 2-TC chips."""
    if n <= 1:
        return 1, 1
    steps = max(2, -(-n // max_block))
    if steps % 2:
        steps += 1
    bn = -(-n // steps)
    return bn, steps


def prepare_params(params, matmul_dtype=jnp.float32):
    """One-time parameter preparation (all reshapes/tiles hoisted out of the fwd).

    matmul_dtype: dtype of the MXU operands for conv2/fc (jnp.bfloat16 recommended
    on v6e/v7x); accumulation is always f32.  Default f32 keeps full precision.
    """
    c1, cin = params["w1"].shape[0], params["w1"].shape[1]
    c2 = params["w2"].shape[0]
    ncls = params["wfc"].shape[0]
    # conv1 weight rows, pre-broadcast to lane = w*c1 + co
    w1rows = jnp.tile(
        jnp.transpose(params["w1"], (2, 3, 1, 0)).reshape(9 * cin, c1), (1, 28))
    b1row = jnp.tile(params["b1"], 28).reshape(1, 28 * c1)
    w2mat = jnp.transpose(params["w2"], (2, 3, 1, 0)).reshape(9 * c1, c2)
    # fc weights in the kernel's (h*7+w, c) feature order, flattened for ONE matmul
    wfc = (params["wfc"].reshape(ncls, c2, 7, 7)
           .transpose(2, 3, 1, 0).reshape(49 * c2, ncls))
    return dict(
        w1=w1rows.astype(jnp.float32),
        b1=b1row.astype(jnp.float32),
        w2=w2mat.astype(matmul_dtype),
        b2=params["b2"].reshape(1, c2).astype(jnp.float32),
        wfc=wfc.astype(matmul_dtype),
        bfc=params["bfc"].reshape(1, ncls).astype(jnp.float32),
    )


def _prepare_input(x_nchw, c1):
    """(N, Cin, 28, 28) -> (N, Cin, 3, 30, 28*c1) kw-shifted, c1-repeated slabs."""
    xpad = jnp.pad(x_nchw.astype(jnp.float32), ((0, 0), (0, 0), (1, 1), (1, 1)))
    slabs = []
    for kw in range(3):
        s = xpad[:, :, :, kw:kw + 28]                  # (N, Cin, 30, 28)
        slabs.append(jnp.repeat(s, c1, axis=-1))       # (N, Cin, 30, 28*c1)
    return jnp.stack(slabs, axis=2)                    # (N, Cin, 3, 30, 28*c1)


def cnn_forward_prepared(prep, x_nchw, block_n=None):
    N, cin, H, W = x_nchw.shape
    # The fc layer (16*7*7 features) pins the input to 28x28 with 3x3/pad-1 convs.
    assert H == 28 and W == 28, "CNN.fc expects 16*7*7 features -> 28x28 input"
    assert prep["w1"].shape[0] == 9 * cin, "in_channels mismatch with conv1"
    c1 = prep["b1"].shape[1] // 28
    c2 = prep["w2"].shape[1]
    ncls = prep["bfc"].shape[1]

    if block_n is None:
        bn, grid_n = _choose_grid(N)
    else:
        bn = block_n
        grid_n = -(-N // bn)
    n_pad = bn * grid_n

    xt = _prepare_input(x_nchw, c1)
    if n_pad != N:
        xt = jnp.pad(xt, ((0, n_pad - N), (0, 0), (0, 0), (0, 0), (0, 0)))

    out = pl.pallas_call(
        _fused_cnn_kernel,
        out_shape=jax.ShapeDtypeStruct((grid_n, bn, ncls), jnp.float32),
        grid_spec=pltpu.PrefetchScalarGridSpec(
            num_scalar_prefetch=0,
            grid=(grid_n,),
            in_specs=[
                pl.BlockSpec((bn, cin, 3, 30, 28 * c1), lambda g: (g, 0, 0, 0, 0)),
                pl.BlockSpec((9 * cin, 28 * c1), lambda g: (0, 0)),
                pl.BlockSpec((1, 28 * c1), lambda g: (0, 0)),
                pl.BlockSpec((9 * c1, c2), lambda g: (0, 0)),
                pl.BlockSpec((1, c2), lambda g: (0, 0)),
                pl.BlockSpec((49 * c2, ncls), lambda g: (0, 0)),
                pl.BlockSpec((1, ncls), lambda g: (0, 0)),
            ],
            out_specs=pl.BlockSpec((1, bn, ncls), lambda g: (g, 0, 0)),
            scratch_shapes=[
                pltpu.VMEM((bn, 16, 18, c1), jnp.float32),      # pooled y1 + halo
                pltpu.VMEM((bn, 14, 16, 9 * c1), jnp.float32),  # conv2 patches
            ],
        ),
        compiler_params=pltpu.CompilerParams(
            dimension_semantics=("parallel",),
            vmem_limit_bytes=48 * 1024 * 1024,   # stays < v7x's 64 MiB physical VMEM
        ),
    )(xt, prep["w1"], prep["b1"], prep["w2"], prep["b2"],
      prep["wfc"], prep["bfc"])
    return out.reshape(n_pad, ncls)[:N]


def cnn_forward(params, x_nchw, block_n=None, matmul_dtype=jnp.float32):
    """Convenience wrapper: prepare params then run the fused kernel."""
    return cnn_forward_prepared(prepare_params(params, matmul_dtype), x_nchw,
                                block_n=block_n)


# ------------------------------- parameters ---------------------------------

def init_params(key, in_channels=1, num_classes=10):
    k1, k2, k3, k4, k5, k6 = jax.random.split(key, 6)
    return dict(
        w1=jax.random.normal(k1, (8, in_channels, 3, 3), jnp.float32) * 0.1,
        b1=jax.random.normal(k2, (8,), jnp.float32) * 0.1,
        w2=jax.random.normal(k3, (16, 8, 3, 3), jnp.float32) * 0.1,
        b2=jax.random.normal(k4, (16,), jnp.float32) * 0.1,
        wfc=jax.random.normal(k5, (num_classes, 16 * 7 * 7), jnp.float32) * 0.05,
        bfc=jax.random.normal(k6, (num_classes,), jnp.float32) * 0.05,
    )


# ------------------------- pure-JAX reference check -------------------------

def cnn_reference(params, x_nchw):
    dn = jax.lax.conv_dimension_numbers(x_nchw.shape, params["w1"].shape,
                                        ("NCHW", "OIHW", "NCHW"))

    def conv(x, w, b):
        y = jax.lax.conv_general_dilated(x, w, (1, 1), ((1, 1), (1, 1)),
                                         dimension_numbers=dn)
        return y + b.reshape(1, -1, 1, 1)

    def pool(x):
        return jax.lax.reduce_window(x, -jnp.inf, jax.lax.max,
                                     (1, 1, 2, 2), (1, 1, 2, 2), "VALID")

    y = pool(jax.nn.relu(conv(x_nchw, params["w1"], params["b1"])))
    y = pool(jax.nn.relu(conv(y, params["w2"], params["b2"])))
    y = y.reshape(y.shape[0], -1)
    return y @ params["wfc"].T + params["bfc"]


# --------------------------------- main --------------------------------------

if __name__ == "__main__":
    key = jax.random.PRNGKey(0)
    kx, kp = jax.random.split(key)
    # fc expects 16*7*7 features => input spatial must be 28x28, in_channels=1
    x = jax.random.normal(kx, (4, 1, 28, 28), jnp.float32)
    params = init_params(kp)

    prep = prepare_params(params)                 # one-time weight preparation
    fwd = jax.jit(cnn_forward_prepared)

    out = jax.block_until_ready(fwd(prep, x))
    assert out.shape == (4, 10) and out.dtype == jnp.float32

    ref = jax.block_until_ready(cnn_reference(params, x))
    # all-f32 path (only accumulation-order / matmul-pass differences remain)
    assert jnp.allclose(out, ref, rtol=1e-3, atol=1e-3), (out, ref)

    print("KERNEL_OK")
</pallas_src>

<mosaic_0001>
module attributes {stable_mosaic.version = 11 : i64} {
  func.func @_fused_cnn_kernel(%arg0: i32, %arg1: memref<2x1x3x30x224xf32, #tpu.memory_space<vmem>>, %arg2: memref<9x224xf32, #tpu.memory_space<vmem>>, %arg3: memref<1x224xf32, #tpu.memory_space<vmem>>, %arg4: memref<72x16xf32, #tpu.memory_space<vmem>>, %arg5: memref<1x16xf32, #tpu.memory_space<vmem>>, %arg6: memref<784x10xf32, #tpu.memory_space<vmem>>, %arg7: memref<1x10xf32, #tpu.memory_space<vmem>>, %arg8: memref<1x2x10xf32, #tpu.memory_space<vmem>>, %arg9: memref<2x16x18x8xf32, #tpu.memory_space<vmem>>, %arg10: memref<2x14x16x72xf32, #tpu.memory_space<vmem>>) attributes {dimension_semantics = [#tpu.dimension_semantics<parallel>], iteration_bounds = array<i64: 2>, scalar_prefetch = 0 : i64, scratch_operands = 2 : i64, tpu.core_type = #tpu.core_type<tc>, window_params = [{transform_indices = @transform_0, window_bounds = array<i64: 2, 1, 3, 30, 224>}, {pipeline_mode = #tpu.pipeline_mode<synchronous>, transform_indices = @transform_1, window_bounds = array<i64: 9, 224>}, {pipeline_mode = #tpu.pipeline_mode<synchronous>, transform_indices = @transform_2, window_bounds = array<i64: 1, 224>}, {pipeline_mode = #tpu.pipeline_mode<synchronous>, transform_indices = @transform_3, window_bounds = array<i64: 72, 16>}, {pipeline_mode = #tpu.pipeline_mode<synchronous>, transform_indices = @transform_4, window_bounds = array<i64: 1, 16>}, {pipeline_mode = #tpu.pipeline_mode<synchronous>, transform_indices = @transform_5, window_bounds = array<i64: 784, 10>}, {pipeline_mode = #tpu.pipeline_mode<synchronous>, transform_indices = @transform_6, window_bounds = array<i64: 1, 10>}, {transform_indices = @transform_7, window_bounds = array<i64: 1, 2, 10>}]} {
    %cst = arith.constant 0.000000e+00 : f32
    %0 = vector.broadcast %cst : f32 to vector<2x28x224xf32>
    %c0 = arith.constant 0 : index
    %c0_0 = arith.constant 0 : index
    %c0_1 = arith.constant 0 : index
    %c0_2 = arith.constant 0 : index
    %c0_3 = arith.constant 0 : index
    %1 = vector.load %arg1[%c0, %c0_0, %c0_1, %c0_2, %c0_3] : memref<2x1x3x30x224xf32, #tpu.memory_space<vmem>>, vector<2x1x1x28x224xf32>
    %2 = vector.shape_cast %1 : vector<2x1x1x28x224xf32> to vector<2x28x224xf32>
    %c0_4 = arith.constant 0 : index
    %c0_5 = arith.constant 0 : index
    %3 = vector.load %arg2[%c0_4, %c0_5] : memref<9x224xf32, #tpu.memory_space<vmem>>, vector<1x224xf32>
    %4 = vector.shape_cast %3 : vector<1x224xf32> to vector<224xf32>
    %5 = vector.shape_cast %4 : vector<224xf32> to vector<1x1x224xf32>
    %6 = vector.broadcast %5 : vector<1x1x224xf32> to vector<2x28x224xf32>
    %7 = arith.mulf %2, %6 : vector<2x28x224xf32>
    %8 = arith.addf %0, %7 : vector<2x28x224xf32>
    %c0_6 = arith.constant 0 : index
    %c0_7 = arith.constant 0 : index
    %c1 = arith.constant 1 : index
    %c0_8 = arith.constant 0 : index
    %c0_9 = arith.constant 0 : index
    %9 = vector.load %arg1[%c0_6, %c0_7, %c1, %c0_8, %c0_9] : memref<2x1x3x30x224xf32, #tpu.memory_space<vmem>>, vector<2x1x1x28x224xf32>
    %10 = vector.shape_cast %9 : vector<2x1x1x28x224xf32> to vector<2x28x224xf32>
    %c1_10 = arith.constant 1 : index
    %c0_11 = arith.constant 0 : index
    %11 = vector.load %arg2[%c1_10, %c0_11] : memref<9x224xf32, #tpu.memory_space<vmem>>, vector<1x224xf32>
    %12 = vector.shape_cast %11 : vector<1x224xf32> to vector<224xf32>
    %13 = vector.shape_cast %12 : vector<224xf32> to vector<1x1x224xf32>
    %14 = vector.broadcast %13 : vector<1x1x224xf32> to vector<2x28x224xf32>
    %15 = arith.mulf %10, %14 : vector<2x28x224xf32>
    %16 = arith.addf %8, %15 : vector<2x28x224xf32>
    %c0_12 = arith.constant 0 : index
    %c0_13 = arith.constant 0 : index
    %c2 = arith.constant 2 : index
    %c0_14 = arith.constant 0 : index
    %c0_15 = arith.constant 0 : index
    %17 = vector.load %arg1[%c0_12, %c0_13, %c2, %c0_14, %c0_15] : memref<2x1x3x30x224xf32, #tpu.memory_space<vmem>>, vector<2x1x1x28x224xf32>
    %18 = vector.shape_cast %17 : vector<2x1x1x28x224xf32> to vector<2x28x224xf32>
    %c2_16 = arith.constant 2 : index
    %c0_17 = arith.constant 0 : index
    %19 = vector.load %arg2[%c2_16, %c0_17] : memref<9x224xf32, #tpu.memory_space<vmem>>, vector<1x224xf32>
    %20 = vector.shape_cast %19 : vector<1x224xf32> to vector<224xf32>
    %21 = vector.shape_cast %20 : vector<224xf32> to vector<1x1x224xf32>
    %22 = vector.broadcast %21 : vector<1x1x224xf32> to vector<2x28x224xf32>
    %23 = arith.mulf %18, %22 : vector<2x28x224xf32>
    %24 = arith.addf %16, %23 : vector<2x28x224xf32>
    %c0_18 = arith.constant 0 : index
    %c0_19 = arith.constant 0 : index
    %c0_20 = arith.constant 0 : index
    %c1_21 = arith.constant 1 : index
    %c0_22 = arith.constant 0 : index
    %25 = vector.load %arg1[%c0_18, %c0_19, %c0_20, %c1_21, %c0_22] : memref<2x1x3x30x224xf32, #tpu.memory_space<vmem>>, vector<2x1x1x28x224xf32>
    %26 = vector.shape_cast %25 : vector<2x1x1x28x224xf32> to vector<2x28x224xf32>
    %c3 = arith.constant 3 : index
    %c0_23 = arith.constant 0 : index
    %27 = vector.load %arg2[%c3, %c0_23] : memref<9x224xf32, #tpu.memory_space<vmem>>, vector<1x224xf32>
    %28 = vector.shape_cast %27 : vector<1x224xf32> to vector<224xf32>
    %29 = vector.shape_cast %28 : vector<224xf32> to vector<1x1x224xf32>
    %30 = vector.broadcast %29 : vector<1x1x224xf32> to vector<2x28x224xf32>
    %31 = arith.mulf %26, %30 : vector<2x28x224xf32>
    %32 = arith.addf %24, %31 : vector<2x28x224xf32>
    %c0_24 = arith.constant 0 : index
    %c0_25 = arith.constant 0 : index
    %c1_26 = arith.constant 1 : index
    %c1_27 = arith.constant 1 : index
    %c0_28 = arith.constant 0 : index
    %33 = vector.load %arg1[%c0_24, %c0_25, %c1_26, %c1_27, %c0_28] : memref<2x1x3x30x224xf32, #tpu.memory_space<vmem>>, vector<2x1x1x28x224xf32>
    %34 = vector.shape_cast %33 : vector<2x1x1x28x224xf32> to vector<2x28x224xf32>
    %c4 = arith.constant 4 : index
    %c0_29 = arith.constant 0 : index
    %35 = vector.load %arg2[%c4, %c0_29] : memref<9x224xf32, #tpu.memory_space<vmem>>, vector<1x224xf32>
    %36 = vector.shape_cast %35 : vector<1x224xf32> to vector<224xf32>
    %37 = vector.shape_cast %36 : vector<224xf32> to vector<1x1x224xf32>
    %38 = vector.broadcast %37 : vector<1x1x224xf32> to vector<2x28x224xf32>
    %39 = arith.mulf %34, %38 : vector<2x28x224xf32>
    %40 = arith.addf %32, %39 : vector<2x28x224xf32>
    %c0_30 = arith.constant 0 : index
    %c0_31 = arith.constant 0 : index
    %c2_32 = arith.constant 2 : index
    %c1_33 = arith.constant 1 : index
    %c0_34 = arith.constant 0 : index
    %41 = vector.load %arg1[%c0_30, %c0_31, %c2_32, %c1_33, %c0_34] : memref<2x1x3x30x224xf32, #tpu.memory_space<vmem>>, vector<2x1x1x28x224xf32>
    %42 = vector.shape_cast %41 : vector<2x1x1x28x224xf32> to vector<2x28x224xf32>
    %c5 = arith.constant 5 : index
    %c0_35 = arith.constant 0 : index
    %43 = vector.load %arg2[%c5, %c0_35] : memref<9x224xf32, #tpu.memory_space<vmem>>, vector<1x224xf32>
    %44 = vector.shape_cast %43 : vector<1x224xf32> to vector<224xf32>
    %45 = vector.shape_cast %44 : vector<224xf32> to vector<1x1x224xf32>
    %46 = vector.broadcast %45 : vector<1x1x224xf32> to vector<2x28x224xf32>
    %47 = arith.mulf %42, %46 : vector<2x28x224xf32>
    %48 = arith.addf %40, %47 : vector<2x28x224xf32>
    %c0_36 = arith.constant 0 : index
    %c0_37 = arith.constant 0 : index
    %c0_38 = arith.constant 0 : index
    %c2_39 = arith.constant 2 : index
    %c0_40 = arith.constant 0 : index
    %49 = vector.load %arg1[%c0_36, %c0_37, %c0_38, %c2_39, %c0_40] : memref<2x1x3x30x224xf32, #tpu.memory_space<vmem>>, vector<2x1x1x28x224xf32>
    %50 = vector.shape_cast %49 : vector<2x1x1x28x224xf32> to vector<2x28x224xf32>
    %c6 = arith.constant 6 : index
    %c0_41 = arith.constant 0 : index
    %51 = vector.load %arg2[%c6, %c0_41] : memref<9x224xf32, #tpu.memory_space<vmem>>, vector<1x224xf32>
    %52 = vector.shape_cast %51 : vector<1x224xf32> to vector<224xf32>
    %53 = vector.shape_cast %52 : vector<224xf32> to vector<1x1x224xf32>
    %54 = vector.broadcast %53 : vector<1x1x224xf32> to vector<2x28x224xf32>
    %55 = arith.mulf %50, %54 : vector<2x28x224xf32>
    %56 = arith.addf %48, %55 : vector<2x28x224xf32>
    %c0_42 = arith.constant 0 : index
    %c0_43 = arith.constant 0 : index
    %c1_44 = arith.constant 1 : index
    %c2_45 = arith.constant 2 : index
    %c0_46 = arith.constant 0 : index
    %57 = vector.load %arg1[%c0_42, %c0_43, %c1_44, %c2_45, %c0_46] : memref<2x1x3x30x224xf32, #tpu.memory_space<vmem>>, vector<2x1x1x28x224xf32>
    %58 = vector.shape_cast %57 : vector<2x1x1x28x224xf32> to vector<2x28x224xf32>
    %c7 = arith.constant 7 : index
    %c0_47 = arith.constant 0 : index
    %59 = vector.load %arg2[%c7, %c0_47] : memref<9x224xf32, #tpu.memory_space<vmem>>, vector<1x224xf32>
    %60 = vector.shape_cast %59 : vector<1x224xf32> to vector<224xf32>
    %61 = vector.shape_cast %60 : vector<224xf32> to vector<1x1x224xf32>
    %62 = vector.broadcast %61 : vector<1x1x224xf32> to vector<2x28x224xf32>
    %63 = arith.mulf %58, %62 : vector<2x28x224xf32>
    %64 = arith.addf %56, %63 : vector<2x28x224xf32>
    %c0_48 = arith.constant 0 : index
    %c0_49 = arith.constant 0 : index
    %c2_50 = arith.constant 2 : index
    %c2_51 = arith.constant 2 : index
    %c0_52 = arith.constant 0 : index
    %65 = vector.load %arg1[%c0_48, %c0_49, %c2_50, %c2_51, %c0_52] : memref<2x1x3x30x224xf32, #tpu.memory_space<vmem>>, vector<2x1x1x28x224xf32>
    %66 = vector.shape_cast %65 : vector<2x1x1x28x224xf32> to vector<2x28x224xf32>
    %c8 = arith.constant 8 : index
    %c0_53 = arith.constant 0 : index
    %67 = vector.load %arg2[%c8, %c0_53] : memref<9x224xf32, #tpu.memory_space<vmem>>, vector<1x224xf32>
    %68 = vector.shape_cast %67 : vector<1x224xf32> to vector<224xf32>
    %69 = vector.shape_cast %68 : vector<224xf32> to vector<1x1x224xf32>
    %70 = vector.broadcast %69 : vector<1x1x224xf32> to vector<2x28x224xf32>
    %71 = arith.mulf %66, %70 : vector<2x28x224xf32>
    %72 = arith.addf %64, %71 : vector<2x28x224xf32>
    %c0_54 = arith.constant 0 : index
    %c0_55 = arith.constant 0 : index
    %73 = vector.load %arg3[%c0_54, %c0_55] : memref<1x224xf32, #tpu.memory_space<vmem>>, vector<1x224xf32>
    %74 = vector.shape_cast %73 : vector<1x224xf32> to vector<1x1x224xf32>
    %75 = vector.broadcast %74 : vector<1x1x224xf32> to vector<2x28x224xf32>
    %76 = arith.addf %72, %75 : vector<2x28x224xf32>
    %cst_56 = arith.constant 0.000000e+00 : f32
    %77 = vector.broadcast %cst_56 : f32 to vector<2x28x224xf32>
    %78 = arith.maximumf %76, %77 : vector<2x28x224xf32>
    %79 = vector.shape_cast %78 : vector<2x28x224xf32> to vector<2x14x2x224xf32>
    %80 = vector.extract_strided_slice %79 {offsets = [0, 0, 0, 0], sizes = [2, 14, 1, 224], strides = [1, 1, 1, 1]} : vector<2x14x2x224xf32> to vector<2x14x1x224xf32>
    %81 = vector.shape_cast %80 : vector<2x14x1x224xf32> to vector<2x14x224xf32>
    %82 = vector.extract_strided_slice %79 {offsets = [0, 0, 1, 0], sizes = [2, 14, 1, 224], strides = [1, 1, 1, 1]} : vector<2x14x2x224xf32> to vector<2x14x1x224xf32>
    %83 = vector.shape_cast %82 : vector<2x14x1x224xf32> to vector<2x14x224xf32>
    %84 = arith.maximumf %81, %83 : vector<2x14x224xf32>
    %cst_57 = arith.constant 0.000000e+00 : f32
    %85 = vector.broadcast %cst_57 : f32 to vector<2x16x18x8xf32>
    %c0_58 = arith.constant 0 : index
    %c0_59 = arith.constant 0 : index
    %c0_60 = arith.constant 0 : index
    %c0_61 = arith.constant 0 : index
    %86 = vector.load %arg9[%c0_58, %c0_59, %c0_60, %c0_61] : memref<2x16x18x8xf32, #tpu.memory_space<vmem>>, vector<2x16x18x8xf32>
    tpu.vector_store %arg9[%c0_58, %c0_59, %c0_60, %c0_61], %85 {strides = array<i32>} : memref<2x16x18x8xf32, #tpu.memory_space<vmem>>, vector<2x16x18x8xf32>,
    %87 = vector.extract_strided_slice %84 {offsets = [0, 0, 0], sizes = [2, 14, 8], strides = [1, 1, 1]} : vector<2x14x224xf32> to vector<2x14x8xf32>
    %88 = vector.extract_strided_slice %84 {offsets = [0, 0, 8], sizes = [2, 14, 8], strides = [1, 1, 1]} : vector<2x14x224xf32> to vector<2x14x8xf32>
    %89 = arith.maximumf %87, %88 : vector<2x14x8xf32>
    %c0_62 = arith.constant 0 : index
    %c1_63 = arith.constant 1 : index
    %c1_64 = arith.constant 1 : index
    %c0_65 = arith.constant 0 : index
    %90 = vector.load %arg9[%c0_62, %c1_63, %c1_64, %c0_65] : memref<2x16x18x8xf32, #tpu.memory_space<vmem>>, vector<2x14x1x8xf32>
    %91 = vector.shape_cast %90 : vector<2x14x1x8xf32> to vector<2x14x8xf32>
    %92 = vector.shape_cast %89 : vector<2x14x8xf32> to vector<2x14x1x8xf32>
    tpu.vector_store %arg9[%c0_62, %c1_63, %c1_64, %c0_65], %92 {strides = array<i32>} : memref<2x16x18x8xf32, #tpu.memory_space<vmem>>, vector<2x14x1x8xf32>,
    %93 = vector.extract_strided_slice %84 {offsets = [0, 0, 16], sizes = [2, 14, 8], strides = [1, 1, 1]} : vector<2x14x224xf32> to vector<2x14x8xf32>
    %94 = vector.extract_strided_slice %84 {offsets = [0, 0, 24], sizes = [2, 14, 8], strides = [1, 1, 1]} : vector<2x14x224xf32> to vector<2x14x8xf32>
    %95 = arith.maximumf %93, %94 : vector<2x14x8xf32>
    %c0_66 = arith.constant 0 : index
    %c1_67 = arith.constant 1 : index
    %c2_68 = arith.constant 2 : index
    %c0_69 = arith.constant 0 : index
    %96 = vector.load %arg9[%c0_66, %c1_67, %c2_68, %c0_69] : memref<2x16x18x8xf32, #tpu.memory_space<vmem>>, vector<2x14x1x8xf32>
    %97 = vector.shape_cast %96 : vector<2x14x1x8xf32> to vector<2x14x8xf32>
    %98 = vector.shape_cast %95 : vector<2x14x8xf32> to vector<2x14x1x8xf32>
    tpu.vector_store %arg9[%c0_66, %c1_67, %c2_68, %c0_69], %98 {strides = array<i32>} : memref<2x16x18x8xf32, #tpu.memory_space<vmem>>, vector<2x14x1x8xf32>,
    %99 = vector.extract_strided_slice %84 {offsets = [0, 0, 32], sizes = [2, 14, 8], strides = [1, 1, 1]} : vector<2x14x224xf32> to vector<2x14x8xf32>
    %100 = vector.extract_strided_slice %84 {offsets = [0, 0, 40], sizes = [2, 14, 8], strides = [1, 1, 1]} : vector<2x14x224xf32> to vector<2x14x8xf32>
    %101 = arith.maximumf %99, %100 : vector<2x14x8xf32>
    %c0_70 = arith.constant 0 : index
    %c1_71 = arith.constant 1 : index
    %c3_72 = arith.constant 3 : index
    %c0_73 = arith.constant 0 : index
    %102 = vector.load %arg9[%c0_70, %c1_71, %c3_72, %c0_73] : memref<2x16x18x8xf32, #tpu.memory_space<vmem>>, vector<2x14x1x8xf32>
    %103 = vector.shape_cast %102 : vector<2x14x1x8xf32> to vector<2x14x8xf32>
    %104 = vector.shape_cast %101 : vector<2x14x8xf32> to vector<2x14x1x8xf32>
    tpu.vector_store %arg9[%c0_70, %c1_71, %c3_72, %c0_73], %104 {strides = array<i32>} : memref<2x16x18x8xf32, #tpu.memory_space<vmem>>, vector<2x14x1x8xf32>,
    %105 = vector.extract_strided_slice %84 {offsets = [0, 0, 48], sizes = [2, 14, 8], strides = [1, 1, 1]} : vector<2x14x224xf32> to vector<2x14x8xf32>
    %106 = vector.extract_strided_slice %84 {offsets = [0, 0, 56], sizes = [2, 14, 8], strides = [1, 1, 1]} : vector<2x14x224xf32> to vector<2x14x8xf32>
    %107 = arith.maximumf %105, %106 : vector<2x14x8xf32>
    %c0_74 = arith.constant 0 : index
    %c1_75 = arith.constant 1 : index
    %c4_76 = arith.constant 4 : index
    %c0_77 = arith.constant 0 : index
    %108 = vector.load %arg9[%c0_74, %c1_75, %c4_76, %c0_77] : memref<2x16x18x8xf32, #tpu.memory_space<vmem>>, vector<2x14x1x8xf32>
    %109 = vector.shape_cast %108 : vector<2x14x1x8xf32> to vector<2x14x8xf32>
    %110 = vector.shape_cast %107 : vector<2x14x8xf32> to vector<2x14x1x8xf32>
    tpu.vector_store %arg9[%c0_74, %c1_75, %c4_76, %c0_77], %110 {strides = array<i32>} : memref<2x16x18x8xf32, #tpu.memory_space<vmem>>, vector<2x14x1x8xf32>,
    %111 = vector.extract_strided_slice %84 {offsets = [0, 0, 64], sizes = [2, 14, 8], strides = [1, 1, 1]} : vector<2x14x224xf32> to vector<2x14x8xf32>
    %112 = vector.extract_strided_slice %84 {offsets = [0, 0, 72], sizes = [2, 14, 8], strides = [1, 1, 1]} : vector<2x14x224xf32> to vector<2x14x8xf32>
    %113 = arith.maximumf %111, %112 : vector<2x14x8xf32>
    %c0_78 = arith.constant 0 : index
    %c1_79 = arith.constant 1 : index
    %c5_80 = arith.constant 5 : index
    %c0_81 = arith.constant 0 : index
    %114 = vector.load %arg9[%c0_78, %c1_79, %c5_80, %c0_81] : memref<2x16x18x8xf32, #tpu.memory_space<vmem>>, vector<2x14x1x8xf32>
    %115 = vector.shape_cast %114 : vector<2x14x1x8xf32> to vector<2x14x8xf32>
    %116 = vector.shape_cast %113 : vector<2x14x8xf32> to vector<2x14x1x8xf32>
    tpu.vector_store %arg9[%c0_78, %c1_79, %c5_80, %c0_81], %116 {strides = array<i32>} : memref<2x16x18x8xf32, #tpu.memory_space<vmem>>, vector<2x14x1x8xf32>,
    %117 = vector.extract_strided_slice %84 {offsets = [0, 0, 80], sizes = [2, 14, 8], strides = [1, 1, 1]} : vector<2x14x224xf32> to vector<2x14x8xf32>
    %118 = vector.extract_strided_slice %84 {offsets = [0, 0, 88], sizes = [2, 14, 8], strides = [1, 1, 1]} : vector<2x14x224xf32> to vector<2x14x8xf32>
    %119 = arith.maximumf %117, %118 : vector<2x14x8xf32>
    %c0_82 = arith.constant 0 : index
    %c1_83 = arith.constant 1 : index
    %c6_84 = arith.constant 6 : index
    %c0_85 = arith.constant 0 : index
    %120 = vector.load %arg9[%c0_82, %c1_83, %c6_84, %c0_85] : memref<2x16x18x8xf32, #tpu.memory_space<vmem>>, vector<2x14x1x8xf32>
    %121 = vector.shape_cast %120 : vector<2x14x1x8xf32> to vector<2x14x8xf32>
    %122 = vector.shape_cast %119 : vector<2x14x8xf32> to vector<2x14x1x8xf32>
    tpu.vector_store %arg9[%c0_82, %c1_83, %c6_84, %c0_85], %122 {strides = array<i32>} : memref<2x16x18x8xf32, #tpu.memory_space<vmem>>, vector<2x14x1x8xf32>,
    %123 = vector.extract_strided_slice %84 {offsets = [0, 0, 96], sizes = [2, 14, 8], strides = [1, 1, 1]} : vector<2x14x224xf32> to vector<2x14x8xf32>
    %124 = vector.extract_strided_slice %84 {offsets = [0, 0, 104], sizes = [2, 14, 8], strides = [1, 1, 1]} : vector<2x14x224xf32> to vector<2x14x8xf32>
    %125 = arith.maximumf %123, %124 : vector<2x14x8xf32>
    %c0_86 = arith.constant 0 : index
    %c1_87 = arith.constant 1 : index
    %c7_88 = arith.constant 7 : index
    %c0_89 = arith.constant 0 : index
    %126 = vector.load %arg9[%c0_86, %c1_87, %c7_88, %c0_89] : memref<2x16x18x8xf32, #tpu.memory_space<vmem>>, vector<2x14x1x8xf32>
    %127 = vector.shape_cast %126 : vector<2x14x1x8xf32> to vector<2x14x8xf32>
    %128 = vector.shape_cast %125 : vector<2x14x8xf32> to vector<2x14x1x8xf32>
    tpu.vector_store %arg9[%c0_86, %c1_87, %c7_88, %c0_89], %128 {strides = array<i32>} : memref<2x16x18x8xf32, #tpu.memory_space<vmem>>, vector<2x14x1x8xf32>,
    %129 = vector.extract_strided_slice %84 {offsets = [0, 0, 112], sizes = [2, 14, 8], strides = [1, 1, 1]} : vector<2x14x224xf32> to vector<2x14x8xf32>
    %130 = vector.extract_strided_slice %84 {offsets = [0, 0, 120], sizes = [2, 14, 8], strides = [1, 1, 1]} : vector<2x14x224xf32> to vector<2x14x8xf32>
    %131 = arith.maximumf %129, %130 : vector<2x14x8xf32>
    %c0_90 = arith.constant 0 : index
    %c1_91 = arith.constant 1 : index
    %c8_92 = arith.constant 8 : index
    %c0_93 = arith.constant 0 : index
    %132 = vector.load %arg9[%c0_90, %c1_91, %c8_92, %c0_93] : memref<2x16x18x8xf32, #tpu.memory_space<vmem>>, vector<2x14x1x8xf32>
    %133 = vector.shape_cast %132 : vector<2x14x1x8xf32> to vector<2x14x8xf32>
    %134 = vector.shape_cast %131 : vector<2x14x8xf32> to vector<2x14x1x8xf32>
    tpu.vector_store %arg9[%c0_90, %c1_91, %c8_92, %c0_93], %134 {strides = array<i32>} : memref<2x16x18x8xf32, #tpu.memory_space<vmem>>, vector<2x14x1x8xf32>,
    %135 = vector.extract_strided_slice %84 {offsets = [0, 0, 128], sizes = [2, 14, 8], strides = [1, 1, 1]} : vector<2x14x224xf32> to vector<2x14x8xf32>
    %136 = vector.extract_strided_slice %84 {offsets = [0, 0, 136], sizes = [2, 14, 8], strides = [1, 1, 1]} : vector<2x14x224xf32> to vector<2x14x8xf32>
    %137 = arith.maximumf %135, %136 : vector<2x14x8xf32>
    %c0_94 = arith.constant 0 : index
    %c1_95 = arith.constant 1 : index
    %c9 = arith.constant 9 : index
    %c0_96 = arith.constant 0 : index
    %138 = vector.load %arg9[%c0_94, %c1_95, %c9, %c0_96] : memref<2x16x18x8xf32, #tpu.memory_space<vmem>>, vector<2x14x1x8xf32>
    %139 = vector.shape_cast %138 : vector<2x14x1x8xf32> to vector<2x14x8xf32>
    %140 = vector.shape_cast %137 : vector<2x14x8xf32> to vector<2x14x1x8xf32>
    tpu.vector_store %arg9[%c0_94, %c1_95, %c9, %c0_96], %140 {strides = array<i32>} : memref<2x16x18x8xf32, #tpu.memory_space<vmem>>, vector<2x14x1x8xf32>,
    %141 = vector.extract_strided_slice %84 {offsets = [0, 0, 144], sizes = [2, 14, 8], strides = [1, 1, 1]} : vector<2x14x224xf32> to vector<2x14x8xf32>
    %142 = vector.extract_strided_slice %84 {offsets = [0, 0, 152], sizes = [2, 14, 8], strides = [1, 1, 1]} : vector<2x14x224xf32> to vector<2x14x8xf32>
    %143 = arith.maximumf %141, %142 : vector<2x14x8xf32>
    %c0_97 = arith.constant 0 : index
    %c1_98 = arith.constant 1 : index
    %c10 = arith.constant 10 : index
    %c0_99 = arith.constant 0 : index
    %144 = vector.load %arg9[%c0_97, %c1_98, %c10, %c0_99] : memref<2x16x18x8xf32, #tpu.memory_space<vmem>>, vector<2x14x1x8xf32>
    %145 = vector.shape_cast %144 : vector<2x14x1x8xf32> to vector<2x14x8xf32>
    %146 = vector.shape_cast %143 : vector<2x14x8xf32> to vector<2x14x1x8xf32>
    tpu.vector_store %arg9[%c0_97, %c1_98, %c10, %c0_99], %146 {strides = array<i32>} : memref<2x16x18x8xf32, #tpu.memory_space<vmem>>, vector<2x14x1x8xf32>,
    %147 = vector.extract_strided_slice %84 {offsets = [0, 0, 160], sizes = [2, 14, 8], strides = [1, 1, 1]} : vector<2x14x224xf32> to vector<2x14x8xf32>
    %148 = vector.extract_strided_slice %84 {offsets = [0, 0, 168], sizes = [2, 14, 8], strides = [1, 1, 1]} : vector<2x14x224xf32> to vector<2x14x8xf32>
    %149 = arith.maximumf %147, %148 : vector<2x14x8xf32>
    %c0_100 = arith.constant 0 : index
    %c1_101 = arith.constant 1 : index
    %c11 = arith.constant 11 : index
    %c0_102 = arith.constant 0 : index
    %150 = vector.load %arg9[%c0_100, %c1_101, %c11, %c0_102] : memref<2x16x18x8xf32, #tpu.memory_space<vmem>>, vector<2x14x1x8xf32>
    %151 = vector.shape_cast %150 : vector<2x14x1x8xf32> to vector<2x14x8xf32>
    %152 = vector.shape_cast %149 : vector<2x14x8xf32> to vector<2x14x1x8xf32>
    tpu.vector_store %arg9[%c0_100, %c1_101, %c11, %c0_102], %152 {strides = array<i32>} : memref<2x16x18x8xf32, #tpu.memory_space<vmem>>, vector<2x14x1x8xf32>,
    %153 = vector.extract_strided_slice %84 {offsets = [0, 0, 176], sizes = [2, 14, 8], strides = [1, 1, 1]} : vector<2x14x224xf32> to vector<2x14x8xf32>
    %154 = vector.extract_strided_slice %84 {offsets = [0, 0, 184], sizes = [2, 14, 8], strides = [1, 1, 1]} : vector<2x14x224xf32> to vector<2x14x8xf32>
    %155 = arith.maximumf %153, %154 : vector<2x14x8xf32>
    %c0_103 = arith.constant 0 : index
    %c1_104 = arith.constant 1 : index
    %c12 = arith.constant 12 : index
    %c0_105 = arith.constant 0 : index
    %156 = vector.load %arg9[%c0_103, %c1_104, %c12, %c0_105] : memref<2x16x18x8xf32, #tpu.memory_space<vmem>>, vector<2x14x1x8xf32>
    %157 = vector.shape_cast %156 : vector<2x14x1x8xf32> to vector<2x14x8xf32>
    %158 = vector.shape_cast %155 : vector<2x14x8xf32> to vector<2x14x1x8xf32>
    tpu.vector_store %arg9[%c0_103, %c1_104, %c12, %c0_105], %158 {strides = array<i32>} : memref<2x16x18x8xf32, #tpu.memory_space<vmem>>, vector<2x14x1x8xf32>,
    %159 = vector.extract_strided_slice %84 {offsets = [0, 0, 192], sizes = [2, 14, 8], strides = [1, 1, 1]} : vector<2x14x224xf32> to vector<2x14x8xf32>
    %160 = vector.extract_strided_slice %84 {offsets = [0, 0, 200], sizes = [2, 14, 8], strides = [1, 1, 1]} : vector<2x14x224xf32> to vector<2x14x8xf32>
    %161 = arith.maximumf %159, %160 : vector<2x14x8xf32>
    %c0_106 = arith.constant 0 : index
    %c1_107 = arith.constant 1 : index
    %c13 = arith.constant 13 : index
    %c0_108 = arith.constant 0 : index
    %162 = vector.load %arg9[%c0_106, %c1_107, %c13, %c0_108] : memref<2x16x18x8xf32, #tpu.memory_space<vmem>>, vector<2x14x1x8xf32>
    %163 = vector.shape_cast %162 : vector<2x14x1x8xf32> to vector<2x14x8xf32>
    %164 = vector.shape_cast %161 : vector<2x14x8xf32> to vector<2x14x1x8xf32>
    tpu.vector_store %arg9[%c0_106, %c1_107, %c13, %c0_108], %164 {strides = array<i32>} : memref<2x16x18x8xf32, #tpu.memory_space<vmem>>, vector<2x14x1x8xf32>,
    %165 = vector.extract_strided_slice %84 {offsets = [0, 0, 208], sizes = [2, 14, 8], strides = [1, 1, 1]} : vector<2x14x224xf32> to vector<2x14x8xf32>
    %166 = vector.extract_strided_slice %84 {offsets = [0, 0, 216], sizes = [2, 14, 8], strides = [1, 1, 1]} : vector<2x14x224xf32> to vector<2x14x8xf32>
    %167 = arith.maximumf %165, %166 : vector<2x14x8xf32>
    %c0_109 = arith.constant 0 : index
    %c1_110 = arith.constant 1 : index
    %c14 = arith.constant 14 : index
    %c0_111 = arith.constant 0 : index
    %168 = vector.load %arg9[%c0_109, %c1_110, %c14, %c0_111] : memref<2x16x18x8xf32, #tpu.memory_space<vmem>>, vector<2x14x1x8xf32>
    %169 = vector.shape_cast %168 : vector<2x14x1x8xf32> to vector<2x14x8xf32>
    %170 = vector.shape_cast %167 : vector<2x14x8xf32> to vector<2x14x1x8xf32>
    tpu.vector_store %arg9[%c0_109, %c1_110, %c14, %c0_111], %170 {strides = array<i32>} : memref<2x16x18x8xf32, #tpu.memory_space<vmem>>, vector<2x14x1x8xf32>,
    %c0_112 = arith.constant 0 : index
    %c0_113 = arith.constant 0 : index
    %c0_114 = arith.constant 0 : index
    %c0_115 = arith.constant 0 : index
    %171 = vector.load %arg9[%c0_112, %c0_113, %c0_114, %c0_115] : memref<2x16x18x8xf32, #tpu.memory_space<vmem>>, vector<2x14x16x8xf32>
    %c0_116 = arith.constant 0 : index
    %c0_117 = arith.constant 0 : index
    %c0_118 = arith.constant 0 : index
    %c0_119 = arith.constant 0 : index
    %172 = vector.load %arg10[%c0_116, %c0_117, %c0_118, %c0_119] : memref<2x14x16x72xf32, #tpu.memory_space<vmem>>, vector<2x14x16x8xf32>
    tpu.vector_store %arg10[%c0_116, %c0_117, %c0_118, %c0_119], %171 {strides = array<i32>} : memref<2x14x16x72xf32, #tpu.memory_space<vmem>>, vector<2x14x16x8xf32>,
    %c0_120 = arith.constant 0 : index
    %c0_121 = arith.constant 0 : index
    %c1_122 = arith.constant 1 : index
    %c0_123 = arith.constant 0 : index
    %173 = vector.load %arg9[%c0_120, %c0_121, %c1_122, %c0_123] : memref<2x16x18x8xf32, #tpu.memory_space<vmem>>, vector<2x14x16x8xf32>
    %c0_124 = arith.constant 0 : index
    %c0_125 = arith.constant 0 : index
    %c0_126 = arith.constant 0 : index
    %c8_127 = arith.constant 8 : index
    %174 = vector.load %arg10[%c0_124, %c0_125, %c0_126, %c8_127] : memref<2x14x16x72xf32, #tpu.memory_space<vmem>>, vector<2x14x16x8xf32>
    tpu.vector_store %arg10[%c0_124, %c0_125, %c0_126, %c8_127], %173 {strides = array<i32>} : memref<2x14x16x72xf32, #tpu.memory_space<vmem>>, vector<2x14x16x8xf32>,
    %c0_128 = arith.constant 0 : index
    %c0_129 = arith.constant 0 : index
    %c2_130 = arith.constant 2 : index
    %c0_131 = arith.constant 0 : index
    %175 = vector.load %arg9[%c0_128, %c0_129, %c2_130, %c0_131] : memref<2x16x18x8xf32, #tpu.memory_space<vmem>>, vector<2x14x16x8xf32>
    %c0_132 = arith.constant 0 : index
    %c0_133 = arith.constant 0 : index
    %c0_134 = arith.constant 0 : index
    %c16 = arith.constant 16 : index
    %176 = vector.load %arg10[%c0_132, %c0_133, %c0_134, %c16] : memref<2x14x16x72xf32, #tpu.memory_space<vmem>>, vector<2x14x16x8xf32>
    tpu.vector_store %arg10[%c0_132, %c0_133, %c0_134, %c16], %175 {strides = array<i32>} : memref<2x14x16x72xf32, #tpu.memory_space<vmem>>, vector<2x14x16x8xf32>,
    %c0_135 = arith.constant 0 : index
    %c1_136 = arith.constant 1 : index
    %c0_137 = arith.constant 0 : index
    %c0_138 = arith.constant 0 : index
    %177 = vector.load %arg9[%c0_135, %c1_136, %c0_137, %c0_138] : memref<2x16x18x8xf32, #tpu.memory_space<vmem>>, vector<2x14x16x8xf32>
    %c0_139 = arith.constant 0 : index
    %c0_140 = arith.constant 0 : index
    %c0_141 = arith.constant 0 : index
    %c24 = arith.constant 24 : index
    %178 = vector.load %arg10[%c0_139, %c0_140, %c0_141, %c24] : memref<2x14x16x72xf32, #tpu.memory_space<vmem>>, vector<2x14x16x8xf32>
    tpu.vector_store %arg10[%c0_139, %c0_140, %c0_141, %c24], %177 {strides = array<i32>} : memref<2x14x16x72xf32, #tpu.memory_space<vmem>>, vector<2x14x16x8xf32>,
    %c0_142 = arith.constant 0 : index
    %c1_143 = arith.constant 1 : index
    %c1_144 = arith.constant 1 : index
    %c0_145 = arith.constant 0 : index
    %179 = vector.load %arg9[%c0_142, %c1_143, %c1_144, %c0_145] : memref<2x16x18x8xf32, #tpu.memory_space<vmem>>, vector<2x14x16x8xf32>
    %c0_146 = arith.constant 0 : index
    %c0_147 = arith.constant 0 : index
    %c0_148 = arith.constant 0 : index
    %c32 = arith.constant 32 : index
    %180 = vector.load %arg10[%c0_146, %c0_147, %c0_148, %c32] : memref<2x14x16x72xf32, #tpu.memory_space<vmem>>, vector<2x14x16x8xf32>
    tpu.vector_store %arg10[%c0_146, %c0_147, %c0_148, %c32], %179 {strides = array<i32>} : memref<2x14x16x72xf32, #tpu.memory_space<vmem>>, vector<2x14x16x8xf32>,
    %c0_149 = arith.constant 0 : index
    %c1_150 = arith.constant 1 : index
    %c2_151 = arith.constant 2 : index
    %c0_152 = arith.constant 0 : index
    %181 = vector.load %arg9[%c0_149, %c1_150, %c2_151, %c0_152] : memref<2x16x18x8xf32, #tpu.memory_space<vmem>>, vector<2x14x16x8xf32>
    %c0_153 = arith.constant 0 : index
    %c0_154 = arith.constant 0 : index
    %c0_155 = arith.constant 0 : index
    %c40 = arith.constant 40 : index
    %182 = vector.load %arg10[%c0_153, %c0_154, %c0_155, %c40] : memref<2x14x16x72xf32, #tpu.memory_space<vmem>>, vector<2x14x16x8xf32>
    tpu.vector_store %arg10[%c0_153, %c0_154, %c0_155, %c40], %181 {strides = array<i32>} : memref<2x14x16x72xf32, #tpu.memory_space<vmem>>, vector<2x14x16x8xf32>,
    %c0_156 = arith.constant 0 : index
    %c2_157 = arith.constant 2 : index
    %c0_158 = arith.constant 0 : index
    %c0_159 = arith.constant 0 : index
    %183 = vector.load %arg9[%c0_156, %c2_157, %c0_158, %c0_159] : memref<2x16x18x8xf32, #tpu.memory_space<vmem>>, vector<2x14x16x8xf32>
    %c0_160 = arith.constant 0 : index
    %c0_161 = arith.constant 0 : index
    %c0_162 = arith.constant 0 : index
    %c48 = arith.constant 48 : index
    %184 = vector.load %arg10[%c0_160, %c0_161, %c0_162, %c48] : memref<2x14x16x72xf32, #tpu.memory_space<vmem>>, vector<2x14x16x8xf32>
    tpu.vector_store %arg10[%c0_160, %c0_161, %c0_162, %c48], %183 {strides = array<i32>} : memref<2x14x16x72xf32, #tpu.memory_space<vmem>>, vector<2x14x16x8xf32>,
    %c0_163 = arith.constant 0 : index
    %c2_164 = arith.constant 2 : index
    %c1_165 = arith.constant 1 : index
    %c0_166 = arith.constant 0 : index
    %185 = vector.load %arg9[%c0_163, %c2_164, %c1_165, %c0_166] : memref<2x16x18x8xf32, #tpu.memory_space<vmem>>, vector<2x14x16x8xf32>
    %c0_167 = arith.constant 0 : index
    %c0_168 = arith.constant 0 : index
    %c0_169 = arith.constant 0 : index
    %c56 = arith.constant 56 : index
    %186 = vector.load %arg10[%c0_167, %c0_168, %c0_169, %c56] : memref<2x14x16x72xf32, #tpu.memory_space<vmem>>, vector<2x14x16x8xf32>
    tpu.vector_store %arg10[%c0_167, %c0_168, %c0_169, %c56], %185 {strides = array<i32>} : memref<2x14x16x72xf32, #tpu.memory_space<vmem>>, vector<2x14x16x8xf32>,
    %c0_170 = arith.constant 0 : index
    %c2_171 = arith.constant 2 : index
    %c2_172 = arith.constant 2 : index
    %c0_173 = arith.constant 0 : index
    %187 = vector.load %arg9[%c0_170, %c2_171, %c2_172, %c0_173] : memref<2x16x18x8xf32, #tpu.memory_space<vmem>>, vector<2x14x16x8xf32>
    %c0_174 = arith.constant 0 : index
    %c0_175 = arith.constant 0 : index
    %c0_176 = arith.constant 0 : index
    %c64 = arith.constant 64 : index
    %188 = vector.load %arg10[%c0_174, %c0_175, %c0_176, %c64] : memref<2x14x16x72xf32, #tpu.memory_space<vmem>>, vector<2x14x16x8xf32>
    tpu.vector_store %arg10[%c0_174, %c0_175, %c0_176, %c64], %187 {strides = array<i32>} : memref<2x14x16x72xf32, #tpu.memory_space<vmem>>, vector<2x14x16x8xf32>,
    %c0_177 = arith.constant 0 : index
    %c0_178 = arith.constant 0 : index
    %c0_179 = arith.constant 0 : index
    %c0_180 = arith.constant 0 : index
    %189 = vector.load %arg10[%c0_177, %c0_178, %c0_179, %c0_180] : memref<2x14x16x72xf32, #tpu.memory_space<vmem>>, vector<2x14x16x72xf32>
    %190 = vector.shape_cast %189 : vector<2x14x16x72xf32> to vector<448x72xf32>
    %c0_181 = arith.constant 0 : index
    %c0_182 = arith.constant 0 : index
    %191 = vector.load %arg4[%c0_181, %c0_182] : memref<72x16xf32, #tpu.memory_space<vmem>>, vector<72x16xf32>
    %cst_183 = arith.constant dense<0.000000e+00> : vector<448x16xf32>
    %192 = tpu.matmul %190, %191, %cst_183 {dimension_numbers = #tpu.dot_dimension_numbers<[1], [0], [0], [1], [0, 0, 1, 1], [], []>} : vector<448x72xf32>, vector<72x16xf32>, vector<448x16xf32> -> vector<448x16xf32>
    %c0_184 = arith.constant 0 : index
    %c0_185 = arith.constant 0 : index
    %193 = vector.load %arg5[%c0_184, %c0_185] : memref<1x16xf32, #tpu.memory_space<vmem>>, vector<1x16xf32>
    %194 = vector.broadcast %193 : vector<1x16xf32> to vector<448x16xf32>
    %195 = arith.addf %192, %194 : vector<448x16xf32>
    %cst_186 = arith.constant 0.000000e+00 : f32
    %196 = vector.broadcast %cst_186 : f32 to vector<448x16xf32>
    %197 = arith.maximumf %195, %196 : vector<448x16xf32>
    %198 = vector.shape_cast %197 : vector<448x16xf32> to vector<2x14x16x16xf32>
    %199 = vector.shape_cast %198 : vector<2x14x16x16xf32> to vector<2x7x2x16x16xf32>
    %200 = vector.extract_strided_slice %199 {offsets = [0, 0, 0, 0, 0], sizes = [2, 7, 1, 16, 16], strides = [1, 1, 1, 1, 1]} : vector<2x7x2x16x16xf32> to vector<2x7x1x16x16xf32>
    %201 = vector.shape_cast %200 : vector<2x7x1x16x16xf32> to vector<2x7x16x16xf32>
    %202 = vector.extract_strided_slice %199 {offsets = [0, 0, 1, 0, 0], sizes = [2, 7, 1, 16, 16], strides = [1, 1, 1, 1, 1]} : vector<2x7x2x16x16xf32> to vector<2x7x1x16x16xf32>
    %203 = vector.shape_cast %202 : vector<2x7x1x16x16xf32> to vector<2x7x16x16xf32>
    %204 = arith.maximumf %201, %203 : vector<2x7x16x16xf32>
    %205 = vector.shape_cast %204 : vector<2x7x16x16xf32> to vector<2x7x8x2x16xf32>
    %206 = vector.extract_strided_slice %205 {offsets = [0, 0, 0, 0, 0], sizes = [2, 7, 8, 1, 16], strides = [1, 1, 1, 1, 1]} : vector<2x7x8x2x16xf32> to vector<2x7x8x1x16xf32>
    %207 = vector.shape_cast %206 : vector<2x7x8x1x16xf32> to vector<2x7x8x16xf32>
    %208 = vector.extract_strided_slice %205 {offsets = [0, 0, 0, 1, 0], sizes = [2, 7, 8, 1, 16], strides = [1, 1, 1, 1, 1]} : vector<2x7x8x2x16xf32> to vector<2x7x8x1x16xf32>
    %209 = vector.shape_cast %208 : vector<2x7x8x1x16xf32> to vector<2x7x8x16xf32>
    %210 = arith.maximumf %207, %209 : vector<2x7x8x16xf32>
    %211 = vector.extract_strided_slice %210 {offsets = [0, 0, 0, 0], sizes = [2, 1, 1, 16], strides = [1, 1, 1, 1]} : vector<2x7x8x16xf32> to vector<2x1x1x16xf32>
    %212 = vector.shape_cast %211 : vector<2x1x1x16xf32> to vector<2x16xf32>
    %213 = vector.extract_strided_slice %210 {offsets = [0, 0, 1, 0], sizes = [2, 1, 1, 16], strides = [1, 1, 1, 1]} : vector<2x7x8x16xf32> to vector<2x1x1x16xf32>
    %214 = vector.shape_cast %213 : vector<2x1x1x16xf32> to vector<2x16xf32>
    %215 = vector.extract_strided_slice %210 {offsets = [0, 0, 2, 0], sizes = [2, 1, 1, 16], strides = [1, 1, 1, 1]} : vector<2x7x8x16xf32> to vector<2x1x1x16xf32>
    %216 = vector.shape_cast %215 : vector<2x1x1x16xf32> to vector<2x16xf32>
    %217 = vector.extract_strided_slice %210 {offsets = [0, 0, 3, 0], sizes = [2, 1, 1, 16], strides = [1, 1, 1, 1]} : vector<2x7x8x16xf32> to vector<2x1x1x16xf32>
    %218 = vector.shape_cast %217 : vector<2x1x1x16xf32> to vector<2x16xf32>
    %219 = vector.extract_strided_slice %210 {offsets = [0, 0, 4, 0], sizes = [2, 1, 1, 16], strides = [1, 1, 1, 1]} : vector<2x7x8x16xf32> to vector<2x1x1x16xf32>
    %220 = vector.shape_cast %219 : vector<2x1x1x16xf32> to vector<2x16xf32>
    %221 = vector.extract_strided_slice %210 {offsets = [0, 0, 5, 0], sizes = [2, 1, 1, 16], strides = [1, 1, 1, 1]} : vector<2x7x8x16xf32> to vector<2x1x1x16xf32>
    %222 = vector.shape_cast %221 : vector<2x1x1x16xf32> to vector<2x16xf32>
    %223 = vector.extract_strided_slice %210 {offsets = [0, 0, 6, 0], sizes = [2, 1, 1, 16], strides = [1, 1, 1, 1]} : vector<2x7x8x16xf32> to vector<2x1x1x16xf32>
    %224 = vector.shape_cast %223 : vector<2x1x1x16xf32> to vector<2x16xf32>
    %225 = vector.extract_strided_slice %210 {offsets = [0, 1, 0, 0], sizes = [2, 1, 1, 16], strides = [1, 1, 1, 1]} : vector<2x7x8x16xf32> to vector<2x1x1x16xf32>
    %226 = vector.shape_cast %225 : vector<2x1x1x16xf32> to vector<2x16xf32>
    %227 = vector.extract_strided_slice %210 {offsets = [0, 1, 1, 0], sizes = [2, 1, 1, 16], strides = [1, 1, 1, 1]} : vector<2x7x8x16xf32> to vector<2x1x1x16xf32>
    %228 = vector.shape_cast %227 : vector<2x1x1x16xf32> to vector<2x16xf32>
    %229 = vector.extract_strided_slice %210 {offsets = [0, 1, 2, 0], sizes = [2, 1, 1, 16], strides = [1, 1, 1, 1]} : vector<2x7x8x16xf32> to vector<2x1x1x16xf32>
    %230 = vector.shape_cast %229 : vector<2x1x1x16xf32> to vector<2x16xf32>
    %231 = vector.extract_strided_slice %210 {offsets = [0, 1, 3, 0], sizes = [2, 1, 1, 16], strides = [1, 1, 1, 1]} : vector<2x7x8x16xf32> to vector<2x1x1x16xf32>
    %232 = vector.shape_cast %231 : vector<2x1x1x16xf32> to vector<2x16xf32>
    %233 = vector.extract_strided_slice %210 {offsets = [0, 1, 4, 0], sizes = [2, 1, 1, 16], strides = [1, 1, 1, 1]} : vector<2x7x8x16xf32> to vector<2x1x1x16xf32>
    %234 = vector.shape_cast %233 : vector<2x1x1x16xf32> to vector<2x16xf32>
    %235 = vector.extract_strided_slice %210 {offsets = [0, 1, 5, 0], sizes = [2, 1, 1, 16], strides = [1, 1, 1, 1]} : vector<2x7x8x16xf32> to vector<2x1x1x16xf32>
    %236 = vector.shape_cast %235 : vector<2x1x1x16xf32> to vector<2x16xf32>
    %237 = vector.extract_strided_slice %210 {offsets = [0, 1, 6, 0], sizes = [2, 1, 1, 16], strides = [1, 1, 1, 1]} : vector<2x7x8x16xf32> to vector<2x1x1x16xf32>
    %238 = vector.shape_cast %237 : vector<2x1x1x16xf32> to vector<2x16xf32>
    %239 = vector.extract_strided_slice %210 {offsets = [0, 2, 0, 0], sizes = [2, 1, 1, 16], strides = [1, 1, 1, 1]} : vector<2x7x8x16xf32> to vector<2x1x1x16xf32>
    %240 = vector.shape_cast %239 : vector<2x1x1x16xf32> to vector<2x16xf32>
    %241 = vector.extract_strided_slice %210 {offsets = [0, 2, 1, 0], sizes = [2, 1, 1, 16], strides = [1, 1, 1, 1]} : vector<2x7x8x16xf32> to vector<2x1x1x16xf32>
    %242 = vector.shape_cast %241 : vector<2x1x1x16xf32> to vector<2x16xf32>
    %243 = vector.extract_strided_slice %210 {offsets = [0, 2, 2, 0], sizes = [2, 1, 1, 16], strides = [1, 1, 1, 1]} : vector<2x7x8x16xf32> to vector<2x1x1x16xf32>
    %244 = vector.shape_cast %243 : vector<2x1x1x16xf32> to vector<2x16xf32>
    %245 = vector.extract_strided_slice %210 {offsets = [0, 2, 3, 0], sizes = [2, 1, 1, 16], strides = [1, 1, 1, 1]} : vector<2x7x8x16xf32> to vector<2x1x1x16xf32>
    %246 = vector.shape_cast %245 : vector<2x1x1x16xf32> to vector<2x16xf32>
    %247 = vector.extract_strided_slice %210 {offsets = [0, 2, 4, 0], sizes = [2, 1, 1, 16], strides = [1, 1, 1, 1]} : vector<2x7x8x16xf32> to vector<2x1x1x16xf32>
    %248 = vector.shape_cast %247 : vector<2x1x1x16xf32> to vector<2x16xf32>
    %249 = vector.extract_strided_slice %210 {offsets = [0, 2, 5, 0], sizes = [2, 1, 1, 16], strides = [1, 1, 1, 1]} : vector<2x7x8x16xf32> to vector<2x1x1x16xf32>
    %250 = vector.shape_cast %249 : vector<2x1x1x16xf32> to vector<2x16xf32>
    %251 = vector.extract_strided_slice %210 {offsets = [0, 2, 6, 0], sizes = [2, 1, 1, 16], strides = [1, 1, 1, 1]} : vector<2x7x8x16xf32> to vector<2x1x1x16xf32>
    %252 = vector.shape_cast %251 : vector<2x1x1x16xf32> to vector<2x16xf32>
    %253 = vector.extract_strided_slice %210 {offsets = [0, 3, 0, 0], sizes = [2, 1, 1, 16], strides = [1, 1, 1, 1]} : vector<2x7x8x16xf32> to vector<2x1x1x16xf32>
    %254 = vector.shape_cast %253 : vector<2x1x1x16xf32> to vector<2x16xf32>
    %255 = vector.extract_strided_slice %210 {offsets = [0, 3, 1, 0], sizes = [2, 1, 1, 16], strides = [1, 1, 1, 1]} : vector<2x7x8x16xf32> to vector<2x1x1x16xf32>
    %256 = vector.shape_cast %255 : vector<2x1x1x16xf32> to vector<2x16xf32>
    %257 = vector.extract_strided_slice %210 {offsets = [0, 3, 2, 0], sizes = [2, 1, 1, 16], strides = [1, 1, 1, 1]} : vector<2x7x8x16xf32> to vector<2x1x1x16xf32>
    %258 = vector.shape_cast %257 : vector<2x1x1x16xf32> to vector<2x16xf32>
    %259 = vector.extract_strided_slice %210 {offsets = [0, 3, 3, 0], sizes = [2, 1, 1, 16], strides = [1, 1, 1, 1]} : vector<2x7x8x16xf32> to vector<2x1x1x16xf32>
    %260 = vector.shape_cast %259 : vector<2x1x1x16xf32> to vector<2x16xf32>
    %261 = vector.extract_strided_slice %210 {offsets = [0, 3, 4, 0], sizes = [2, 1, 1, 16], strides = [1, 1, 1, 1]} : vector<2x7x8x16xf32> to vector<2x1x1x16xf32>
    %262 = vector.shape_cast %261 : vector<2x1x1x16xf32> to vector<2x16xf32>
    %263 = vector.extract_strided_slice %210 {offsets = [0, 3, 5, 0], sizes = [2, 1, 1, 16], strides = [1, 1, 1, 1]} : vector<2x7x8x16xf32> to vector<2x1x1x16xf32>
    %264 = vector.shape_cast %263 : vector<2x1x1x16xf32> to vector<2x16xf32>
    %265 = vector.extract_strided_slice %210 {offsets = [0, 3, 6, 0], sizes = [2, 1, 1, 16], strides = [1, 1, 1, 1]} : vector<2x7x8x16xf32> to vector<2x1x1x16xf32>
    %266 = vector.shape_cast %265 : vector<2x1x1x16xf32> to vector<2x16xf32>
    %267 = vector.extract_strided_slice %210 {offsets = [0, 4, 0, 0], sizes = [2, 1, 1, 16], strides = [1, 1, 1, 1]} : vector<2x7x8x16xf32> to vector<2x1x1x16xf32>
    %268 = vector.shape_cast %267 : vector<2x1x1x16xf32> to vector<2x16xf32>
    %269 = vector.extract_strided_slice %210 {offsets = [0, 4, 1, 0], sizes = [2, 1, 1, 16], strides = [1, 1, 1, 1]} : vector<2x7x8x16xf32> to vector<2x1x1x16xf32>
    %270 = vector.shape_cast %269 : vector<2x1x1x16xf32> to vector<2x16xf32>
    %271 = vector.extract_strided_slice %210 {offsets = [0, 4, 2, 0], sizes = [2, 1, 1, 16], strides = [1, 1, 1, 1]} : vector<2x7x8x16xf32> to vector<2x1x1x16xf32>
    %272 = vector.shape_cast %271 : vector<2x1x1x16xf32> to vector<2x16xf32>
    %273 = vector.extract_strided_slice %210 {offsets = [0, 4, 3, 0], sizes = [2, 1, 1, 16], strides = [1, 1, 1, 1]} : vector<2x7x8x16xf32> to vector<2x1x1x16xf32>
    %274 = vector.shape_cast %273 : vector<2x1x1x16xf32> to vector<2x16xf32>
    %275 = vector.extract_strided_slice %210 {offsets = [0, 4, 4, 0], sizes = [2, 1, 1, 16], strides = [1, 1, 1, 1]} : vector<2x7x8x16xf32> to vector<2x1x1x16xf32>
    %276 = vector.shape_cast %275 : vector<2x1x1x16xf32> to vector<2x16xf32>
    %277 = vector.extract_strided_slice %210 {offsets = [0, 4, 5, 0], sizes = [2, 1, 1, 16], strides = [1, 1, 1, 1]} : vector<2x7x8x16xf32> to vector<2x1x1x16xf32>
    %278 = vector.shape_cast %277 : vector<2x1x1x16xf32> to vector<2x16xf32>
    %279 = vector.extract_strided_slice %210 {offsets = [0, 4, 6, 0], sizes = [2, 1, 1, 16], strides = [1, 1, 1, 1]} : vector<2x7x8x16xf32> to vector<2x1x1x16xf32>
    %280 = vector.shape_cast %279 : vector<2x1x1x16xf32> to vector<2x16xf32>
    %281 = vector.extract_strided_slice %210 {offsets = [0, 5, 0, 0], sizes = [2, 1, 1, 16], strides = [1, 1, 1, 1]} : vector<2x7x8x16xf32> to vector<2x1x1x16xf32>
    %282 = vector.shape_cast %281 : vector<2x1x1x16xf32> to vector<2x16xf32>
    %283 = vector.extract_strided_slice %210 {offsets = [0, 5, 1, 0], sizes = [2, 1, 1, 16], strides = [1, 1, 1, 1]} : vector<2x7x8x16xf32> to vector<2x1x1x16xf32>
    %284 = vector.shape_cast %283 : vector<2x1x1x16xf32> to vector<2x16xf32>
    %285 = vector.extract_strided_slice %210 {offsets = [0, 5, 2, 0], sizes = [2, 1, 1, 16], strides = [1, 1, 1, 1]} : vector<2x7x8x16xf32> to vector<2x1x1x16xf32>
    %286 = vector.shape_cast %285 : vector<2x1x1x16xf32> to vector<2x16xf32>
    %287 = vector.extract_strided_slice %210 {offsets = [0, 5, 3, 0], sizes = [2, 1, 1, 16], strides = [1, 1, 1, 1]} : vector<2x7x8x16xf32> to vector<2x1x1x16xf32>
    %288 = vector.shape_cast %287 : vector<2x1x1x16xf32> to vector<2x16xf32>
    %289 = vector.extract_strided_slice %210 {offsets = [0, 5, 4, 0], sizes = [2, 1, 1, 16], strides = [1, 1, 1, 1]} : vector<2x7x8x16xf32> to vector<2x1x1x16xf32>
    %290 = vector.shape_cast %289 : vector<2x1x1x16xf32> to vector<2x16xf32>
    %291 = vector.extract_strided_slice %210 {offsets = [0, 5, 5, 0], sizes = [2, 1, 1, 16], strides = [1, 1, 1, 1]} : vector<2x7x8x16xf32> to vector<2x1x1x16xf32>
    %292 = vector.shape_cast %291 : vector<2x1x1x16xf32> to vector<2x16xf32>
    %293 = vector.extract_strided_slice %210 {offsets = [0, 5, 6, 0], sizes = [2, 1, 1, 16], strides = [1, 1, 1, 1]} : vector<2x7x8x16xf32> to vector<2x1x1x16xf32>
    %294 = vector.shape_cast %293 : vector<2x1x1x16xf32> to vector<2x16xf32>
    %295 = vector.extract_strided_slice %210 {offsets = [0, 6, 0, 0], sizes = [2, 1, 1, 16], strides = [1, 1, 1, 1]} : vector<2x7x8x16xf32> to vector<2x1x1x16xf32>
    %296 = vector.shape_cast %295 : vector<2x1x1x16xf32> to vector<2x16xf32>
    %297 = vector.extract_strided_slice %210 {offsets = [0, 6, 1, 0], sizes = [2, 1, 1, 16], strides = [1, 1, 1, 1]} : vector<2x7x8x16xf32> to vector<2x1x1x16xf32>
    %298 = vector.shape_cast %297 : vector<2x1x1x16xf32> to vector<2x16xf32>
    %299 = vector.extract_strided_slice %210 {offsets = [0, 6, 2, 0], sizes = [2, 1, 1, 16], strides = [1, 1, 1, 1]} : vector<2x7x8x16xf32> to vector<2x1x1x16xf32>
    %300 = vector.shape_cast %299 : vector<2x1x1x16xf32> to vector<2x16xf32>
    %301 = vector.extract_strided_slice %210 {offsets = [0, 6, 3, 0], sizes = [2, 1, 1, 16], strides = [1, 1, 1, 1]} : vector<2x7x8x16xf32> to vector<2x1x1x16xf32>
    %302 = vector.shape_cast %301 : vector<2x1x1x16xf32> to vector<2x16xf32>
    %303 = vector.extract_strided_slice %210 {offsets = [0, 6, 4, 0], sizes = [2, 1, 1, 16], strides = [1, 1, 1, 1]} : vector<2x7x8x16xf32> to vector<2x1x1x16xf32>
    %304 = vector.shape_cast %303 : vector<2x1x1x16xf32> to vector<2x16xf32>
    %305 = vector.extract_strided_slice %210 {offsets = [0, 6, 5, 0], sizes = [2, 1, 1, 16], strides = [1, 1, 1, 1]} : vector<2x7x8x16xf32> to vector<2x1x1x16xf32>
    %306 = vector.shape_cast %305 : vector<2x1x1x16xf32> to vector<2x16xf32>
    %307 = vector.extract_strided_slice %210 {offsets = [0, 6, 6, 0], sizes = [2, 1, 1, 16], strides = [1, 1, 1, 1]} : vector<2x7x8x16xf32> to vector<2x1x1x16xf32>
    %308 = vector.shape_cast %307 : vector<2x1x1x16xf32> to vector<2x16xf32>
    %309 = tpu.concatenate %212, %214, %216, %218, %220, %222, %224, %226, %228, %230, %232, %234, %236, %238, %240, %242 in 1 : vector<2x16xf32>, vector<2x16xf32>, vector<2x16xf32>, vector<2x16xf32>, vector<2x16xf32>, vector<2x16xf32>, vector<2x16xf32>, vector<2x16xf32>, vector<2x16xf32>, vector<2x16xf32>, vector<2x16xf32>, vector<2x16xf32>, vector<2x16xf32>, vector<2x16xf32>, vector<2x16xf32>, vector<2x16xf32> -> vector<2x256xf32>
    %310 = tpu.concatenate %244, %246, %248, %250, %252, %254, %256, %258, %260, %262, %264, %266, %268, %270, %272, %274 in 1 : vector<2x16xf32>, vector<2x16xf32>, vector<2x16xf32>, vector<2x16xf32>, vector<2x16xf32>, vector<2x16xf32>, vector<2x16xf32>, vector<2x16xf32>, vector<2x16xf32>, vector<2x16xf32>, vector<2x16xf32>, vector<2x16xf32>, vector<2x16xf32>, vector<2x16xf32>, vector<2x16xf32>, vector<2x16xf32> -> vector<2x256xf32>
    %311 = tpu.concatenate %276, %278, %280, %282, %284, %286, %288, %290, %292, %294, %296, %298, %300, %302, %304, %306 in 1 : vector<2x16xf32>, vector<2x16xf32>, vector<2x16xf32>, vector<2x16xf32>, vector<2x16xf32>, vector<2x16xf32>, vector<2x16xf32>, vector<2x16xf32>, vector<2x16xf32>, vector<2x16xf32>, vector<2x16xf32>, vector<2x16xf32>, vector<2x16xf32>, vector<2x16xf32>, vector<2x16xf32>, vector<2x16xf32> -> vector<2x256xf32>
    %312 = tpu.concatenate %309, %310, %311, %308 in 1 : vector<2x256xf32>, vector<2x256xf32>, vector<2x256xf32>, vector<2x16xf32> -> vector<2x784xf32>
    %c0_187 = arith.constant 0 : index
    %c0_188 = arith.constant 0 : index
    %313 = vector.load %arg6[%c0_187, %c0_188] : memref<784x10xf32, #tpu.memory_space<vmem>>, vector<784x10xf32>
    %cst_189 = arith.constant dense<0.000000e+00> : vector<2x10xf32>
    %314 = tpu.matmul %312, %313, %cst_189 {dimension_numbers = #tpu.dot_dimension_numbers<[1], [0], [0], [1], [0, 0, 1, 1], [], []>} : vector<2x784xf32>, vector<784x10xf32>, vector<2x10xf32> -> vector<2x10xf32>
    %c0_190 = arith.constant 0 : index
    %c0_191 = arith.constant 0 : index
    %315 = vector.load %arg7[%c0_190, %c0_191] : memref<1x10xf32, #tpu.memory_space<vmem>>, vector<1x10xf32>
    %316 = vector.broadcast %315 : vector<1x10xf32> to vector<2x10xf32>
    %317 = arith.addf %314, %316 : vector<2x10xf32>
    %c0_192 = arith.constant 0 : index
    %c0_193 = arith.constant 0 : index
    %c0_194 = arith.constant 0 : index
    %318 = vector.load %arg8[%c0_192, %c0_193, %c0_194] : memref<1x2x10xf32, #tpu.memory_space<vmem>>, vector<1x2x10xf32>
    %319 = vector.shape_cast %318 : vector<1x2x10xf32> to vector<2x10xf32>
    %320 = vector.shape_cast %317 : vector<2x10xf32> to vector<1x2x10xf32>
    tpu.vector_store %arg8[%c0_192, %c0_193, %c0_194], %320 {strides = array<i32>} : memref<1x2x10xf32, #tpu.memory_space<vmem>>, vector<1x2x10xf32>,
    return
  }
  func.func @transform_0(%arg0: i32) -> (i32, i32, i32, i32, i32) {
    %c0_i32 = arith.constant 0 : i32
    %c0_i32_0 = arith.constant 0 : i32
    %c0_i32_1 = arith.constant 0 : i32
    %c0_i32_2 = arith.constant 0 : i32
    %c0_i32_3 = arith.constant 0 : i32
    return %arg0, %c0_i32, %c0_i32_0, %c0_i32_1, %c0_i32_2 : i32, i32, i32, i32, i32
  }
  func.func @transform_1(%arg0: i32) -> (i32, i32) {
    %c0_i32 = arith.constant 0 : i32
    %c0_i32_0 = arith.constant 0 : i32
    %c0_i32_1 = arith.constant 0 : i32
    return %c0_i32, %c0_i32_0 : i32, i32
  }
  func.func @transform_2(%arg0: i32) -> (i32, i32) {
    %c0_i32 = arith.constant 0 : i32
    %c0_i32_0 = arith.constant 0 : i32
    %c0_i32_1 = arith.constant 0 : i32
    return %c0_i32, %c0_i32_0 : i32, i32
  }
  func.func @transform_3(%arg0: i32) -> (i32, i32) {
    %c0_i32 = arith.constant 0 : i32
    %c0_i32_0 = arith.constant 0 : i32
    %c0_i32_1 = arith.constant 0 : i32
    return %c0_i32, %c0_i32_0 : i32, i32
  }
  func.func @transform_4(%arg0: i32) -> (i32, i32) {
    %c0_i32 = arith.constant 0 : i32
    %c0_i32_0 = arith.constant 0 : i32
    %c0_i32_1 = arith.constant 0 : i32
    return %c0_i32, %c0_i32_0 : i32, i32
  }
  func.func @transform_5(%arg0: i32) -> (i32, i32) {
    %c0_i32 = arith.constant 0 : i32
    %c0_i32_0 = arith.constant 0 : i32
    %c0_i32_1 = arith.constant 0 : i32
    return %c0_i32, %c0_i32_0 : i32, i32
  }
  func.func @transform_6(%arg0: i32) -> (i32, i32) {
    %c0_i32 = arith.constant 0 : i32
    %c0_i32_0 = arith.constant 0 : i32
    %c0_i32_1 = arith.constant 0 : i32
    return %c0_i32, %c0_i32_0 : i32, i32
  }
  func.func @transform_7(%arg0: i32) -> (i32, i32, i32) {
    %c0_i32 = arith.constant 0 : i32
    %c0_i32_0 = arith.constant 0 : i32
    %c0_i32_1 = arith.constant 0 : i32
    return %arg0, %c0_i32, %c0_i32_0 : i32, i32, i32
  }
}

</mosaic_0001>

<llo_original>
// kernel: cnn_forward_prepared.1
$region0: #{cnn_forward_prepared.1}
  #allocation0 [shape = 'u32[]', space=smem, size = 0x4, offset = 0x4, fixed_abs, tag = 'smem constant byte address 0x4 - core index']
  #allocation1 [shape = 'u32[144,128]{1,0:T(1,128)}', space=vmem, size = 0x12000, scoped, tag = 'internal scratch']
  #allocation2 [shape = 'f32[2,16,18,8]{3,2,1,0:T(8,128)}', space=vmem, size = 0x60000, scoped, tag = 'scratch operand']
  #allocation3 [shape = 'f32[2,14,16,72]{3,2,1,0:T(8,128)}', space=vmem, size = 0x38000, scoped, tag = 'scratch operand']
  %s0 = inlined_call_operand.vmem [shape: f32[4,1,3,30,224], index: 0, kind: input, shape index: {}]
  %s1 = inlined_call_operand.vmem [shape: f32[9,224], index: 1, kind: input, shape index: {}]
  %s2 = inlined_call_operand.vmem [shape: f32[1,224], index: 2, kind: input, shape index: {}]
  %s3 = inlined_call_operand.vmem [shape: f32[72,16], index: 3, kind: input, shape index: {}]
  %s4 = inlined_call_operand.vmem [shape: f32[1,16], index: 4, kind: input, shape index: {}]
  %s5 = inlined_call_operand.vmem [shape: f32[784,10], index: 5, kind: input, shape index: {}]
  %s6 = inlined_call_operand.vmem [shape: f32[1,10], index: 6, kind: input, shape index: {}]
  %s7 = inlined_call_operand.hbm [shape: f32[2,2,10], index: 7, kind: output, shape index: {}]
  %s8 = sld [smem:[#allocation0]]
  $region61: #{cnn_forward_prepared.1} parent=0
    _
  %s10 = ssub.s32 1, %s8
  %s11 = scalar_select 0, %s10, %s8
  $region1: #{cnn_forward_prepared.1} parent=0
    #allocation4 [shape = 'u8[2048]{0}', space=vmem, size = 0x800, scoped, tag = 'output window, operand 0']
    #allocation5 [shape = 's32[2]{0}', space=sflag, size = 0x8, scoped, tag = 'scoped memory for cnn_forward_prepared.1']
    %12 = vsyncpa [#allocation5], 0
    %s13 = scalar_lea.sflag [#allocation5], 1
    %14 = vsyncpa %s13, 0
    loop: start=0, step=1, limit=4
    $region2: #{cnn_forward_prepared.1} parent=1 // loop_pre_header
      _
    $region3: #{cnn_forward_prepared.1} parent=1 // loop_header
      %s16 = sphi 0, %s20
      %p17 = scmp.ge.s32.totalorder %s16, 4
      %s26 = sphi 0, %s28
      %s29 = sphi 0, %s26
      %s30 = sphi 0, %s29
      %s46 = sphi 0, %s30
      %s50 = sphi 0, %s50
      %s52 = sphi 0, %s50
      %s53 = sphi 0, %s52
      %s67 = sphi 0, %s53
      %s71 = sphi 0, %s71
      %s73 = sphi 0, %s71
      %s74 = sphi 0, %s73
      %s88 = sphi 0, %s74
      %s92 = sphi 0, %s92
      %s94 = sphi 0, %s92
      %s95 = sphi 0, %s94
      %s109 = sphi 0, %s95
      %s113 = sphi 0, %s113
      %s115 = sphi 0, %s113
      %s116 = sphi 0, %s115
      %s130 = sphi 0, %s116
      %s134 = sphi 0, %s134
      %s136 = sphi 0, %s134
      %s137 = sphi 0, %s136
      %s151 = sphi 0, %s137
      %s155 = sphi 0, %s155
      %s157 = sphi 0, %s155
      %s158 = sphi 0, %s157
      %s172 = sphi 0, %s158
      %s178 = sphi 0, %s180
      %s181 = sphi 0, %s178
      %s182 = sphi 0, %s181
      %s198 = sphi 0, %s182
    $region4: #{cnn_forward_prepared.1} parent=1 // loop_header_branch
      %19 = sbr.rel (%p17) target = $region8
    $region5: #{cnn_forward_prepared.1} parent=1 // loop_body
      %s21 = ssub.s32 %s16, 1
      %s22 = ssub.s32 %s16, 2
      %s23 = sadd.s32 %s16, 1
      %s24 = ssub.s32 %s16, %s23
      %p25 = scmp.eq.s32.totalorder %s24, 0
      %s27 = sadd.s32 %s26, 1
      %s28 = scalar_select %p25, %s26, %s27
      %p31 = pneg %p25
      %p32 = scmp.eq.s32.totalorder %s16, 1
      %p33 = por %p31, %p32
      %p34 = scmp.ne.s32.totalorder %s26, %s29
      %p35 = scmp.eq.s32.totalorder %s16, 0
      %p36 = por %p34, %p35
      %p37 = scmp.ne.s32.totalorder %s26, %s29
      %p38 = scmp.eq.s32.totalorder %s21, 1
      %p39 = por %p37, %p38
      %p40 = scmp.ne.s32.totalorder %s29, %s30
      %p41 = scmp.eq.s32.totalorder %s21, 0
      %p42 = por %p40, %p41
      %p43 = scmp.ne.s32.totalorder %s29, %s30
      %p44 = scmp.eq.s32.totalorder %s22, 1
      %p45 = por %p43, %p44
      %p47 = scmp.ne.s32.totalorder %s30, %s46
      %p48 = scmp.eq.s32.totalorder %s22, 0
      %p49 = por %p47, %p48
      %s51 = sadd.s32 %s50, 1
      %p54 = scmp.eq.s32.totalorder %s16, 1
      %p55 = scmp.ne.s32.totalorder %s50, %s52
      %p56 = scmp.eq.s32.totalorder %s16, 0
      %p57 = por %p55, %p56
      %p58 = scmp.ne.s32.totalorder %s50, %s52
      %p59 = scmp.eq.s32.totalorder %s21, 1
      %p60 = por %p58, %p59
      %p61 = scmp.ne.s32.totalorder %s52, %s53
      %p62 = scmp.eq.s32.totalorder %s21, 0
      %p63 = por %p61, %p62
      %p64 = scmp.ne.s32.totalorder %s52, %s53
      %p65 = scmp.eq.s32.totalorder %s22, 1
      %p66 = por %p64, %p65
      %p68 = scmp.ne.s32.totalorder %s53, %s67
      %p69 = scmp.eq.s32.totalorder %s22, 0
      %p70 = por %p68, %p69
      %s72 = sadd.s32 %s71, 1
      %p75 = scmp.eq.s32.totalorder %s16, 1
      %p76 = scmp.ne.s32.totalorder %s71, %s73
      %p77 = scmp.eq.s32.totalorder %s16, 0
      %p78 = por %p76, %p77
      %p79 = scmp.ne.s32.totalorder %s71, %s73
      %p80 = scmp.eq.s32.totalorder %s21, 1
      %p81 = por %p79, %p80
      %p82 = scmp.ne.s32.totalorder %s73, %s74
      %p83 = scmp.eq.s32.totalorder %s21, 0
      %p84 = por %p82, %p83
      %p85 = scmp.ne.s32.totalorder %s73, %s74
      %p86 = scmp.eq.s32.totalorder %s22, 1
      %p87 = por %p85, %p86
      %p89 = scmp.ne.s32.totalorder %s74, %s88
      %p90 = scmp.eq.s32.totalorder %s22, 0
      %p91 = por %p89, %p90
      %s93 = sadd.s32 %s92, 1
      %p96 = scmp.eq.s32.totalorder %s16, 1
      %p97 = scmp.ne.s32.totalorder %s92, %s94
      %p98 = scmp.eq.s32.totalorder %s16, 0
      %p99 = por %p97, %p98
      %p100 = scmp.ne.s32.totalorder %s92, %s94
      %p101 = scmp.eq.s32.totalorder %s21, 1
      %p102 = por %p100, %p101
      %p103 = scmp.ne.s32.totalorder %s94, %s95
      %p104 = scmp.eq.s32.totalorder %s21, 0
      %p105 = por %p103, %p104
      %p106 = scmp.ne.s32.totalorder %s94, %s95
      %p107 = scmp.eq.s32.totalorder %s22, 1
      %p108 = por %p106, %p107
      %p110 = scmp.ne.s32.totalorder %s95, %s109
      %p111 = scmp.eq.s32.totalorder %s22, 0
      %p112 = por %p110, %p111
      %s114 = sadd.s32 %s113, 1
      %p117 = scmp.eq.s32.totalorder %s16, 1
      %p118 = scmp.ne.s32.totalorder %s113, %s115
      %p119 = scmp.eq.s32.totalorder %s16, 0
      %p120 = por %p118, %p119
      %p121 = scmp.ne.s32.totalorder %s113, %s115
      %p122 = scmp.eq.s32.totalorder %s21, 1
      %p123 = por %p121, %p122
      %p124 = scmp.ne.s32.totalorder %s115, %s116
      %p125 = scmp.eq.s32.totalorder %s21, 0
      %p126 = por %p124, %p125
      %p127 = scmp.ne.s32.totalorder %s115, %s116
      %p128 = scmp.eq.s32.totalorder %s22, 1
      %p129 = por %p127, %p128
      %p131 = scmp.ne.s32.totalorder %s116, %s130
      %p132 = scmp.eq.s32.totalorder %s22, 0
      %p133 = por %p131, %p132
      %s135 = sadd.s32 %s134, 1
      %p138 = scmp.eq.s32.totalorder %s16, 1
      %p139 = scmp.ne.s32.totalorder %s134, %s136
      %p140 = scmp.eq.s32.totalorder %s16, 0
      %p141 = por %p139, %p140
      %p142 = scmp.ne.s32.totalorder %s134, %s136
      %p143 = scmp.eq.s32.totalorder %s21, 1
      %p144 = por %p142, %p143
      %p145 = scmp.ne.s32.totalorder %s136, %s137
      %p146 = scmp.eq.s32.totalorder %s21, 0
      %p147 = por %p145, %p146
      %p148 = scmp.ne.s32.totalorder %s136, %s137
      %p149 = scmp.eq.s32.totalorder %s22, 1
      %p150 = por %p148, %p149
      %p152 = scmp.ne.s32.totalorder %s137, %s151
      %p153 = scmp.eq.s32.totalorder %s22, 0
      %p154 = por %p152, %p153
      %s156 = sadd.s32 %s155, 1
      %p159 = scmp.eq.s32.totalorder %s16, 1
      %p160 = scmp.ne.s32.totalorder %s155, %s157
      %p161 = scmp.eq.s32.totalorder %s16, 0
      %p162 = por %p160, %p161
      %p163 = scmp.ne.s32.totalorder %s155, %s157
      %p164 = scmp.eq.s32.totalorder %s21, 1
      %p165 = por %p163, %p164
      %p166 = scmp.ne.s32.totalorder %s157, %s158
      %p167 = scmp.eq.s32.totalorder %s21, 0
      %p168 = por %p166, %p167
      %p169 = scmp.ne.s32.totalorder %s157, %s158
      %p170 = scmp.eq.s32.totalorder %s22, 1
      %p171 = por %p169, %p170
      %p173 = scmp.ne.s32.totalorder %s158, %s172
      %p174 = scmp.eq.s32.totalorder %s22, 0
      %p175 = por %p173, %p174
      %s176 = ssub.s32 %s16, %s23
      %p177 = scmp.eq.s32.totalorder %s176, 0
      %s179 = sadd.s32 %s178, 1
      %s180 = scalar_select %p177, %s178, %s179
      %p183 = pneg %p177
      %p184 = scmp.eq.s32.totalorder %s16, 1
      %p185 = por %p183, %p184
      %p186 = scmp.ne.s32.totalorder %s178, %s181
      %p187 = scmp.eq.s32.totalorder %s16, 0
      %p188 = por %p186, %p187
      %p189 = scmp.ne.s32.totalorder %s178, %s181
      %p190 = scmp.eq.s32.totalorder %s21, 1
      %p191 = por %p189, %p190
      %p192 = scmp.ne.s32.totalorder %s181, %s182
      %p193 = scmp.eq.s32.totalorder %s21, 0
      %p194 = por %p192, %p193
      %p195 = scmp.ne.s32.totalorder %s181, %s182
      %p196 = scmp.eq.s32.totalorder %s22, 1
      %p197 = por %p195, %p196
      %p199 = scmp.ne.s32.totalorder %s182, %s198
      %p200 = scmp.eq.s32.totalorder %s22, 0
      %p201 = por %p199, %p200
      %p202 = scmp.le.s32.totalorder 1, %s16
      %p203 = scmp.lt.s32.totalorder %s16, 3
      %p204 = pnand %p202, %p203
      %p205 = pneg %p204
      // Predicated region
      $region9: #{cnn_forward_prepared.1} parent=5 // pred_check
        _
      $region10: #{cnn_forward_prepared.1} parent=5 // pred_check_branch
        %207 = sbr.rel (%p204) target = $region12
      $region11: #{cnn_forward_prepared.1} parent=5 // pred_region
        %s208 = ssub.s32 %s16, 1
        // Predicated region
        $region13: #{cnn_forward_prepared.1} parent=11 // pred_check
          %p209 = pneg %p63
        $region14: #{cnn_forward_prepared.1} parent=11 // pred_check_branch
          %211 = sbr.rel (%p209) target = $region16
        $region15: #{cnn_forward_prepared.1} parent=11 // pred_region
          _
        $region16: #{cnn_forward_prepared.1} parent=11 // pred_fallthru
          _
        // Predicated region
        $region17: #{cnn_forward_prepared.1} parent=11 // pred_check
          %p212 = pneg %p84
        $region18: #{cnn_forward_prepared.1} parent=11 // pred_check_branch
          %214 = sbr.rel (%p212) target = $region20
        $region19: #{cnn_forward_prepared.1} parent=11 // pred_region
          _
        $region20: #{cnn_forward_prepared.1} parent=11 // pred_fallthru
          _
        // Predicated region
        $region21: #{cnn_forward_prepared.1} parent=11 // pred_check
          %p215 = pneg %p105
        $region22: #{cnn_forward_prepared.1} parent=11 // pred_check_branch
          %217 = sbr.rel (%p215) target = $region24
        $region23: #{cnn_forward_prepared.1} parent=11 // pred_region
          _
        $region24: #{cnn_forward_prepared.1} parent=11 // pred_fallthru
          _
        // Predicated region
        $region25: #{cnn_forward_prepared.1} parent=11 // pred_check
          %p218 = pneg %p126
        $region26: #{cnn_forward_prepared.1} parent=11 // pred_check_branch
          %220 = sbr.rel (%p218) target = $region28
        $region27: #{cnn_forward_prepared.1} parent=11 // pred_region
          _
        $region28: #{cnn_forward_prepared.1} parent=11 // pred_fallthru
          _
        // Predicated region
        $region29: #{cnn_forward_prepared.1} parent=11 // pred_check
          %p221 = pneg %p147
        $region30: #{cnn_forward_prepared.1} parent=11 // pred_check_branch
          %223 = sbr.rel (%p221) target = $region32
        $region31: #{cnn_forward_prepared.1} parent=11 // pred_region
          _
        $region32: #{cnn_forward_prepared.1} parent=11 // pred_fallthru
          _
        // Predicated region
        $region33: #{cnn_forward_prepared.1} parent=11 // pred_check
          %p224 = pneg %p168
        $region34: #{cnn_forward_prepared.1} parent=11 // pred_check_branch
          %226 = sbr.rel (%p224) target = $region36
        $region35: #{cnn_forward_prepared.1} parent=11 // pred_region
          _
        $region36: #{cnn_forward_prepared.1} parent=11 // pred_fallthru
          _
      $region12: #{cnn_forward_prepared.1} parent=5 // pred_fallthru
        _
      %p227 = scmp.lt.s32.totalorder %s16, 2
      // Predicated region
      $region37: #{cnn_forward_prepared.1} parent=5 // pred_check
        %p228 = pneg %p227
      $region38: #{cnn_forward_prepared.1} parent=5 // pred_check_branch
        %230 = sbr.rel (%p228) target = $region40
      $region39: #{cnn_forward_prepared.1} parent=5 // pred_region
        // Predicated region
        $region41: #{cnn_forward_prepared.1} parent=39 // pred_check
          %p231 = pneg %p36
        $region42: #{cnn_forward_prepared.1} parent=39 // pred_check_branch
          %233 = sbr.rel (%p231) target = $region44
        $region43: #{cnn_forward_prepared.1} parent=39 // pred_region
          %s234 = smul.u32 2, %s16
          %p235 = scmp.lt.s32.totalorder %s234, 3
          %s236 = scalar_select %p235, %s234, 3
          %s237 = smul.addr %s236, 24
          %s238 = smul.addr %s237, 8
          %s239 = scalar_lea.vmem %s0, %s238
          %s240 = smul.u32 2, %s16
        $region44: #{cnn_forward_prepared.1} parent=39 // pred_fallthru
          _
      $region40: #{cnn_forward_prepared.1} parent=5 // pred_fallthru
        _
      %p241 = scmp.le.s32.totalorder 1, %s16
      %p242 = scmp.lt.s32.totalorder %s16, 3
      %p243 = pnand %p241, %p242
      %p244 = pneg %p243
      // Predicated region
      $region45: #{cnn_forward_prepared.1} parent=5 // pred_check
        _
      $region46: #{cnn_forward_prepared.1} parent=5 // pred_check_branch
        %246 = sbr.rel (%p243) target = $region48
      $region47: #{cnn_forward_prepared.1} parent=5 // pred_region
        %s247 = ssub.s32 %s16, 1
        %s248 = smul.u32 2, %s21
        %p249 = scmp.lt.s32.totalorder %s248, 3
        %s250 = scalar_select %p249, %s248, 3
        %s251 = smul.addr %s250, 24
        %s252 = smul.addr %s251, 8
        %s253 = scalar_lea.vmem %s0, %s252
        %p254 = pneg %p42
        %p255 = pneg %p39
        %p256 = pneg %p63
        %p257 = pneg %p60
        %p258 = pneg %p84
        %p259 = pneg %p81
        %p260 = pneg %p105
        %p261 = pneg %p102
        %p262 = pneg %p126
        %p263 = pneg %p123
        %p264 = pneg %p147
        %p265 = pneg %p144
        %p266 = pneg %p168
        %p267 = pneg %p165
        %p268 = pneg %p194
        %p269 = pneg %p191
        %s270 = sand.u32 %s181, 1
        %s271 = scalar_lea.sflag [#allocation5], %s270
        %s272 = sand.u32 %s181, 1
        %s273 = smul.addr %s272, 2
        %s274 = scalar_lea.vmem [#allocation4], %s273
        %s275 = smul.u32 2, %s21
        %p276 = scmp.lt.s32.totalorder %s275, 3
        %s277 = scalar_select %p276, %s275, 3
        %s278 = smul.addr %s277, 24
        %s279 = smul.addr %s278, 8
        %s280 = scalar_lea.vmem %s0, %s279
        %s281 = smul.u32 2, %s21
        %v282 = vld [vmem:[%s280] sm:$0xff]
        %v283 = vld [vmem:[%s280 + $0x8] sm:$0xff]
        %v284 = vld [vmem:[%s280 + $0x10] sm:$0xff]
        %v285 = vld [vmem:[%s280 + $0x18] sm:$0xff]
        %v286 = vld [vmem:[%s280 + $0x20] sm:$0xff]
        %v287 = vld [vmem:[%s280 + $0x28] sm:$0xff]
        %v288 = vld [vmem:[%s280 + $0x30] sm:$0xf]
        %v289 = vld [vmem:[%s280 + $0x38] sm:$0xf]
        %v290 = vld [vmem:[%s280 + $0xc0] sm:$0xff]
        %v291 = vld [vmem:[%s280 + $0xc8] sm:$0xff]
        %v292 = vld [vmem:[%s280 + $0xd0] sm:$0xff]
        %v293 = vld [vmem:[%s280 + $0xd8] sm:$0xff]
        %v294 = vld [vmem:[%s280 + $0xe0] sm:$0xff]
        %v295 = vld [vmem:[%s280 + $0xe8] sm:$0xff]
        %v296 = vld [vmem:[%s280 + $0xf0] sm:$0xf]
        %v297 = vld [vmem:[%s280 + $0xf8] sm:$0xf]
        %v298 = vld [vmem:[%s1] ss:$8 sm:$0x3]
        %v300 = vlaneseq
        %v301 = vshrl.u32 %v300, 7
        %v302 = vsub.s32 0, %v301
        %v303 = vrot.slane %v298, %v302
        %v304 = vlaneseq
        %v305 = vshrl.u32 %v304, 7
        %v306 = vsub.s32 1, %v305
        %v307 = vrot.slane %v298, %v306
        %v310 = vmul.f32 %v282, %v303
        %v311 = vmul.f32 %v283, %v307
        %v312 = vmul.f32 %v284, %v303
        %v313 = vmul.f32 %v285, %v307
        %v314 = vmul.f32 %v286, %v303
        %v315 = vmul.f32 %v287, %v307
        %v316 = vmul.f32 %v288, %v303
        %v317 = vmul.f32 %v289, %v307
        %v318 = vmul.f32 %v290, %v303
        %v319 = vmul.f32 %v291, %v307
        %v320 = vmul.f32 %v292, %v303
        %v321 = vmul.f32 %v293, %v307
        %v322 = vmul.f32 %v294, %v303
        %v323 = vmul.f32 %v295, %v307
        %v324 = vmul.f32 %v296, %v303
        %v325 = vmul.f32 %v297, %v307
        %v326 = vadd.f32 %v310, 0.0
        %v327 = vadd.f32 %v311, 0.0
        %v328 = vadd.f32 %v312, 0.0
        %v329 = vadd.f32 %v313, 0.0
        %v330 = vadd.f32 %v314, 0.0
        %v331 = vadd.f32 %v315, 0.0
        %v332 = vadd.f32 %v316, 0.0
        %v333 = vadd.f32 %v317, 0.0
        %v334 = vadd.f32 %v318, 0.0
        %v335 = vadd.f32 %v319, 0.0
        %v336 = vadd.f32 %v320, 0.0
        %v337 = vadd.f32 %v321, 0.0
        %v338 = vadd.f32 %v322, 0.0
        %v339 = vadd.f32 %v323, 0.0
        %v340 = vadd.f32 %v324, 0.0
        %v341 = vadd.f32 %v325, 0.0
        %s342 = scalar_lea.vmem %s280, 64
        %v343 = vld [vmem:[%s342] sm:$0xff]
        %v344 = vld [vmem:[%s342 + $0x8] sm:$0xff]
        %v345 = vld [vmem:[%s342 + $0x10] sm:$0xff]
        %v346 = vld [vmem:[%s342 + $0x18] sm:$0xff]
        %v347 = vld [vmem:[%s342 + $0x20] sm:$0xff]
        %v348 = vld [vmem:[%s342 + $0x28] sm:$0xff]
        %v349 = vld [vmem:[%s342 + $0x30] sm:$0xf]
        %v350 = vld [vmem:[%s342 + $0x38] sm:$0xf]
        %v351 = vld [vmem:[%s342 + $0xc0] sm:$0xff]
        %v352 = vld [vmem:[%s342 + $0xc8] sm:$0xff]
        %v353 = vld [vmem:[%s342 + $0xd0] sm:$0xff]
        %v354 = vld [vmem:[%s342 + $0xd8] sm:$0xff]
        %v355 = vld [vmem:[%s342 + $0xe0] sm:$0xff]
        %v356 = vld [vmem:[%s342 + $0xe8] sm:$0xff]
        %v357 = vld [vmem:[%s342 + $0xf0] sm:$0xf]
        %v358 = vld [vmem:[%s342 + $0xf8] sm:$0xf]
        %s359 = scalar_lea.vmem %s1, 1
        %v360 = vld [vmem:[%s359] ss:$8 sm:$0x3]
        %v362 = vlaneseq
        %v363 = vshrl.u32 %v362, 7
        %v364 = vsub.s32 0, %v363
        %v365 = vrot.slane %v360, %v364
        %v366 = vlaneseq
        %v367 = vshrl.u32 %v366, 7
        %v368 = vsub.s32 1, %v367
        %v369 = vrot.slane %v360, %v368
        %v372 = vmul.f32 %v343, %v365
        %v373 = vmul.f32 %v344, %v369
        %v374 = vmul.f32 %v345, %v365
        %v375 = vmul.f32 %v346, %v369
        %v376 = vmul.f32 %v347, %v365
        %v377 = vmul.f32 %v348, %v369
        %v378 = vmul.f32 %v349, %v365
        %v379 = vmul.f32 %v350, %v369
        %v380 = vmul.f32 %v351, %v365
        %v381 = vmul.f32 %v352, %v369
        %v382 = vmul.f32 %v353, %v365
        %v383 = vmul.f32 %v354, %v369
        %v384 = vmul.f32 %v355, %v365
        %v385 = vmul.f32 %v356, %v369
        %v386 = vmul.f32 %v357, %v365
        %v387 = vmul.f32 %v358, %v369
        %v388 = vadd.f32 %v326, %v372
        %v389 = vadd.f32 %v327, %v373
        %v390 = vadd.f32 %v328, %v374
        %v391 = vadd.f32 %v329, %v375
        %v392 = vadd.f32 %v330, %v376
        %v393 = vadd.f32 %v331, %v377
        %v394 = vadd.f32 %v332, %v378
        %v395 = vadd.f32 %v333, %v379
        %v396 = vadd.f32 %v334, %v380
        %v397 = vadd.f32 %v335, %v381
        %v398 = vadd.f32 %v336, %v382
        %v399 = vadd.f32 %v337, %v383
        %v400 = vadd.f32 %v338, %v384
        %v401 = vadd.f32 %v339, %v385
        %v402 = vadd.f32 %v340, %v386
        %v403 = vadd.f32 %v341, %v387
        %s404 = scalar_lea.vmem %s280, 128
        %v405 = vld [vmem:[%s404] sm:$0xff]
        %v406 = vld [vmem:[%s404 + $0x8] sm:$0xff]
        %v407 = vld [vmem:[%s404 + $0x10] sm:$0xff]
        %v408 = vld [vmem:[%s404 + $0x18] sm:$0xff]
        %v409 = vld [vmem:[%s404 + $0x20] sm:$0xff]
        %v410 = vld [vmem:[%s404 + $0x28] sm:$0xff]
        %v411 = vld [vmem:[%s404 + $0x30] sm:$0xf]
        %v412 = vld [vmem:[%s404 + $0x38] sm:$0xf]
        %v413 = vld [vmem:[%s404 + $0xc0] sm:$0xff]
        %v414 = vld [vmem:[%s404 + $0xc8] sm:$0xff]
        %v415 = vld [vmem:[%s404 + $0xd0] sm:$0xff]
        %v416 = vld [vmem:[%s404 + $0xd8] sm:$0xff]
        %v417 = vld [vmem:[%s404 + $0xe0] sm:$0xff]
        %v418 = vld [vmem:[%s404 + $0xe8] sm:$0xff]
        %v419 = vld [vmem:[%s404 + $0xf0] sm:$0xf]
        %v420 = vld [vmem:[%s404 + $0xf8] sm:$0xf]
        %s421 = scalar_lea.vmem %s1, 2
        %v422 = vld [vmem:[%s421] ss:$8 sm:$0x3]
        %v424 = vlaneseq
        %v425 = vshrl.u32 %v424, 7
        %v426 = vsub.s32 0, %v425
        %v427 = vrot.slane %v422, %v426
        %v428 = vlaneseq
        %v429 = vshrl.u32 %v428, 7
        %v430 = vsub.s32 1, %v429
        %v431 = vrot.slane %v422, %v430
        %v434 = vmul.f32 %v405, %v427
        %v435 = vmul.f32 %v406, %v431
        %v436 = vmul.f32 %v407, %v427
        %v437 = vmul.f32 %v408, %v431
        %v438 = vmul.f32 %v409, %v427
        %v439 = vmul.f32 %v410, %v431
        %v440 = vmul.f32 %v411, %v427
        %v441 = vmul.f32 %v412, %v431
        %v442 = vmul.f32 %v413, %v427
        %v443 = vmul.f32 %v414, %v431
        %v444 = vmul.f32 %v415, %v427
        %v445 = vmul.f32 %v416, %v431
        %v446 = vmul.f32 %v417, %v427
        %v447 = vmul.f32 %v418, %v431
        %v448 = vmul.f32 %v419, %v427
        %v449 = vmul.f32 %v420, %v431
        %v450 = vadd.f32 %v388, %v434
        %v451 = vadd.f32 %v389, %v435
        %v452 = vadd.f32 %v390, %v436
        %v453 = vadd.f32 %v391, %v437
        %v454 = vadd.f32 %v392, %v438
        %v455 = vadd.f32 %v393, %v439
        %v456 = vadd.f32 %v394, %v440
        %v457 = vadd.f32 %v395, %v441
        %v458 = vadd.f32 %v396, %v442
        %v459 = vadd.f32 %v397, %v443
        %v460 = vadd.f32 %v398, %v444
        %v461 = vadd.f32 %v399, %v445
        %v462 = vadd.f32 %v400, %v446
        %v463 = vadd.f32 %v401, %v447
        %v464 = vadd.f32 %v402, %v448
        %v465 = vadd.f32 %v403, %v449
        %v466 = vld [vmem:[%s280] sm:$0xfe]
        %v467 = vld [vmem:[%s280 + $0x8] sm:$0xfe]
        %v468 = vld [vmem:[%s280 + $0x30] sm:$0x1f]
        %v469 = vld [vmem:[%s280 + $0x38] sm:$0x1f]
        %v470 = vld [vmem:[%s280 + $0xc0] sm:$0xfe]
        %v471 = vld [vmem:[%s280 + $0xc8] sm:$0xfe]
        %v472 = vld [vmem:[%s280 + $0xf0] sm:$0x1f]
        %v473 = vld [vmem:[%s280 + $0xf8] sm:$0x1f]
        %s474 = scalar_lea.vmem %s1, 3
        %v475 = vld [vmem:[%s474] ss:$8 sm:$0x3]
        %v477 = vlaneseq
        %v478 = vshrl.u32 %v477, 7
        %v479 = vsub.s32 0, %v478
        %v480 = vrot.slane %v475, %v479
        %v481 = vlaneseq
        %v482 = vshrl.u32 %v481, 7
        %v483 = vsub.s32 1, %v482
        %v484 = vrot.slane %v475, %v483
        %v487 = vmul.f32 %v466, %v480
        %v488 = vmul.f32 %v467, %v484
        %v489 = vmul.f32 %v284, %v480
        %v490 = vmul.f32 %v285, %v484
        %v491 = vmul.f32 %v286, %v480
        %v492 = vmul.f32 %v287, %v484
        %v493 = vmul.f32 %v468, %v480
        %v494 = vmul.f32 %v469, %v484
        %v495 = vmul.f32 %v470, %v480
        %v496 = vmul.f32 %v471, %v484
        %v497 = vmul.f32 %v292, %v480
        %v498 = vmul.f32 %v293, %v484
        %v499 = vmul.f32 %v294, %v480
        %v500 = vmul.f32 %v295, %v484
        %v501 = vmul.f32 %v472, %v480
        %v502 = vmul.f32 %v473, %v484
        %vm519 = vcmask 1046528
        %v520 = vrot.slane %v487, 1
        %v521 = vrot.slane %v489, 1
        %v522 = vsel %vm519, %v520, %v521
        %v523 = vrot.slane %v488, 1
        %v524 = vrot.slane %v490, 1
        %v525 = vsel %vm519, %v523, %v524
        %v526 = vrot.slane %v491, 1
        %v527 = vsel %vm519, %v521, %v526
        %v528 = vrot.slane %v492, 1
        %v529 = vsel %vm519, %v524, %v528
        %v530 = vrot.slane %v493, 1
        %v531 = vsel %vm519, %v526, %v530
        %v532 = vrot.slane %v494, 1
        %v533 = vsel %vm519, %v528, %v532
        %v534 = vrot.slane %v495, 1
        %v535 = vrot.slane %v497, 1
        %v536 = vsel %vm519, %v534, %v535
        %v537 = vrot.slane %v496, 1
        %v538 = vrot.slane %v498, 1
        %v539 = vsel %vm519, %v537, %v538
        %v540 = vrot.slane %v499, 1
        %v541 = vsel %vm519, %v535, %v540
        %v542 = vrot.slane %v500, 1
        %v543 = vsel %vm519, %v538, %v542
        %v544 = vrot.slane %v501, 1
        %v545 = vsel %vm519, %v540, %v544
        %v546 = vrot.slane %v502, 1
        %v547 = vsel %vm519, %v542, %v546
        %v564 = vadd.f32 %v450, %v522
        %v565 = vadd.f32 %v451, %v525
        %v566 = vadd.f32 %v452, %v527
        %v567 = vadd.f32 %v453, %v529
        %v568 = vadd.f32 %v454, %v531
        %v569 = vadd.f32 %v455, %v533
        %v570 = vadd.f32 %v456, %v530
        %v571 = vadd.f32 %v457, %v532
        %v572 = vadd.f32 %v458, %v536
        %v573 = vadd.f32 %v459, %v539
        %v574 = vadd.f32 %v460, %v541
        %v575 = vadd.f32 %v461, %v543
        %v576 = vadd.f32 %v462, %v545
        %v577 = vadd.f32 %v463, %v547
        %v578 = vadd.f32 %v464, %v544
        %v579 = vadd.f32 %v465, %v546
        %v580 = vld [vmem:[%s342] sm:$0xfe]
        %v581 = vld [vmem:[%s342 + $0x8] sm:$0xfe]
        %v582 = vld [vmem:[%s342 + $0x30] sm:$0x1f]
        %v583 = vld [vmem:[%s342 + $0x38] sm:$0x1f]
        %v584 = vld [vmem:[%s342 + $0xc0] sm:$0xfe]
        %v585 = vld [vmem:[%s342 + $0xc8] sm:$0xfe]
        %v586 = vld [vmem:[%s342 + $0xf0] sm:$0x1f]
        %v587 = vld [vmem:[%s342 + $0xf8] sm:$0x1f]
        %s588 = scalar_lea.vmem %s1, 4
        %v589 = vld [vmem:[%s588] ss:$8 sm:$0x3]
        %v591 = vlaneseq
        %v592 = vshrl.u32 %v591, 7
        %v593 = vsub.s32 0, %v592
        %v594 = vrot.slane %v589, %v593
        %v595 = vlaneseq
        %v596 = vshrl.u32 %v595, 7
        %v597 = vsub.s32 1, %v596
        %v598 = vrot.slane %v589, %v597
        %v601 = vmul.f32 %v580, %v594
        %v602 = vmul.f32 %v581, %v598
        %v603 = vmul.f32 %v345, %v594
        %v604 = vmul.f32 %v346, %v598
        %v605 = vmul.f32 %v347, %v594
        %v606 = vmul.f32 %v348, %v598
        %v607 = vmul.f32 %v582, %v594
        %v608 = vmul.f32 %v583, %v598
        %v609 = vmul.f32 %v584, %v594
        %v610 = vmul.f32 %v585, %v598
        %v611 = vmul.f32 %v353, %v594
        %v612 = vmul.f32 %v354, %v598
        %v613 = vmul.f32 %v355, %v594
        %v614 = vmul.f32 %v356, %v598
        %v615 = vmul.f32 %v586, %v594
        %v616 = vmul.f32 %v587, %v598
        %v633 = vrot.slane %v601, 1
        %v634 = vrot.slane %v603, 1
        %v635 = vsel %vm519, %v633, %v634
        %v636 = vrot.slane %v602, 1
        %v637 = vrot.slane %v604, 1
        %v638 = vsel %vm519, %v636, %v637
        %v639 = vrot.slane %v605, 1
        %v640 = vsel %vm519, %v634, %v639
        %v641 = vrot.slane %v606, 1
        %v642 = vsel %vm519, %v637, %v641
        %v643 = vrot.slane %v607, 1
        %v644 = vsel %vm519, %v639, %v643
        %v645 = vrot.slane %v608, 1
        %v646 = vsel %vm519, %v641, %v645
        %v647 = vrot.slane %v609, 1
        %v648 = vrot.slane %v611, 1
        %v649 = vsel %vm519, %v647, %v648
        %v650 = vrot.slane %v610, 1
        %v651 = vrot.slane %v612, 1
        %v652 = vsel %vm519, %v650, %v651
        %v653 = vrot.slane %v613, 1
        %v654 = vsel %vm519, %v648, %v653
        %v655 = vrot.slane %v614, 1
        %v656 = vsel %vm519, %v651, %v655
        %v657 = vrot.slane %v615, 1
        %v658 = vsel %vm519, %v653, %v657
        %v659 = vrot.slane %v616, 1
        %v660 = vsel %vm519, %v655, %v659
        %v677 = vadd.f32 %v564, %v635
        %v678 = vadd.f32 %v565, %v638
        %v679 = vadd.f32 %v566, %v640
        %v680 = vadd.f32 %v567, %v642
        %v681 = vadd.f32 %v568, %v644
        %v682 = vadd.f32 %v569, %v646
        %v683 = vadd.f32 %v570, %v643
        %v684 = vadd.f32 %v571, %v645
        %v685 = vadd.f32 %v572, %v649
        %v686 = vadd.f32 %v573, %v652
        %v687 = vadd.f32 %v574, %v654
        %v688 = vadd.f32 %v575, %v656
        %v689 = vadd.f32 %v576, %v658
        %v690 = vadd.f32 %v577, %v660
        %v691 = vadd.f32 %v578, %v657
        %v692 = vadd.f32 %v579, %v659
        %v693 = vld [vmem:[%s404] sm:$0xfe]
        %v694 = vld [vmem:[%s404 + $0x8] sm:$0xfe]
        %v695 = vld [vmem:[%s404 + $0x30] sm:$0x1f]
        %v696 = vld [vmem:[%s404 + $0x38] sm:$0x1f]
        %v697 = vld [vmem:[%s404 + $0xc0] sm:$0xfe]
        %v698 = vld [vmem:[%s404 + $0xc8] sm:$0xfe]
        %v699 = vld [vmem:[%s404 + $0xf0] sm:$0x1f]
        %v700 = vld [vmem:[%s404 + $0xf8] sm:$0x1f]
        %s701 = scalar_lea.vmem %s1, 5
        %v702 = vld [vmem:[%s701] ss:$8 sm:$0x3]
        %v704 = vlaneseq
        %v705 = vshrl.u32 %v704, 7
        %v706 = vsub.s32 0, %v705
        %v707 = vrot.slane %v702, %v706
        %v708 = vlaneseq
        %v709 = vshrl.u32 %v708, 7
        %v710 = vsub.s32 1, %v709
        %v711 = vrot.slane %v702, %v710
        %v714 = vmul.f32 %v693, %v707
        %v715 = vmul.f32 %v694, %v711
        %v716 = vmul.f32 %v407, %v707
        %v717 = vmul.f32 %v408, %v711
        %v718 = vmul.f32 %v409, %v707
        %v719 = vmul.f32 %v410, %v711
        %v720 = vmul.f32 %v695, %v707
        %v721 = vmul.f32 %v696, %v711
        %v722 = vmul.f32 %v697, %v707
        %v723 = vmul.f32 %v698, %v711
        %v724 = vmul.f32 %v415, %v707
        %v725 = vmul.f32 %v416, %v711
        %v726 = vmul.f32 %v417, %v707
        %v727 = vmul.f32 %v418, %v711
        %v728 = vmul.f32 %v699, %v707
        %v729 = vmul.f32 %v700, %v711
        %v746 = vrot.slane %v714, 1
        %v747 = vrot.slane %v716, 1
        %v748 = vsel %vm519, %v746, %v747
        %v749 = vrot.slane %v715, 1
        %v750 = vrot.slane %v717, 1
        %v751 = vsel %vm519, %v749, %v750
        %v752 = vrot.slane %v718, 1
        %v753 = vsel %vm519, %v747, %v752
        %v754 = vrot.slane %v719, 1
        %v755 = vsel %vm519, %v750, %v754
        %v756 = vrot.slane %v720, 1
        %v757 = vsel %vm519, %v752, %v756
        %v758 = vrot.slane %v721, 1
        %v759 = vsel %vm519, %v754, %v758
        %v760 = vrot.slane %v722, 1
        %v761 = vrot.slane %v724, 1
        %v762 = vsel %vm519, %v760, %v761
        %v763 = vrot.slane %v723, 1
        %v764 = vrot.slane %v725, 1
        %v765 = vsel %vm519, %v763, %v764
        %v766 = vrot.slane %v726, 1
        %v767 = vsel %vm519, %v761, %v766
        %v768 = vrot.slane %v727, 1
        %v769 = vsel %vm519, %v764, %v768
        %v770 = vrot.slane %v728, 1
        %v771 = vsel %vm519, %v766, %v770
        %v772 = vrot.slane %v729, 1
        %v773 = vsel %vm519, %v768, %v772
        %v790 = vadd.f32 %v677, %v748
        %v791 = vadd.f32 %v678, %v751
        %v792 = vadd.f32 %v679, %v753
        %v793 = vadd.f32 %v680, %v755
        %v794 = vadd.f32 %v681, %v757
        %v795 = vadd.f32 %v682, %v759
        %v796 = vadd.f32 %v683, %v756
        %v797 = vadd.f32 %v684, %v758
        %v798 = vadd.f32 %v685, %v762
        %v799 = vadd.f32 %v686, %v765
        %v800 = vadd.f32 %v687, %v767
        %v801 = vadd.f32 %v688, %v769
        %v802 = vadd.f32 %v689, %v771
        %v803 = vadd.f32 %v690, %v773
        %v804 = vadd.f32 %v691, %v770
        %v805 = vadd.f32 %v692, %v772
        %v806 = vld [vmem:[%s280] sm:$0xfc]
        %v807 = vld [vmem:[%s280 + $0x8] sm:$0xfc]
        %v808 = vld [vmem:[%s280 + $0x30] sm:$0x3f]
        %v809 = vld [vmem:[%s280 + $0x38] sm:$0x3f]
        %v810 = vld [vmem:[%s280 + $0xc0] sm:$0xfc]
        %v811 = vld [vmem:[%s280 + $0xc8] sm:$0xfc]
        %v812 = vld [vmem:[%s280 + $0xf0] sm:$0x3f]
        %v813 = vld [vmem:[%s280 + $0xf8] sm:$0x3f]
        %s814 = scalar_lea.vmem %s1, 6
        %v815 = vld [vmem:[%s814] ss:$8 sm:$0x3]
        %v817 = vlaneseq
        %v818 = vshrl.u32 %v817, 7
        %v819 = vsub.s32 0, %v818
        %v820 = vrot.slane %v815, %v819
        %v821 = vlaneseq
        %v822 = vshrl.u32 %v821, 7
        %v823 = vsub.s32 1, %v822
        %v824 = vrot.slane %v815, %v823
        %v827 = vmul.f32 %v806, %v820
        %v828 = vmul.f32 %v807, %v824
        %v829 = vmul.f32 %v284, %v820
        %v830 = vmul.f32 %v285, %v824
        %v831 = vmul.f32 %v286, %v820
        %v832 = vmul.f32 %v287, %v824
        %v833 = vmul.f32 %v808, %v820
        %v834 = vmul.f32 %v809, %v824
        %v835 = vmul.f32 %v810, %v820
        %v836 = vmul.f32 %v811, %v824
        %v837 = vmul.f32 %v292, %v820
        %v838 = vmul.f32 %v293, %v824
        %v839 = vmul.f32 %v294, %v820
        %v840 = vmul.f32 %v295, %v824
        %v841 = vmul.f32 %v812, %v820
        %v842 = vmul.f32 %v813, %v824
        %vm859 = vcmask 1045504
        %v860 = vrot.slane %v827, 2
        %v861 = vrot.slane %v829, 2
        %v862 = vsel %vm859, %v860, %v861
        %v863 = vrot.slane %v828, 2
        %v864 = vrot.slane %v830, 2
        %v865 = vsel %vm859, %v863, %v864
        %v866 = vrot.slane %v831, 2
        %v867 = vsel %vm859, %v861, %v866
        %v868 = vrot.slane %v832, 2
        %v869 = vsel %vm859, %v864, %v868
        %v870 = vrot.slane %v833, 2
        %v871 = vsel %vm859, %v866, %v870
        %v872 = vrot.slane %v834, 2
        %v873 = vsel %vm859, %v868, %v872
        %v874 = vrot.slane %v835, 2
        %v875 = vrot.slane %v837, 2
        %v876 = vsel %vm859, %v874, %v875
        %v877 = vrot.slane %v836, 2
        %v878 = vrot.slane %v838, 2
        %v879 = vsel %vm859, %v877, %v878
        %v880 = vrot.slane %v839, 2
        %v881 = vsel %vm859, %v875, %v880
        %v882 = vrot.slane %v840, 2
        %v883 = vsel %vm859, %v878, %v882
        %v884 = vrot.slane %v841, 2
        %v885 = vsel %vm859, %v880, %v884
        %v886 = vrot.slane %v842, 2
        %v887 = vsel %vm859, %v882, %v886
        %v904 = vadd.f32 %v790, %v862
        %v905 = vadd.f32 %v791, %v865
        %v906 = vadd.f32 %v792, %v867
        %v907 = vadd.f32 %v793, %v869
        %v908 = vadd.f32 %v794, %v871
        %v909 = vadd.f32 %v795, %v873
        %v910 = vadd.f32 %v796, %v870
        %v911 = vadd.f32 %v797, %v872
        %v912 = vadd.f32 %v798, %v876
        %v913 = vadd.f32 %v799, %v879
        %v914 = vadd.f32 %v800, %v881
        %v915 = vadd.f32 %v801, %v883
        %v916 = vadd.f32 %v802, %v885
        %v917 = vadd.f32 %v803, %v887
        %v918 = vadd.f32 %v804, %v884
        %v919 = vadd.f32 %v805, %v886
        %v920 = vld [vmem:[%s342] sm:$0xfc]
        %v921 = vld [vmem:[%s342 + $0x8] sm:$0xfc]
        %v922 = vld [vmem:[%s342 + $0x30] sm:$0x3f]
        %v923 = vld [vmem:[%s342 + $0x38] sm:$0x3f]
        %v924 = vld [vmem:[%s342 + $0xc0] sm:$0xfc]
        %v925 = vld [vmem:[%s342 + $0xc8] sm:$0xfc]
        %v926 = vld [vmem:[%s342 + $0xf0] sm:$0x3f]
        %v927 = vld [vmem:[%s342 + $0xf8] sm:$0x3f]
        %s928 = scalar_lea.vmem %s1, 7
        %v929 = vld [vmem:[%s928] ss:$8 sm:$0x3]
        %v931 = vlaneseq
        %v932 = vshrl.u32 %v931, 7
        %v933 = vsub.s32 0, %v932
        %v934 = vrot.slane %v929, %v933
        %v935 = vlaneseq
        %v936 = vshrl.u32 %v935, 7
        %v937 = vsub.s32 1, %v936
        %v938 = vrot.slane %v929, %v937
        %v941 = vmul.f32 %v920, %v934
        %v942 = vmul.f32 %v921, %v938
        %v943 = vmul.f32 %v345, %v934
        %v944 = vmul.f32 %v346, %v938
        %v945 = vmul.f32 %v347, %v934
        %v946 = vmul.f32 %v348, %v938
        %v947 = vmul.f32 %v922, %v934
        %v948 = vmul.f32 %v923, %v938
        %v949 = vmul.f32 %v924, %v934
        %v950 = vmul.f32 %v925, %v938
        %v951 = vmul.f32 %v353, %v934
        %v952 = vmul.f32 %v354, %v938
        %v953 = vmul.f32 %v355, %v934
        %v954 = vmul.f32 %v356, %v938
        %v955 = vmul.f32 %v926, %v934
        %v956 = vmul.f32 %v927, %v938
        %v973 = vrot.slane %v941, 2
        %v974 = vrot.slane %v943, 2
        %v975 = vsel %vm859, %v973, %v974
        %v976 = vrot.slane %v942, 2
        %v977 = vrot.slane %v944, 2
        %v978 = vsel %vm859, %v976, %v977
        %v979 = vrot.slane %v945, 2
        %v980 = vsel %vm859, %v974, %v979
        %v981 = vrot.slane %v946, 2
        %v982 = vsel %vm859, %v977, %v981
        %v983 = vrot.slane %v947, 2
        %v984 = vsel %vm859, %v979, %v983
        %v985 = vrot.slane %v948, 2
        %v986 = vsel %vm859, %v981, %v985
        %v987 = vrot.slane %v949, 2
        %v988 = vrot.slane %v951, 2
        %v989 = vsel %vm859, %v987, %v988
        %v990 = vrot.slane %v950, 2
        %v991 = vrot.slane %v952, 2
        %v992 = vsel %vm859, %v990, %v991
        %v993 = vrot.slane %v953, 2
        %v994 = vsel %vm859, %v988, %v993
        %v995 = vrot.slane %v954, 2
        %v996 = vsel %vm859, %v991, %v995
        %v997 = vrot.slane %v955, 2
        %v998 = vsel %vm859, %v993, %v997
        %v999 = vrot.slane %v956, 2
        %v1000 = vsel %vm859, %v995, %v999
        %v1017 = vadd.f32 %v904, %v975
        %v1018 = vadd.f32 %v905, %v978
        %v1019 = vadd.f32 %v906, %v980
        %v1020 = vadd.f32 %v907, %v982
        %v1021 = vadd.f32 %v908, %v984
        %v1022 = vadd.f32 %v909, %v986
        %v1023 = vadd.f32 %v910, %v983
        %v1024 = vadd.f32 %v911, %v985
        %v1025 = vadd.f32 %v912, %v989
        %v1026 = vadd.f32 %v913, %v992
        %v1027 = vadd.f32 %v914, %v994
        %v1028 = vadd.f32 %v915, %v996
        %v1029 = vadd.f32 %v916, %v998
        %v1030 = vadd.f32 %v917, %v1000
        %v1031 = vadd.f32 %v918, %v997
        %v1032 = vadd.f32 %v919, %v999
        %v1033 = vld [vmem:[%s404] sm:$0xfc]
        %v1034 = vld [vmem:[%s404 + $0x8] sm:$0xfc]
        %v1035 = vld [vmem:[%s404 + $0x30] sm:$0x3f]
        %v1036 = vld [vmem:[%s404 + $0x38] sm:$0x3f]
        %v1037 = vld [vmem:[%s404 + $0xc0] sm:$0xfc]
        %v1038 = vld [vmem:[%s404 + $0xc8] sm:$0xfc]
        %v1039 = vld [vmem:[%s404 + $0xf0] sm:$0x3f]
        %v1040 = vld [vmem:[%s404 + $0xf8] sm:$0x3f]
        %s1041 = scalar_lea.vmem %s1, 16
        %v1042 = vld [vmem:[%s1041] ss:$8 sm:$0x3]
        %v1044 = vlaneseq
        %v1045 = vshrl.u32 %v1044, 7
        %v1046 = vsub.s32 0, %v1045
        %v1047 = vrot.slane %v1042, %v1046
        %v1048 = vlaneseq
        %v1049 = vshrl.u32 %v1048, 7
        %v1050 = vsub.s32 1, %v1049
        %v1051 = vrot.slane %v1042, %v1050
        %v1054 = vmul.f32 %v1033, %v1047
        %v1055 = vmul.f32 %v1034, %v1051
        %v1056 = vmul.f32 %v407, %v1047
        %v1057 = vmul.f32 %v408, %v1051
        %v1058 = vmul.f32 %v409, %v1047
        %v1059 = vmul.f32 %v410, %v1051
        %v1060 = vmul.f32 %v1035, %v1047
        %v1061 = vmul.f32 %v1036, %v1051
        %v1062 = vmul.f32 %v1037, %v1047
        %v1063 = vmul.f32 %v1038, %v1051
        %v1064 = vmul.f32 %v415, %v1047
        %v1065 = vmul.f32 %v416, %v1051
        %v1066 = vmul.f32 %v417, %v1047
        %v1067 = vmul.f32 %v418, %v1051
        %v1068 = vmul.f32 %v1039, %v1047
        %v1069 = vmul.f32 %v1040, %v1051
        %v1086 = vrot.slane %v1054, 2
        %v1087 = vrot.slane %v1056, 2
        %v1088 = vsel %vm859, %v1086, %v1087
        %v1089 = vrot.slane %v1055, 2
        %v1090 = vrot.slane %v1057, 2
        %v1091 = vsel %vm859, %v1089, %v1090
        %v1092 = vrot.slane %v1058, 2
        %v1093 = vsel %vm859, %v1087, %v1092
        %v1094 = vrot.slane %v1059, 2
        %v1095 = vsel %vm859, %v1090, %v1094
        %v1096 = vrot.slane %v1060, 2
        %v1097 = vsel %vm859, %v1092, %v1096
        %v1098 = vrot.slane %v1061, 2
        %v1099 = vsel %vm859, %v1094, %v1098
        %v1100 = vrot.slane %v1062, 2
        %v1101 = vrot.slane %v1064, 2
        %v1102 = vsel %vm859, %v1100, %v1101
        %v1103 = vrot.slane %v1063, 2
        %v1104 = vrot.slane %v1065, 2
        %v1105 = vsel %vm859, %v1103, %v1104
        %v1106 = vrot.slane %v1066, 2
        %v1107 = vsel %vm859, %v1101, %v1106
        %v1108 = vrot.slane %v1067, 2
        %v1109 = vsel %vm859, %v1104, %v1108
        %v1110 = vrot.slane %v1068, 2
        %v1111 = vsel %vm859, %v1106, %v1110
        %v1112 = vrot.slane %v1069, 2
        %v1113 = vsel %vm859, %v1108, %v1112
        %v1130 = vadd.f32 %v1017, %v1088
        %v1131 = vadd.f32 %v1018, %v1091
        %v1132 = vadd.f32 %v1019, %v1093
        %v1133 = vadd.f32 %v1020, %v1095
        %v1134 = vadd.f32 %v1021, %v1097
        %v1135 = vadd.f32 %v1022, %v1099
        %v1136 = vadd.f32 %v1023, %v1096
        %v1137 = vadd.f32 %v1024, %v1098
        %v1138 = vadd.f32 %v1025, %v1102
        %v1139 = vadd.f32 %v1026, %v1105
        %v1140 = vadd.f32 %v1027, %v1107
        %v1141 = vadd.f32 %v1028, %v1109
        %v1142 = vadd.f32 %v1029, %v1111
        %v1143 = vadd.f32 %v1030, %v1113
        %v1144 = vadd.f32 %v1031, %v1110
        %v1145 = vadd.f32 %v1032, %v1112
        %v1146 = vld [vmem:[%s2] sm:$0x3]
        %v1148 = vlaneseq
        %v1149 = vshrl.u32 %v1148, 7
        %v1150 = vsub.s32 0, %v1149
        %v1151 = vrot.slane %v1146, %v1150
        %v1152 = vlaneseq
        %v1153 = vshrl.u32 %v1152, 7
        %v1154 = vsub.s32 1, %v1153
        %v1155 = vrot.slane %v1146, %v1154
        %v1158 = vadd.f32 %v1130, %v1151
        %v1159 = vadd.f32 %v1131, %v1155
        %v1160 = vadd.f32 %v1132, %v1151
        %v1161 = vadd.f32 %v1133, %v1155
        %v1162 = vadd.f32 %v1134, %v1151
        %v1163 = vadd.f32 %v1135, %v1155
        %v1164 = vadd.f32 %v1136, %v1151
        %v1165 = vadd.f32 %v1137, %v1155
        %v1166 = vadd.f32 %v1138, %v1151
        %v1167 = vadd.f32 %v1139, %v1155
        %v1168 = vadd.f32 %v1140, %v1151
        %v1169 = vadd.f32 %v1141, %v1155
        %v1170 = vadd.f32 %v1142, %v1151
        %v1171 = vadd.f32 %v1143, %v1155
        %v1172 = vadd.f32 %v1144, %v1151
        %v1173 = vadd.f32 %v1145, %v1155
        %v1174 = vmax.f32 %v1158, 0.0
        %v1175 = vmax.f32 %v1159, 0.0
        %v1176 = vmax.f32 %v1160, 0.0
        %v1177 = vmax.f32 %v1161, 0.0
        %v1178 = vmax.f32 %v1162, 0.0
        %v1179 = vmax.f32 %v1163, 0.0
        %v1180 = vmax.f32 %v1164, 0.0
        %v1181 = vmax.f32 %v1165, 0.0
        %v1182 = vmax.f32 %v1166, 0.0
        %v1183 = vmax.f32 %v1167, 0.0
        %v1184 = vmax.f32 %v1168, 0.0
        %v1185 = vmax.f32 %v1169, 0.0
        %v1186 = vmax.f32 %v1170, 0.0
        %v1187 = vmax.f32 %v1171, 0.0
        %v1188 = vmax.f32 %v1172, 0.0
        %v1189 = vmax.f32 %v1173, 0.0
        %v1206 = vcombine.low %v1174, %v1175
        %v1207 = vcombine.high %v1174, %v1175
        %v1209 = vunpack.c.l.s4 1983009808
        %v1210 = vunpack.c.0.s8 %v1209
        %v1211 = vlaneseq
        %v1212 = vshrl.u32 %v1211, 7
        %v1213 = vsub.s32 %v1210, %v1212
        %v1214 = vrot.slane %v1206, %v1213
        %v1216 = vunpack.c.l.s4 1983009808
        %v1217 = vunpack.c.0.s8 %v1216
        %v1218 = vlaneseq
        %v1219 = vshrl.u32 %v1218, 7
        %v1220 = vsub.s32 %v1217, %v1219
        %v1221 = vrot.slane %v1207, %v1220
        %v1222 = vcombine.high %v1214, %v1214
        %v1223 = vcombine.high %v1221, %v1221
        %v1224 = vcombine.low %v1176, %v1177
        %v1225 = vcombine.high %v1176, %v1177
        %v1227 = vunpack.c.l.s4 1983009808
        %v1228 = vunpack.c.0.s8 %v1227
        %v1229 = vlaneseq
        %v1230 = vshrl.u32 %v1229, 7
        %v1231 = vsub.s32 %v1228, %v1230
        %v1232 = vrot.slane %v1224, %v1231
        %v1234 = vunpack.c.l.s4 1983009808
        %v1235 = vunpack.c.0.s8 %v1234
        %v1236 = vlaneseq
        %v1237 = vshrl.u32 %v1236, 7
        %v1238 = vsub.s32 %v1235, %v1237
        %v1239 = vrot.slane %v1225, %v1238
        %v1240 = vcombine.high %v1232, %v1232
        %v1241 = vcombine.high %v1239, %v1239
        %v1242 = vcombine.low %v1178, %v1179
        %v1243 = vcombine.high %v1178, %v1179
        %v1245 = vunpack.c.l.s4 1983009808
        %v1246 = vunpack.c.0.s8 %v1245
        %v1247 = vlaneseq
        %v1248 = vshrl.u32 %v1247, 7
        %v1249 = vsub.s32 %v1246, %v1248
        %v1250 = vrot.slane %v1242, %v1249
        %v1252 = vunpack.c.l.s4 1983009808
        %v1253 = vunpack.c.0.s8 %v1252
        %v1254 = vlaneseq
        %v1255 = vshrl.u32 %v1254, 7
        %v1256 = vsub.s32 %v1253, %v1255
        %v1257 = vrot.slane %v1243, %v1256
        %v1258 = vcombine.high %v1250, %v1250
        %v1259 = vcombine.high %v1257, %v1257
        %v1260 = vcombine.low %v1180, %v1181
        %v1262 = vunpack.c.l.s4 1983009808
        %v1263 = vunpack.c.0.s8 %v1262
        %v1264 = vlaneseq
        %v1265 = vshrl.u32 %v1264, 7
        %v1266 = vsub.s32 %v1263, %v1265
        %v1267 = vrot.slane %v1260, %v1266
        %v1268 = vcombine.high %v1267, %v1267
        %v1269 = vcombine.low %v1182, %v1183
        %v1270 = vcombine.high %v1182, %v1183
        %v1272 = vunpack.c.l.s4 1983009808
        %v1273 = vunpack.c.0.s8 %v1272
        %v1274 = vlaneseq
        %v1275 = vshrl.u32 %v1274, 7
        %v1276 = vsub.s32 %v1273, %v1275
        %v1277 = vrot.slane %v1269, %v1276
        %v1279 = vunpack.c.l.s4 1983009808
        %v1280 = vunpack.c.0.s8 %v1279
        %v1281 = vlaneseq
        %v1282 = vshrl.u32 %v1281, 7
        %v1283 = vsub.s32 %v1280, %v1282
        %v1284 = vrot.slane %v1270, %v1283
        %v1285 = vcombine.high %v1277, %v1277
        %v1286 = vcombine.high %v1284, %v1284
        %v1287 = vcombine.low %v1184, %v1185
        %v1288 = vcombine.high %v1184, %v1185
        %v1290 = vunpack.c.l.s4 1983009808
        %v1291 = vunpack.c.0.s8 %v1290
        %v1292 = vlaneseq
        %v1293 = vshrl.u32 %v1292, 7
        %v1294 = vsub.s32 %v1291, %v1293
        %v1295 = vrot.slane %v1287, %v1294
        %v1297 = vunpack.c.l.s4 1983009808
        %v1298 = vunpack.c.0.s8 %v1297
        %v1299 = vlaneseq
        %v1300 = vshrl.u32 %v1299, 7
        %v1301 = vsub.s32 %v1298, %v1300
        %v1302 = vrot.slane %v1288, %v1301
        %v1303 = vcombine.high %v1295, %v1295
        %v1304 = vcombine.high %v1302, %v1302
        %v1305 = vcombine.low %v1186, %v1187
        %v1306 = vcombine.high %v1186, %v1187
        %v1308 = vunpack.c.l.s4 1983009808
        %v1309 = vunpack.c.0.s8 %v1308
        %v1310 = vlaneseq
        %v1311 = vshrl.u32 %v1310, 7
        %v1312 = vsub.s32 %v1309, %v1311
        %v1313 = vrot.slane %v1305, %v1312
        %v1315 = vunpack.c.l.s4 1983009808
        %v1316 = vunpack.c.0.s8 %v1315
        %v1317 = vlaneseq
        %v1318 = vshrl.u32 %v1317, 7
        %v1319 = vsub.s32 %v1316, %v1318
        %v1320 = vrot.slane %v1306, %v1319
        %v1321 = vcombine.high %v1313, %v1313
        %v1322 = vcombine.high %v1320, %v1320
        %v1323 = vcombine.low %v1188, %v1189
        %v1325 = vunpack.c.l.s4 1983009808
        %v1326 = vunpack.c.0.s8 %v1325
        %v1327 = vlaneseq
        %v1328 = vshrl.u32 %v1327, 7
        %v1329 = vsub.s32 %v1326, %v1328
        %v1330 = vrot.slane %v1323, %v1329
        %v1331 = vcombine.high %v1330, %v1330
        %v1360 = vrot.slane %v1214, 7
        %v1361 = vrot.slane %v1360, 2
        %v1362 = vrot.slane %v1222, 7
        %v1363 = vrot.slane %v1362, 2
        %v1364 = vrot.slane %v1221, 7
        %v1365 = vrot.slane %v1364, 2
        %v1366 = vrot.slane %v1223, 7
        %v1367 = vrot.slane %v1366, 2
        %v1368 = vrot.slane %v1232, 7
        %v1369 = vrot.slane %v1368, 2
        %v1370 = vrot.slane %v1240, 7
        %v1371 = vrot.slane %v1370, 2
        %v1372 = vrot.slane %v1239, 7
        %v1373 = vrot.slane %v1372, 2
        %v1374 = vrot.slane %v1241, 7
        %v1375 = vrot.slane %v1374, 2
        %v1376 = vrot.slane %v1250, 7
        %v1377 = vrot.slane %v1376, 2
        %v1378 = vrot.slane %v1258, 7
        %v1379 = vrot.slane %v1378, 2
        %v1380 = vrot.slane %v1257, 7
        %v1381 = vrot.slane %v1380, 2
        %v1382 = vrot.slane %v1259, 7
        %v1383 = vrot.slane %v1382, 2
        %v1384 = vrot.slane %v1267, 7
        %v1385 = vrot.slane %v1384, 2
        %v1386 = vrot.slane %v1268, 7
        %v1387 = vrot.slane %v1386, 2
        %v1388 = vrot.slane %v1277, 7
        %v1389 = vrot.slane %v1388, 2
        %v1390 = vrot.slane %v1285, 7
        %v1391 = vrot.slane %v1390, 2
        %v1392 = vrot.slane %v1284, 7
        %v1393 = vrot.slane %v1392, 2
        %v1394 = vrot.slane %v1286, 7
        %v1395 = vrot.slane %v1394, 2
        %v1396 = vrot.slane %v1295, 7
        %v1397 = vrot.slane %v1396, 2
        %v1398 = vrot.slane %v1303, 7
        %v1399 = vrot.slane %v1398, 2
        %v1400 = vrot.slane %v1302, 7
        %v1401 = vrot.slane %v1400, 2
        %v1402 = vrot.slane %v1304, 7
        %v1403 = vrot.slane %v1402, 2
        %v1404 = vrot.slane %v1313, 7
        %v1405 = vrot.slane %v1404, 2
        %v1406 = vrot.slane %v1321, 7
        %v1407 = vrot.slane %v1406, 2
        %v1408 = vrot.slane %v1320, 7
        %v1409 = vrot.slane %v1408, 2
        %v1410 = vrot.slane %v1322, 7
        %v1411 = vrot.slane %v1410, 2
        %v1412 = vrot.slane %v1330, 7
        %v1413 = vrot.slane %v1412, 2
        %v1414 = vrot.slane %v1331, 7
        %v1415 = vrot.slane %v1414, 2
        %v1444 = vmax.f32 %v1214, %v1361
        %v1445 = vmax.f32 %v1222, %v1363
        %v1446 = vmax.f32 %v1221, %v1365
        %v1447 = vmax.f32 %v1223, %v1367
        %v1448 = vmax.f32 %v1232, %v1369
        %v1449 = vmax.f32 %v1240, %v1371
        %v1450 = vmax.f32 %v1239, %v1373
        %v1451 = vmax.f32 %v1241, %v1375
        %v1452 = vmax.f32 %v1250, %v1377
        %v1453 = vmax.f32 %v1258, %v1379
        %v1454 = vmax.f32 %v1257, %v1381
        %v1455 = vmax.f32 %v1259, %v1383
        %v1456 = vmax.f32 %v1267, %v1385
        %v1457 = vmax.f32 %v1268, %v1387
        %v1458 = vmax.f32 %v1277, %v1389
        %v1459 = vmax.f32 %v1285, %v1391
        %v1460 = vmax.f32 %v1284, %v1393
        %v1461 = vmax.f32 %v1286, %v1395
        %v1462 = vmax.f32 %v1295, %v1397
        %v1463 = vmax.f32 %v1303, %v1399
        %v1464 = vmax.f32 %v1302, %v1401
        %v1465 = vmax.f32 %v1304, %v1403
        %v1466 = vmax.f32 %v1313, %v1405
        %v1467 = vmax.f32 %v1321, %v1407
        %v1468 = vmax.f32 %v1320, %v1409
        %v1469 = vmax.f32 %v1322, %v1411
        %v1470 = vmax.f32 %v1330, %v1413
        %v1471 = vmax.f32 %v1331, %v1415
        %vm1472 = vcmask 64512
        %1473 = vst.msk [vmem:[#allocation2] sm:$0xff] %vm1472, 0.0
        %1474 = vst.msk [vmem:[#allocation2 + $0x8] sm:$0xff] %vm1472, 0.0
        %vm1475 = vcmask 58368
        %1476 = vst.msk [vmem:[#allocation2 + $0x10] sm:$0x3] %vm1475, 0.0
        %1477 = vst.msk [vmem:[#allocation2 + $0x18] sm:$0xff] %vm1472, 0.0
        %1478 = vst.msk [vmem:[#allocation2 + $0x20] sm:$0xff] %vm1472, 0.0
        %1479 = vst.msk [vmem:[#allocation2 + $0x28] sm:$0x3] %vm1475, 0.0
        %1480 = vst.msk [vmem:[#allocation2 + $0x30] sm:$0xff] %vm1472, 0.0
        %1481 = vst.msk [vmem:[#allocation2 + $0x38] sm:$0xff] %vm1472, 0.0
        %1482 = vst.msk [vmem:[#allocation2 + $0x40] sm:$0x3] %vm1475, 0.0
        %1483 = vst.msk [vmem:[#allocation2 + $0x48] sm:$0xff] %vm1472, 0.0
        %1484 = vst.msk [vmem:[#allocation2 + $0x50] sm:$0xff] %vm1472, 0.0
        %1485 = vst.msk [vmem:[#allocation2 + $0x58] sm:$0x3] %vm1475, 0.0
        %1486 = vst.msk [vmem:[#allocation2 + $0x60] sm:$0xff] %vm1472, 0.0
        %1487 = vst.msk [vmem:[#allocation2 + $0x68] sm:$0xff] %vm1472, 0.0
        %1488 = vst.msk [vmem:[#allocation2 + $0x70] sm:$0x3] %vm1475, 0.0
        %1489 = vst.msk [vmem:[#allocation2 + $0x78] sm:$0xff] %vm1472, 0.0
        %1490 = vst.msk [vmem:[#allocation2 + $0x80] sm:$0xff] %vm1472, 0.0
        %1491 = vst.msk [vmem:[#allocation2 + $0x88] sm:$0x3] %vm1475, 0.0
        %1492 = vst.msk [vmem:[#allocation2 + $0x90] sm:$0xff] %vm1472, 0.0
        %1493 = vst.msk [vmem:[#allocation2 + $0x98] sm:$0xff] %vm1472, 0.0
        %1494 = vst.msk [vmem:[#allocation2 + $0xa0] sm:$0x3] %vm1475, 0.0
        %1495 = vst.msk [vmem:[#allocation2 + $0xa8] sm:$0xff] %vm1472, 0.0
        %1496 = vst.msk [vmem:[#allocation2 + $0xb0] sm:$0xff] %vm1472, 0.0
        %1497 = vst.msk [vmem:[#allocation2 + $0xb8] sm:$0x3] %vm1475, 0.0
        %1498 = vst.msk [vmem:[#allocation2 + $0xc0] sm:$0xff] %vm1472, 0.0
        %1499 = vst.msk [vmem:[#allocation2 + $0xc8] sm:$0xff] %vm1472, 0.0
        %1500 = vst.msk [vmem:[#allocation2 + $0xd0] sm:$0x3] %vm1475, 0.0
        %1501 = vst.msk [vmem:[#allocation2 + $0xd8] sm:$0xff] %vm1472, 0.0
        %1502 = vst.msk [vmem:[#allocation2 + $0xe0] sm:$0xff] %vm1472, 0.0
        %1503 = vst.msk [vmem:[#allocation2 + $0xe8] sm:$0x3] %vm1475, 0.0
        %1504 = vst.msk [vmem:[#allocation2 + $0xf0] sm:$0xff] %vm1472, 0.0
        %1505 = vst.msk [vmem:[#allocation2 + $0xf8] sm:$0xff] %vm1472, 0.0
        %1506 = vst.msk [vmem:[#allocation2 + $0x100] sm:$0x3] %vm1475, 0.0
        %1507 = vst.msk [vmem:[#allocation2 + $0x108] sm:$0xff] %vm1472, 0.0
        %1508 = vst.msk [vmem:[#allocation2 + $0x110] sm:$0xff] %vm1472, 0.0
        %1509 = vst.msk [vmem:[#allocation2 + $0x118] sm:$0x3] %vm1475, 0.0
        %1510 = vst.msk [vmem:[#allocation2 + $0x120] sm:$0xff] %vm1472, 0.0
        %1511 = vst.msk [vmem:[#allocation2 + $0x128] sm:$0xff] %vm1472, 0.0
        %1512 = vst.msk [vmem:[#allocation2 + $0x130] sm:$0x3] %vm1475, 0.0
        %1513 = vst.msk [vmem:[#allocation2 + $0x138] sm:$0xff] %vm1472, 0.0
        %1514 = vst.msk [vmem:[#allocation2 + $0x140] sm:$0xff] %vm1472, 0.0
        %1515 = vst.msk [vmem:[#allocation2 + $0x148] sm:$0x3] %vm1475, 0.0
        %1516 = vst.msk [vmem:[#allocation2 + $0x150] sm:$0xff] %vm1472, 0.0
        %1517 = vst.msk [vmem:[#allocation2 + $0x158] sm:$0xff] %vm1472, 0.0
        %1518 = vst.msk [vmem:[#allocation2 + $0x160] sm:$0x3] %vm1475, 0.0
        %1519 = vst.msk [vmem:[#allocation2 + $0x168] sm:$0xff] %vm1472, 0.0
        %1520 = vst.msk [vmem:[#allocation2 + $0x170] sm:$0xff] %vm1472, 0.0
        %1521 = vst.msk [vmem:[#allocation2 + $0x178] sm:$0x3] %vm1475, 0.0
        %1522 = vst.msk [vmem:[#allocation2 + $0x180] sm:$0xff] %vm1472, 0.0
        %1523 = vst.msk [vmem:[#allocation2 + $0x188] sm:$0xff] %vm1472, 0.0
        %1524 = vst.msk [vmem:[#allocation2 + $0x190] sm:$0x3] %vm1475, 0.0
        %1525 = vst.msk [vmem:[#allocation2 + $0x198] sm:$0xff] %vm1472, 0.0
        %1526 = vst.msk [vmem:[#allocation2 + $0x1a0] sm:$0xff] %vm1472, 0.0
        %1527 = vst.msk [vmem:[#allocation2 + $0x1a8] sm:$0x3] %vm1475, 0.0
        %1528 = vst.msk [vmem:[#allocation2 + $0x1b0] sm:$0xff] %vm1472, 0.0
        %1529 = vst.msk [vmem:[#allocation2 + $0x1b8] sm:$0xff] %vm1472, 0.0
        %1530 = vst.msk [vmem:[#allocation2 + $0x1c0] sm:$0x3] %vm1475, 0.0
        %1531 = vst.msk [vmem:[#allocation2 + $0x1c8] sm:$0xff] %vm1472, 0.0
        %1532 = vst.msk [vmem:[#allocation2 + $0x1d0] sm:$0xff] %vm1472, 0.0
        %1533 = vst.msk [vmem:[#allocation2 + $0x1d8] sm:$0x3] %vm1475, 0.0
        %1534 = vst.msk [vmem:[#allocation2 + $0x1e0] sm:$0xff] %vm1472, 0.0
        %1535 = vst.msk [vmem:[#allocation2 + $0x1e8] sm:$0xff] %vm1472, 0.0
        %1536 = vst.msk [vmem:[#allocation2 + $0x1f0] sm:$0x3] %vm1475, 0.0
        %1537 = vst.msk [vmem:[#allocation2 + $0x1f8] sm:$0xff] %vm1472, 0.0
        %1538 = vst.msk [vmem:[#allocation2 + $0x200] sm:$0xff] %vm1472, 0.0
        %1539 = vst.msk [vmem:[#allocation2 + $0x208] sm:$0x3] %vm1475, 0.0
        %1540 = vst.msk [vmem:[#allocation2 + $0x210] sm:$0xff] %vm1472, 0.0
        %1541 = vst.msk [vmem:[#allocation2 + $0x218] sm:$0xff] %vm1472, 0.0
        %1542 = vst.msk [vmem:[#allocation2 + $0x220] sm:$0x3] %vm1475, 0.0
        %1543 = vst.msk [vmem:[#allocation2 + $0x228] sm:$0xff] %vm1472, 0.0
        %1544 = vst.msk [vmem:[#allocation2 + $0x230] sm:$0xff] %vm1472, 0.0
        %1545 = vst.msk [vmem:[#allocation2 + $0x238] sm:$0x3] %vm1475, 0.0
        %1546 = vst.msk [vmem:[#allocation2 + $0x240] sm:$0xff] %vm1472, 0.0
        %1547 = vst.msk [vmem:[#allocation2 + $0x248] sm:$0xff] %vm1472, 0.0
        %1548 = vst.msk [vmem:[#allocation2 + $0x250] sm:$0x3] %vm1475, 0.0
        %1549 = vst.msk [vmem:[#allocation2 + $0x258] sm:$0xff] %vm1472, 0.0
        %1550 = vst.msk [vmem:[#allocation2 + $0x260] sm:$0xff] %vm1472, 0.0
        %1551 = vst.msk [vmem:[#allocation2 + $0x268] sm:$0x3] %vm1475, 0.0
        %1552 = vst.msk [vmem:[#allocation2 + $0x270] sm:$0xff] %vm1472, 0.0
        %1553 = vst.msk [vmem:[#allocation2 + $0x278] sm:$0xff] %vm1472, 0.0
        %1554 = vst.msk [vmem:[#allocation2 + $0x280] sm:$0x3] %vm1475, 0.0
        %1555 = vst.msk [vmem:[#allocation2 + $0x288] sm:$0xff] %vm1472, 0.0
        %1556 = vst.msk [vmem:[#allocation2 + $0x290] sm:$0xff] %vm1472, 0.0
        %1557 = vst.msk [vmem:[#allocation2 + $0x298] sm:$0x3] %vm1475, 0.0
        %1558 = vst.msk [vmem:[#allocation2 + $0x2a0] sm:$0xff] %vm1472, 0.0
        %1559 = vst.msk [vmem:[#allocation2 + $0x2a8] sm:$0xff] %vm1472, 0.0
        %1560 = vst.msk [vmem:[#allocation2 + $0x2b0] sm:$0x3] %vm1475, 0.0
        %1561 = vst.msk [vmem:[#allocation2 + $0x2b8] sm:$0xff] %vm1472, 0.0
        %1562 = vst.msk [vmem:[#allocation2 + $0x2c0] sm:$0xff] %vm1472, 0.0
        %1563 = vst.msk [vmem:[#allocation2 + $0x2c8] sm:$0x3] %vm1475, 0.0
        %1564 = vst.msk [vmem:[#allocation2 + $0x2d0] sm:$0xff] %vm1472, 0.0
        %1565 = vst.msk [vmem:[#allocation2 + $0x2d8] sm:$0xff] %vm1472, 0.0
        %1566 = vst.msk [vmem:[#allocation2 + $0x2e0] sm:$0x3] %vm1475, 0.0
        %1567 = vst.msk [vmem:[#allocation2 + $0x2e8] sm:$0xff] %vm1472, 0.0
        %1568 = vst.msk [vmem:[#allocation2 + $0x2f0] sm:$0xff] %vm1472, 0.0
        %1569 = vst.msk [vmem:[#allocation2 + $0x2f8] sm:$0x3] %vm1475, 0.0
        %1598 = vrot.lane.b32.xlu0 %v1444, 120
        %v1599 = vpop.permute.xlu0 %1598
        %1600 = vrot.lane.b32.xlu0 %v1445, 120
        %v1601 = vpop.permute.xlu0 %1600
        %1602 = vrot.lane.b32.xlu0 %v1446, 120
        %v1603 = vpop.permute.xlu0 %1602
        %1604 = vrot.lane.b32.xlu0 %v1447, 120
        %v1605 = vpop.permute.xlu0 %1604
        %1606 = vrot.lane.b32.xlu0 %v1448, 120
        %v1607 = vpop.permute.xlu0 %1606
        %1608 = vrot.lane.b32.xlu0 %v1449, 120
        %v1609 = vpop.permute.xlu0 %1608
        %1610 = vrot.lane.b32.xlu0 %v1450, 120
        %v1611 = vpop.permute.xlu0 %1610
        %1612 = vrot.lane.b32.xlu0 %v1451, 120
        %v1613 = vpop.permute.xlu0 %1612
        %1614 = vrot.lane.b32.xlu0 %v1452, 120
        %v1615 = vpop.permute.xlu0 %1614
        %1616 = vrot.lane.b32.xlu0 %v1453, 120
        %v1617 = vpop.permute.xlu0 %1616
        %1618 = vrot.lane.b32.xlu0 %v1454, 120
        %v1619 = vpop.permute.xlu0 %1618
        %1620 = vrot.lane.b32.xlu0 %v1455, 120
        %v1621 = vpop.permute.xlu0 %1620
        %1622 = vrot.lane.b32.xlu0 %v1456, 120
        %v1623 = vpop.permute.xlu0 %1622
        %1624 = vrot.lane.b32.xlu0 %v1457, 120
        %v1625 = vpop.permute.xlu0 %1624
        %1626 = vrot.lane.b32.xlu0 %v1458, 120
        %v1627 = vpop.permute.xlu0 %1626
        %1628 = vrot.lane.b32.xlu0 %v1459, 120
        %v1629 = vpop.permute.xlu0 %1628
        %1630 = vrot.lane.b32.xlu0 %v1460, 120
        %v1631 = vpop.permute.xlu0 %1630
        %1632 = vrot.lane.b32.xlu0 %v1461, 120
        %v1633 = vpop.permute.xlu0 %1632
        %1634 = vrot.lane.b32.xlu0 %v1462, 120
        %v1635 = vpop.permute.xlu0 %1634
        %1636 = vrot.lane.b32.xlu0 %v1463, 120
        %v1637 = vpop.permute.xlu0 %1636
        %1638 = vrot.lane.b32.xlu0 %v1464, 120
        %v1639 = vpop.permute.xlu0 %1638
        %1640 = vrot.lane.b32.xlu0 %v1465, 120
        %v1641 = vpop.permute.xlu0 %1640
        %1642 = vrot.lane.b32.xlu0 %v1466, 120
        %v1643 = vpop.permute.xlu0 %1642
        %1644 = vrot.lane.b32.xlu0 %v1467, 120
        %v1645 = vpop.permute.xlu0 %1644
        %1646 = vrot.lane.b32.xlu0 %v1468, 120
        %v1647 = vpop.permute.xlu0 %1646
        %1648 = vrot.lane.b32.xlu0 %v1469, 120
        %v1649 = vpop.permute.xlu0 %1648
        %1650 = vrot.lane.b32.xlu0 %v1470, 120
        %v1651 = vpop.permute.xlu0 %1650
        %1652 = vrot.lane.b32.xlu0 %v1471, 120
        %v1653 = vpop.permute.xlu0 %1652
        %v1682 = vmax.f32 %v1444, %v1599
        %v1683 = vmax.f32 %v1445, %v1601
        %v1684 = vmax.f32 %v1446, %v1603
        %v1685 = vmax.f32 %v1447, %v1605
        %v1686 = vmax.f32 %v1448, %v1607
        %v1687 = vmax.f32 %v1449, %v1609
        %v1688 = vmax.f32 %v1450, %v1611
        %v1689 = vmax.f32 %v1451, %v1613
        %v1690 = vmax.f32 %v1452, %v1615
        %v1691 = vmax.f32 %v1453, %v1617
        %v1692 = vmax.f32 %v1454, %v1619
        %v1693 = vmax.f32 %v1455, %v1621
        %v1694 = vmax.f32 %v1456, %v1623
        %v1695 = vmax.f32 %v1457, %v1625
        %v1696 = vmax.f32 %v1458, %v1627
        %v1697 = vmax.f32 %v1459, %v1629
        %v1698 = vmax.f32 %v1460, %v1631
        %v1699 = vmax.f32 %v1461, %v1633
        %v1700 = vmax.f32 %v1462, %v1635
        %v1701 = vmax.f32 %v1463, %v1637
        %v1702 = vmax.f32 %v1464, %v1639
        %v1703 = vmax.f32 %v1465, %v1641
        %v1704 = vmax.f32 %v1466, %v1643
        %v1705 = vmax.f32 %v1467, %v1645
        %v1706 = vmax.f32 %v1468, %v1647
        %v1707 = vmax.f32 %v1469, %v1649
        %v1708 = vmax.f32 %v1470, %v1651
        %v1709 = vmax.f32 %v1471, %v1653
        %s1710 = scalar_lea.vmem [#allocation2], 24
        %vm1711 = vcmask 57344
        %1712 = vst.msk [vmem:[%s1710 + $0x1] sm:$0x1] %vm1711, %v1682
        %1713 = vst.msk [vmem:[%s1710 + $0x19] sm:$0x1] %vm1711, %v1683
        %1714 = vst.msk [vmem:[%s1710 + $0x31] sm:$0x1] %vm1711, %v1684
        %1715 = vst.msk [vmem:[%s1710 + $0x49] sm:$0x1] %vm1711, %v1685
        %1716 = vst.msk [vmem:[%s1710 + $0x61] sm:$0x1] %vm1711, %v1686
        %1717 = vst.msk [vmem:[%s1710 + $0x79] sm:$0x1] %vm1711, %v1687
        %1718 = vst.msk [vmem:[%s1710 + $0x91] sm:$0x1] %vm1711, %v1688
        %1719 = vst.msk [vmem:[%s1710 + $0xa9] sm:$0x1] %vm1711, %v1689
        %1720 = vst.msk [vmem:[%s1710 + $0xc1] sm:$0x1] %vm1711, %v1690
        %1721 = vst.msk [vmem:[%s1710 + $0xd9] sm:$0x1] %vm1711, %v1691
        %1722 = vst.msk [vmem:[%s1710 + $0xf1] sm:$0x1] %vm1711, %v1692
        %1723 = vst.msk [vmem:[%s1710 + $0x109] sm:$0x1] %vm1711, %v1693
        %1724 = vst.msk [vmem:[%s1710 + $0x121] sm:$0x1] %vm1711, %v1694
        %1725 = vst.msk [vmem:[%s1710 + $0x139] sm:$0x1] %vm1711, %v1695
        %1726 = vst.msk [vmem:[%s1710 + $0x181] sm:$0x1] %vm1711, %v1696
        %1727 = vst.msk [vmem:[%s1710 + $0x199] sm:$0x1] %vm1711, %v1697
        %1728 = vst.msk [vmem:[%s1710 + $0x1b1] sm:$0x1] %vm1711, %v1698
        %1729 = vst.msk [vmem:[%s1710 + $0x1c9] sm:$0x1] %vm1711, %v1699
        %1730 = vst.msk [vmem:[%s1710 + $0x1e1] sm:$0x1] %vm1711, %v1700
        %1731 = vst.msk [vmem:[%s1710 + $0x1f9] sm:$0x1] %vm1711, %v1701
        %1732 = vst.msk [vmem:[%s1710 + $0x211] sm:$0x1] %vm1711, %v1702
        %1733 = vst.msk [vmem:[%s1710 + $0x229] sm:$0x1] %vm1711, %v1703
        %1734 = vst.msk [vmem:[%s1710 + $0x241] sm:$0x1] %vm1711, %v1704
        %1735 = vst.msk [vmem:[%s1710 + $0x259] sm:$0x1] %vm1711, %v1705
        %1736 = vst.msk [vmem:[%s1710 + $0x271] sm:$0x1] %vm1711, %v1706
        %1737 = vst.msk [vmem:[%s1710 + $0x289] sm:$0x1] %vm1711, %v1707
        %1738 = vst.msk [vmem:[%s1710 + $0x2a1] sm:$0x1] %vm1711, %v1708
        %1739 = vst.msk [vmem:[%s1710 + $0x2b9] sm:$0x1] %vm1711, %v1709
        %v1768 = vlaneseq
        %v1769 = vshrl.u32 %v1768, 7
        %v1770 = vsub.s32 0, %v1769
        %v1771 = vrot.slane %v1682, %v1770
        %v1772 = vlaneseq
        %v1773 = vshrl.u32 %v1772, 7
        %v1774 = vsub.s32 0, %v1773
        %v1775 = vrot.slane %v1683, %v1774
        %v1776 = vlaneseq
        %v1777 = vshrl.u32 %v1776, 7
        %v1778 = vsub.s32 0, %v1777
        %v1779 = vrot.slane %v1684, %v1778
        %v1780 = vlaneseq
        %v1781 = vshrl.u32 %v1780, 7
        %v1782 = vsub.s32 0, %v1781
        %v1783 = vrot.slane %v1685, %v1782
        %v1784 = vlaneseq
        %v1785 = vshrl.u32 %v1784, 7
        %v1786 = vsub.s32 0, %v1785
        %v1787 = vrot.slane %v1686, %v1786
        %v1788 = vlaneseq
        %v1789 = vshrl.u32 %v1788, 7
        %v1790 = vsub.s32 0, %v1789
        %v1791 = vrot.slane %v1687, %v1790
        %v1792 = vlaneseq
        %v1793 = vshrl.u32 %v1792, 7
        %v1794 = vsub.s32 0, %v1793
        %v1795 = vrot.slane %v1688, %v1794
        %v1796 = vlaneseq
        %v1797 = vshrl.u32 %v1796, 7
        %v1798 = vsub.s32 0, %v1797
        %v1799 = vrot.slane %v1689, %v1798
        %v1800 = vlaneseq
        %v1801 = vshrl.u32 %v1800, 7
        %v1802 = vsub.s32 0, %v1801
        %v1803 = vrot.slane %v1690, %v1802
        %v1804 = vlaneseq
        %v1805 = vshrl.u32 %v1804, 7
        %v1806 = vsub.s32 0, %v1805
        %v1807 = vrot.slane %v1691, %v1806
        %v1808 = vlaneseq
        %v1809 = vshrl.u32 %v1808, 7
        %v1810 = vsub.s32 0, %v1809
        %v1811 = vrot.slane %v1692, %v1810
        %v1812 = vlaneseq
        %v1813 = vshrl.u32 %v1812, 7
        %v1814 = vsub.s32 0, %v1813
        %v1815 = vrot.slane %v1693, %v1814
        %v1816 = vlaneseq
        %v1817 = vshrl.u32 %v1816, 7
        %v1818 = vsub.s32 0, %v1817
        %v1819 = vrot.slane %v1694, %v1818
        %v1820 = vlaneseq
        %v1821 = vshrl.u32 %v1820, 7
        %v1822 = vsub.s32 0, %v1821
        %v1823 = vrot.slane %v1695, %v1822
        %v1824 = vlaneseq
        %v1825 = vshrl.u32 %v1824, 7
        %v1826 = vsub.s32 0, %v1825
        %v1827 = vrot.slane %v1696, %v1826
        %v1828 = vlaneseq
        %v1829 = vshrl.u32 %v1828, 7
        %v1830 = vsub.s32 0, %v1829
        %v1831 = vrot.slane %v1697, %v1830
        %v1832 = vlaneseq
        %v1833 = vshrl.u32 %v1832, 7
        %v1834 = vsub.s32 0, %v1833
        %v1835 = vrot.slane %v1698, %v1834
        %v1836 = vlaneseq
        %v1837 = vshrl.u32 %v1836, 7
        %v1838 = vsub.s32 0, %v1837
        %v1839 = vrot.slane %v1699, %v1838
        %v1840 = vlaneseq
        %v1841 = vshrl.u32 %v1840, 7
        %v1842 = vsub.s32 0, %v1841
        %v1843 = vrot.slane %v1700, %v1842
        %v1844 = vlaneseq
        %v1845 = vshrl.u32 %v1844, 7
        %v1846 = vsub.s32 0, %v1845
        %v1847 = vrot.slane %v1701, %v1846
        %v1848 = vlaneseq
        %v1849 = vshrl.u32 %v1848, 7
        %v1850 = vsub.s32 0, %v1849
        %v1851 = vrot.slane %v1702, %v1850
        %v1852 = vlaneseq
        %v1853 = vshrl.u32 %v1852, 7
        %v1854 = vsub.s32 0, %v1853
        %v1855 = vrot.slane %v1703, %v1854
        %v1856 = vlaneseq
        %v1857 = vshrl.u32 %v1856, 7
        %v1858 = vsub.s32 0, %v1857
        %v1859 = vrot.slane %v1704, %v1858
        %v1860 = vlaneseq
        %v1861 = vshrl.u32 %v1860, 7
        %v1862 = vsub.s32 0, %v1861
        %v1863 = vrot.slane %v1705, %v1862
        %v1864 = vlaneseq
        %v1865 = vshrl.u32 %v1864, 7
        %v1866 = vsub.s32 0, %v1865
        %v1867 = vrot.slane %v1706, %v1866
        %v1868 = vlaneseq
        %v1869 = vshrl.u32 %v1868, 7
        %v1870 = vsub.s32 0, %v1869
        %v1871 = vrot.slane %v1707, %v1870
        %v1872 = vlaneseq
        %v1873 = vshrl.u32 %v1872, 7
        %v1874 = vsub.s32 0, %v1873
        %v1875 = vrot.slane %v1708, %v1874
        %v1876 = vlaneseq
        %v1877 = vshrl.u32 %v1876, 7
        %v1878 = vsub.s32 0, %v1877
        %v1879 = vrot.slane %v1709, %v1878
        %1880 = vrot.lane.b32.xlu0 %v1771, 112
        %v1881 = vpop.permute.xlu0 %1880
        %1882 = vrot.lane.b32.xlu0 %v1775, 112
        %v1883 = vpop.permute.xlu0 %1882
        %1884 = vrot.lane.b32.xlu0 %v1779, 112
        %v1885 = vpop.permute.xlu0 %1884
        %1886 = vrot.lane.b32.xlu0 %v1783, 112
        %v1887 = vpop.permute.xlu0 %1886
        %1888 = vrot.lane.b32.xlu0 %v1787, 112
        %v1889 = vpop.permute.xlu0 %1888
        %1890 = vrot.lane.b32.xlu0 %v1791, 112
        %v1891 = vpop.permute.xlu0 %1890
        %1892 = vrot.lane.b32.xlu0 %v1795, 112
        %v1893 = vpop.permute.xlu0 %1892
        %1894 = vrot.lane.b32.xlu0 %v1799, 112
        %v1895 = vpop.permute.xlu0 %1894
        %1896 = vrot.lane.b32.xlu0 %v1803, 112
        %v1897 = vpop.permute.xlu0 %1896
        %1898 = vrot.lane.b32.xlu0 %v1807, 112
        %v1899 = vpop.permute.xlu0 %1898
        %1900 = vrot.lane.b32.xlu0 %v1811, 112
        %v1901 = vpop.permute.xlu0 %1900
        %1902 = vrot.lane.b32.xlu0 %v1815, 112
        %v1903 = vpop.permute.xlu0 %1902
        %1904 = vrot.lane.b32.xlu0 %v1819, 112
        %v1905 = vpop.permute.xlu0 %1904
        %1906 = vrot.lane.b32.xlu0 %v1823, 112
        %v1907 = vpop.permute.xlu0 %1906
        %1908 = vrot.lane.b32.xlu0 %v1827, 112
        %v1909 = vpop.permute.xlu0 %1908
        %1910 = vrot.lane.b32.xlu0 %v1831, 112
        %v1911 = vpop.permute.xlu0 %1910
        %1912 = vrot.lane.b32.xlu0 %v1835, 112
        %v1913 = vpop.permute.xlu0 %1912
        %1914 = vrot.lane.b32.xlu0 %v1839, 112
        %v1915 = vpop.permute.xlu0 %1914
        %1916 = vrot.lane.b32.xlu0 %v1843, 112
        %v1917 = vpop.permute.xlu0 %1916
        %1918 = vrot.lane.b32.xlu0 %v1847, 112
        %v1919 = vpop.permute.xlu0 %1918
        %1920 = vrot.lane.b32.xlu0 %v1851, 112
        %v1921 = vpop.permute.xlu0 %1920
        %1922 = vrot.lane.b32.xlu0 %v1855, 112
        %v1923 = vpop.permute.xlu0 %1922
        %1924 = vrot.lane.b32.xlu0 %v1859, 112
        %v1925 = vpop.permute.xlu0 %1924
        %1926 = vrot.lane.b32.xlu0 %v1863, 112
        %v1927 = vpop.permute.xlu0 %1926
        %1928 = vrot.lane.b32.xlu0 %v1867, 112
        %v1929 = vpop.permute.xlu0 %1928
        %1930 = vrot.lane.b32.xlu0 %v1871, 112
        %v1931 = vpop.permute.xlu0 %1930
        %1932 = vrot.lane.b32.xlu0 %v1875, 112
        %v1933 = vpop.permute.xlu0 %1932
        %1934 = vrot.lane.b32.xlu0 %v1879, 112
        %v1935 = vpop.permute.xlu0 %1934
        %1964 = vst.msk [vmem:[%s1710 + $0x2] sm:$0x1] %vm1711, %v1881
        %1965 = vst.msk [vmem:[%s1710 + $0x1a] sm:$0x1] %vm1711, %v1883
        %1966 = vst.msk [vmem:[%s1710 + $0x32] sm:$0x1] %vm1711, %v1885
        %1967 = vst.msk [vmem:[%s1710 + $0x4a] sm:$0x1] %vm1711, %v1887
        %1968 = vst.msk [vmem:[%s1710 + $0x62] sm:$0x1] %vm1711, %v1889
        %1969 = vst.msk [vmem:[%s1710 + $0x7a] sm:$0x1] %vm1711, %v1891
        %1970 = vst.msk [vmem:[%s1710 + $0x92] sm:$0x1] %vm1711, %v1893
        %1971 = vst.msk [vmem:[%s1710 + $0xaa] sm:$0x1] %vm1711, %v1895
        %1972 = vst.msk [vmem:[%s1710 + $0xc2] sm:$0x1] %vm1711, %v1897
        %1973 = vst.msk [vmem:[%s1710 + $0xda] sm:$0x1] %vm1711, %v1899
        %1974 = vst.msk [vmem:[%s1710 + $0xf2] sm:$0x1] %vm1711, %v1901
        %1975 = vst.msk [vmem:[%s1710 + $0x10a] sm:$0x1] %vm1711, %v1903
        %1976 = vst.msk [vmem:[%s1710 + $0x122] sm:$0x1] %vm1711, %v1905
        %1977 = vst.msk [vmem:[%s1710 + $0x13a] sm:$0x1] %vm1711, %v1907
        %1978 = vst.msk [vmem:[%s1710 + $0x182] sm:$0x1] %vm1711, %v1909
        %1979 = vst.msk [vmem:[%s1710 + $0x19a] sm:$0x1] %vm1711, %v1911
        %1980 = vst.msk [vmem:[%s1710 + $0x1b2] sm:$0x1] %vm1711, %v1913
        %1981 = vst.msk [vmem:[%s1710 + $0x1ca] sm:$0x1] %vm1711, %v1915
        %1982 = vst.msk [vmem:[%s1710 + $0x1e2] sm:$0x1] %vm1711, %v1917
        %1983 = vst.msk [vmem:[%s1710 + $0x1fa] sm:$0x1] %vm1711, %v1919
        %1984 = vst.msk [vmem:[%s1710 + $0x212] sm:$0x1] %vm1711, %v1921
        %1985 = vst.msk [vmem:[%s1710 + $0x22a] sm:$0x1] %vm1711, %v1923
        %1986 = vst.msk [vmem:[%s1710 + $0x242] sm:$0x1] %vm1711, %v1925
        %1987 = vst.msk [vmem:[%s1710 + $0x25a] sm:$0x1] %vm1711, %v1927
        %1988 = vst.msk [vmem:[%s1710 + $0x272] sm:$0x1] %vm1711, %v1929
        %1989 = vst.msk [vmem:[%s1710 + $0x28a] sm:$0x1] %vm1711, %v1931
        %1990 = vst.msk [vmem:[%s1710 + $0x2a2] sm:$0x1] %vm1711, %v1933
        %1991 = vst.msk [vmem:[%s1710 + $0x2ba] sm:$0x1] %vm1711, %v1935
        %1992 = vrot.lane.b32.xlu0 %v1771, 96
        %v1993 = vpop.permute.xlu0 %1992
        %1994 = vrot.lane.b32.xlu0 %v1775, 96
        %v1995 = vpop.permute.xlu0 %1994
        %1996 = vrot.lane.b32.xlu0 %v1779, 96
        %v1997 = vpop.permute.xlu0 %1996
        %1998 = vrot.lane.b32.xlu0 %v1783, 96
        %v1999 = vpop.permute.xlu0 %1998
        %2000 = vrot.lane.b32.xlu0 %v1787, 96
        %v2001 = vpop.permute.xlu0 %2000
        %2002 = vrot.lane.b32.xlu0 %v1791, 96
        %v2003 = vpop.permute.xlu0 %2002
        %2004 = vrot.lane.b32.xlu0 %v1795, 96
        %v2005 = vpop.permute.xlu0 %2004
        %2006 = vrot.lane.b32.xlu0 %v1799, 96
        %v2007 = vpop.permute.xlu0 %2006
        %2008 = vrot.lane.b32.xlu0 %v1803, 96
        %v2009 = vpop.permute.xlu0 %2008
        %2010 = vrot.lane.b32.xlu0 %v1807, 96
        %v2011 = vpop.permute.xlu0 %2010
        %2012 = vrot.lane.b32.xlu0 %v1811, 96
        %v2013 = vpop.permute.xlu0 %2012
        %2014 = vrot.lane.b32.xlu0 %v1815, 96
        %v2015 = vpop.permute.xlu0 %2014
        %2016 = vrot.lane.b32.xlu0 %v1819, 96
        %v2017 = vpop.permute.xlu0 %2016
        %2018 = vrot.lane.b32.xlu0 %v1823, 96
        %v2019 = vpop.permute.xlu0 %2018
        %2020 = vrot.lane.b32.xlu0 %v1827, 96
        %v2021 = vpop.permute.xlu0 %2020
        %2022 = vrot.lane.b32.xlu0 %v1831, 96
        %v2023 = vpop.permute.xlu0 %2022
        %2024 = vrot.lane.b32.xlu0 %v1835, 96
        %v2025 = vpop.permute.xlu0 %2024
        %2026 = vrot.lane.b32.xlu0 %v1839, 96
        %v2027 = vpop.permute.xlu0 %2026
        %2028 = vrot.lane.b32.xlu0 %v1843, 96
        %v2029 = vpop.permute.xlu0 %2028
        %2030 = vrot.lane.b32.xlu0 %v1847, 96
        %v2031 = vpop.permute.xlu0 %2030
        %2032 = vrot.lane.b32.xlu0 %v1851, 96
        %v2033 = vpop.permute.xlu0 %2032
        %2034 = vrot.lane.b32.xlu0 %v1855, 96
        %v2035 = vpop.permute.xlu0 %2034
        %2036 = vrot.lane.b32.xlu0 %v1859, 96
        %v2037 = vpop.permute.xlu0 %2036
        %2038 = vrot.lane.b32.xlu0 %v1863, 96
        %v2039 = vpop.permute.xlu0 %2038
        %2040 = vrot.lane.b32.xlu0 %v1867, 96
        %v2041 = vpop.permute.xlu0 %2040
        %2042 = vrot.lane.b32.xlu0 %v1871, 96
        %v2043 = vpop.permute.xlu0 %2042
        %2044 = vrot.lane.b32.xlu0 %v1875, 96
        %v2045 = vpop.permute.xlu0 %2044
        %2046 = vrot.lane.b32.xlu0 %v1879, 96
        %v2047 = vpop.permute.xlu0 %2046
        %2076 = vst.msk [vmem:[%s1710 + $0x3] sm:$0x1] %vm1711, %v1993
        %2077 = vst.msk [vmem:[%s1710 + $0x1b] sm:$0x1] %vm1711, %v1995
        %2078 = vst.msk [vmem:[%s1710 + $0x33] sm:$0x1] %vm1711, %v1997
        %2079 = vst.msk [vmem:[%s1710 + $0x4b] sm:$0x1] %vm1711, %v1999
        %2080 = vst.msk [vmem:[%s1710 + $0x63] sm:$0x1] %vm1711, %v2001
        %2081 = vst.msk [vmem:[%s1710 + $0x7b] sm:$0x1] %vm1711, %v2003
        %2082 = vst.msk [vmem:[%s1710 + $0x93] sm:$0x1] %vm1711, %v2005
        %2083 = vst.msk [vmem:[%s1710 + $0xab] sm:$0x1] %vm1711, %v2007
        %2084 = vst.msk [vmem:[%s1710 + $0xc3] sm:$0x1] %vm1711, %v2009
        %2085 = vst.msk [vmem:[%s1710 + $0xdb] sm:$0x1] %vm1711, %v2011
        %2086 = vst.msk [vmem:[%s1710 + $0xf3] sm:$0x1] %vm1711, %v2013
        %2087 = vst.msk [vmem:[%s1710 + $0x10b] sm:$0x1] %vm1711, %v2015
        %2088 = vst.msk [vmem:[%s1710 + $0x123] sm:$0x1] %vm1711, %v2017
        %2089 = vst.msk [vmem:[%s1710 + $0x13b] sm:$0x1] %vm1711, %v2019
        %2090 = vst.msk [vmem:[%s1710 + $0x183] sm:$0x1] %vm1711, %v2021
        %2091 = vst.msk [vmem:[%s1710 + $0x19b] sm:$0x1] %vm1711, %v2023
        %2092 = vst.msk [vmem:[%s1710 + $0x1b3] sm:$0x1] %vm1711, %v2025
        %2093 = vst.msk [vmem:[%s1710 + $0x1cb] sm:$0x1] %vm1711, %v2027
        %2094 = vst.msk [vmem:[%s1710 + $0x1e3] sm:$0x1] %vm1711, %v2029
        %2095 = vst.msk [vmem:[%s1710 + $0x1fb] sm:$0x1] %vm1711, %v2031
        %2096 = vst.msk [vmem:[%s1710 + $0x213] sm:$0x1] %vm1711, %v2033
        %2097 = vst.msk [vmem:[%s1710 + $0x22b] sm:$0x1] %vm1711, %v2035
        %2098 = vst.msk [vmem:[%s1710 + $0x243] sm:$0x1] %vm1711, %v2037
        %2099 = vst.msk [vmem:[%s1710 + $0x25b] sm:$0x1] %vm1711, %v2039
        %2100 = vst.msk [vmem:[%s1710 + $0x273] sm:$0x1] %vm1711, %v2041
        %2101 = vst.msk [vmem:[%s1710 + $0x28b] sm:$0x1] %vm1711, %v2043
        %2102 = vst.msk [vmem:[%s1710 + $0x2a3] sm:$0x1] %vm1711, %v2045
        %2103 = vst.msk [vmem:[%s1710 + $0x2bb] sm:$0x1] %vm1711, %v2047
        %2104 = vrot.lane.b32.xlu0 %v1771, 80
        %v2105 = vpop.permute.xlu0 %2104
        %2106 = vrot.lane.b32.xlu0 %v1775, 80
        %v2107 = vpop.permute.xlu0 %2106
        %2108 = vrot.lane.b32.xlu0 %v1779, 80
        %v2109 = vpop.permute.xlu0 %2108
        %2110 = vrot.lane.b32.xlu0 %v1783, 80
        %v2111 = vpop.permute.xlu0 %2110
        %2112 = vrot.lane.b32.xlu0 %v1787, 80
        %v2113 = vpop.permute.xlu0 %2112
        %2114 = vrot.lane.b32.xlu0 %v1791, 80
        %v2115 = vpop.permute.xlu0 %2114
        %2116 = vrot.lane.b32.xlu0 %v1795, 80
        %v2117 = vpop.permute.xlu0 %2116
        %2118 = vrot.lane.b32.xlu0 %v1799, 80
        %v2119 = vpop.permute.xlu0 %2118
        %2120 = vrot.lane.b32.xlu0 %v1803, 80
        %v2121 = vpop.permute.xlu0 %2120
        %2122 = vrot.lane.b32.xlu0 %v1807, 80
        %v2123 = vpop.permute.xlu0 %2122
        %2124 = vrot.lane.b32.xlu0 %v1811, 80
        %v2125 = vpop.permute.xlu0 %2124
        %2126 = vrot.lane.b32.xlu0 %v1815, 80
        %v2127 = vpop.permute.xlu0 %2126
        %2128 = vrot.lane.b32.xlu0 %v1819, 80
        %v2129 = vpop.permute.xlu0 %2128
        %2130 = vrot.lane.b32.xlu0 %v1823, 80
        %v2131 = vpop.permute.xlu0 %2130
        %2132 = vrot.lane.b32.xlu0 %v1827, 80
        %v2133 = vpop.permute.xlu0 %2132
        %2134 = vrot.lane.b32.xlu0 %v1831, 80
        %v2135 = vpop.permute.xlu0 %2134
        %2136 = vrot.lane.b32.xlu0 %v1835, 80
        %v2137 = vpop.permute.xlu0 %2136
        %2138 = vrot.lane.b32.xlu0 %v1839, 80
        %v2139 = vpop.permute.xlu0 %2138
        %2140 = vrot.lane.b32.xlu0 %v1843, 80
        %v2141 = vpop.permute.xlu0 %2140
        %2142 = vrot.lane.b32.xlu0 %v1847, 80
        %v2143 = vpop.permute.xlu0 %2142
        %2144 = vrot.lane.b32.xlu0 %v1851, 80
        %v2145 = vpop.permute.xlu0 %2144
        %2146 = vrot.lane.b32.xlu0 %v1855, 80
        %v2147 = vpop.permute.xlu0 %2146
        %2148 = vrot.lane.b32.xlu0 %v1859, 80
        %v2149 = vpop.permute.xlu0 %2148
        %2150 = vrot.lane.b32.xlu0 %v1863, 80
        %v2151 = vpop.permute.xlu0 %2150
        %2152 = vrot.lane.b32.xlu0 %v1867, 80
        %v2153 = vpop.permute.xlu0 %2152
        %2154 = vrot.lane.b32.xlu0 %v1871, 80
        %v2155 = vpop.permute.xlu0 %2154
        %2156 = vrot.lane.b32.xlu0 %v1875, 80
        %v2157 = vpop.permute.xlu0 %2156
        %2158 = vrot.lane.b32.xlu0 %v1879, 80
        %v2159 = vpop.permute.xlu0 %2158
        %2188 = vst.msk [vmem:[%s1710 + $0x4] sm:$0x1] %vm1711, %v2105
        %2189 = vst.msk [vmem:[%s1710 + $0x1c] sm:$0x1] %vm1711, %v2107
        %2190 = vst.msk [vmem:[%s1710 + $0x34] sm:$0x1] %vm1711, %v2109
        %2191 = vst.msk [vmem:[%s1710 + $0x4c] sm:$0x1] %vm1711, %v2111
        %2192 = vst.msk [vmem:[%s1710 + $0x64] sm:$0x1] %vm1711, %v2113
        %2193 = vst.msk [vmem:[%s1710 + $0x7c] sm:$0x1] %vm1711, %v2115
        %2194 = vst.msk [vmem:[%s1710 + $0x94] sm:$0x1] %vm1711, %v2117
        %2195 = vst.msk [vmem:[%s1710 + $0xac] sm:$0x1] %vm1711, %v2119
        %2196 = vst.msk [vmem:[%s1710 + $0xc4] sm:$0x1] %vm1711, %v2121
        %2197 = vst.msk [vmem:[%s1710 + $0xdc] sm:$0x1] %vm1711, %v2123
        %2198 = vst.msk [vmem:[%s1710 + $0xf4] sm:$0x1] %vm1711, %v2125
        %2199 = vst.msk [vmem:[%s1710 + $0x10c] sm:$0x1] %vm1711, %v2127
        %2200 = vst.msk [vmem:[%s1710 + $0x124] sm:$0x1] %vm1711, %v2129
        %2201 = vst.msk [vmem:[%s1710 + $0x13c] sm:$0x1] %vm1711, %v2131
        %2202 = vst.msk [vmem:[%s1710 + $0x184] sm:$0x1] %vm1711, %v2133
        %2203 = vst.msk [vmem:[%s1710 + $0x19c] sm:$0x1] %vm1711, %v2135
        %2204 = vst.msk [vmem:[%s1710 + $0x1b4] sm:$0x1] %vm1711, %v2137
        %2205 = vst.msk [vmem:[%s1710 + $0x1cc] sm:$0x1] %vm1711, %v2139
        %2206 = vst.msk [vmem:[%s1710 + $0x1e4] sm:$0x1] %vm1711, %v2141
        %2207 = vst.msk [vmem:[%s1710 + $0x1fc] sm:$0x1] %vm1711, %v2143
        %2208 = vst.msk [vmem:[%s1710 + $0x214] sm:$0x1] %vm1711, %v2145
        %2209 = vst.msk [vmem:[%s1710 + $0x22c] sm:$0x1] %vm1711, %v2147
        %2210 = vst.msk [vmem:[%s1710 + $0x244] sm:$0x1] %vm1711, %v2149
        %2211 = vst.msk [vmem:[%s1710 + $0x25c] sm:$0x1] %vm1711, %v2151
        %2212 = vst.msk [vmem:[%s1710 + $0x274] sm:$0x1] %vm1711, %v2153
        %2213 = vst.msk [vmem:[%s1710 + $0x28c] sm:$0x1] %vm1711, %v2155
        %2214 = vst.msk [vmem:[%s1710 + $0x2a4] sm:$0x1] %vm1711, %v2157
        %2215 = vst.msk [vmem:[%s1710 + $0x2bc] sm:$0x1] %vm1711, %v2159
        %2216 = vrot.lane.b32.xlu0 %v1771, 64
        %v2217 = vpop.permute.xlu0 %2216
        %2218 = vrot.lane.b32.xlu0 %v1775, 64
        %v2219 = vpop.permute.xlu0 %2218
        %2220 = vrot.lane.b32.xlu0 %v1779, 64
        %v2221 = vpop.permute.xlu0 %2220
        %2222 = vrot.lane.b32.xlu0 %v1783, 64
        %v2223 = vpop.permute.xlu0 %2222
        %2224 = vrot.lane.b32.xlu0 %v1787, 64
        %v2225 = vpop.permute.xlu0 %2224
        %2226 = vrot.lane.b32.xlu0 %v1791, 64
        %v2227 = vpop.permute.xlu0 %2226
        %2228 = vrot.lane.b32.xlu0 %v1795, 64
        %v2229 = vpop.permute.xlu0 %2228
        %2230 = vrot.lane.b32.xlu0 %v1799, 64
        %v2231 = vpop.permute.xlu0 %2230
        %2232 = vrot.lane.b32.xlu0 %v1803, 64
        %v2233 = vpop.permute.xlu0 %2232
        %2234 = vrot.lane.b32.xlu0 %v1807, 64
        %v2235 = vpop.permute.xlu0 %2234
        %2236 = vrot.lane.b32.xlu0 %v1811, 64
        %v2237 = vpop.permute.xlu0 %2236
        %2238 = vrot.lane.b32.xlu0 %v1815, 64
        %v2239 = vpop.permute.xlu0 %2238
        %2240 = vrot.lane.b32.xlu0 %v1819, 64
        %v2241 = vpop.permute.xlu0 %2240
        %2242 = vrot.lane.b32.xlu0 %v1823, 64
        %v2243 = vpop.permute.xlu0 %2242
        %2244 = vrot.lane.b32.xlu0 %v1827, 64
        %v2245 = vpop.permute.xlu0 %2244
        %2246 = vrot.lane.b32.xlu0 %v1831, 64
        %v2247 = vpop.permute.xlu0 %2246
        %2248 = vrot.lane.b32.xlu0 %v1835, 64
        %v2249 = vpop.permute.xlu0 %2248
        %2250 = vrot.lane.b32.xlu0 %v1839, 64
        %v2251 = vpop.permute.xlu0 %2250
        %2252 = vrot.lane.b32.xlu0 %v1843, 64
        %v2253 = vpop.permute.xlu0 %2252
        %2254 = vrot.lane.b32.xlu0 %v1847, 64
        %v2255 = vpop.permute.xlu0 %2254
        %2256 = vrot.lane.b32.xlu0 %v1851, 64
        %v2257 = vpop.permute.xlu0 %2256
        %2258 = vrot.lane.b32.xlu0 %v1855, 64
        %v2259 = vpop.permute.xlu0 %2258
        %2260 = vrot.lane.b32.xlu0 %v1859, 64
        %v2261 = vpop.permute.xlu0 %2260
        %2262 = vrot.lane.b32.xlu0 %v1863, 64
        %v2263 = vpop.permute.xlu0 %2262
        %2264 = vrot.lane.b32.xlu0 %v1867, 64
        %v2265 = vpop.permute.xlu0 %2264
        %2266 = vrot.lane.b32.xlu0 %v1871, 64
        %v2267 = vpop.permute.xlu0 %2266
        %2268 = vrot.lane.b32.xlu0 %v1875, 64
        %v2269 = vpop.permute.xlu0 %2268
        %2270 = vrot.lane.b32.xlu0 %v1879, 64
        %v2271 = vpop.permute.xlu0 %2270
        %2300 = vst.msk [vmem:[%s1710 + $0x5] sm:$0x1] %vm1711, %v2217
        %2301 = vst.msk [vmem:[%s1710 + $0x1d] sm:$0x1] %vm1711, %v2219
        %2302 = vst.msk [vmem:[%s1710 + $0x35] sm:$0x1] %vm1711, %v2221
        %2303 = vst.msk [vmem:[%s1710 + $0x4d] sm:$0x1] %vm1711, %v2223
        %2304 = vst.msk [vmem:[%s1710 + $0x65] sm:$0x1] %vm1711, %v2225
        %2305 = vst.msk [vmem:[%s1710 + $0x7d] sm:$0x1] %vm1711, %v2227
        %2306 = vst.msk [vmem:[%s1710 + $0x95] sm:$0x1] %vm1711, %v2229
        %2307 = vst.msk [vmem:[%s1710 + $0xad] sm:$0x1] %vm1711, %v2231
        %2308 = vst.msk [vmem:[%s1710 + $0xc5] sm:$0x1] %vm1711, %v2233
        %2309 = vst.msk [vmem:[%s1710 + $0xdd] sm:$0x1] %vm1711, %v2235
        %2310 = vst.msk [vmem:[%s1710 + $0xf5] sm:$0x1] %vm1711, %v2237
        %2311 = vst.msk [vmem:[%s1710 + $0x10d] sm:$0x1] %vm1711, %v2239
        %2312 = vst.msk [vmem:[%s1710 + $0x125] sm:$0x1] %vm1711, %v2241
        %2313 = vst.msk [vmem:[%s1710 + $0x13d] sm:$0x1] %vm1711, %v2243
        %2314 = vst.msk [vmem:[%s1710 + $0x185] sm:$0x1] %vm1711, %v2245
        %2315 = vst.msk [vmem:[%s1710 + $0x19d] sm:$0x1] %vm1711, %v2247
        %2316 = vst.msk [vmem:[%s1710 + $0x1b5] sm:$0x1] %vm1711, %v2249
        %2317 = vst.msk [vmem:[%s1710 + $0x1cd] sm:$0x1] %vm1711, %v2251
        %2318 = vst.msk [vmem:[%s1710 + $0x1e5] sm:$0x1] %vm1711, %v2253
        %2319 = vst.msk [vmem:[%s1710 + $0x1fd] sm:$0x1] %vm1711, %v2255
        %2320 = vst.msk [vmem:[%s1710 + $0x215] sm:$0x1] %vm1711, %v2257
        %2321 = vst.msk [vmem:[%s1710 + $0x22d] sm:$0x1] %vm1711, %v2259
        %2322 = vst.msk [vmem:[%s1710 + $0x245] sm:$0x1] %vm1711, %v2261
        %2323 = vst.msk [vmem:[%s1710 + $0x25d] sm:$0x1] %vm1711, %v2263
        %2324 = vst.msk [vmem:[%s1710 + $0x275] sm:$0x1] %vm1711, %v2265
        %2325 = vst.msk [vmem:[%s1710 + $0x28d] sm:$0x1] %vm1711, %v2267
        %2326 = vst.msk [vmem:[%s1710 + $0x2a5] sm:$0x1] %vm1711, %v2269
        %2327 = vst.msk [vmem:[%s1710 + $0x2bd] sm:$0x1] %vm1711, %v2271
        %2328 = vrot.lane.b32.xlu0 %v1771, 48
        %v2329 = vpop.permute.xlu0 %2328
        %2330 = vrot.lane.b32.xlu0 %v1775, 48
        %v2331 = vpop.permute.xlu0 %2330
        %2332 = vrot.lane.b32.xlu0 %v1779, 48
        %v2333 = vpop.permute.xlu0 %2332
        %2334 = vrot.lane.b32.xlu0 %v1783, 48
        %v2335 = vpop.permute.xlu0 %2334
        %2336 = vrot.lane.b32.xlu0 %v1787, 48
        %v2337 = vpop.permute.xlu0 %2336
        %2338 = vrot.lane.b32.xlu0 %v1791, 48
        %v2339 = vpop.permute.xlu0 %2338
        %2340 = vrot.lane.b32.xlu0 %v1795, 48
        %v2341 = vpop.permute.xlu0 %2340
        %2342 = vrot.lane.b32.xlu0 %v1799, 48
        %v2343 = vpop.permute.xlu0 %2342
        %2344 = vrot.lane.b32.xlu0 %v1803, 48
        %v2345 = vpop.permute.xlu0 %2344
        %2346 = vrot.lane.b32.xlu0 %v1807, 48
        %v2347 = vpop.permute.xlu0 %2346
        %2348 = vrot.lane.b32.xlu0 %v1811, 48
        %v2349 = vpop.permute.xlu0 %2348
        %2350 = vrot.lane.b32.xlu0 %v1815, 48
        %v2351 = vpop.permute.xlu0 %2350
        %2352 = vrot.lane.b32.xlu0 %v1819, 48
        %v2353 = vpop.permute.xlu0 %2352
        %2354 = vrot.lane.b32.xlu0 %v1823, 48
        %v2355 = vpop.permute.xlu0 %2354
        %2356 = vrot.lane.b32.xlu0 %v1827, 48
        %v2357 = vpop.permute.xlu0 %2356
        %2358 = vrot.lane.b32.xlu0 %v1831, 48
        %v2359 = vpop.permute.xlu0 %2358
        %2360 = vrot.lane.b32.xlu0 %v1835, 48
        %v2361 = vpop.permute.xlu0 %2360
        %2362 = vrot.lane.b32.xlu0 %v1839, 48
        %v2363 = vpop.permute.xlu0 %2362
        %2364 = vrot.lane.b32.xlu0 %v1843, 48
        %v2365 = vpop.permute.xlu0 %2364
        %2366 = vrot.lane.b32.xlu0 %v1847, 48
        %v2367 = vpop.permute.xlu0 %2366
        %2368 = vrot.lane.b32.xlu0 %v1851, 48
        %v2369 = vpop.permute.xlu0 %2368
        %2370 = vrot.lane.b32.xlu0 %v1855, 48
        %v2371 = vpop.permute.xlu0 %2370
        %2372 = vrot.lane.b32.xlu0 %v1859, 48
        %v2373 = vpop.permute.xlu0 %2372
        %2374 = vrot.lane.b32.xlu0 %v1863, 48
        %v2375 = vpop.permute.xlu0 %2374
        %2376 = vrot.lane.b32.xlu0 %v1867, 48
        %v2377 = vpop.permute.xlu0 %2376
        %2378 = vrot.lane.b32.xlu0 %v1871, 48
        %v2379 = vpop.permute.xlu0 %2378
        %2380 = vrot.lane.b32.xlu0 %v1875, 48
        %v2381 = vpop.permute.xlu0 %2380
        %2382 = vrot.lane.b32.xlu0 %v1879, 48
        %v2383 = vpop.permute.xlu0 %2382
        %2412 = vst.msk [vmem:[%s1710 + $0x6] sm:$0x1] %vm1711, %v2329
        %2413 = vst.msk [vmem:[%s1710 + $0x1e] sm:$0x1] %vm1711, %v2331
        %2414 = vst.msk [vmem:[%s1710 + $0x36] sm:$0x1] %vm1711, %v2333
        %2415 = vst.msk [vmem:[%s1710 + $0x4e] sm:$0x1] %vm1711, %v2335
        %2416 = vst.msk [vmem:[%s1710 + $0x66] sm:$0x1] %vm1711, %v2337
        %2417 = vst.msk [vmem:[%s1710 + $0x7e] sm:$0x1] %vm1711, %v2339
        %2418 = vst.msk [vmem:[%s1710 + $0x96] sm:$0x1] %vm1711, %v2341
        %2419 = vst.msk [vmem:[%s1710 + $0xae] sm:$0x1] %vm1711, %v2343
        %2420 = vst.msk [vmem:[%s1710 + $0xc6] sm:$0x1] %vm1711, %v2345
        %2421 = vst.msk [vmem:[%s1710 + $0xde] sm:$0x1] %vm1711, %v2347
        %2422 = vst.msk [vmem:[%s1710 + $0xf6] sm:$0x1] %vm1711, %v2349
        %2423 = vst.msk [vmem:[%s1710 + $0x10e] sm:$0x1] %vm1711, %v2351
        %2424 = vst.msk [vmem:[%s1710 + $0x126] sm:$0x1] %vm1711, %v2353
        %2425 = vst.msk [vmem:[%s1710 + $0x13e] sm:$0x1] %vm1711, %v2355
        %2426 = vst.msk [vmem:[%s1710 + $0x186] sm:$0x1] %vm1711, %v2357
        %2427 = vst.msk [vmem:[%s1710 + $0x19e] sm:$0x1] %vm1711, %v2359
        %2428 = vst.msk [vmem:[%s1710 + $0x1b6] sm:$0x1] %vm1711, %v2361
        %2429 = vst.msk [vmem:[%s1710 + $0x1ce] sm:$0x1] %vm1711, %v2363
        %2430 = vst.msk [vmem:[%s1710 + $0x1e6] sm:$0x1] %vm1711, %v2365
        %2431 = vst.msk [vmem:[%s1710 + $0x1fe] sm:$0x1] %vm1711, %v2367
        %2432 = vst.msk [vmem:[%s1710 + $0x216] sm:$0x1] %vm1711, %v2369
        %2433 = vst.msk [vmem:[%s1710 + $0x22e] sm:$0x1] %vm1711, %v2371
        %2434 = vst.msk [vmem:[%s1710 + $0x246] sm:$0x1] %vm1711, %v2373
        %2435 = vst.msk [vmem:[%s1710 + $0x25e] sm:$0x1] %vm1711, %v2375
        %2436 = vst.msk [vmem:[%s1710 + $0x276] sm:$0x1] %vm1711, %v2377
        %2437 = vst.msk [vmem:[%s1710 + $0x28e] sm:$0x1] %vm1711, %v2379
        %2438 = vst.msk [vmem:[%s1710 + $0x2a6] sm:$0x1] %vm1711, %v2381
        %2439 = vst.msk [vmem:[%s1710 + $0x2be] sm:$0x1] %vm1711, %v2383
        %2440 = vrot.lane.b32.xlu0 %v1771, 32
        %v2441 = vpop.permute.xlu0 %2440
        %2442 = vrot.lane.b32.xlu0 %v1775, 32
        %v2443 = vpop.permute.xlu0 %2442
        %2444 = vrot.lane.b32.xlu0 %v1779, 32
        %v2445 = vpop.permute.xlu0 %2444
        %2446 = vrot.lane.b32.xlu0 %v1783, 32
        %v2447 = vpop.permute.xlu0 %2446
        %2448 = vrot.lane.b32.xlu0 %v1787, 32
        %v2449 = vpop.permute.xlu0 %2448
        %2450 = vrot.lane.b32.xlu0 %v1791, 32
        %v2451 = vpop.permute.xlu0 %2450
        %2452 = vrot.lane.b32.xlu0 %v1795, 32
        %v2453 = vpop.permute.xlu0 %2452
        %2454 = vrot.lane.b32.xlu0 %v1799, 32
        %v2455 = vpop.permute.xlu0 %2454
        %2456 = vrot.lane.b32.xlu0 %v1803, 32
        %v2457 = vpop.permute.xlu0 %2456
        %2458 = vrot.lane.b32.xlu0 %v1807, 32
        %v2459 = vpop.permute.xlu0 %2458
        %2460 = vrot.lane.b32.xlu0 %v1811, 32
        %v2461 = vpop.permute.xlu0 %2460
        %2462 = vrot.lane.b32.xlu0 %v1815, 32
        %v2463 = vpop.permute.xlu0 %2462
        %2464 = vrot.lane.b32.xlu0 %v1819, 32
        %v2465 = vpop.permute.xlu0 %2464
        %2466 = vrot.lane.b32.xlu0 %v1823, 32
        %v2467 = vpop.permute.xlu0 %2466
        %2468 = vrot.lane.b32.xlu0 %v1827, 32
        %v2469 = vpop.permute.xlu0 %2468
        %2470 = vrot.lane.b32.xlu0 %v1831, 32
        %v2471 = vpop.permute.xlu0 %2470
        %2472 = vrot.lane.b32.xlu0 %v1835, 32
        %v2473 = vpop.permute.xlu0 %2472
        %2474 = vrot.lane.b32.xlu0 %v1839, 32
        %v2475 = vpop.permute.xlu0 %2474
        %2476 = vrot.lane.b32.xlu0 %v1843, 32
        %v2477 = vpop.permute.xlu0 %2476
        %2478 = vrot.lane.b32.xlu0 %v1847, 32
        %v2479 = vpop.permute.xlu0 %2478
        %2480 = vrot.lane.b32.xlu0 %v1851, 32
        %v2481 = vpop.permute.xlu0 %2480
        %2482 = vrot.lane.b32.xlu0 %v1855, 32
        %v2483 = vpop.permute.xlu0 %2482
        %2484 = vrot.lane.b32.xlu0 %v1859, 32
        %v2485 = vpop.permute.xlu0 %2484
        %2486 = vrot.lane.b32.xlu0 %v1863, 32
        %v2487 = vpop.permute.xlu0 %2486
        %2488 = vrot.lane.b32.xlu0 %v1867, 32
        %v2489 = vpop.permute.xlu0 %2488
        %2490 = vrot.lane.b32.xlu0 %v1871, 32
        %v2491 = vpop.permute.xlu0 %2490
        %2492 = vrot.lane.b32.xlu0 %v1875, 32
        %v2493 = vpop.permute.xlu0 %2492
        %2494 = vrot.lane.b32.xlu0 %v1879, 32
        %v2495 = vpop.permute.xlu0 %2494
        %2524 = vst.msk [vmem:[%s1710 + $0x7] sm:$0x1] %vm1711, %v2441
        %2525 = vst.msk [vmem:[%s1710 + $0x1f] sm:$0x1] %vm1711, %v2443
        %2526 = vst.msk [vmem:[%s1710 + $0x37] sm:$0x1] %vm1711, %v2445
        %2527 = vst.msk [vmem:[%s1710 + $0x4f] sm:$0x1] %vm1711, %v2447
        %2528 = vst.msk [vmem:[%s1710 + $0x67] sm:$0x1] %vm1711, %v2449
        %2529 = vst.msk [vmem:[%s1710 + $0x7f] sm:$0x1] %vm1711, %v2451
        %2530 = vst.msk [vmem:[%s1710 + $0x97] sm:$0x1] %vm1711, %v2453
        %2531 = vst.msk [vmem:[%s1710 + $0xaf] sm:$0x1] %vm1711, %v2455
        %2532 = vst.msk [vmem:[%s1710 + $0xc7] sm:$0x1] %vm1711, %v2457
        %2533 = vst.msk [vmem:[%s1710 + $0xdf] sm:$0x1] %vm1711, %v2459
        %2534 = vst.msk [vmem:[%s1710 + $0xf7] sm:$0x1] %vm1711, %v2461
        %2535 = vst.msk [vmem:[%s1710 + $0x10f] sm:$0x1] %vm1711, %v2463
        %2536 = vst.msk [vmem:[%s1710 + $0x127] sm:$0x1] %vm1711, %v2465
        %2537 = vst.msk [vmem:[%s1710 + $0x13f] sm:$0x1] %vm1711, %v2467
        %2538 = vst.msk [vmem:[%s1710 + $0x187] sm:$0x1] %vm1711, %v2469
        %2539 = vst.msk [vmem:[%s1710 + $0x19f] sm:$0x1] %vm1711, %v2471
        %2540 = vst.msk [vmem:[%s1710 + $0x1b7] sm:$0x1] %vm1711, %v2473
        %2541 = vst.msk [vmem:[%s1710 + $0x1cf] sm:$0x1] %vm1711, %v2475
        %2542 = vst.msk [vmem:[%s1710 + $0x1e7] sm:$0x1] %vm1711, %v2477
        %2543 = vst.msk [vmem:[%s1710 + $0x1ff] sm:$0x1] %vm1711, %v2479
        %2544 = vst.msk [vmem:[%s1710 + $0x217] sm:$0x1] %vm1711, %v2481
        %2545 = vst.msk [vmem:[%s1710 + $0x22f] sm:$0x1] %vm1711, %v2483
        %2546 = vst.msk [vmem:[%s1710 + $0x247] sm:$0x1] %vm1711, %v2485
        %2547 = vst.msk [vmem:[%s1710 + $0x25f] sm:$0x1] %vm1711, %v2487
        %2548 = vst.msk [vmem:[%s1710 + $0x277] sm:$0x1] %vm1711, %v2489
        %2549 = vst.msk [vmem:[%s1710 + $0x28f] sm:$0x1] %vm1711, %v2491
        %2550 = vst.msk [vmem:[%s1710 + $0x2a7] sm:$0x1] %vm1711, %v2493
        %2551 = vst.msk [vmem:[%s1710 + $0x2bf] sm:$0x1] %vm1711, %v2495
        %2552 = vrot.lane.b32.xlu0 %v1771, 16
        %v2553 = vpop.permute.xlu0 %2552
        %2554 = vrot.lane.b32.xlu0 %v1775, 16
        %v2555 = vpop.permute.xlu0 %2554
        %2556 = vrot.lane.b32.xlu0 %v1779, 16
        %v2557 = vpop.permute.xlu0 %2556
        %2558 = vrot.lane.b32.xlu0 %v1783, 16
        %v2559 = vpop.permute.xlu0 %2558
        %2560 = vrot.lane.b32.xlu0 %v1787, 16
        %v2561 = vpop.permute.xlu0 %2560
        %2562 = vrot.lane.b32.xlu0 %v1791, 16
        %v2563 = vpop.permute.xlu0 %2562
        %2564 = vrot.lane.b32.xlu0 %v1795, 16
        %v2565 = vpop.permute.xlu0 %2564
        %2566 = vrot.lane.b32.xlu0 %v1799, 16
        %v2567 = vpop.permute.xlu0 %2566
        %2568 = vrot.lane.b32.xlu0 %v1803, 16
        %v2569 = vpop.permute.xlu0 %2568
        %2570 = vrot.lane.b32.xlu0 %v1807, 16
        %v2571 = vpop.permute.xlu0 %2570
        %2572 = vrot.lane.b32.xlu0 %v1811, 16
        %v2573 = vpop.permute.xlu0 %2572
        %2574 = vrot.lane.b32.xlu0 %v1815, 16
        %v2575 = vpop.permute.xlu0 %2574
        %2576 = vrot.lane.b32.xlu0 %v1819, 16
        %v2577 = vpop.permute.xlu0 %2576
        %2578 = vrot.lane.b32.xlu0 %v1823, 16
        %v2579 = vpop.permute.xlu0 %2578
        %2580 = vrot.lane.b32.xlu0 %v1827, 16
        %v2581 = vpop.permute.xlu0 %2580
        %2582 = vrot.lane.b32.xlu0 %v1831, 16
        %v2583 = vpop.permute.xlu0 %2582
        %2584 = vrot.lane.b32.xlu0 %v1835, 16
        %v2585 = vpop.permute.xlu0 %2584
        %2586 = vrot.lane.b32.xlu0 %v1839, 16
        %v2587 = vpop.permute.xlu0 %2586
        %2588 = vrot.lane.b32.xlu0 %v1843, 16
        %v2589 = vpop.permute.xlu0 %2588
        %2590 = vrot.lane.b32.xlu0 %v1847, 16
        %v2591 = vpop.permute.xlu0 %2590
        %2592 = vrot.lane.b32.xlu0 %v1851, 16
        %v2593 = vpop.permute.xlu0 %2592
        %2594 = vrot.lane.b32.xlu0 %v1855, 16
        %v2595 = vpop.permute.xlu0 %2594
        %2596 = vrot.lane.b32.xlu0 %v1859, 16
        %v2597 = vpop.permute.xlu0 %2596
        %2598 = vrot.lane.b32.xlu0 %v1863, 16
        %v2599 = vpop.permute.xlu0 %2598
        %2600 = vrot.lane.b32.xlu0 %v1867, 16
        %v2601 = vpop.permute.xlu0 %2600
        %2602 = vrot.lane.b32.xlu0 %v1871, 16
        %v2603 = vpop.permute.xlu0 %2602
        %2604 = vrot.lane.b32.xlu0 %v1875, 16
        %v2605 = vpop.permute.xlu0 %2604
        %2606 = vrot.lane.b32.xlu0 %v1879, 16
        %v2607 = vpop.permute.xlu0 %2606
        %2636 = vst.msk [vmem:[%s1710 + $0x8] sm:$0x1] %vm1711, %v2553
        %2637 = vst.msk [vmem:[%s1710 + $0x20] sm:$0x1] %vm1711, %v2555
        %2638 = vst.msk [vmem:[%s1710 + $0x38] sm:$0x1] %vm1711, %v2557
        %2639 = vst.msk [vmem:[%s1710 + $0x50] sm:$0x1] %vm1711, %v2559
        %2640 = vst.msk [vmem:[%s1710 + $0x68] sm:$0x1] %vm1711, %v2561
        %2641 = vst.msk [vmem:[%s1710 + $0x80] sm:$0x1] %vm1711, %v2563
        %2642 = vst.msk [vmem:[%s1710 + $0x98] sm:$0x1] %vm1711, %v2565
        %2643 = vst.msk [vmem:[%s1710 + $0xb0] sm:$0x1] %vm1711, %v2567
        %2644 = vst.msk [vmem:[%s1710 + $0xc8] sm:$0x1] %vm1711, %v2569
        %2645 = vst.msk [vmem:[%s1710 + $0xe0] sm:$0x1] %vm1711, %v2571
        %2646 = vst.msk [vmem:[%s1710 + $0xf8] sm:$0x1] %vm1711, %v2573
        %2647 = vst.msk [vmem:[%s1710 + $0x110] sm:$0x1] %vm1711, %v2575
        %2648 = vst.msk [vmem:[%s1710 + $0x128] sm:$0x1] %vm1711, %v2577
        %2649 = vst.msk [vmem:[%s1710 + $0x140] sm:$0x1] %vm1711, %v2579
        %2650 = vst.msk [vmem:[%s1710 + $0x188] sm:$0x1] %vm1711, %v2581
        %2651 = vst.msk [vmem:[%s1710 + $0x1a0] sm:$0x1] %vm1711, %v2583
        %2652 = vst.msk [vmem:[%s1710 + $0x1b8] sm:$0x1] %vm1711, %v2585
        %2653 = vst.msk [vmem:[%s1710 + $0x1d0] sm:$0x1] %vm1711, %v2587
        %2654 = vst.msk [vmem:[%s1710 + $0x1e8] sm:$0x1] %vm1711, %v2589
        %2655 = vst.msk [vmem:[%s1710 + $0x200] sm:$0x1] %vm1711, %v2591
        %2656 = vst.msk [vmem:[%s1710 + $0x218] sm:$0x1] %vm1711, %v2593
        %2657 = vst.msk [vmem:[%s1710 + $0x230] sm:$0x1] %vm1711, %v2595
        %2658 = vst.msk [vmem:[%s1710 + $0x248] sm:$0x1] %vm1711, %v2597
        %2659 = vst.msk [vmem:[%s1710 + $0x260] sm:$0x1] %vm1711, %v2599
        %2660 = vst.msk [vmem:[%s1710 + $0x278] sm:$0x1] %vm1711, %v2601
        %2661 = vst.msk [vmem:[%s1710 + $0x290] sm:$0x1] %vm1711, %v2603
        %2662 = vst.msk [vmem:[%s1710 + $0x2a8] sm:$0x1] %vm1711, %v2605
        %2663 = vst.msk [vmem:[%s1710 + $0x2c0] sm:$0x1] %vm1711, %v2607
        %v2664 = vrot.slane %v1444, 2
        %v2665 = vrot.slane %v1445, 2
        %v2666 = vrot.slane %v1446, 2
        %v2667 = vrot.slane %v1447, 2
        %v2668 = vrot.slane %v1448, 2
        %v2669 = vrot.slane %v1449, 2
        %v2670 = vrot.slane %v1450, 2
        %v2671 = vrot.slane %v1451, 2
        %v2672 = vrot.slane %v1452, 2
        %v2673 = vrot.slane %v1453, 2
        %v2674 = vrot.slane %v1454, 2
        %v2675 = vrot.slane %v1455, 2
        %v2676 = vrot.slane %v1456, 2
        %v2677 = vrot.slane %v1457, 2
        %v2678 = vrot.slane %v1458, 2
        %v2679 = vrot.slane %v1459, 2
        %v2680 = vrot.slane %v1460, 2
        %v2681 = vrot.slane %v1461, 2
        %v2682 = vrot.slane %v1462, 2
        %v2683 = vrot.slane %v1463, 2
        %v2684 = vrot.slane %v1464, 2
        %v2685 = vrot.slane %v1465, 2
        %v2686 = vrot.slane %v1466, 2
        %v2687 = vrot.slane %v1467, 2
        %v2688 = vrot.slane %v1468, 2
        %v2689 = vrot.slane %v1469, 2
        %v2690 = vrot.slane %v1470, 2
        %v2691 = vrot.slane %v1471, 2
        %v2720 = vrot.slane %v1599, 2
        %v2721 = vrot.slane %v1601, 2
        %v2722 = vrot.slane %v1603, 2
        %v2723 = vrot.slane %v1605, 2
        %v2724 = vrot.slane %v1607, 2
        %v2725 = vrot.slane %v1609, 2
        %v2726 = vrot.slane %v1611, 2
        %v2727 = vrot.slane %v1613, 2
        %v2728 = vrot.slane %v1615, 2
        %v2729 = vrot.slane %v1617, 2
        %v2730 = vrot.slane %v1619, 2
        %v2731 = vrot.slane %v1621, 2
        %v2732 = vrot.slane %v1623, 2
        %v2733 = vrot.slane %v1625, 2
        %v2734 = vrot.slane %v1627, 2
        %v2735 = vrot.slane %v1629, 2
        %v2736 = vrot.slane %v1631, 2
        %v2737 = vrot.slane %v1633, 2
        %v2738 = vrot.slane %v1635, 2
        %v2739 = vrot.slane %v1637, 2
        %v2740 = vrot.slane %v1639, 2
        %v2741 = vrot.slane %v1641, 2
        %v2742 = vrot.slane %v1643, 2
        %v2743 = vrot.slane %v1645, 2
        %v2744 = vrot.slane %v1647, 2
        %v2745 = vrot.slane %v1649, 2
        %v2746 = vrot.slane %v1651, 2
        %v2747 = vrot.slane %v1653, 2
        %v2776 = vmax.f32 %v2664, %v2720
        %v2777 = vmax.f32 %v2665, %v2721
        %v2778 = vmax.f32 %v2666, %v2722
        %v2779 = vmax.f32 %v2667, %v2723
        %v2780 = vmax.f32 %v2668, %v2724
        %v2781 = vmax.f32 %v2669, %v2725
        %v2782 = vmax.f32 %v2670, %v2726
        %v2783 = vmax.f32 %v2671, %v2727
        %v2784 = vmax.f32 %v2672, %v2728
        %v2785 = vmax.f32 %v2673, %v2729
        %v2786 = vmax.f32 %v2674, %v2730
        %v2787 = vmax.f32 %v2675, %v2731
        %v2788 = vmax.f32 %v2676, %v2732
        %v2789 = vmax.f32 %v2677, %v2733
        %v2790 = vmax.f32 %v2678, %v2734
        %v2791 = vmax.f32 %v2679, %v2735
        %v2792 = vmax.f32 %v2680, %v2736
        %v2793 = vmax.f32 %v2681, %v2737
        %v2794 = vmax.f32 %v2682, %v2738
        %v2795 = vmax.f32 %v2683, %v2739
        %v2796 = vmax.f32 %v2684, %v2740
        %v2797 = vmax.f32 %v2685, %v2741
        %v2798 = vmax.f32 %v2686, %v2742
        %v2799 = vmax.f32 %v2687, %v2743
        %v2800 = vmax.f32 %v2688, %v2744
        %v2801 = vmax.f32 %v2689, %v2745
        %v2802 = vmax.f32 %v2690, %v2746
        %v2803 = vmax.f32 %v2691, %v2747
        %2804 = vst.msk [vmem:[%s1710 + $0x9] sm:$0x1] %vm1711, %v2776
        %2805 = vst.msk [vmem:[%s1710 + $0x21] sm:$0x1] %vm1711, %v2777
        %2806 = vst.msk [vmem:[%s1710 + $0x39] sm:$0x1] %vm1711, %v2778
        %2807 = vst.msk [vmem:[%s1710 + $0x51] sm:$0x1] %vm1711, %v2779
        %2808 = vst.msk [vmem:[%s1710 + $0x69] sm:$0x1] %vm1711, %v2780
        %2809 = vst.msk [vmem:[%s1710 + $0x81] sm:$0x1] %vm1711, %v2781
        %2810 = vst.msk [vmem:[%s1710 + $0x99] sm:$0x1] %vm1711, %v2782
        %2811 = vst.msk [vmem:[%s1710 + $0xb1] sm:$0x1] %vm1711, %v2783
        %2812 = vst.msk [vmem:[%s1710 + $0xc9] sm:$0x1] %vm1711, %v2784
        %2813 = vst.msk [vmem:[%s1710 + $0xe1] sm:$0x1] %vm1711, %v2785
        %2814 = vst.msk [vmem:[%s1710 + $0xf9] sm:$0x1] %vm1711, %v2786
        %2815 = vst.msk [vmem:[%s1710 + $0x111] sm:$0x1] %vm1711, %v2787
        %2816 = vst.msk [vmem:[%s1710 + $0x129] sm:$0x1] %vm1711, %v2788
        %2817 = vst.msk [vmem:[%s1710 + $0x141] sm:$0x1] %vm1711, %v2789
        %2818 = vst.msk [vmem:[%s1710 + $0x189] sm:$0x1] %vm1711, %v2790
        %2819 = vst.msk [vmem:[%s1710 + $0x1a1] sm:$0x1] %vm1711, %v2791
        %2820 = vst.msk [vmem:[%s1710 + $0x1b9] sm:$0x1] %vm1711, %v2792
        %2821 = vst.msk [vmem:[%s1710 + $0x1d1] sm:$0x1] %vm1711, %v2793
        %2822 = vst.msk [vmem:[%s1710 + $0x1e9] sm:$0x1] %vm1711, %v2794
        %2823 = vst.msk [vmem:[%s1710 + $0x201] sm:$0x1] %vm1711, %v2795
        %2824 = vst.msk [vmem:[%s1710 + $0x219] sm:$0x1] %vm1711, %v2796
        %2825 = vst.msk [vmem:[%s1710 + $0x231] sm:$0x1] %vm1711, %v2797
        %2826 = vst.msk [vmem:[%s1710 + $0x249] sm:$0x1] %vm1711, %v2798
        %2827 = vst.msk [vmem:[%s1710 + $0x261] sm:$0x1] %vm1711, %v2799
        %2828 = vst.msk [vmem:[%s1710 + $0x279] sm:$0x1] %vm1711, %v2800
        %2829 = vst.msk [vmem:[%s1710 + $0x291] sm:$0x1] %vm1711, %v2801
        %2830 = vst.msk [vmem:[%s1710 + $0x2a9] sm:$0x1] %vm1711, %v2802
        %2831 = vst.msk [vmem:[%s1710 + $0x2c1] sm:$0x1] %vm1711, %v2803
        %2832 = vrot.lane.b32.xlu0 %v1444, 112
        %v2833 = vpop.permute.xlu0 %2832
        %2834 = vrot.lane.b32.xlu0 %v1445, 112
        %v2835 = vpop.permute.xlu0 %2834
        %2836 = vrot.lane.b32.xlu0 %v1446, 112
        %v2837 = vpop.permute.xlu0 %2836
        %2838 = vrot.lane.b32.xlu0 %v1447, 112
        %v2839 = vpop.permute.xlu0 %2838
        %2840 = vrot.lane.b32.xlu0 %v1448, 112
        %v2841 = vpop.permute.xlu0 %2840
        %2842 = vrot.lane.b32.xlu0 %v1449, 112
        %v2843 = vpop.permute.xlu0 %2842
        %2844 = vrot.lane.b32.xlu0 %v1450, 112
        %v2845 = vpop.permute.xlu0 %2844
        %2846 = vrot.lane.b32.xlu0 %v1451, 112
        %v2847 = vpop.permute.xlu0 %2846
        %2848 = vrot.lane.b32.xlu0 %v1452, 112
        %v2849 = vpop.permute.xlu0 %2848
        %2850 = vrot.lane.b32.xlu0 %v1453, 112
        %v2851 = vpop.permute.xlu0 %2850
        %2852 = vrot.lane.b32.xlu0 %v1454, 112
        %v2853 = vpop.permute.xlu0 %2852
        %2854 = vrot.lane.b32.xlu0 %v1455, 112
        %v2855 = vpop.permute.xlu0 %2854
        %2856 = vrot.lane.b32.xlu0 %v1456, 112
        %v2857 = vpop.permute.xlu0 %2856
        %2858 = vrot.lane.b32.xlu0 %v1457, 112
        %v2859 = vpop.permute.xlu0 %2858
        %2860 = vrot.lane.b32.xlu0 %v1458, 112
        %v2861 = vpop.permute.xlu0 %2860
        %2862 = vrot.lane.b32.xlu0 %v1459, 112
        %v2863 = vpop.permute.xlu0 %2862
        %2864 = vrot.lane.b32.xlu0 %v1460, 112
        %v2865 = vpop.permute.xlu0 %2864
        %2866 = vrot.lane.b32.xlu0 %v1461, 112
        %v2867 = vpop.permute.xlu0 %2866
        %2868 = vrot.lane.b32.xlu0 %v1462, 112
        %v2869 = vpop.permute.xlu0 %2868
        %2870 = vrot.lane.b32.xlu0 %v1463, 112
        %v2871 = vpop.permute.xlu0 %2870
        %2872 = vrot.lane.b32.xlu0 %v1464, 112
        %v2873 = vpop.permute.xlu0 %2872
        %2874 = vrot.lane.b32.xlu0 %v1465, 112
        %v2875 = vpop.permute.xlu0 %2874
        %2876 = vrot.lane.b32.xlu0 %v1466, 112
        %v2877 = vpop.permute.xlu0 %2876
        %2878 = vrot.lane.b32.xlu0 %v1467, 112
        %v2879 = vpop.permute.xlu0 %2878
        %2880 = vrot.lane.b32.xlu0 %v1468, 112
        %v2881 = vpop.permute.xlu0 %2880
        %2882 = vrot.lane.b32.xlu0 %v1469, 112
        %v2883 = vpop.permute.xlu0 %2882
        %2884 = vrot.lane.b32.xlu0 %v1470, 112
        %v2885 = vpop.permute.xlu0 %2884
        %2886 = vrot.lane.b32.xlu0 %v1471, 112
        %v2887 = vpop.permute.xlu0 %2886
        %v2888 = vrot.slane %v2833, 2
        %v2889 = vrot.slane %v2835, 2
        %v2890 = vrot.slane %v2837, 2
        %v2891 = vrot.slane %v2839, 2
        %v2892 = vrot.slane %v2841, 2
        %v2893 = vrot.slane %v2843, 2
        %v2894 = vrot.slane %v2845, 2
        %v2895 = vrot.slane %v2847, 2
        %v2896 = vrot.slane %v2849, 2
        %v2897 = vrot.slane %v2851, 2
        %v2898 = vrot.slane %v2853, 2
        %v2899 = vrot.slane %v2855, 2
        %v2900 = vrot.slane %v2857, 2
        %v2901 = vrot.slane %v2859, 2
        %v2902 = vrot.slane %v2861, 2
        %v2903 = vrot.slane %v2863, 2
        %v2904 = vrot.slane %v2865, 2
        %v2905 = vrot.slane %v2867, 2
        %v2906 = vrot.slane %v2869, 2
        %v2907 = vrot.slane %v2871, 2
        %v2908 = vrot.slane %v2873, 2
        %v2909 = vrot.slane %v2875, 2
        %v2910 = vrot.slane %v2877, 2
        %v2911 = vrot.slane %v2879, 2
        %v2912 = vrot.slane %v2881, 2
        %v2913 = vrot.slane %v2883, 2
        %v2914 = vrot.slane %v2885, 2
        %v2915 = vrot.slane %v2887, 2
        %2944 = vrot.lane.b32.xlu0 %v1444, 104
        %v2945 = vpop.permute.xlu0 %2944
        %2946 = vrot.lane.b32.xlu0 %v1445, 104
        %v2947 = vpop.permute.xlu0 %2946
        %2948 = vrot.lane.b32.xlu0 %v1446, 104
        %v2949 = vpop.permute.xlu0 %2948
        %2950 = vrot.lane.b32.xlu0 %v1447, 104
        %v2951 = vpop.permute.xlu0 %2950
        %2952 = vrot.lane.b32.xlu0 %v1448, 104
        %v2953 = vpop.permute.xlu0 %2952
        %2954 = vrot.lane.b32.xlu0 %v1449, 104
        %v2955 = vpop.permute.xlu0 %2954
        %2956 = vrot.lane.b32.xlu0 %v1450, 104
        %v2957 = vpop.permute.xlu0 %2956
        %2958 = vrot.lane.b32.xlu0 %v1451, 104
        %v2959 = vpop.permute.xlu0 %2958
        %2960 = vrot.lane.b32.xlu0 %v1452, 104
        %v2961 = vpop.permute.xlu0 %2960
        %2962 = vrot.lane.b32.xlu0 %v1453, 104
        %v2963 = vpop.permute.xlu0 %2962
        %2964 = vrot.lane.b32.xlu0 %v1454, 104
        %v2965 = vpop.permute.xlu0 %2964
        %2966 = vrot.lane.b32.xlu0 %v1455, 104
        %v2967 = vpop.permute.xlu0 %2966
        %2968 = vrot.lane.b32.xlu0 %v1456, 104
        %v2969 = vpop.permute.xlu0 %2968
        %2970 = vrot.lane.b32.xlu0 %v1457, 104
        %v2971 = vpop.permute.xlu0 %2970
        %2972 = vrot.lane.b32.xlu0 %v1458, 104
        %v2973 = vpop.permute.xlu0 %2972
        %2974 = vrot.lane.b32.xlu0 %v1459, 104
        %v2975 = vpop.permute.xlu0 %2974
        %2976 = vrot.lane.b32.xlu0 %v1460, 104
        %v2977 = vpop.permute.xlu0 %2976
        %2978 = vrot.lane.b32.xlu0 %v1461, 104
        %v2979 = vpop.permute.xlu0 %2978
        %2980 = vrot.lane.b32.xlu0 %v1462, 104
        %v2981 = vpop.permute.xlu0 %2980
        %2982 = vrot.lane.b32.xlu0 %v1463, 104
        %v2983 = vpop.permute.xlu0 %2982
        %2984 = vrot.lane.b32.xlu0 %v1464, 104
        %v2985 = vpop.permute.xlu0 %2984
        %2986 = vrot.lane.b32.xlu0 %v1465, 104
        %v2987 = vpop.permute.xlu0 %2986
        %2988 = vrot.lane.b32.xlu0 %v1466, 104
        %v2989 = vpop.permute.xlu0 %2988
        %2990 = vrot.lane.b32.xlu0 %v1467, 104
        %v2991 = vpop.permute.xlu0 %2990
        %2992 = vrot.lane.b32.xlu0 %v1468, 104
        %v2993 = vpop.permute.xlu0 %2992
        %2994 = vrot.lane.b32.xlu0 %v1469, 104
        %v2995 = vpop.permute.xlu0 %2994
        %2996 = vrot.lane.b32.xlu0 %v1470, 104
        %v2997 = vpop.permute.xlu0 %2996
        %2998 = vrot.lane.b32.xlu0 %v1471, 104
        %v2999 = vpop.permute.xlu0 %2998
        %v3000 = vrot.slane %v2945, 2
        %v3001 = vrot.slane %v2947, 2
        %v3002 = vrot.slane %v2949, 2
        %v3003 = vrot.slane %v2951, 2
        %v3004 = vrot.slane %v2953, 2
        %v3005 = vrot.slane %v2955, 2
        %v3006 = vrot.slane %v2957, 2
        %v3007 = vrot.slane %v2959, 2
        %v3008 = vrot.slane %v2961, 2
        %v3009 = vrot.slane %v2963, 2
        %v3010 = vrot.slane %v2965, 2
        %v3011 = vrot.slane %v2967, 2
        %v3012 = vrot.slane %v2969, 2
        %v3013 = vrot.slane %v2971, 2
        %v3014 = vrot.slane %v2973, 2
        %v3015 = vrot.slane %v2975, 2
        %v3016 = vrot.slane %v2977, 2
        %v3017 = vrot.slane %v2979, 2
        %v3018 = vrot.slane %v2981, 2
        %v3019 = vrot.slane %v2983, 2
        %v3020 = vrot.slane %v2985, 2
        %v3021 = vrot.slane %v2987, 2
        %v3022 = vrot.slane %v2989, 2
        %v3023 = vrot.slane %v2991, 2
        %v3024 = vrot.slane %v2993, 2
        %v3025 = vrot.slane %v2995, 2
        %v3026 = vrot.slane %v2997, 2
        %v3027 = vrot.slane %v2999, 2
        %v3056 = vmax.f32 %v2888, %v3000
        %v3057 = vmax.f32 %v2889, %v3001
        %v3058 = vmax.f32 %v2890, %v3002
        %v3059 = vmax.f32 %v2891, %v3003
        %v3060 = vmax.f32 %v2892, %v3004
        %v3061 = vmax.f32 %v2893, %v3005
        %v3062 = vmax.f32 %v2894, %v3006
        %v3063 = vmax.f32 %v2895, %v3007
        %v3064 = vmax.f32 %v2896, %v3008
        %v3065 = vmax.f32 %v2897, %v3009
        %v3066 = vmax.f32 %v2898, %v3010
        %v3067 = vmax.f32 %v2899, %v3011
        %v3068 = vmax.f32 %v2900, %v3012
        %v3069 = vmax.f32 %v2901, %v3013
        %v3070 = vmax.f32 %v2902, %v3014
        %v3071 = vmax.f32 %v2903, %v3015
        %v3072 = vmax.f32 %v2904, %v3016
        %v3073 = vmax.f32 %v2905, %v3017
        %v3074 = vmax.f32 %v2906, %v3018
        %v3075 = vmax.f32 %v2907, %v3019
        %v3076 = vmax.f32 %v2908, %v3020
        %v3077 = vmax.f32 %v2909, %v3021
        %v3078 = vmax.f32 %v2910, %v3022
        %v3079 = vmax.f32 %v2911, %v3023
        %v3080 = vmax.f32 %v2912, %v3024
        %v3081 = vmax.f32 %v2913, %v3025
        %v3082 = vmax.f32 %v2914, %v3026
        %v3083 = vmax.f32 %v2915, %v3027
        %3084 = vst.msk [vmem:[%s1710 + $0xa] sm:$0x1] %vm1711, %v3056
        %3085 = vst.msk [vmem:[%s1710 + $0x22] sm:$0x1] %vm1711, %v3057
        %3086 = vst.msk [vmem:[%s1710 + $0x3a] sm:$0x1] %vm1711, %v3058
        %3087 = vst.msk [vmem:[%s1710 + $0x52] sm:$0x1] %vm1711, %v3059
        %3088 = vst.msk [vmem:[%s1710 + $0x6a] sm:$0x1] %vm1711, %v3060
        %3089 = vst.msk [vmem:[%s1710 + $0x82] sm:$0x1] %vm1711, %v3061
        %3090 = vst.msk [vmem:[%s1710 + $0x9a] sm:$0x1] %vm1711, %v3062
        %3091 = vst.msk [vmem:[%s1710 + $0xb2] sm:$0x1] %vm1711, %v3063
        %3092 = vst.msk [vmem:[%s1710 + $0xca] sm:$0x1] %vm1711, %v3064
        %3093 = vst.msk [vmem:[%s1710 + $0xe2] sm:$0x1] %vm1711, %v3065
        %3094 = vst.msk [vmem:[%s1710 + $0xfa] sm:$0x1] %vm1711, %v3066
        %3095 = vst.msk [vmem:[%s1710 + $0x112] sm:$0x1] %vm1711, %v3067
        %3096 = vst.msk [vmem:[%s1710 + $0x12a] sm:$0x1] %vm1711, %v3068
        %3097 = vst.msk [vmem:[%s1710 + $0x142] sm:$0x1] %vm1711, %v3069
        %3098 = vst.msk [vmem:[%s1710 + $0x18a] sm:$0x1] %vm1711, %v3070
        %3099 = vst.msk [vmem:[%s1710 + $0x1a2] sm:$0x1] %vm1711, %v3071
        %3100 = vst.msk [vmem:[%s1710 + $0x1ba] sm:$0x1] %vm1711, %v3072
        %3101 = vst.msk [vmem:[%s1710 + $0x1d2] sm:$0x1] %vm1711, %v3073
        %3102 = vst.msk [vmem:[%s1710 + $0x1ea] sm:$0x1] %vm1711, %v3074
        %3103 = vst.msk [vmem:[%s1710 + $0x202] sm:$0x1] %vm1711, %v3075
        %3104 = vst.msk [vmem:[%s1710 + $0x21a] sm:$0x1] %vm1711, %v3076
        %3105 = vst.msk [vmem:[%s1710 + $0x232] sm:$0x1] %vm1711, %v3077
        %3106 = vst.msk [vmem:[%s1710 + $0x24a] sm:$0x1] %vm1711, %v3078
        %3107 = vst.msk [vmem:[%s1710 + $0x262] sm:$0x1] %vm1711, %v3079
        %3108 = vst.msk [vmem:[%s1710 + $0x27a] sm:$0x1] %vm1711, %v3080
        %3109 = vst.msk [vmem:[%s1710 + $0x292] sm:$0x1] %vm1711, %v3081
        %3110 = vst.msk [vmem:[%s1710 + $0x2aa] sm:$0x1] %vm1711, %v3082
        %3111 = vst.msk [vmem:[%s1710 + $0x2c2] sm:$0x1] %vm1711, %v3083
        %3112 = vrot.lane.b32.xlu0 %v1444, 96
        %v3113 = vpop.permute.xlu0 %3112
        %3114 = vrot.lane.b32.xlu0 %v1445, 96
        %v3115 = vpop.permute.xlu0 %3114
        %3116 = vrot.lane.b32.xlu0 %v1446, 96
        %v3117 = vpop.permute.xlu0 %3116
        %3118 = vrot.lane.b32.xlu0 %v1447, 96
        %v3119 = vpop.permute.xlu0 %3118
        %3120 = vrot.lane.b32.xlu0 %v1448, 96
        %v3121 = vpop.permute.xlu0 %3120
        %3122 = vrot.lane.b32.xlu0 %v1449, 96
        %v3123 = vpop.permute.xlu0 %3122
        %3124 = vrot.lane.b32.xlu0 %v1450, 96
        %v3125 = vpop.permute.xlu0 %3124
        %3126 = vrot.lane.b32.xlu0 %v1451, 96
        %v3127 = vpop.permute.xlu0 %3126
        %3128 = vrot.lane.b32.xlu0 %v1452, 96
        %v3129 = vpop.permute.xlu0 %3128
        %3130 = vrot.lane.b32.xlu0 %v1453, 96
        %v3131 = vpop.permute.xlu0 %3130
        %3132 = vrot.lane.b32.xlu0 %v1454, 96
        %v3133 = vpop.permute.xlu0 %3132
        %3134 = vrot.lane.b32.xlu0 %v1455, 96
        %v3135 = vpop.permute.xlu0 %3134
        %3136 = vrot.lane.b32.xlu0 %v1456, 96
        %v3137 = vpop.permute.xlu0 %3136
        %3138 = vrot.lane.b32.xlu0 %v1457, 96
        %v3139 = vpop.permute.xlu0 %3138
        %3140 = vrot.lane.b32.xlu0 %v1458, 96
        %v3141 = vpop.permute.xlu0 %3140
        %3142 = vrot.lane.b32.xlu0 %v1459, 96
        %v3143 = vpop.permute.xlu0 %3142
        %3144 = vrot.lane.b32.xlu0 %v1460, 96
        %v3145 = vpop.permute.xlu0 %3144
        %3146 = vrot.lane.b32.xlu0 %v1461, 96
        %v3147 = vpop.permute.xlu0 %3146
        %3148 = vrot.lane.b32.xlu0 %v1462, 96
        %v3149 = vpop.permute.xlu0 %3148
        %3150 = vrot.lane.b32.xlu0 %v1463, 96
        %v3151 = vpop.permute.xlu0 %3150
        %3152 = vrot.lane.b32.xlu0 %v1464, 96
        %v3153 = vpop.permute.xlu0 %3152
        %3154 = vrot.lane.b32.xlu0 %v1465, 96
        %v3155 = vpop.permute.xlu0 %3154
        %3156 = vrot.lane.b32.xlu0 %v1466, 96
        %v3157 = vpop.permute.xlu0 %3156
        %3158 = vrot.lane.b32.xlu0 %v1467, 96
        %v3159 = vpop.permute.xlu0 %3158
        %3160 = vrot.lane.b32.xlu0 %v1468, 96
        %v3161 = vpop.permute.xlu0 %3160
        %3162 = vrot.lane.b32.xlu0 %v1469, 96
        %v3163 = vpop.permute.xlu0 %3162
        %3164 = vrot.lane.b32.xlu0 %v1470, 96
        %v3165 = vpop.permute.xlu0 %3164
        %3166 = vrot.lane.b32.xlu0 %v1471, 96
        %v3167 = vpop.permute.xlu0 %3166
        %v3168 = vrot.slane %v3113, 2
        %v3169 = vrot.slane %v3115, 2
        %v3170 = vrot.slane %v3117, 2
        %v3171 = vrot.slane %v3119, 2
        %v3172 = vrot.slane %v3121, 2
        %v3173 = vrot.slane %v3123, 2
        %v3174 = vrot.slane %v3125, 2
        %v3175 = vrot.slane %v3127, 2
        %v3176 = vrot.slane %v3129, 2
        %v3177 = vrot.slane %v3131, 2
        %v3178 = vrot.slane %v3133, 2
        %v3179 = vrot.slane %v3135, 2
        %v3180 = vrot.slane %v3137, 2
        %v3181 = vrot.slane %v3139, 2
        %v3182 = vrot.slane %v3141, 2
        %v3183 = vrot.slane %v3143, 2
        %v3184 = vrot.slane %v3145, 2
        %v3185 = vrot.slane %v3147, 2
        %v3186 = vrot.slane %v3149, 2
        %v3187 = vrot.slane %v3151, 2
        %v3188 = vrot.slane %v3153, 2
        %v3189 = vrot.slane %v3155, 2
        %v3190 = vrot.slane %v3157, 2
        %v3191 = vrot.slane %v3159, 2
        %v3192 = vrot.slane %v3161, 2
        %v3193 = vrot.slane %v3163, 2
        %v3194 = vrot.slane %v3165, 2
        %v3195 = vrot.slane %v3167, 2
        %3224 = vrot.lane.b32.xlu0 %v1444, 88
        %v3225 = vpop.permute.xlu0 %3224
        %3226 = vrot.lane.b32.xlu0 %v1445, 88
        %v3227 = vpop.permute.xlu0 %3226
        %3228 = vrot.lane.b32.xlu0 %v1446, 88
        %v3229 = vpop.permute.xlu0 %3228
        %3230 = vrot.lane.b32.xlu0 %v1447, 88
        %v3231 = vpop.permute.xlu0 %3230
        %3232 = vrot.lane.b32.xlu0 %v1448, 88
        %v3233 = vpop.permute.xlu0 %3232
        %3234 = vrot.lane.b32.xlu0 %v1449, 88
        %v3235 = vpop.permute.xlu0 %3234
        %3236 = vrot.lane.b32.xlu0 %v1450, 88
        %v3237 = vpop.permute.xlu0 %3236
        %3238 = vrot.lane.b32.xlu0 %v1451, 88
        %v3239 = vpop.permute.xlu0 %3238
        %3240 = vrot.lane.b32.xlu0 %v1452, 88
        %v3241 = vpop.permute.xlu0 %3240
        %3242 = vrot.lane.b32.xlu0 %v1453, 88
        %v3243 = vpop.permute.xlu0 %3242
        %3244 = vrot.lane.b32.xlu0 %v1454, 88
        %v3245 = vpop.permute.xlu0 %3244
        %3246 = vrot.lane.b32.xlu0 %v1455, 88
        %v3247 = vpop.permute.xlu0 %3246
        %3248 = vrot.lane.b32.xlu0 %v1456, 88
        %v3249 = vpop.permute.xlu0 %3248
        %3250 = vrot.lane.b32.xlu0 %v1457, 88
        %v3251 = vpop.permute.xlu0 %3250
        %3252 = vrot.lane.b32.xlu0 %v1458, 88
        %v3253 = vpop.permute.xlu0 %3252
        %3254 = vrot.lane.b32.xlu0 %v1459, 88
        %v3255 = vpop.permute.xlu0 %3254
        %3256 = vrot.lane.b32.xlu0 %v1460, 88
        %v3257 = vpop.permute.xlu0 %3256
        %3258 = vrot.lane.b32.xlu0 %v1461, 88
        %v3259 = vpop.permute.xlu0 %3258
        %3260 = vrot.lane.b32.xlu0 %v1462, 88
        %v3261 = vpop.permute.xlu0 %3260
        %3262 = vrot.lane.b32.xlu0 %v1463, 88
        %v3263 = vpop.permute.xlu0 %3262
        %3264 = vrot.lane.b32.xlu0 %v1464, 88
        %v3265 = vpop.permute.xlu0 %3264
        %3266 = vrot.lane.b32.xlu0 %v1465, 88
        %v3267 = vpop.permute.xlu0 %3266
        %3268 = vrot.lane.b32.xlu0 %v1466, 88
        %v3269 = vpop.permute.xlu0 %3268
        %3270 = vrot.lane.b32.xlu0 %v1467, 88
        %v3271 = vpop.permute.xlu0 %3270
        %3272 = vrot.lane.b32.xlu0 %v1468, 88
        %v3273 = vpop.permute.xlu0 %3272
        %3274 = vrot.lane.b32.xlu0 %v1469, 88
        %v3275 = vpop.permute.xlu0 %3274
        %3276 = vrot.lane.b32.xlu0 %v1470, 88
        %v3277 = vpop.permute.xlu0 %3276
        %3278 = vrot.lane.b32.xlu0 %v1471, 88
        %v3279 = vpop.permute.xlu0 %3278
        %v3280 = vrot.slane %v3225, 2
        %v3281 = vrot.slane %v3227, 2
        %v3282 = vrot.slane %v3229, 2
        %v3283 = vrot.slane %v3231, 2
        %v3284 = vrot.slane %v3233, 2
        %v3285 = vrot.slane %v3235, 2
        %v3286 = vrot.slane %v3237, 2
        %v3287 = vrot.slane %v3239, 2
        %v3288 = vrot.slane %v3241, 2
        %v3289 = vrot.slane %v3243, 2
        %v3290 = vrot.slane %v3245, 2
        %v3291 = vrot.slane %v3247, 2
        %v3292 = vrot.slane %v3249, 2
        %v3293 = vrot.slane %v3251, 2
        %v3294 = vrot.slane %v3253, 2
        %v3295 = vrot.slane %v3255, 2
        %v3296 = vrot.slane %v3257, 2
        %v3297 = vrot.slane %v3259, 2
        %v3298 = vrot.slane %v3261, 2
        %v3299 = vrot.slane %v3263, 2
        %v3300 = vrot.slane %v3265, 2
        %v3301 = vrot.slane %v3267, 2
        %v3302 = vrot.slane %v3269, 2
        %v3303 = vrot.slane %v3271, 2
        %v3304 = vrot.slane %v3273, 2
        %v3305 = vrot.slane %v3275, 2
        %v3306 = vrot.slane %v3277, 2
        %v3307 = vrot.slane %v3279, 2
        %v3336 = vmax.f32 %v3168, %v3280
        %v3337 = vmax.f32 %v3169, %v3281
        %v3338 = vmax.f32 %v3170, %v3282
        %v3339 = vmax.f32 %v3171, %v3283
        %v3340 = vmax.f32 %v3172, %v3284
        %v3341 = vmax.f32 %v3173, %v3285
        %v3342 = vmax.f32 %v3174, %v3286
        %v3343 = vmax.f32 %v3175, %v3287
        %v3344 = vmax.f32 %v3176, %v3288
        %v3345 = vmax.f32 %v3177, %v3289
        %v3346 = vmax.f32 %v3178, %v3290
        %v3347 = vmax.f32 %v3179, %v3291
        %v3348 = vmax.f32 %v3180, %v3292
        %v3349 = vmax.f32 %v3181, %v3293
        %v3350 = vmax.f32 %v3182, %v3294
        %v3351 = vmax.f32 %v3183, %v3295
        %v3352 = vmax.f32 %v3184, %v3296
        %v3353 = vmax.f32 %v3185, %v3297
        %v3354 = vmax.f32 %v3186, %v3298
        %v3355 = vmax.f32 %v3187, %v3299
        %v3356 = vmax.f32 %v3188, %v3300
        %v3357 = vmax.f32 %v3189, %v3301
        %v3358 = vmax.f32 %v3190, %v3302
        %v3359 = vmax.f32 %v3191, %v3303
        %v3360 = vmax.f32 %v3192, %v3304
        %v3361 = vmax.f32 %v3193, %v3305
        %v3362 = vmax.f32 %v3194, %v3306
        %v3363 = vmax.f32 %v3195, %v3307
        %3364 = vst.msk [vmem:[%s1710 + $0xb] sm:$0x1] %vm1711, %v3336
        %3365 = vst.msk [vmem:[%s1710 + $0x23] sm:$0x1] %vm1711, %v3337
        %3366 = vst.msk [vmem:[%s1710 + $0x3b] sm:$0x1] %vm1711, %v3338
        %3367 = vst.msk [vmem:[%s1710 + $0x53] sm:$0x1] %vm1711, %v3339
        %3368 = vst.msk [vmem:[%s1710 + $0x6b] sm:$0x1] %vm1711, %v3340
        %3369 = vst.msk [vmem:[%s1710 + $0x83] sm:$0x1] %vm1711, %v3341
        %3370 = vst.msk [vmem:[%s1710 + $0x9b] sm:$0x1] %vm1711, %v3342
        %3371 = vst.msk [vmem:[%s1710 + $0xb3] sm:$0x1] %vm1711, %v3343
        %3372 = vst.msk [vmem:[%s1710 + $0xcb] sm:$0x1] %vm1711, %v3344
        %3373 = vst.msk [vmem:[%s1710 + $0xe3] sm:$0x1] %vm1711, %v3345
        %3374 = vst.msk [vmem:[%s1710 + $0xfb] sm:$0x1] %vm1711, %v3346
        %3375 = vst.msk [vmem:[%s1710 + $0x113] sm:$0x1] %vm1711, %v3347
        %3376 = vst.msk [vmem:[%s1710 + $0x12b] sm:$0x1] %vm1711, %v3348
        %3377 = vst.msk [vmem:[%s1710 + $0x143] sm:$0x1] %vm1711, %v3349
        %3378 = vst.msk [vmem:[%s1710 + $0x18b] sm:$0x1] %vm1711, %v3350
        %3379 = vst.msk [vmem:[%s1710 + $0x1a3] sm:$0x1] %vm1711, %v3351
        %3380 = vst.msk [vmem:[%s1710 + $0x1bb] sm:$0x1] %vm1711, %v3352
        %3381 = vst.msk [vmem:[%s1710 + $0x1d3] sm:$0x1] %vm1711, %v3353
        %3382 = vst.msk [vmem:[%s1710 + $0x1eb] sm:$0x1] %vm1711, %v3354
        %3383 = vst.msk [vmem:[%s1710 + $0x203] sm:$0x1] %vm1711, %v3355
        %3384 = vst.msk [vmem:[%s1710 + $0x21b] sm:$0x1] %vm1711, %v3356
        %3385 = vst.msk [vmem:[%s1710 + $0x233] sm:$0x1] %vm1711, %v3357
        %3386 = vst.msk [vmem:[%s1710 + $0x24b] sm:$0x1] %vm1711, %v3358
        %3387 = vst.msk [vmem:[%s1710 + $0x263] sm:$0x1] %vm1711, %v3359
        %3388 = vst.msk [vmem:[%s1710 + $0x27b] sm:$0x1] %vm1711, %v3360
        %3389 = vst.msk [vmem:[%s1710 + $0x293] sm:$0x1] %vm1711, %v3361
        %3390 = vst.msk [vmem:[%s1710 + $0x2ab] sm:$0x1] %vm1711, %v3362
        %3391 = vst.msk [vmem:[%s1710 + $0x2c3] sm:$0x1] %vm1711, %v3363
        %3392 = vrot.lane.b32.xlu0 %v1444, 80
        %v3393 = vpop.permute.xlu0 %3392
        %3394 = vrot.lane.b32.xlu0 %v1445, 80
        %v3395 = vpop.permute.xlu0 %3394
        %3396 = vrot.lane.b32.xlu0 %v1446, 80
        %v3397 = vpop.permute.xlu0 %3396
        %3398 = vrot.lane.b32.xlu0 %v1447, 80
        %v3399 = vpop.permute.xlu0 %3398
        %3400 = vrot.lane.b32.xlu0 %v1448, 80
        %v3401 = vpop.permute.xlu0 %3400
        %3402 = vrot.lane.b32.xlu0 %v1449, 80
        %v3403 = vpop.permute.xlu0 %3402
        %3404 = vrot.lane.b32.xlu0 %v1450, 80
        %v3405 = vpop.permute.xlu0 %3404
        %3406 = vrot.lane.b32.xlu0 %v1451, 80
        %v3407 = vpop.permute.xlu0 %3406
        %3408 = vrot.lane.b32.xlu0 %v1452, 80
        %v3409 = vpop.permute.xlu0 %3408
        %3410 = vrot.lane.b32.xlu0 %v1453, 80
        %v3411 = vpop.permute.xlu0 %3410
        %3412 = vrot.lane.b32.xlu0 %v1454, 80
        %v3413 = vpop.permute.xlu0 %3412
        %3414 = vrot.lane.b32.xlu0 %v1455, 80
        %v3415 = vpop.permute.xlu0 %3414
        %3416 = vrot.lane.b32.xlu0 %v1456, 80
        %v3417 = vpop.permute.xlu0 %3416
        %3418 = vrot.lane.b32.xlu0 %v1457, 80
        %v3419 = vpop.permute.xlu0 %3418
        %3420 = vrot.lane.b32.xlu0 %v1458, 80
        %v3421 = vpop.permute.xlu0 %3420
        %3422 = vrot.lane.b32.xlu0 %v1459, 80
        %v3423 = vpop.permute.xlu0 %3422
        %3424 = vrot.lane.b32.xlu0 %v1460, 80
        %v3425 = vpop.permute.xlu0 %3424
        %3426 = vrot.lane.b32.xlu0 %v1461, 80
        %v3427 = vpop.permute.xlu0 %3426
        %3428 = vrot.lane.b32.xlu0 %v1462, 80
        %v3429 = vpop.permute.xlu0 %3428
        %3430 = vrot.lane.b32.xlu0 %v1463, 80
        %v3431 = vpop.permute.xlu0 %3430
        %3432 = vrot.lane.b32.xlu0 %v1464, 80
        %v3433 = vpop.permute.xlu0 %3432
        %3434 = vrot.lane.b32.xlu0 %v1465, 80
        %v3435 = vpop.permute.xlu0 %3434
        %3436 = vrot.lane.b32.xlu0 %v1466, 80
        %v3437 = vpop.permute.xlu0 %3436
        %3438 = vrot.lane.b32.xlu0 %v1467, 80
        %v3439 = vpop.permute.xlu0 %3438
        %3440 = vrot.lane.b32.xlu0 %v1468, 80
        %v3441 = vpop.permute.xlu0 %3440
        %3442 = vrot.lane.b32.xlu0 %v1469, 80
        %v3443 = vpop.permute.xlu0 %3442
        %3444 = vrot.lane.b32.xlu0 %v1470, 80
        %v3445 = vpop.permute.xlu0 %3444
        %3446 = vrot.lane.b32.xlu0 %v1471, 80
        %v3447 = vpop.permute.xlu0 %3446
        %v3448 = vrot.slane %v3393, 2
        %v3449 = vrot.slane %v3395, 2
        %v3450 = vrot.slane %v3397, 2
        %v3451 = vrot.slane %v3399, 2
        %v3452 = vrot.slane %v3401, 2
        %v3453 = vrot.slane %v3403, 2
        %v3454 = vrot.slane %v3405, 2
        %v3455 = vrot.slane %v3407, 2
        %v3456 = vrot.slane %v3409, 2
        %v3457 = vrot.slane %v3411, 2
        %v3458 = vrot.slane %v3413, 2
        %v3459 = vrot.slane %v3415, 2
        %v3460 = vrot.slane %v3417, 2
        %v3461 = vrot.slane %v3419, 2
        %v3462 = vrot.slane %v3421, 2
        %v3463 = vrot.slane %v3423, 2
        %v3464 = vrot.slane %v3425, 2
        %v3465 = vrot.slane %v3427, 2
        %v3466 = vrot.slane %v3429, 2
        %v3467 = vrot.slane %v3431, 2
        %v3468 = vrot.slane %v3433, 2
        %v3469 = vrot.slane %v3435, 2
        %v3470 = vrot.slane %v3437, 2
        %v3471 = vrot.slane %v3439, 2
        %v3472 = vrot.slane %v3441, 2
        %v3473 = vrot.slane %v3443, 2
        %v3474 = vrot.slane %v3445, 2
        %v3475 = vrot.slane %v3447, 2
        %3504 = vrot.lane.b32.xlu0 %v1444, 72
        %v3505 = vpop.permute.xlu0 %3504
        %3506 = vrot.lane.b32.xlu0 %v1445, 72
        %v3507 = vpop.permute.xlu0 %3506
        %3508 = vrot.lane.b32.xlu0 %v1446, 72
        %v3509 = vpop.permute.xlu0 %3508
        %3510 = vrot.lane.b32.xlu0 %v1447, 72
        %v3511 = vpop.permute.xlu0 %3510
        %3512 = vrot.lane.b32.xlu0 %v1448, 72
        %v3513 = vpop.permute.xlu0 %3512
        %3514 = vrot.lane.b32.xlu0 %v1449, 72
        %v3515 = vpop.permute.xlu0 %3514
        %3516 = vrot.lane.b32.xlu0 %v1450, 72
        %v3517 = vpop.permute.xlu0 %3516
        %3518 = vrot.lane.b32.xlu0 %v1451, 72
        %v3519 = vpop.permute.xlu0 %3518
        %3520 = vrot.lane.b32.xlu0 %v1452, 72
        %v3521 = vpop.permute.xlu0 %3520
        %3522 = vrot.lane.b32.xlu0 %v1453, 72
        %v3523 = vpop.permute.xlu0 %3522
        %3524 = vrot.lane.b32.xlu0 %v1454, 72
        %v3525 = vpop.permute.xlu0 %3524
        %3526 = vrot.lane.b32.xlu0 %v1455, 72
        %v3527 = vpop.permute.xlu0 %3526
        %3528 = vrot.lane.b32.xlu0 %v1456, 72
        %v3529 = vpop.permute.xlu0 %3528
        %3530 = vrot.lane.b32.xlu0 %v1457, 72
        %v3531 = vpop.permute.xlu0 %3530
        %3532 = vrot.lane.b32.xlu0 %v1458, 72
        %v3533 = vpop.permute.xlu0 %3532
        %3534 = vrot.lane.b32.xlu0 %v1459, 72
        %v3535 = vpop.permute.xlu0 %3534
        %3536 = vrot.lane.b32.xlu0 %v1460, 72
        %v3537 = vpop.permute.xlu0 %3536
        %3538 = vrot.lane.b32.xlu0 %v1461, 72
        %v3539 = vpop.permute.xlu0 %3538
        %3540 = vrot.lane.b32.xlu0 %v1462, 72
        %v3541 = vpop.permute.xlu0 %3540
        %3542 = vrot.lane.b32.xlu0 %v1463, 72
        %v3543 = vpop.permute.xlu0 %3542
        %3544 = vrot.lane.b32.xlu0 %v1464, 72
        %v3545 = vpop.permute.xlu0 %3544
        %3546 = vrot.lane.b32.xlu0 %v1465, 72
        %v3547 = vpop.permute.xlu0 %3546
        %3548 = vrot.lane.b32.xlu0 %v1466, 72
        %v3549 = vpop.permute.xlu0 %3548
        %3550 = vrot.lane.b32.xlu0 %v1467, 72
        %v3551 = vpop.permute.xlu0 %3550
        %3552 = vrot.lane.b32.xlu0 %v1468, 72
        %v3553 = vpop.permute.xlu0 %3552
        %3554 = vrot.lane.b32.xlu0 %v1469, 72
        %v3555 = vpop.permute.xlu0 %3554
        %3556 = vrot.lane.b32.xlu0 %v1470, 72
        %v3557 = vpop.permute.xlu0 %3556
        %3558 = vrot.lane.b32.xlu0 %v1471, 72
        %v3559 = vpop.permute.xlu0 %3558
        %v3560 = vrot.slane %v3505, 2
        %v3561 = vrot.slane %v3507, 2
        %v3562 = vrot.slane %v3509, 2
        %v3563 = vrot.slane %v3511, 2
        %v3564 = vrot.slane %v3513, 2
        %v3565 = vrot.slane %v3515, 2
        %v3566 = vrot.slane %v3517, 2
        %v3567 = vrot.slane %v3519, 2
        %v3568 = vrot.slane %v3521, 2
        %v3569 = vrot.slane %v3523, 2
        %v3570 = vrot.slane %v3525, 2
        %v3571 = vrot.slane %v3527, 2
        %v3572 = vrot.slane %v3529, 2
        %v3573 = vrot.slane %v3531, 2
        %v3574 = vrot.slane %v3533, 2
        %v3575 = vrot.slane %v3535, 2
        %v3576 = vrot.slane %v3537, 2
        %v3577 = vrot.slane %v3539, 2
        %v3578 = vrot.slane %v3541, 2
        %v3579 = vrot.slane %v3543, 2
        %v3580 = vrot.slane %v3545, 2
        %v3581 = vrot.slane %v3547, 2
        %v3582 = vrot.slane %v3549, 2
        %v3583 = vrot.slane %v3551, 2
        %v3584 = vrot.slane %v3553, 2
        %v3585 = vrot.slane %v3555, 2
        %v3586 = vrot.slane %v3557, 2
        %v3587 = vrot.slane %v3559, 2
        %v3616 = vmax.f32 %v3448, %v3560
        %v3617 = vmax.f32 %v3449, %v3561
        %v3618 = vmax.f32 %v3450, %v3562
        %v3619 = vmax.f32 %v3451, %v3563
        %v3620 = vmax.f32 %v3452, %v3564
        %v3621 = vmax.f32 %v3453, %v3565
        %v3622 = vmax.f32 %v3454, %v3566
        %v3623 = vmax.f32 %v3455, %v3567
        %v3624 = vmax.f32 %v3456, %v3568
        %v3625 = vmax.f32 %v3457, %v3569
        %v3626 = vmax.f32 %v3458, %v3570
        %v3627 = vmax.f32 %v3459, %v3571
        %v3628 = vmax.f32 %v3460, %v3572
        %v3629 = vmax.f32 %v3461, %v3573
        %v3630 = vmax.f32 %v3462, %v3574
        %v3631 = vmax.f32 %v3463, %v3575
        %v3632 = vmax.f32 %v3464, %v3576
        %v3633 = vmax.f32 %v3465, %v3577
        %v3634 = vmax.f32 %v3466, %v3578
        %v3635 = vmax.f32 %v3467, %v3579
        %v3636 = vmax.f32 %v3468, %v3580
        %v3637 = vmax.f32 %v3469, %v3581
        %v3638 = vmax.f32 %v3470, %v3582
        %v3639 = vmax.f32 %v3471, %v3583
        %v3640 = vmax.f32 %v3472, %v3584
        %v3641 = vmax.f32 %v3473, %v3585
        %v3642 = vmax.f32 %v3474, %v3586
        %v3643 = vmax.f32 %v3475, %v3587
        %3644 = vst.msk [vmem:[%s1710 + $0xc] sm:$0x1] %vm1711, %v3616
        %3645 = vst.msk [vmem:[%s1710 + $0x24] sm:$0x1] %vm1711, %v3617
        %3646 = vst.msk [vmem:[%s1710 + $0x3c] sm:$0x1] %vm1711, %v3618
        %3647 = vst.msk [vmem:[%s1710 + $0x54] sm:$0x1] %vm1711, %v3619
        %3648 = vst.msk [vmem:[%s1710 + $0x6c] sm:$0x1] %vm1711, %v3620
        %3649 = vst.msk [vmem:[%s1710 + $0x84] sm:$0x1] %vm1711, %v3621
        %3650 = vst.msk [vmem:[%s1710 + $0x9c] sm:$0x1] %vm1711, %v3622
        %3651 = vst.msk [vmem:[%s1710 + $0xb4] sm:$0x1] %vm1711, %v3623
        %3652 = vst.msk [vmem:[%s1710 + $0xcc] sm:$0x1] %vm1711, %v3624
        %3653 = vst.msk [vmem:[%s1710 + $0xe4] sm:$0x1] %vm1711, %v3625
        %3654 = vst.msk [vmem:[%s1710 + $0xfc] sm:$0x1] %vm1711, %v3626
        %3655 = vst.msk [vmem:[%s1710 + $0x114] sm:$0x1] %vm1711, %v3627
        %3656 = vst.msk [vmem:[%s1710 + $0x12c] sm:$0x1] %vm1711, %v3628
        %3657 = vst.msk [vmem:[%s1710 + $0x144] sm:$0x1] %vm1711, %v3629
        %3658 = vst.msk [vmem:[%s1710 + $0x18c] sm:$0x1] %vm1711, %v3630
        %3659 = vst.msk [vmem:[%s1710 + $0x1a4] sm:$0x1] %vm1711, %v3631
        %3660 = vst.msk [vmem:[%s1710 + $0x1bc] sm:$0x1] %vm1711, %v3632
        %3661 = vst.msk [vmem:[%s1710 + $0x1d4] sm:$0x1] %vm1711, %v3633
        %3662 = vst.msk [vmem:[%s1710 + $0x1ec] sm:$0x1] %vm1711, %v3634
        %3663 = vst.msk [vmem:[%s1710 + $0x204] sm:$0x1] %vm1711, %v3635
        %3664 = vst.msk [vmem:[%s1710 + $0x21c] sm:$0x1] %vm1711, %v3636
        %3665 = vst.msk [vmem:[%s1710 + $0x234] sm:$0x1] %vm1711, %v3637
        %3666 = vst.msk [vmem:[%s1710 + $0x24c] sm:$0x1] %vm1711, %v3638
        %3667 = vst.msk [vmem:[%s1710 + $0x264] sm:$0x1] %vm1711, %v3639
        %3668 = vst.msk [vmem:[%s1710 + $0x27c] sm:$0x1] %vm1711, %v3640
        %3669 = vst.msk [vmem:[%s1710 + $0x294] sm:$0x1] %vm1711, %v3641
        %3670 = vst.msk [vmem:[%s1710 + $0x2ac] sm:$0x1] %vm1711, %v3642
        %3671 = vst.msk [vmem:[%s1710 + $0x2c4] sm:$0x1] %vm1711, %v3643
        %3672 = vrot.lane.b32.xlu0 %v1444, 64
        %v3673 = vpop.permute.xlu0 %3672
        %3674 = vrot.lane.b32.xlu0 %v1445, 64
        %v3675 = vpop.permute.xlu0 %3674
        %3676 = vrot.lane.b32.xlu0 %v1446, 64
        %v3677 = vpop.permute.xlu0 %3676
        %3678 = vrot.lane.b32.xlu0 %v1447, 64
        %v3679 = vpop.permute.xlu0 %3678
        %3680 = vrot.lane.b32.xlu0 %v1448, 64
        %v3681 = vpop.permute.xlu0 %3680
        %3682 = vrot.lane.b32.xlu0 %v1449, 64
        %v3683 = vpop.permute.xlu0 %3682
        %3684 = vrot.lane.b32.xlu0 %v1450, 64
        %v3685 = vpop.permute.xlu0 %3684
        %3686 = vrot.lane.b32.xlu0 %v1451, 64
        %v3687 = vpop.permute.xlu0 %3686
        %3688 = vrot.lane.b32.xlu0 %v1452, 64
        %v3689 = vpop.permute.xlu0 %3688
        %3690 = vrot.lane.b32.xlu0 %v1453, 64
        %v3691 = vpop.permute.xlu0 %3690
        %3692 = vrot.lane.b32.xlu0 %v1454, 64
        %v3693 = vpop.permute.xlu0 %3692
        %3694 = vrot.lane.b32.xlu0 %v1455, 64
        %v3695 = vpop.permute.xlu0 %3694
        %3696 = vrot.lane.b32.xlu0 %v1456, 64
        %v3697 = vpop.permute.xlu0 %3696
        %3698 = vrot.lane.b32.xlu0 %v1457, 64
        %v3699 = vpop.permute.xlu0 %3698
        %3700 = vrot.lane.b32.xlu0 %v1458, 64
        %v3701 = vpop.permute.xlu0 %3700
        %3702 = vrot.lane.b32.xlu0 %v1459, 64
        %v3703 = vpop.permute.xlu0 %3702
        %3704 = vrot.lane.b32.xlu0 %v1460, 64
        %v3705 = vpop.permute.xlu0 %3704
        %3706 = vrot.lane.b32.xlu0 %v1461, 64
        %v3707 = vpop.permute.xlu0 %3706
        %3708 = vrot.lane.b32.xlu0 %v1462, 64
        %v3709 = vpop.permute.xlu0 %3708
        %3710 = vrot.lane.b32.xlu0 %v1463, 64
        %v3711 = vpop.permute.xlu0 %3710
        %3712 = vrot.lane.b32.xlu0 %v1464, 64
        %v3713 = vpop.permute.xlu0 %3712
        %3714 = vrot.lane.b32.xlu0 %v1465, 64
        %v3715 = vpop.permute.xlu0 %3714
        %3716 = vrot.lane.b32.xlu0 %v1466, 64
        %v3717 = vpop.permute.xlu0 %3716
        %3718 = vrot.lane.b32.xlu0 %v1467, 64
        %v3719 = vpop.permute.xlu0 %3718
        %3720 = vrot.lane.b32.xlu0 %v1468, 64
        %v3721 = vpop.permute.xlu0 %3720
        %3722 = vrot.lane.b32.xlu0 %v1469, 64
        %v3723 = vpop.permute.xlu0 %3722
        %3724 = vrot.lane.b32.xlu0 %v1470, 64
        %v3725 = vpop.permute.xlu0 %3724
        %3726 = vrot.lane.b32.xlu0 %v1471, 64
        %v3727 = vpop.permute.xlu0 %3726
        %v3728 = vrot.slane %v3673, 2
        %v3729 = vrot.slane %v3675, 2
        %v3730 = vrot.slane %v3677, 2
        %v3731 = vrot.slane %v3679, 2
        %v3732 = vrot.slane %v3681, 2
        %v3733 = vrot.slane %v3683, 2
        %v3734 = vrot.slane %v3685, 2
        %v3735 = vrot.slane %v3687, 2
        %v3736 = vrot.slane %v3689, 2
        %v3737 = vrot.slane %v3691, 2
        %v3738 = vrot.slane %v3693, 2
        %v3739 = vrot.slane %v3695, 2
        %v3740 = vrot.slane %v3697, 2
        %v3741 = vrot.slane %v3699, 2
        %v3742 = vrot.slane %v3701, 2
        %v3743 = vrot.slane %v3703, 2
        %v3744 = vrot.slane %v3705, 2
        %v3745 = vrot.slane %v3707, 2
        %v3746 = vrot.slane %v3709, 2
        %v3747 = vrot.slane %v3711, 2
        %v3748 = vrot.slane %v3713, 2
        %v3749 = vrot.slane %v3715, 2
        %v3750 = vrot.slane %v3717, 2
        %v3751 = vrot.slane %v3719, 2
        %v3752 = vrot.slane %v3721, 2
        %v3753 = vrot.slane %v3723, 2
        %v3754 = vrot.slane %v3725, 2
        %v3755 = vrot.slane %v3727, 2
        %3784 = vrot.lane.b32.xlu0 %v1444, 56
        %v3785 = vpop.permute.xlu0 %3784
        %3786 = vrot.lane.b32.xlu0 %v1445, 56
        %v3787 = vpop.permute.xlu0 %3786
        %3788 = vrot.lane.b32.xlu0 %v1446, 56
        %v3789 = vpop.permute.xlu0 %3788
        %3790 = vrot.lane.b32.xlu0 %v1447, 56
        %v3791 = vpop.permute.xlu0 %3790
        %3792 = vrot.lane.b32.xlu0 %v1448, 56
        %v3793 = vpop.permute.xlu0 %3792
        %3794 = vrot.lane.b32.xlu0 %v1449, 56
        %v3795 = vpop.permute.xlu0 %3794
        %3796 = vrot.lane.b32.xlu0 %v1450, 56
        %v3797 = vpop.permute.xlu0 %3796
        %3798 = vrot.lane.b32.xlu0 %v1451, 56
        %v3799 = vpop.permute.xlu0 %3798
        %3800 = vrot.lane.b32.xlu0 %v1452, 56
        %v3801 = vpop.permute.xlu0 %3800
        %3802 = vrot.lane.b32.xlu0 %v1453, 56
        %v3803 = vpop.permute.xlu0 %3802
        %3804 = vrot.lane.b32.xlu0 %v1454, 56
        %v3805 = vpop.permute.xlu0 %3804
        %3806 = vrot.lane.b32.xlu0 %v1455, 56
        %v3807 = vpop.permute.xlu0 %3806
        %3808 = vrot.lane.b32.xlu0 %v1456, 56
        %v3809 = vpop.permute.xlu0 %3808
        %3810 = vrot.lane.b32.xlu0 %v1457, 56
        %v3811 = vpop.permute.xlu0 %3810
        %3812 = vrot.lane.b32.xlu0 %v1458, 56
        %v3813 = vpop.permute.xlu0 %3812
        %3814 = vrot.lane.b32.xlu0 %v1459, 56
        %v3815 = vpop.permute.xlu0 %3814
        %3816 = vrot.lane.b32.xlu0 %v1460, 56
        %v3817 = vpop.permute.xlu0 %3816
        %3818 = vrot.lane.b32.xlu0 %v1461, 56
        %v3819 = vpop.permute.xlu0 %3818
        %3820 = vrot.lane.b32.xlu0 %v1462, 56
        %v3821 = vpop.permute.xlu0 %3820
        %3822 = vrot.lane.b32.xlu0 %v1463, 56
        %v3823 = vpop.permute.xlu0 %3822
        %3824 = vrot.lane.b32.xlu0 %v1464, 56
        %v3825 = vpop.permute.xlu0 %3824
        %3826 = vrot.lane.b32.xlu0 %v1465, 56
        %v3827 = vpop.permute.xlu0 %3826
        %3828 = vrot.lane.b32.xlu0 %v1466, 56
        %v3829 = vpop.permute.xlu0 %3828
        %3830 = vrot.lane.b32.xlu0 %v1467, 56
        %v3831 = vpop.permute.xlu0 %3830
        %3832 = vrot.lane.b32.xlu0 %v1468, 56
        %v3833 = vpop.permute.xlu0 %3832
        %3834 = vrot.lane.b32.xlu0 %v1469, 56
        %v3835 = vpop.permute.xlu0 %3834
        %3836 = vrot.lane.b32.xlu0 %v1470, 56
        %v3837 = vpop.permute.xlu0 %3836
        %3838 = vrot.lane.b32.xlu0 %v1471, 56
        %v3839 = vpop.permute.xlu0 %3838
        %v3840 = vrot.slane %v3785, 2
        %v3841 = vrot.slane %v3787, 2
        %v3842 = vrot.slane %v3789, 2
        %v3843 = vrot.slane %v3791, 2
        %v3844 = vrot.slane %v3793, 2
        %v3845 = vrot.slane %v3795, 2
        %v3846 = vrot.slane %v3797, 2
        %v3847 = vrot.slane %v3799, 2
        %v3848 = vrot.slane %v3801, 2
        %v3849 = vrot.slane %v3803, 2
        %v3850 = vrot.slane %v3805, 2
        %v3851 = vrot.slane %v3807, 2
        %v3852 = vrot.slane %v3809, 2
        %v3853 = vrot.slane %v3811, 2
        %v3854 = vrot.slane %v3813, 2
        %v3855 = vrot.slane %v3815, 2
        %v3856 = vrot.slane %v3817, 2
        %v3857 = vrot.slane %v3819, 2
        %v3858 = vrot.slane %v3821, 2
        %v3859 = vrot.slane %v3823, 2
        %v3860 = vrot.slane %v3825, 2
        %v3861 = vrot.slane %v3827, 2
        %v3862 = vrot.slane %v3829, 2
        %v3863 = vrot.slane %v3831, 2
        %v3864 = vrot.slane %v3833, 2
        %v3865 = vrot.slane %v3835, 2
        %v3866 = vrot.slane %v3837, 2
        %v3867 = vrot.slane %v3839, 2
        %v3896 = vmax.f32 %v3728, %v3840
        %v3897 = vmax.f32 %v3729, %v3841
        %v3898 = vmax.f32 %v3730, %v3842
        %v3899 = vmax.f32 %v3731, %v3843
        %v3900 = vmax.f32 %v3732, %v3844
        %v3901 = vmax.f32 %v3733, %v3845
        %v3902 = vmax.f32 %v3734, %v3846
        %v3903 = vmax.f32 %v3735, %v3847
        %v3904 = vmax.f32 %v3736, %v3848
        %v3905 = vmax.f32 %v3737, %v3849
        %v3906 = vmax.f32 %v3738, %v3850
        %v3907 = vmax.f32 %v3739, %v3851
        %v3908 = vmax.f32 %v3740, %v3852
        %v3909 = vmax.f32 %v3741, %v3853
        %v3910 = vmax.f32 %v3742, %v3854
        %v3911 = vmax.f32 %v3743, %v3855
        %v3912 = vmax.f32 %v3744, %v3856
        %v3913 = vmax.f32 %v3745, %v3857
        %v3914 = vmax.f32 %v3746, %v3858
        %v3915 = vmax.f32 %v3747, %v3859
        %v3916 = vmax.f32 %v3748, %v3860
        %v3917 = vmax.f32 %v3749, %v3861
        %v3918 = vmax.f32 %v3750, %v3862
        %v3919 = vmax.f32 %v3751, %v3863
        %v3920 = vmax.f32 %v3752, %v3864
        %v3921 = vmax.f32 %v3753, %v3865
        %v3922 = vmax.f32 %v3754, %v3866
        %v3923 = vmax.f32 %v3755, %v3867
        %3924 = vst.msk [vmem:[%s1710 + $0xd] sm:$0x1] %vm1711, %v3896
        %3925 = vst.msk [vmem:[%s1710 + $0x25] sm:$0x1] %vm1711, %v3897
        %3926 = vst.msk [vmem:[%s1710 + $0x3d] sm:$0x1] %vm1711, %v3898
        %3927 = vst.msk [vmem:[%s1710 + $0x55] sm:$0x1] %vm1711, %v3899
        %3928 = vst.msk [vmem:[%s1710 + $0x6d] sm:$0x1] %vm1711, %v3900
        %3929 = vst.msk [vmem:[%s1710 + $0x85] sm:$0x1] %vm1711, %v3901
        %3930 = vst.msk [vmem:[%s1710 + $0x9d] sm:$0x1] %vm1711, %v3902
        %3931 = vst.msk [vmem:[%s1710 + $0xb5] sm:$0x1] %vm1711, %v3903
        %3932 = vst.msk [vmem:[%s1710 + $0xcd] sm:$0x1] %vm1711, %v3904
        %3933 = vst.msk [vmem:[%s1710 + $0xe5] sm:$0x1] %vm1711, %v3905
        %3934 = vst.msk [vmem:[%s1710 + $0xfd] sm:$0x1] %vm1711, %v3906
        %3935 = vst.msk [vmem:[%s1710 + $0x115] sm:$0x1] %vm1711, %v3907
        %3936 = vst.msk [vmem:[%s1710 + $0x12d] sm:$0x1] %vm1711, %v3908
        %3937 = vst.msk [vmem:[%s1710 + $0x145] sm:$0x1] %vm1711, %v3909
        %3938 = vst.msk [vmem:[%s1710 + $0x18d] sm:$0x1] %vm1711, %v3910
        %3939 = vst.msk [vmem:[%s1710 + $0x1a5] sm:$0x1] %vm1711, %v3911
        %3940 = vst.msk [vmem:[%s1710 + $0x1bd] sm:$0x1] %vm1711, %v3912
        %3941 = vst.msk [vmem:[%s1710 + $0x1d5] sm:$0x1] %vm1711, %v3913
        %3942 = vst.msk [vmem:[%s1710 + $0x1ed] sm:$0x1] %vm1711, %v3914
        %3943 = vst.msk [vmem:[%s1710 + $0x205] sm:$0x1] %vm1711, %v3915
        %3944 = vst.msk [vmem:[%s1710 + $0x21d] sm:$0x1] %vm1711, %v3916
        %3945 = vst.msk [vmem:[%s1710 + $0x235] sm:$0x1] %vm1711, %v3917
        %3946 = vst.msk [vmem:[%s1710 + $0x24d] sm:$0x1] %vm1711, %v3918
        %3947 = vst.msk [vmem:[%s1710 + $0x265] sm:$0x1] %vm1711, %v3919
        %3948 = vst.msk [vmem:[%s1710 + $0x27d] sm:$0x1] %vm1711, %v3920
        %3949 = vst.msk [vmem:[%s1710 + $0x295] sm:$0x1] %vm1711, %v3921
        %3950 = vst.msk [vmem:[%s1710 + $0x2ad] sm:$0x1] %vm1711, %v3922
        %3951 = vst.msk [vmem:[%s1710 + $0x2c5] sm:$0x1] %vm1711, %v3923
        %3952 = vrot.lane.b32.xlu0 %v1444, 48
        %v3953 = vpop.permute.xlu0 %3952
        %3954 = vrot.lane.b32.xlu0 %v1445, 48
        %v3955 = vpop.permute.xlu0 %3954
        %3956 = vrot.lane.b32.xlu0 %v1446, 48
        %v3957 = vpop.permute.xlu0 %3956
        %3958 = vrot.lane.b32.xlu0 %v1447, 48
        %v3959 = vpop.permute.xlu0 %3958
        %3960 = vrot.lane.b32.xlu0 %v1448, 48
        %v3961 = vpop.permute.xlu0 %3960
        %3962 = vrot.lane.b32.xlu0 %v1449, 48
        %v3963 = vpop.permute.xlu0 %3962
        %3964 = vrot.lane.b32.xlu0 %v1450, 48
        %v3965 = vpop.permute.xlu0 %3964
        %3966 = vrot.lane.b32.xlu0 %v1451, 48
        %v3967 = vpop.permute.xlu0 %3966
        %3968 = vrot.lane.b32.xlu0 %v1452, 48
        %v3969 = vpop.permute.xlu0 %3968
        %3970 = vrot.lane.b32.xlu0 %v1453, 48
        %v3971 = vpop.permute.xlu0 %3970
        %3972 = vrot.lane.b32.xlu0 %v1454, 48
        %v3973 = vpop.permute.xlu0 %3972
        %3974 = vrot.lane.b32.xlu0 %v1455, 48
        %v3975 = vpop.permute.xlu0 %3974
        %3976 = vrot.lane.b32.xlu0 %v1456, 48
        %v3977 = vpop.permute.xlu0 %3976
        %3978 = vrot.lane.b32.xlu0 %v1457, 48
        %v3979 = vpop.permute.xlu0 %3978
        %3980 = vrot.lane.b32.xlu0 %v1458, 48
        %v3981 = vpop.permute.xlu0 %3980
        %3982 = vrot.lane.b32.xlu0 %v1459, 48
        %v3983 = vpop.permute.xlu0 %3982
        %3984 = vrot.lane.b32.xlu0 %v1460, 48
        %v3985 = vpop.permute.xlu0 %3984
        %3986 = vrot.lane.b32.xlu0 %v1461, 48
        %v3987 = vpop.permute.xlu0 %3986
        %3988 = vrot.lane.b32.xlu0 %v1462, 48
        %v3989 = vpop.permute.xlu0 %3988
        %3990 = vrot.lane.b32.xlu0 %v1463, 48
        %v3991 = vpop.permute.xlu0 %3990
        %3992 = vrot.lane.b32.xlu0 %v1464, 48
        %v3993 = vpop.permute.xlu0 %3992
        %3994 = vrot.lane.b32.xlu0 %v1465, 48
        %v3995 = vpop.permute.xlu0 %3994
        %3996 = vrot.lane.b32.xlu0 %v1466, 48
        %v3997 = vpop.permute.xlu0 %3996
        %3998 = vrot.lane.b32.xlu0 %v1467, 48
        %v3999 = vpop.permute.xlu0 %3998
        %4000 = vrot.lane.b32.xlu0 %v1468, 48
        %v4001 = vpop.permute.xlu0 %4000
        %4002 = vrot.lane.b32.xlu0 %v1469, 48
        %v4003 = vpop.permute.xlu0 %4002
        %4004 = vrot.lane.b32.xlu0 %v1470, 48
        %v4005 = vpop.permute.xlu0 %4004
        %4006 = vrot.lane.b32.xlu0 %v1471, 48
        %v4007 = vpop.permute.xlu0 %4006
        %v4008 = vrot.slane %v3953, 2
        %v4009 = vrot.slane %v3955, 2
        %v4010 = vrot.slane %v3957, 2
        %v4011 = vrot.slane %v3959, 2
        %v4012 = vrot.slane %v3961, 2
        %v4013 = vrot.slane %v3963, 2
        %v4014 = vrot.slane %v3965, 2
        %v4015 = vrot.slane %v3967, 2
        %v4016 = vrot.slane %v3969, 2
        %v4017 = vrot.slane %v3971, 2
        %v4018 = vrot.slane %v3973, 2
        %v4019 = vrot.slane %v3975, 2
        %v4020 = vrot.slane %v3977, 2
        %v4021 = vrot.slane %v3979, 2
        %v4022 = vrot.slane %v3981, 2
        %v4023 = vrot.slane %v3983, 2
        %v4024 = vrot.slane %v3985, 2
        %v4025 = vrot.slane %v3987, 2
        %v4026 = vrot.slane %v3989, 2
        %v4027 = vrot.slane %v3991, 2
        %v4028 = vrot.slane %v3993, 2
        %v4029 = vrot.slane %v3995, 2
        %v4030 = vrot.slane %v3997, 2
        %v4031 = vrot.slane %v3999, 2
        %v4032 = vrot.slane %v4001, 2
        %v4033 = vrot.slane %v4003, 2
        %v4034 = vrot.slane %v4005, 2
        %v4035 = vrot.slane %v4007, 2
        %4064 = vrot.lane.b32.xlu0 %v1444, 40
        %v4065 = vpop.permute.xlu0 %4064
        %4066 = vrot.lane.b32.xlu0 %v1445, 40
        %v4067 = vpop.permute.xlu0 %4066
        %4068 = vrot.lane.b32.xlu0 %v1446, 40
        %v4069 = vpop.permute.xlu0 %4068
        %4070 = vrot.lane.b32.xlu0 %v1447, 40
        %v4071 = vpop.permute.xlu0 %4070
        %4072 = vrot.lane.b32.xlu0 %v1448, 40
        %v4073 = vpop.permute.xlu0 %4072
        %4074 = vrot.lane.b32.xlu0 %v1449, 40
        %v4075 = vpop.permute.xlu0 %4074
        %4076 = vrot.lane.b32.xlu0 %v1450, 40
        %v4077 = vpop.permute.xlu0 %4076
        %4078 = vrot.lane.b32.xlu0 %v1451, 40
        %v4079 = vpop.permute.xlu0 %4078
        %4080 = vrot.lane.b32.xlu0 %v1452, 40
        %v4081 = vpop.permute.xlu0 %4080
        %4082 = vrot.lane.b32.xlu0 %v1453, 40
        %v4083 = vpop.permute.xlu0 %4082
        %4084 = vrot.lane.b32.xlu0 %v1454, 40
        %v4085 = vpop.permute.xlu0 %4084
        %4086 = vrot.lane.b32.xlu0 %v1455, 40
        %v4087 = vpop.permute.xlu0 %4086
        %4088 = vrot.lane.b32.xlu0 %v1456, 40
        %v4089 = vpop.permute.xlu0 %4088
        %4090 = vrot.lane.b32.xlu0 %v1457, 40
        %v4091 = vpop.permute.xlu0 %4090
        %4092 = vrot.lane.b32.xlu0 %v1458, 40
        %v4093 = vpop.permute.xlu0 %4092
        %4094 = vrot.lane.b32.xlu0 %v1459, 40
        %v4095 = vpop.permute.xlu0 %4094
        %4096 = vrot.lane.b32.xlu0 %v1460, 40
        %v4097 = vpop.permute.xlu0 %4096
        %4098 = vrot.lane.b32.xlu0 %v1461, 40
        %v4099 = vpop.permute.xlu0 %4098
        %4100 = vrot.lane.b32.xlu0 %v1462, 40
        %v4101 = vpop.permute.xlu0 %4100
        %4102 = vrot.lane.b32.xlu0 %v1463, 40
        %v4103 = vpop.permute.xlu0 %4102
        %4104 = vrot.lane.b32.xlu0 %v1464, 40
        %v4105 = vpop.permute.xlu0 %4104
        %4106 = vrot.lane.b32.xlu0 %v1465, 40
        %v4107 = vpop.permute.xlu0 %4106
        %4108 = vrot.lane.b32.xlu0 %v1466, 40
        %v4109 = vpop.permute.xlu0 %4108
        %4110 = vrot.lane.b32.xlu0 %v1467, 40
        %v4111 = vpop.permute.xlu0 %4110
        %4112 = vrot.lane.b32.xlu0 %v1468, 40
        %v4113 = vpop.permute.xlu0 %4112
        %4114 = vrot.lane.b32.xlu0 %v1469, 40
        %v4115 = vpop.permute.xlu0 %4114
        %4116 = vrot.lane.b32.xlu0 %v1470, 40
        %v4117 = vpop.permute.xlu0 %4116
        %4118 = vrot.lane.b32.xlu0 %v1471, 40
        %v4119 = vpop.permute.xlu0 %4118
        %v4120 = vrot.slane %v4065, 2
        %v4121 = vrot.slane %v4067, 2
        %v4122 = vrot.slane %v4069, 2
        %v4123 = vrot.slane %v4071, 2
        %v4124 = vrot.slane %v4073, 2
        %v4125 = vrot.slane %v4075, 2
        %v4126 = vrot.slane %v4077, 2
        %v4127 = vrot.slane %v4079, 2
        %v4128 = vrot.slane %v4081, 2
        %v4129 = vrot.slane %v4083, 2
        %v4130 = vrot.slane %v4085, 2
        %v4131 = vrot.slane %v4087, 2
        %v4132 = vrot.slane %v4089, 2
        %v4133 = vrot.slane %v4091, 2
        %v4134 = vrot.slane %v4093, 2
        %v4135 = vrot.slane %v4095, 2
        %v4136 = vrot.slane %v4097, 2
        %v4137 = vrot.slane %v4099, 2
        %v4138 = vrot.slane %v4101, 2
        %v4139 = vrot.slane %v4103, 2
        %v4140 = vrot.slane %v4105, 2
        %v4141 = vrot.slane %v4107, 2
        %v4142 = vrot.slane %v4109, 2
        %v4143 = vrot.slane %v4111, 2
        %v4144 = vrot.slane %v4113, 2
        %v4145 = vrot.slane %v4115, 2
        %v4146 = vrot.slane %v4117, 2
        %v4147 = vrot.slane %v4119, 2
        %v4176 = vmax.f32 %v4008, %v4120
        %v4177 = vmax.f32 %v4009, %v4121
        %v4178 = vmax.f32 %v4010, %v4122
        %v4179 = vmax.f32 %v4011, %v4123
        %v4180 = vmax.f32 %v4012, %v4124
        %v4181 = vmax.f32 %v4013, %v4125
        %v4182 = vmax.f32 %v4014, %v4126
        %v4183 = vmax.f32 %v4015, %v4127
        %v4184 = vmax.f32 %v4016, %v4128
        %v4185 = vmax.f32 %v4017, %v4129
        %v4186 = vmax.f32 %v4018, %v4130
        %v4187 = vmax.f32 %v4019, %v4131
        %v4188 = vmax.f32 %v4020, %v4132
        %v4189 = vmax.f32 %v4021, %v4133
        %v4190 = vmax.f32 %v4022, %v4134
        %v4191 = vmax.f32 %v4023, %v4135
        %v4192 = vmax.f32 %v4024, %v4136
        %v4193 = vmax.f32 %v4025, %v4137
        %v4194 = vmax.f32 %v4026, %v4138
        %v4195 = vmax.f32 %v4027, %v4139
        %v4196 = vmax.f32 %v4028, %v4140
        %v4197 = vmax.f32 %v4029, %v4141
        %v4198 = vmax.f32 %v4030, %v4142
        %v4199 = vmax.f32 %v4031, %v4143
        %v4200 = vmax.f32 %v4032, %v4144
        %v4201 = vmax.f32 %v4033, %v4145
        %v4202 = vmax.f32 %v4034, %v4146
        %v4203 = vmax.f32 %v4035, %v4147
        %4204 = vst.msk [vmem:[%s1710 + $0xe] sm:$0x1] %vm1711, %v4176
        %4205 = vst.msk [vmem:[%s1710 + $0x26] sm:$0x1] %vm1711, %v4177
        %4206 = vst.msk [vmem:[%s1710 + $0x3e] sm:$0x1] %vm1711, %v4178
        %4207 = vst.msk [vmem:[%s1710 + $0x56] sm:$0x1] %vm1711, %v4179
        %4208 = vst.msk [vmem:[%s1710 + $0x6e] sm:$0x1] %vm1711, %v4180
        %4209 = vst.msk [vmem:[%s1710 + $0x86] sm:$0x1] %vm1711, %v4181
        %4210 = vst.msk [vmem:[%s1710 + $0x9e] sm:$0x1] %vm1711, %v4182
        %4211 = vst.msk [vmem:[%s1710 + $0xb6] sm:$0x1] %vm1711, %v4183
        %4212 = vst.msk [vmem:[%s1710 + $0xce] sm:$0x1] %vm1711, %v4184
        %4213 = vst.msk [vmem:[%s1710 + $0xe6] sm:$0x1] %vm1711, %v4185
        %4214 = vst.msk [vmem:[%s1710 + $0xfe] sm:$0x1] %vm1711, %v4186
        %4215 = vst.msk [vmem:[%s1710 + $0x116] sm:$0x1] %vm1711, %v4187
        %4216 = vst.msk [vmem:[%s1710 + $0x12e] sm:$0x1] %vm1711, %v4188
        %4217 = vst.msk [vmem:[%s1710 + $0x146] sm:$0x1] %vm1711, %v4189
        %4218 = vst.msk [vmem:[%s1710 + $0x18e] sm:$0x1] %vm1711, %v4190
        %4219 = vst.msk [vmem:[%s1710 + $0x1a6] sm:$0x1] %vm1711, %v4191
        %4220 = vst.msk [vmem:[%s1710 + $0x1be] sm:$0x1] %vm1711, %v4192
        %4221 = vst.msk [vmem:[%s1710 + $0x1d6] sm:$0x1] %vm1711, %v4193
        %4222 = vst.msk [vmem:[%s1710 + $0x1ee] sm:$0x1] %vm1711, %v4194
        %4223 = vst.msk [vmem:[%s1710 + $0x206] sm:$0x1] %vm1711, %v4195
        %4224 = vst.msk [vmem:[%s1710 + $0x21e] sm:$0x1] %vm1711, %v4196
        %4225 = vst.msk [vmem:[%s1710 + $0x236] sm:$0x1] %vm1711, %v4197
        %4226 = vst.msk [vmem:[%s1710 + $0x24e] sm:$0x1] %vm1711, %v4198
        %4227 = vst.msk [vmem:[%s1710 + $0x266] sm:$0x1] %vm1711, %v4199
        %4228 = vst.msk [vmem:[%s1710 + $0x27e] sm:$0x1] %vm1711, %v4200
        %4229 = vst.msk [vmem:[%s1710 + $0x296] sm:$0x1] %vm1711, %v4201
        %4230 = vst.msk [vmem:[%s1710 + $0x2ae] sm:$0x1] %vm1711, %v4202
        %4231 = vst.msk [vmem:[%s1710 + $0x2c6] sm:$0x1] %vm1711, %v4203
        %v4232 = vld [vmem:[#allocation2] sm:$0xff]
        %v4233 = vld [vmem:[#allocation2 + $0x8] sm:$0xff]
        %v4234 = vld [vmem:[#allocation2 + $0x18] sm:$0xff]
        %v4235 = vld [vmem:[#allocation2 + $0x20] sm:$0xff]
        %v4236 = vld [vmem:[#allocation2 + $0x30] sm:$0xff]
        %v4237 = vld [vmem:[#allocation2 + $0x38] sm:$0xff]
        %v4238 = vld [vmem:[#allocation2 + $0x48] sm:$0xff]
        %v4239 = vld [vmem:[#allocation2 + $0x50] sm:$0xff]
        %v4240 = vld [vmem:[#allocation2 + $0x60] sm:$0xff]
        %v4241 = vld [vmem:[#allocation2 + $0x68] sm:$0xff]
        %v4242 = vld [vmem:[#allocation2 + $0x78] sm:$0xff]
        %v4243 = vld [vmem:[#allocation2 + $0x80] sm:$0xff]
        %v4244 = vld [vmem:[#allocation2 + $0x90] sm:$0xff]
        %v4245 = vld [vmem:[#allocation2 + $0x98] sm:$0xff]
        %v4246 = vld [vmem:[#allocation2 + $0xa8] sm:$0xff]
        %v4247 = vld [vmem:[#allocation2 + $0xb0] sm:$0xff]
        %v4248 = vld [vmem:[#allocation2 + $0xc0] sm:$0xff]
        %v4249 = vld [vmem:[#allocation2 + $0xc8] sm:$0xff]
        %v4250 = vld [vmem:[#allocation2 + $0xd8] sm:$0xff]
        %v4251 = vld [vmem:[#allocation2 + $0xe0] sm:$0xff]
        %v4252 = vld [vmem:[#allocation2 + $0xf0] sm:$0xff]
        %v4253 = vld [vmem:[#allocation2 + $0xf8] sm:$0xff]
        %v4254 = vld [vmem:[#allocation2 + $0x108] sm:$0xff]
        %v4255 = vld [vmem:[#allocation2 + $0x110] sm:$0xff]
        %v4256 = vld [vmem:[#allocation2 + $0x120] sm:$0xff]
        %v4257 = vld [vmem:[#allocation2 + $0x128] sm:$0xff]
        %v4258 = vld [vmem:[#allocation2 + $0x138] sm:$0xff]
        %v4259 = vld [vmem:[#allocation2 + $0x140] sm:$0xff]
        %v4260 = vld [vmem:[#allocation2 + $0x180] sm:$0xff]
        %v4261 = vld [vmem:[#allocation2 + $0x188] sm:$0xff]
        %v4262 = vld [vmem:[#allocation2 + $0x198] sm:$0xff]
        %v4263 = vld [vmem:[#allocation2 + $0x1a0] sm:$0xff]
        %v4264 = vld [vmem:[#allocation2 + $0x1b0] sm:$0xff]
        %v4265 = vld [vmem:[#allocation2 + $0x1b8] sm:$0xff]
        %v4266 = vld [vmem:[#allocation2 + $0x1c8] sm:$0xff]
        %v4267 = vld [vmem:[#allocation2 + $0x1d0] sm:$0xff]
        %v4268 = vld [vmem:[#allocation2 + $0x1e0] sm:$0xff]
        %v4269 = vld [vmem:[#allocation2 + $0x1e8] sm:$0xff]
        %v4270 = vld [vmem:[#allocation2 + $0x1f8] sm:$0xff]
        %v4271 = vld [vmem:[#allocation2 + $0x200] sm:$0xff]
        %v4272 = vld [vmem:[#allocation2 + $0x210] sm:$0xff]
        %v4273 = vld [vmem:[#allocation2 + $0x218] sm:$0xff]
        %v4274 = vld [vmem:[#allocation2 + $0x228] sm:$0xff]
        %v4275 = vld [vmem:[#allocation2 + $0x230] sm:$0xff]
        %v4276 = vld [vmem:[#allocation2 + $0x240] sm:$0xff]
        %v4277 = vld [vmem:[#allocation2 + $0x248] sm:$0xff]
        %v4278 = vld [vmem:[#allocation2 + $0x258] sm:$0xff]
        %v4279 = vld [vmem:[#allocation2 + $0x260] sm:$0xff]
        %v4280 = vld [vmem:[#allocation2 + $0x270] sm:$0xff]
        %v4281 = vld [vmem:[#allocation2 + $0x278] sm:$0xff]
        %v4282 = vld [vmem:[#allocation2 + $0x288] sm:$0xff]
        %v4283 = vld [vmem:[#allocation2 + $0x290] sm:$0xff]
        %v4284 = vld [vmem:[#allocation2 + $0x2a0] sm:$0xff]
        %v4285 = vld [vmem:[#allocation2 + $0x2a8] sm:$0xff]
        %v4286 = vld [vmem:[#allocation2 + $0x2b8] sm:$0xff]
        %v4287 = vld [vmem:[#allocation2 + $0x2c0] sm:$0xff]
        %4288 = vst.msk [vmem:[#allocation3] sm:$0xff] %vm1472, %v4232
        %4289 = vst.msk [vmem:[#allocation3 + $0x8] sm:$0xff] %vm1472, %v4233
        %4290 = vst.msk [vmem:[#allocation3 + $0x10] sm:$0xff] %vm1472, %v4234
        %4291 = vst.msk [vmem:[#allocation3 + $0x18] sm:$0xff] %vm1472, %v4235
        %4292 = vst.msk [vmem:[#allocation3 + $0x20] sm:$0xff] %vm1472, %v4236
        %4293 = vst.msk [vmem:[#allocation3 + $0x28] sm:$0xff] %vm1472, %v4237
        %4294 = vst.msk [vmem:[#allocation3 + $0x30] sm:$0xff] %vm1472, %v4238
        %4295 = vst.msk [vmem:[#allocation3 + $0x38] sm:$0xff] %vm1472, %v4239
        %4296 = vst.msk [vmem:[#allocation3 + $0x40] sm:$0xff] %vm1472, %v4240
        %4297 = vst.msk [vmem:[#allocation3 + $0x48] sm:$0xff] %vm1472, %v4241
        %4298 = vst.msk [vmem:[#allocation3 + $0x50] sm:$0xff] %vm1472, %v4242
        %4299 = vst.msk [vmem:[#allocation3 + $0x58] sm:$0xff] %vm1472, %v4243
        %4300 = vst.msk [vmem:[#allocation3 + $0x60] sm:$0xff] %vm1472, %v4244
        %4301 = vst.msk [vmem:[#allocation3 + $0x68] sm:$0xff] %vm1472, %v4245
        %4302 = vst.msk [vmem:[#allocation3 + $0x70] sm:$0xff] %vm1472, %v4246
        %4303 = vst.msk [vmem:[#allocation3 + $0x78] sm:$0xff] %vm1472, %v4247
        %4304 = vst.msk [vmem:[#allocation3 + $0x80] sm:$0xff] %vm1472, %v4248
        %4305 = vst.msk [vmem:[#allocation3 + $0x88] sm:$0xff] %vm1472, %v4249
        %4306 = vst.msk [vmem:[#allocation3 + $0x90] sm:$0xff] %vm1472, %v4250
        %4307 = vst.msk [vmem:[#allocation3 + $0x98] sm:$0xff] %vm1472, %v4251
        %4308 = vst.msk [vmem:[#allocation3 + $0xa0] sm:$0xff] %vm1472, %v4252
        %4309 = vst.msk [vmem:[#allocation3 + $0xa8] sm:$0xff] %vm1472, %v4253
        %4310 = vst.msk [vmem:[#allocation3 + $0xb0] sm:$0xff] %vm1472, %v4254
        %4311 = vst.msk [vmem:[#allocation3 + $0xb8] sm:$0xff] %vm1472, %v4255
        %4312 = vst.msk [vmem:[#allocation3 + $0xc0] sm:$0xff] %vm1472, %v4256
        %4313 = vst.msk [vmem:[#allocation3 + $0xc8] sm:$0xff] %vm1472, %v4257
        %4314 = vst.msk [vmem:[#allocation3 + $0xd0] sm:$0xff] %vm1472, %v4258
        %4315 = vst.msk [vmem:[#allocation3 + $0xd8] sm:$0xff] %vm1472, %v4259
        %4316 = vst.msk [vmem:[#allocation3 + $0xe0] sm:$0xff] %vm1472, %v4260
        %4317 = vst.msk [vmem:[#allocation3 + $0xe8] sm:$0xff] %vm1472, %v4261
        %4318 = vst.msk [vmem:[#allocation3 + $0xf0] sm:$0xff] %vm1472, %v4262
        %4319 = vst.msk [vmem:[#allocation3 + $0xf8] sm:$0xff] %vm1472, %v4263
        %4320 = vst.msk [vmem:[#allocation3 + $0x100] sm:$0xff] %vm1472, %v4264
        %4321 = vst.msk [vmem:[#allocation3 + $0x108] sm:$0xff] %vm1472, %v4265
        %4322 = vst.msk [vmem:[#allocation3 + $0x110] sm:$0xff] %vm1472, %v4266
        %4323 = vst.msk [vmem:[#allocation3 + $0x118] sm:$0xff] %vm1472, %v4267
        %4324 = vst.msk [vmem:[#allocation3 + $0x120] sm:$0xff] %vm1472, %v4268
        %4325 = vst.msk [vmem:[#allocation3 + $0x128] sm:$0xff] %vm1472, %v4269
        %4326 = vst.msk [vmem:[#allocation3 + $0x130] sm:$0xff] %vm1472, %v4270
        %4327 = vst.msk [vmem:[#allocation3 + $0x138] sm:$0xff] %vm1472, %v4271
        %4328 = vst.msk [vmem:[#allocation3 + $0x140] sm:$0xff] %vm1472, %v4272
        %4329 = vst.msk [vmem:[#allocation3 + $0x148] sm:$0xff] %vm1472, %v4273
        %4330 = vst.msk [vmem:[#allocation3 + $0x150] sm:$0xff] %vm1472, %v4274
        %4331 = vst.msk [vmem:[#allocation3 + $0x158] sm:$0xff] %vm1472, %v4275
        %4332 = vst.msk [vmem:[#allocation3 + $0x160] sm:$0xff] %vm1472, %v4276
        %4333 = vst.msk [vmem:[#allocation3 + $0x168] sm:$0xff] %vm1472, %v4277
        %4334 = vst.msk [vmem:[#allocation3 + $0x170] sm:$0xff] %vm1472, %v4278
        %4335 = vst.msk [vmem:[#allocation3 + $0x178] sm:$0xff] %vm1472, %v4279
        %4336 = vst.msk [vmem:[#allocation3 + $0x180] sm:$0xff] %vm1472, %v4280
        %4337 = vst.msk [vmem:[#allocation3 + $0x188] sm:$0xff] %vm1472, %v4281
        %4338 = vst.msk [vmem:[#allocation3 + $0x190] sm:$0xff] %vm1472, %v4282
        %4339 = vst.msk [vmem:[#allocation3 + $0x198] sm:$0xff] %vm1472, %v4283
        %4340 = vst.msk [vmem:[#allocation3 + $0x1a0] sm:$0xff] %vm1472, %v4284
        %4341 = vst.msk [vmem:[#allocation3 + $0x1a8] sm:$0xff] %vm1472, %v4285
        %4342 = vst.msk [vmem:[#allocation3 + $0x1b0] sm:$0xff] %vm1472, %v4286
        %4343 = vst.msk [vmem:[#allocation3 + $0x1b8] sm:$0xff] %vm1472, %v4287
        %v4344 = vld [vmem:[#allocation2 + $0x1] sm:$0xff]
        %v4345 = vld [vmem:[#allocation2 + $0x9] sm:$0xff]
        %v4346 = vld [vmem:[#allocation2 + $0x19] sm:$0xff]
        %v4347 = vld [vmem:[#allocation2 + $0x21] sm:$0xff]
        %v4348 = vld [vmem:[#allocation2 + $0x31] sm:$0xff]
        %v4349 = vld [vmem:[#allocation2 + $0x39] sm:$0xff]
        %v4350 = vld [vmem:[#allocation2 + $0x49] sm:$0xff]
        %v4351 = vld [vmem:[#allocation2 + $0x51] sm:$0xff]
        %v4352 = vld [vmem:[#allocation2 + $0x61] sm:$0xff]
        %v4353 = vld [vmem:[#allocation2 + $0x69] sm:$0xff]
        %v4354 = vld [vmem:[#allocation2 + $0x79] sm:$0xff]
        %v4355 = vld [vmem:[#allocation2 + $0x81] sm:$0xff]
        %v4356 = vld [vmem:[#allocation2 + $0x91] sm:$0xff]
        %v4357 = vld [vmem:[#allocation2 + $0x99] sm:$0xff]
        %v4358 = vld [vmem:[#allocation2 + $0xa9] sm:$0xff]
        %v4359 = vld [vmem:[#allocation2 + $0xb1] sm:$0xff]
        %v4360 = vld [vmem:[#allocation2 + $0xc1] sm:$0xff]
        %v4361 = vld [vmem:[#allocation2 + $0xc9] sm:$0xff]
        %v4362 = vld [vmem:[#allocation2 + $0xd9] sm:$0xff]
        %v4363 = vld [vmem:[#allocation2 + $0xe1] sm:$0xff]
        %v4364 = vld [vmem:[#allocation2 + $0xf1] sm:$0xff]
        %v4365 = vld [vmem:[#allocation2 + $0xf9] sm:$0xff]
        %v4366 = vld [vmem:[#allocation2 + $0x109] sm:$0xff]
        %v4367 = vld [vmem:[#allocation2 + $0x111] sm:$0xff]
        %v4368 = vld [vmem:[#allocation2 + $0x121] sm:$0xff]
        %v4369 = vld [vmem:[#allocation2 + $0x129] sm:$0xff]
        %v4370 = vld [vmem:[#allocation2 + $0x139] sm:$0xff]
        %v4371 = vld [vmem:[#allocation2 + $0x141] sm:$0xff]
        %v4372 = vld [vmem:[#allocation2 + $0x181] sm:$0xff]
        %v4373 = vld [vmem:[#allocation2 + $0x189] sm:$0xff]
        %v4374 = vld [vmem:[#allocation2 + $0x199] sm:$0xff]
        %v4375 = vld [vmem:[#allocation2 + $0x1a1] sm:$0xff]
        %v4376 = vld [vmem:[#allocation2 + $0x1b1] sm:$0xff]
        %v4377 = vld [vmem:[#allocation2 + $0x1b9] sm:$0xff]
        %v4378 = vld [vmem:[#allocation2 + $0x1c9] sm:$0xff]
        %v4379 = vld [vmem:[#allocation2 + $0x1d1] sm:$0xff]
        %v4380 = vld [vmem:[#allocation2 + $0x1e1] sm:$0xff]
        %v4381 = vld [vmem:[#allocation2 + $0x1e9] sm:$0xff]
        %v4382 = vld [vmem:[#allocation2 + $0x1f9] sm:$0xff]
        %v4383 = vld [vmem:[#allocation2 + $0x201] sm:$0xff]
        %v4384 = vld [vmem:[#allocation2 + $0x211] sm:$0xff]
        %v4385 = vld [vmem:[#allocation2 + $0x219] sm:$0xff]
        %v4386 = vld [vmem:[#allocation2 + $0x229] sm:$0xff]
        %v4387 = vld [vmem:[#allocation2 + $0x231] sm:$0xff]
        %v4388 = vld [vmem:[#allocation2 + $0x241] sm:$0xff]
        %v4389 = vld [vmem:[#allocation2 + $0x249] sm:$0xff]
        %v4390 = vld [vmem:[#allocation2 + $0x259] sm:$0xff]
        %v4391 = vld [vmem:[#allocation2 + $0x261] sm:$0xff]
        %v4392 = vld [vmem:[#allocation2 + $0x271] sm:$0xff]
        %v4393 = vld [vmem:[#allocation2 + $0x279] sm:$0xff]
        %v4394 = vld [vmem:[#allocation2 + $0x289] sm:$0xff]
        %v4395 = vld [vmem:[#allocation2 + $0x291] sm:$0xff]
        %v4396 = vld [vmem:[#allocation2 + $0x2a1] sm:$0xff]
        %v4397 = vld [vmem:[#allocation2 + $0x2a9] sm:$0xff]
        %v4398 = vld [vmem:[#allocation2 + $0x2b9] sm:$0xff]
        %v4399 = vld [vmem:[#allocation2 + $0x2c1] sm:$0xff]
        %4456 = vrot.lane.b32.xlu0 %v4344, 8
        %v4457 = vpop.permute.xlu0 %4456
        %4458 = vrot.lane.b32.xlu0 %v4345, 8
        %v4459 = vpop.permute.xlu0 %4458
        %4460 = vrot.lane.b32.xlu0 %v4346, 8
        %v4461 = vpop.permute.xlu0 %4460
        %4462 = vrot.lane.b32.xlu0 %v4347, 8
        %v4463 = vpop.permute.xlu0 %4462
        %4464 = vrot.lane.b32.xlu0 %v4348, 8
        %v4465 = vpop.permute.xlu0 %4464
        %4466 = vrot.lane.b32.xlu0 %v4349, 8
        %v4467 = vpop.permute.xlu0 %4466
        %4468 = vrot.lane.b32.xlu0 %v4350, 8
        %v4469 = vpop.permute.xlu0 %4468
        %4470 = vrot.lane.b32.xlu0 %v4351, 8
        %v4471 = vpop.permute.xlu0 %4470
        %4472 = vrot.lane.b32.xlu0 %v4352, 8
        %v4473 = vpop.permute.xlu0 %4472
        %4474 = vrot.lane.b32.xlu0 %v4353, 8
        %v4475 = vpop.permute.xlu0 %4474
        %4476 = vrot.lane.b32.xlu0 %v4354, 8
        %v4477 = vpop.permute.xlu0 %4476
        %4478 = vrot.lane.b32.xlu0 %v4355, 8
        %v4479 = vpop.permute.xlu0 %4478
        %4480 = vrot.lane.b32.xlu0 %v4356, 8
        %v4481 = vpop.permute.xlu0 %4480
        %4482 = vrot.lane.b32.xlu0 %v4357, 8
        %v4483 = vpop.permute.xlu0 %4482
        %4484 = vrot.lane.b32.xlu0 %v4358, 8
        %v4485 = vpop.permute.xlu0 %4484
        %4486 = vrot.lane.b32.xlu0 %v4359, 8
        %v4487 = vpop.permute.xlu0 %4486
        %4488 = vrot.lane.b32.xlu0 %v4360, 8
        %v4489 = vpop.permute.xlu0 %4488
        %4490 = vrot.lane.b32.xlu0 %v4361, 8
        %v4491 = vpop.permute.xlu0 %4490
        %4492 = vrot.lane.b32.xlu0 %v4362, 8
        %v4493 = vpop.permute.xlu0 %4492
        %4494 = vrot.lane.b32.xlu0 %v4363, 8
        %v4495 = vpop.permute.xlu0 %4494
        %4496 = vrot.lane.b32.xlu0 %v4364, 8
        %v4497 = vpop.permute.xlu0 %4496
        %4498 = vrot.lane.b32.xlu0 %v4365, 8
        %v4499 = vpop.permute.xlu0 %4498
        %4500 = vrot.lane.b32.xlu0 %v4366, 8
        %v4501 = vpop.permute.xlu0 %4500
        %4502 = vrot.lane.b32.xlu0 %v4367, 8
        %v4503 = vpop.permute.xlu0 %4502
        %4504 = vrot.lane.b32.xlu0 %v4368, 8
        %v4505 = vpop.permute.xlu0 %4504
        %4506 = vrot.lane.b32.xlu0 %v4369, 8
        %v4507 = vpop.permute.xlu0 %4506
        %4508 = vrot.lane.b32.xlu0 %v4370, 8
        %v4509 = vpop.permute.xlu0 %4508
        %4510 = vrot.lane.b32.xlu0 %v4371, 8
        %v4511 = vpop.permute.xlu0 %4510
        %4512 = vrot.lane.b32.xlu0 %v4372, 8
        %v4513 = vpop.permute.xlu0 %4512
        %4514 = vrot.lane.b32.xlu0 %v4373, 8
        %v4515 = vpop.permute.xlu0 %4514
        %4516 = vrot.lane.b32.xlu0 %v4374, 8
        %v4517 = vpop.permute.xlu0 %4516
        %4518 = vrot.lane.b32.xlu0 %v4375, 8
        %v4519 = vpop.permute.xlu0 %4518
        %4520 = vrot.lane.b32.xlu0 %v4376, 8
        %v4521 = vpop.permute.xlu0 %4520
        %4522 = vrot.lane.b32.xlu0 %v4377, 8
        %v4523 = vpop.permute.xlu0 %4522
        %4524 = vrot.lane.b32.xlu0 %v4378, 8
        %v4525 = vpop.permute.xlu0 %4524
        %4526 = vrot.lane.b32.xlu0 %v4379, 8
        %v4527 = vpop.permute.xlu0 %4526
        %4528 = vrot.lane.b32.xlu0 %v4380, 8
        %v4529 = vpop.permute.xlu0 %4528
        %4530 = vrot.lane.b32.xlu0 %v4381, 8
        %v4531 = vpop.permute.xlu0 %4530
        %4532 = vrot.lane.b32.xlu0 %v4382, 8
        %v4533 = vpop.permute.xlu0 %4532
        %4534 = vrot.lane.b32.xlu0 %v4383, 8
        %v4535 = vpop.permute.xlu0 %4534
        %4536 = vrot.lane.b32.xlu0 %v4384, 8
        %v4537 = vpop.permute.xlu0 %4536
        %4538 = vrot.lane.b32.xlu0 %v4385, 8
        %v4539 = vpop.permute.xlu0 %4538
        %4540 = vrot.lane.b32.xlu0 %v4386, 8
        %v4541 = vpop.permute.xlu0 %4540
        %4542 = vrot.lane.b32.xlu0 %v4387, 8
        %v4543 = vpop.permute.xlu0 %4542
        %4544 = vrot.lane.b32.xlu0 %v4388, 8
        %v4545 = vpop.permute.xlu0 %4544
        %4546 = vrot.lane.b32.xlu0 %v4389, 8
        %v4547 = vpop.permute.xlu0 %4546
        %4548 = vrot.lane.b32.xlu0 %v4390, 8
        %v4549 = vpop.permute.xlu0 %4548
        %4550 = vrot.lane.b32.xlu0 %v4391, 8
        %v4551 = vpop.permute.xlu0 %4550
        %4552 = vrot.lane.b32.xlu0 %v4392, 8
        %v4553 = vpop.permute.xlu0 %4552
        %4554 = vrot.lane.b32.xlu0 %v4393, 8
        %v4555 = vpop.permute.xlu0 %4554
        %4556 = vrot.lane.b32.xlu0 %v4394, 8
        %v4557 = vpop.permute.xlu0 %4556
        %4558 = vrot.lane.b32.xlu0 %v4395, 8
        %v4559 = vpop.permute.xlu0 %4558
        %4560 = vrot.lane.b32.xlu0 %v4396, 8
        %v4561 = vpop.permute.xlu0 %4560
        %4562 = vrot.lane.b32.xlu0 %v4397, 8
        %v4563 = vpop.permute.xlu0 %4562
        %4564 = vrot.lane.b32.xlu0 %v4398, 8
        %v4565 = vpop.permute.xlu0 %4564
        %4566 = vrot.lane.b32.xlu0 %v4399, 8
        %v4567 = vpop.permute.xlu0 %4566
        %vm4624 = vcmask 130112
        %4625 = vst.msk [vmem:[#allocation3] sm:$0xff] %vm4624, %v4457
        %4626 = vst.msk [vmem:[#allocation3 + $0x8] sm:$0xff] %vm4624, %v4459
        %4627 = vst.msk [vmem:[#allocation3 + $0x10] sm:$0xff] %vm4624, %v4461
        %4628 = vst.msk [vmem:[#allocation3 + $0x18] sm:$0xff] %vm4624, %v4463
        %4629 = vst.msk [vmem:[#allocation3 + $0x20] sm:$0xff] %vm4624, %v4465
        %4630 = vst.msk [vmem:[#allocation3 + $0x28] sm:$0xff] %vm4624, %v4467
        %4631 = vst.msk [vmem:[#allocation3 + $0x30] sm:$0xff] %vm4624, %v4469
        %4632 = vst.msk [vmem:[#allocation3 + $0x38] sm:$0xff] %vm4624, %v4471
        %4633 = vst.msk [vmem:[#allocation3 + $0x40] sm:$0xff] %vm4624, %v4473
        %4634 = vst.msk [vmem:[#allocation3 + $0x48] sm:$0xff] %vm4624, %v4475
        %4635 = vst.msk [vmem:[#allocation3 + $0x50] sm:$0xff] %vm4624, %v4477
        %4636 = vst.msk [vmem:[#allocation3 + $0x58] sm:$0xff] %vm4624, %v4479
        %4637 = vst.msk [vmem:[#allocation3 + $0x60] sm:$0xff] %vm4624, %v4481
        %4638 = vst.msk [vmem:[#allocation3 + $0x68] sm:$0xff] %vm4624, %v4483
        %4639 = vst.msk [vmem:[#allocation3 + $0x70] sm:$0xff] %vm4624, %v4485
        %4640 = vst.msk [vmem:[#allocation3 + $0x78] sm:$0xff] %vm4624, %v4487
        %4641 = vst.msk [vmem:[#allocation3 + $0x80] sm:$0xff] %vm4624, %v4489
        %4642 = vst.msk [vmem:[#allocation3 + $0x88] sm:$0xff] %vm4624, %v4491
        %4643 = vst.msk [vmem:[#allocation3 + $0x90] sm:$0xff] %vm4624, %v4493
        %4644 = vst.msk [vmem:[#allocation3 + $0x98] sm:$0xff] %vm4624, %v4495
        %4645 = vst.msk [vmem:[#allocation3 + $0xa0] sm:$0xff] %vm4624, %v4497
        %4646 = vst.msk [vmem:[#allocation3 + $0xa8] sm:$0xff] %vm4624, %v4499
        %4647 = vst.msk [vmem:[#allocation3 + $0xb0] sm:$0xff] %vm4624, %v4501
        %4648 = vst.msk [vmem:[#allocation3 + $0xb8] sm:$0xff] %vm4624, %v4503
        %4649 = vst.msk [vmem:[#allocation3 + $0xc0] sm:$0xff] %vm4624, %v4505
        %4650 = vst.msk [vmem:[#allocation3 + $0xc8] sm:$0xff] %vm4624, %v4507
        %4651 = vst.msk [vmem:[#allocation3 + $0xd0] sm:$0xff] %vm4624, %v4509
        %4652 = vst.msk [vmem:[#allocation3 + $0xd8] sm:$0xff] %vm4624, %v4511
        %4653 = vst.msk [vmem:[#allocation3 + $0xe0] sm:$0xff] %vm4624, %v4513
        %4654 = vst.msk [vmem:[#allocation3 + $0xe8] sm:$0xff] %vm4624, %v4515
        %4655 = vst.msk [vmem:[#allocation3 + $0xf0] sm:$0xff] %vm4624, %v4517
        %4656 = vst.msk [vmem:[#allocation3 + $0xf8] sm:$0xff] %vm4624, %v4519
        %4657 = vst.msk [vmem:[#allocation3 + $0x100] sm:$0xff] %vm4624, %v4521
        %4658 = vst.msk [vmem:[#allocation3 + $0x108] sm:$0xff] %vm4624, %v4523
        %4659 = vst.msk [vmem:[#allocation3 + $0x110] sm:$0xff] %vm4624, %v4525
        %4660 = vst.msk [vmem:[#allocation3 + $0x118] sm:$0xff] %vm4624, %v4527
        %4661 = vst.msk [vmem:[#allocation3 + $0x120] sm:$0xff] %vm4624, %v4529
        %4662 = vst.msk [vmem:[#allocation3 + $0x128] sm:$0xff] %vm4624, %v4531
        %4663 = vst.msk [vmem:[#allocation3 + $0x130] sm:$0xff] %vm4624, %v4533
        %4664 = vst.msk [vmem:[#allocation3 + $0x138] sm:$0xff] %vm4624, %v4535
        %4665 = vst.msk [vmem:[#allocation3 + $0x140] sm:$0xff] %vm4624, %v4537
        %4666 = vst.msk [vmem:[#allocation3 + $0x148] sm:$0xff] %vm4624, %v4539
        %4667 = vst.msk [vmem:[#allocation3 + $0x150] sm:$0xff] %vm4624, %v4541
        %4668 = vst.msk [vmem:[#allocation3 + $0x158] sm:$0xff] %vm4624, %v4543
        %4669 = vst.msk [vmem:[#allocation3 + $0x160] sm:$0xff] %vm4624, %v4545
        %4670 = vst.msk [vmem:[#allocation3 + $0x168] sm:$0xff] %vm4624, %v4547
        %4671 = vst.msk [vmem:[#allocation3 + $0x170] sm:$0xff] %vm4624, %v4549
        %4672 = vst.msk [vmem:[#allocation3 + $0x178] sm:$0xff] %vm4624, %v4551
        %4673 = vst.msk [vmem:[#allocation3 + $0x180] sm:$0xff] %vm4624, %v4553
        %4674 = vst.msk [vmem:[#allocation3 + $0x188] sm:$0xff] %vm4624, %v4555
        %4675 = vst.msk [vmem:[#allocation3 + $0x190] sm:$0xff] %vm4624, %v4557
        %4676 = vst.msk [vmem:[#allocation3 + $0x198] sm:$0xff] %vm4624, %v4559
        %4677 = vst.msk [vmem:[#allocation3 + $0x1a0] sm:$0xff] %vm4624, %v4561
        %4678 = vst.msk [vmem:[#allocation3 + $0x1a8] sm:$0xff] %vm4624, %v4563
        %4679 = vst.msk [vmem:[#allocation3 + $0x1b0] sm:$0xff] %vm4624, %v4565
        %4680 = vst.msk [vmem:[#allocation3 + $0x1b8] sm:$0xff] %vm4624, %v4567
        %v4681 = vld [vmem:[#allocation2 + $0x2] sm:$0xff]
        %v4682 = vld [vmem:[#allocation2 + $0xa] sm:$0xff]
        %v4683 = vld [vmem:[#allocation2 + $0x1a] sm:$0xff]
        %v4684 = vld [vmem:[#allocation2 + $0x22] sm:$0xff]
        %v4685 = vld [vmem:[#allocation2 + $0x32] sm:$0xff]
        %v4686 = vld [vmem:[#allocation2 + $0x3a] sm:$0xff]
        %v4687 = vld [vmem:[#allocation2 + $0x4a] sm:$0xff]
        %v4688 = vld [vmem:[#allocation2 + $0x52] sm:$0xff]
        %v4689 = vld [vmem:[#allocation2 + $0x62] sm:$0xff]
        %v4690 = vld [vmem:[#allocation2 + $0x6a] sm:$0xff]
        %v4691 = vld [vmem:[#allocation2 + $0x7a] sm:$0xff]
        %v4692 = vld [vmem:[#allocation2 + $0x82] sm:$0xff]
        %v4693 = vld [vmem:[#allocation2 + $0x92] sm:$0xff]
        %v4694 = vld [vmem:[#allocation2 + $0x9a] sm:$0xff]
        %v4695 = vld [vmem:[#allocation2 + $0xaa] sm:$0xff]
        %v4696 = vld [vmem:[#allocation2 + $0xb2] sm:$0xff]
        %v4697 = vld [vmem:[#allocation2 + $0xc2] sm:$0xff]
        %v4698 = vld [vmem:[#allocation2 + $0xca] sm:$0xff]
        %v4699 = vld [vmem:[#allocation2 + $0xda] sm:$0xff]
        %v4700 = vld [vmem:[#allocation2 + $0xe2] sm:$0xff]
        %v4701 = vld [vmem:[#allocation2 + $0xf2] sm:$0xff]
        %v4702 = vld [vmem:[#allocation2 + $0xfa] sm:$0xff]
        %v4703 = vld [vmem:[#allocation2 + $0x10a] sm:$0xff]
        %v4704 = vld [vmem:[#allocation2 + $0x112] sm:$0xff]
        %v4705 = vld [vmem:[#allocation2 + $0x122] sm:$0xff]
        %v4706 = vld [vmem:[#allocation2 + $0x12a] sm:$0xff]
        %v4707 = vld [vmem:[#allocation2 + $0x13a] sm:$0xff]
        %v4708 = vld [vmem:[#allocation2 + $0x142] sm:$0xff]
        %v4709 = vld [vmem:[#allocation2 + $0x182] sm:$0xff]
        %v4710 = vld [vmem:[#allocation2 + $0x18a] sm:$0xff]
        %v4711 = vld [vmem:[#allocation2 + $0x19a] sm:$0xff]
        %v4712 = vld [vmem:[#allocation2 + $0x1a2] sm:$0xff]
        %v4713 = vld [vmem:[#allocation2 + $0x1b2] sm:$0xff]
        %v4714 = vld [vmem:[#allocation2 + $0x1ba] sm:$0xff]
        %v4715 = vld [vmem:[#allocation2 + $0x1ca] sm:$0xff]
        %v4716 = vld [vmem:[#allocation2 + $0x1d2] sm:$0xff]
        %v4717 = vld [vmem:[#allocation2 + $0x1e2] sm:$0xff]
        %v4718 = vld [vmem:[#allocation2 + $0x1ea] sm:$0xff]
        %v4719 = vld [vmem:[#allocation2 + $0x1fa] sm:$0xff]
        %v4720 = vld [vmem:[#allocation2 + $0x202] sm:$0xff]
        %v4721 = vld [vmem:[#allocation2 + $0x212] sm:$0xff]
        %v4722 = vld [vmem:[#allocation2 + $0x21a] sm:$0xff]
        %v4723 = vld [vmem:[#allocation2 + $0x22a] sm:$0xff]
        %v4724 = vld [vmem:[#allocation2 + $0x232] sm:$0xff]
        %v4725 = vld [vmem:[#allocation2 + $0x242] sm:$0xff]
        %v4726 = vld [vmem:[#allocation2 + $0x24a] sm:$0xff]
        %v4727 = vld [vmem:[#allocation2 + $0x25a] sm:$0xff]
        %v4728 = vld [vmem:[#allocation2 + $0x262] sm:$0xff]
        %v4729 = vld [vmem:[#allocation2 + $0x272] sm:$0xff]
        %v4730 = vld [vmem:[#allocation2 + $0x27a] sm:$0xff]
        %v4731 = vld [vmem:[#allocation2 + $0x28a] sm:$0xff]
        %v4732 = vld [vmem:[#allocation2 + $0x292] sm:$0xff]
        %v4733 = vld [vmem:[#allocation2 + $0x2a2] sm:$0xff]
        %v4734 = vld [vmem:[#allocation2 + $0x2aa] sm:$0xff]
        %v4735 = vld [vmem:[#allocation2 + $0x2ba] sm:$0xff]
        %v4736 = vld [vmem:[#allocation2 + $0x2c2] sm:$0xff]
        %4793 = vrot.lane.b32.xlu0 %v4681, 16
        %v4794 = vpop.permute.xlu0 %4793
        %4795 = vrot.lane.b32.xlu0 %v4682, 16
        %v4796 = vpop.permute.xlu0 %4795
        %4797 = vrot.lane.b32.xlu0 %v4683, 16
        %v4798 = vpop.permute.xlu0 %4797
        %4799 = vrot.lane.b32.xlu0 %v4684, 16
        %v4800 = vpop.permute.xlu0 %4799
        %4801 = vrot.lane.b32.xlu0 %v4685, 16
        %v4802 = vpop.permute.xlu0 %4801
        %4803 = vrot.lane.b32.xlu0 %v4686, 16
        %v4804 = vpop.permute.xlu0 %4803
        %4805 = vrot.lane.b32.xlu0 %v4687, 16
        %v4806 = vpop.permute.xlu0 %4805
        %4807 = vrot.lane.b32.xlu0 %v4688, 16
        %v4808 = vpop.permute.xlu0 %4807
        %4809 = vrot.lane.b32.xlu0 %v4689, 16
        %v4810 = vpop.permute.xlu0 %4809
        %4811 = vrot.lane.b32.xlu0 %v4690, 16
        %v4812 = vpop.permute.xlu0 %4811
        %4813 = vrot.lane.b32.xlu0 %v4691, 16
        %v4814 = vpop.permute.xlu0 %4813
        %4815 = vrot.lane.b32.xlu0 %v4692, 16
        %v4816 = vpop.permute.xlu0 %4815
        %4817 = vrot.lane.b32.xlu0 %v4693, 16
        %v4818 = vpop.permute.xlu0 %4817
        %4819 = vrot.lane.b32.xlu0 %v4694, 16
        %v4820 = vpop.permute.xlu0 %4819
        %4821 = vrot.lane.b32.xlu0 %v4695, 16
        %v4822 = vpop.permute.xlu0 %4821
        %4823 = vrot.lane.b32.xlu0 %v4696, 16
        %v4824 = vpop.permute.xlu0 %4823
        %4825 = vrot.lane.b32.xlu0 %v4697, 16
        %v4826 = vpop.permute.xlu0 %4825
        %4827 = vrot.lane.b32.xlu0 %v4698, 16
        %v4828 = vpop.permute.xlu0 %4827
        %4829 = vrot.lane.b32.xlu0 %v4699, 16
        %v4830 = vpop.permute.xlu0 %4829
        %4831 = vrot.lane.b32.xlu0 %v4700, 16
        %v4832 = vpop.permute.xlu0 %4831
        %4833 = vrot.lane.b32.xlu0 %v4701, 16
        %v4834 = vpop.permute.xlu0 %4833
        %4835 = vrot.lane.b32.xlu0 %v4702, 16
        %v4836 = vpop.permute.xlu0 %4835
        %4837 = vrot.lane.b32.xlu0 %v4703, 16
        %v4838 = vpop.permute.xlu0 %4837
        %4839 = vrot.lane.b32.xlu0 %v4704, 16
        %v4840 = vpop.permute.xlu0 %4839
        %4841 = vrot.lane.b32.xlu0 %v4705, 16
        %v4842 = vpop.permute.xlu0 %4841
        %4843 = vrot.lane.b32.xlu0 %v4706, 16
        %v4844 = vpop.permute.xlu0 %4843
        %4845 = vrot.lane.b32.xlu0 %v4707, 16
        %v4846 = vpop.permute.xlu0 %4845
        %4847 = vrot.lane.b32.xlu0 %v4708, 16
        %v4848 = vpop.permute.xlu0 %4847
        %4849 = vrot.lane.b32.xlu0 %v4709, 16
        %v4850 = vpop.permute.xlu0 %4849
        %4851 = vrot.lane.b32.xlu0 %v4710, 16
        %v4852 = vpop.permute.xlu0 %4851
        %4853 = vrot.lane.b32.xlu0 %v4711, 16
        %v4854 = vpop.permute.xlu0 %4853
        %4855 = vrot.lane.b32.xlu0 %v4712, 16
        %v4856 = vpop.permute.xlu0 %4855
        %4857 = vrot.lane.b32.xlu0 %v4713, 16
        %v4858 = vpop.permute.xlu0 %4857
        %4859 = vrot.lane.b32.xlu0 %v4714, 16
        %v4860 = vpop.permute.xlu0 %4859
        %4861 = vrot.lane.b32.xlu0 %v4715, 16
        %v4862 = vpop.permute.xlu0 %4861
        %4863 = vrot.lane.b32.xlu0 %v4716, 16
        %v4864 = vpop.permute.xlu0 %4863
        %4865 = vrot.lane.b32.xlu0 %v4717, 16
        %v4866 = vpop.permute.xlu0 %4865
        %4867 = vrot.lane.b32.xlu0 %v4718, 16
        %v4868 = vpop.permute.xlu0 %4867
        %4869 = vrot.lane.b32.xlu0 %v4719, 16
        %v4870 = vpop.permute.xlu0 %4869
        %4871 = vrot.lane.b32.xlu0 %v4720, 16
        %v4872 = vpop.permute.xlu0 %4871
        %4873 = vrot.lane.b32.xlu0 %v4721, 16
        %v4874 = vpop.permute.xlu0 %4873
        %4875 = vrot.lane.b32.xlu0 %v4722, 16
        %v4876 = vpop.permute.xlu0 %4875
        %4877 = vrot.lane.b32.xlu0 %v4723, 16
        %v4878 = vpop.permute.xlu0 %4877
        %4879 = vrot.lane.b32.xlu0 %v4724, 16
        %v4880 = vpop.permute.xlu0 %4879
        %4881 = vrot.lane.b32.xlu0 %v4725, 16
        %v4882 = vpop.permute.xlu0 %4881
        %4883 = vrot.lane.b32.xlu0 %v4726, 16
        %v4884 = vpop.permute.xlu0 %4883
        %4885 = vrot.lane.b32.xlu0 %v4727, 16
        %v4886 = vpop.permute.xlu0 %4885
        %4887 = vrot.lane.b32.xlu0 %v4728, 16
        %v4888 = vpop.permute.xlu0 %4887
        %4889 = vrot.lane.b32.xlu0 %v4729, 16
        %v4890 = vpop.permute.xlu0 %4889
        %4891 = vrot.lane.b32.xlu0 %v4730, 16
        %v4892 = vpop.permute.xlu0 %4891
        %4893 = vrot.lane.b32.xlu0 %v4731, 16
        %v4894 = vpop.permute.xlu0 %4893
        %4895 = vrot.lane.b32.xlu0 %v4732, 16
        %v4896 = vpop.permute.xlu0 %4895
        %4897 = vrot.lane.b32.xlu0 %v4733, 16
        %v4898 = vpop.permute.xlu0 %4897
        %4899 = vrot.lane.b32.xlu0 %v4734, 16
        %v4900 = vpop.permute.xlu0 %4899
        %4901 = vrot.lane.b32.xlu0 %v4735, 16
        %v4902 = vpop.permute.xlu0 %4901
        %4903 = vrot.lane.b32.xlu0 %v4736, 16
        %v4904 = vpop.permute.xlu0 %4903
        %vm4961 = vcmask 195712
        %4962 = vst.msk [vmem:[#allocation3] sm:$0xff] %vm4961, %v4794
        %4963 = vst.msk [vmem:[#allocation3 + $0x8] sm:$0xff] %vm4961, %v4796
        %4964 = vst.msk [vmem:[#allocation3 + $0x10] sm:$0xff] %vm4961, %v4798
        %4965 = vst.msk [vmem:[#allocation3 + $0x18] sm:$0xff] %vm4961, %v4800
        %4966 = vst.msk [vmem:[#allocation3 + $0x20] sm:$0xff] %vm4961, %v4802
        %4967 = vst.msk [vmem:[#allocation3 + $0x28] sm:$0xff] %vm4961, %v4804
        %4968 = vst.msk [vmem:[#allocation3 + $0x30] sm:$0xff] %vm4961, %v4806
        %4969 = vst.msk [vmem:[#allocation3 + $0x38] sm:$0xff] %vm4961, %v4808
        %4970 = vst.msk [vmem:[#allocation3 + $0x40] sm:$0xff] %vm4961, %v4810
        %4971 = vst.msk [vmem:[#allocation3 + $0x48] sm:$0xff] %vm4961, %v4812
        %4972 = vst.msk [vmem:[#allocation3 + $0x50] sm:$0xff] %vm4961, %v4814
        %4973 = vst.msk [vmem:[#allocation3 + $0x58] sm:$0xff] %vm4961, %v4816
        %4974 = vst.msk [vmem:[#allocation3 + $0x60] sm:$0xff] %vm4961, %v4818
        %4975 = vst.msk [vmem:[#allocation3 + $0x68] sm:$0xff] %vm4961, %v4820
        %4976 = vst.msk [vmem:[#allocation3 + $0x70] sm:$0xff] %vm4961, %v4822
        %4977 = vst.msk [vmem:[#allocation3 + $0x78] sm:$0xff] %vm4961, %v4824
        %4978 = vst.msk [vmem:[#allocation3 + $0x80] sm:$0xff] %vm4961, %v4826
        %4979 = vst.msk [vmem:[#allocation3 + $0x88] sm:$0xff] %vm4961, %v4828
        %4980 = vst.msk [vmem:[#allocation3 + $0x90] sm:$0xff] %vm4961, %v4830
        %4981 = vst.msk [vmem:[#allocation3 + $0x98] sm:$0xff] %vm4961, %v4832
        %4982 = vst.msk [vmem:[#allocation3 + $0xa0] sm:$0xff] %vm4961, %v4834
        %4983 = vst.msk [vmem:[#allocation3 + $0xa8] sm:$0xff] %vm4961, %v4836
        %4984 = vst.msk [vmem:[#allocation3 + $0xb0] sm:$0xff] %vm4961, %v4838
        %4985 = vst.msk [vmem:[#allocation3 + $0xb8] sm:$0xff] %vm4961, %v4840
        %4986 = vst.msk [vmem:[#allocation3 + $0xc0] sm:$0xff] %vm4961, %v4842
        %4987 = vst.msk [vmem:[#allocation3 + $0xc8] sm:$0xff] %vm4961, %v4844
        %4988 = vst.msk [vmem:[#allocation3 + $0xd0] sm:$0xff] %vm4961, %v4846
        %4989 = vst.msk [vmem:[#allocation3 + $0xd8] sm:$0xff] %vm4961, %v4848
        %4990 = vst.msk [vmem:[#allocation3 + $0xe0] sm:$0xff] %vm4961, %v4850
        %4991 = vst.msk [vmem:[#allocation3 + $0xe8] sm:$0xff] %vm4961, %v4852
        %4992 = vst.msk [vmem:[#allocation3 + $0xf0] sm:$0xff] %vm4961, %v4854
        %4993 = vst.msk [vmem:[#allocation3 + $0xf8] sm:$0xff] %vm4961, %v4856
        %4994 = vst.msk [vmem:[#allocation3 + $0x100] sm:$0xff] %vm4961, %v4858
        %4995 = vst.msk [vmem:[#allocation3 + $0x108] sm:$0xff] %vm4961, %v4860
        %4996 = vst.msk [vmem:[#allocation3 + $0x110] sm:$0xff] %vm4961, %v4862
        %4997 = vst.msk [vmem:[#allocation3 + $0x118] sm:$0xff] %vm4961, %v4864
        %4998 = vst.msk [vmem:[#allocation3 + $0x120] sm:$0xff] %vm4961, %v4866
        %4999 = vst.msk [vmem:[#allocation3 + $0x128] sm:$0xff] %vm4961, %v4868
        %5000 = vst.msk [vmem:[#allocation3 + $0x130] sm:$0xff] %vm4961, %v4870
        %5001 = vst.msk [vmem:[#allocation3 + $0x138] sm:$0xff] %vm4961, %v4872
        %5002 = vst.msk [vmem:[#allocation3 + $0x140] sm:$0xff] %vm4961, %v4874
        %5003 = vst.msk [vmem:[#allocation3 + $0x148] sm:$0xff] %vm4961, %v4876
        %5004 = vst.msk [vmem:[#allocation3 + $0x150] sm:$0xff] %vm4961, %v4878
        %5005 = vst.msk [vmem:[#allocation3 + $0x158] sm:$0xff] %vm4961, %v4880
        %5006 = vst.msk [vmem:[#allocation3 + $0x160] sm:$0xff] %vm4961, %v4882
        %5007 = vst.msk [vmem:[#allocation3 + $0x168] sm:$0xff] %vm4961, %v4884
        %5008 = vst.msk [vmem:[#allocation3 + $0x170] sm:$0xff] %vm4961, %v4886
        %5009 = vst.msk [vmem:[#allocation3 + $0x178] sm:$0xff] %vm4961, %v4888
        %5010 = vst.msk [vmem:[#allocation3 + $0x180] sm:$0xff] %vm4961, %v4890
        %5011 = vst.msk [vmem:[#allocation3 + $0x188] sm:$0xff] %vm4961, %v4892
        %5012 = vst.msk [vmem:[#allocation3 + $0x190] sm:$0xff] %vm4961, %v4894
        %5013 = vst.msk [vmem:[#allocation3 + $0x198] sm:$0xff] %vm4961, %v4896
        %5014 = vst.msk [vmem:[#allocation3 + $0x1a0] sm:$0xff] %vm4961, %v4898
        %5015 = vst.msk [vmem:[#allocation3 + $0x1a8] sm:$0xff] %vm4961, %v4900
        %5016 = vst.msk [vmem:[#allocation3 + $0x1b0] sm:$0xff] %vm4961, %v4902
        %5017 = vst.msk [vmem:[#allocation3 + $0x1b8] sm:$0xff] %vm4961, %v4904
        %v5018 = vld [vmem:[%s1710] sm:$0xff]
        %v5019 = vld [vmem:[%s1710 + $0x8] sm:$0xff]
        %v5020 = vld [vmem:[%s1710 + $0x18] sm:$0xff]
        %v5021 = vld [vmem:[%s1710 + $0x20] sm:$0xff]
        %v5022 = vld [vmem:[%s1710 + $0x30] sm:$0xff]
        %v5023 = vld [vmem:[%s1710 + $0x38] sm:$0xff]
        %v5024 = vld [vmem:[%s1710 + $0x48] sm:$0xff]
        %v5025 = vld [vmem:[%s1710 + $0x50] sm:$0xff]
        %v5026 = vld [vmem:[%s1710 + $0x60] sm:$0xff]
        %v5027 = vld [vmem:[%s1710 + $0x68] sm:$0xff]
        %v5028 = vld [vmem:[%s1710 + $0x78] sm:$0xff]
        %v5029 = vld [vmem:[%s1710 + $0x80] sm:$0xff]
        %v5030 = vld [vmem:[%s1710 + $0x90] sm:$0xff]
        %v5031 = vld [vmem:[%s1710 + $0x98] sm:$0xff]
        %v5032 = vld [vmem:[%s1710 + $0xa8] sm:$0xff]
        %v5033 = vld [vmem:[%s1710 + $0xb0] sm:$0xff]
        %v5034 = vld [vmem:[%s1710 + $0xc0] sm:$0xff]
        %v5035 = vld [vmem:[%s1710 + $0xc8] sm:$0xff]
        %v5036 = vld [vmem:[%s1710 + $0xd8] sm:$0xff]
        %v5037 = vld [vmem:[%s1710 + $0xe0] sm:$0xff]
        %v5038 = vld [vmem:[%s1710 + $0xf0] sm:$0xff]
        %v5039 = vld [vmem:[%s1710 + $0xf8] sm:$0xff]
        %v5040 = vld [vmem:[%s1710 + $0x108] sm:$0xff]
        %v5041 = vld [vmem:[%s1710 + $0x110] sm:$0xff]
        %v5042 = vld [vmem:[%s1710 + $0x120] sm:$0xff]
        %v5043 = vld [vmem:[%s1710 + $0x128] sm:$0xff]
        %v5044 = vld [vmem:[%s1710 + $0x138] sm:$0xff]
        %v5045 = vld [vmem:[%s1710 + $0x140] sm:$0xff]
        %v5046 = vld [vmem:[%s1710 + $0x180] sm:$0xff]
        %v5047 = vld [vmem:[%s1710 + $0x188] sm:$0xff]
        %v5048 = vld [vmem:[%s1710 + $0x198] sm:$0xff]
        %v5049 = vld [vmem:[%s1710 + $0x1a0] sm:$0xff]
        %v5050 = vld [vmem:[%s1710 + $0x1b0] sm:$0xff]
        %v5051 = vld [vmem:[%s1710 + $0x1b8] sm:$0xff]
        %v5052 = vld [vmem:[%s1710 + $0x1c8] sm:$0xff]
        %v5053 = vld [vmem:[%s1710 + $0x1d0] sm:$0xff]
        %v5054 = vld [vmem:[%s1710 + $0x1e0] sm:$0xff]
        %v5055 = vld [vmem:[%s1710 + $0x1e8] sm:$0xff]
        %v5056 = vld [vmem:[%s1710 + $0x1f8] sm:$0xff]
        %v5057 = vld [vmem:[%s1710 + $0x200] sm:$0xff]
        %v5058 = vld [vmem:[%s1710 + $0x210] sm:$0xff]
        %v5059 = vld [vmem:[%s1710 + $0x218] sm:$0xff]
        %v5060 = vld [vmem:[%s1710 + $0x228] sm:$0xff]
        %v5061 = vld [vmem:[%s1710 + $0x230] sm:$0xff]
        %v5062 = vld [vmem:[%s1710 + $0x240] sm:$0xff]
        %v5063 = vld [vmem:[%s1710 + $0x248] sm:$0xff]
        %v5064 = vld [vmem:[%s1710 + $0x258] sm:$0xff]
        %v5065 = vld [vmem:[%s1710 + $0x260] sm:$0xff]
        %v5066 = vld [vmem:[%s1710 + $0x270] sm:$0xff]
        %v5067 = vld [vmem:[%s1710 + $0x278] sm:$0xff]
        %v5068 = vld [vmem:[%s1710 + $0x288] sm:$0xff]
        %v5069 = vld [vmem:[%s1710 + $0x290] sm:$0xff]
        %v5070 = vld [vmem:[%s1710 + $0x2a0] sm:$0xff]
        %v5071 = vld [vmem:[%s1710 + $0x2a8] sm:$0xff]
        %v5072 = vld [vmem:[%s1710 + $0x2b8] sm:$0xff]
        %v5073 = vld [vmem:[%s1710 + $0x2c0] sm:$0xff]
        %5130 = vrot.lane.b32.xlu0 %v5018, 24
        %v5131 = vpop.permute.xlu0 %5130
        %5132 = vrot.lane.b32.xlu0 %v5019, 24
        %v5133 = vpop.permute.xlu0 %5132
        %5134 = vrot.lane.b32.xlu0 %v5020, 24
        %v5135 = vpop.permute.xlu0 %5134
        %5136 = vrot.lane.b32.xlu0 %v5021, 24
        %v5137 = vpop.permute.xlu0 %5136
        %5138 = vrot.lane.b32.xlu0 %v5022, 24
        %v5139 = vpop.permute.xlu0 %5138
        %5140 = vrot.lane.b32.xlu0 %v5023, 24
        %v5141 = vpop.permute.xlu0 %5140
        %5142 = vrot.lane.b32.xlu0 %v5024, 24
        %v5143 = vpop.permute.xlu0 %5142
        %5144 = vrot.lane.b32.xlu0 %v5025, 24
        %v5145 = vpop.permute.xlu0 %5144
        %5146 = vrot.lane.b32.xlu0 %v5026, 24
        %v5147 = vpop.permute.xlu0 %5146
        %5148 = vrot.lane.b32.xlu0 %v5027, 24
        %v5149 = vpop.permute.xlu0 %5148
        %5150 = vrot.lane.b32.xlu0 %v5028, 24
        %v5151 = vpop.permute.xlu0 %5150
        %5152 = vrot.lane.b32.xlu0 %v5029, 24
        %v5153 = vpop.permute.xlu0 %5152
        %5154 = vrot.lane.b32.xlu0 %v5030, 24
        %v5155 = vpop.permute.xlu0 %5154
        %5156 = vrot.lane.b32.xlu0 %v5031, 24
        %v5157 = vpop.permute.xlu0 %5156
        %5158 = vrot.lane.b32.xlu0 %v5032, 24
        %v5159 = vpop.permute.xlu0 %5158
        %5160 = vrot.lane.b32.xlu0 %v5033, 24
        %v5161 = vpop.permute.xlu0 %5160
        %5162 = vrot.lane.b32.xlu0 %v5034, 24
        %v5163 = vpop.permute.xlu0 %5162
        %5164 = vrot.lane.b32.xlu0 %v5035, 24
        %v5165 = vpop.permute.xlu0 %5164
        %5166 = vrot.lane.b32.xlu0 %v5036, 24
        %v5167 = vpop.permute.xlu0 %5166
        %5168 = vrot.lane.b32.xlu0 %v5037, 24
        %v5169 = vpop.permute.xlu0 %5168
        %5170 = vrot.lane.b32.xlu0 %v5038, 24
        %v5171 = vpop.permute.xlu0 %5170
        %5172 = vrot.lane.b32.xlu0 %v5039, 24
        %v5173 = vpop.permute.xlu0 %5172
        %5174 = vrot.lane.b32.xlu0 %v5040, 24
        %v5175 = vpop.permute.xlu0 %5174
        %5176 = vrot.lane.b32.xlu0 %v5041, 24
        %v5177 = vpop.permute.xlu0 %5176
        %5178 = vrot.lane.b32.xlu0 %v5042, 24
        %v5179 = vpop.permute.xlu0 %5178
        %5180 = vrot.lane.b32.xlu0 %v5043, 24
        %v5181 = vpop.permute.xlu0 %5180
        %5182 = vrot.lane.b32.xlu0 %v5044, 24
        %v5183 = vpop.permute.xlu0 %5182
        %5184 = vrot.lane.b32.xlu0 %v5045, 24
        %v5185 = vpop.permute.xlu0 %5184
        %5186 = vrot.lane.b32.xlu0 %v5046, 24
        %v5187 = vpop.permute.xlu0 %5186
        %5188 = vrot.lane.b32.xlu0 %v5047, 24
        %v5189 = vpop.permute.xlu0 %5188
        %5190 = vrot.lane.b32.xlu0 %v5048, 24
        %v5191 = vpop.permute.xlu0 %5190
        %5192 = vrot.lane.b32.xlu0 %v5049, 24
        %v5193 = vpop.permute.xlu0 %5192
        %5194 = vrot.lane.b32.xlu0 %v5050, 24
        %v5195 = vpop.permute.xlu0 %5194
        %5196 = vrot.lane.b32.xlu0 %v5051, 24
        %v5197 = vpop.permute.xlu0 %5196
        %5198 = vrot.lane.b32.xlu0 %v5052, 24
        %v5199 = vpop.permute.xlu0 %5198
        %5200 = vrot.lane.b32.xlu0 %v5053, 24
        %v5201 = vpop.permute.xlu0 %5200
        %5202 = vrot.lane.b32.xlu0 %v5054, 24
        %v5203 = vpop.permute.xlu0 %5202
        %5204 = vrot.lane.b32.xlu0 %v5055, 24
        %v5205 = vpop.permute.xlu0 %5204
        %5206 = vrot.lane.b32.xlu0 %v5056, 24
        %v5207 = vpop.permute.xlu0 %5206
        %5208 = vrot.lane.b32.xlu0 %v5057, 24
        %v5209 = vpop.permute.xlu0 %5208
        %5210 = vrot.lane.b32.xlu0 %v5058, 24
        %v5211 = vpop.permute.xlu0 %5210
        %5212 = vrot.lane.b32.xlu0 %v5059, 24
        %v5213 = vpop.permute.xlu0 %5212
        %5214 = vrot.lane.b32.xlu0 %v5060, 24
        %v5215 = vpop.permute.xlu0 %5214
        %5216 = vrot.lane.b32.xlu0 %v5061, 24
        %v5217 = vpop.permute.xlu0 %5216
        %5218 = vrot.lane.b32.xlu0 %v5062, 24
        %v5219 = vpop.permute.xlu0 %5218
        %5220 = vrot.lane.b32.xlu0 %v5063, 24
        %v5221 = vpop.permute.xlu0 %5220
        %5222 = vrot.lane.b32.xlu0 %v5064, 24
        %v5223 = vpop.permute.xlu0 %5222
        %5224 = vrot.lane.b32.xlu0 %v5065, 24
        %v5225 = vpop.permute.xlu0 %5224
        %5226 = vrot.lane.b32.xlu0 %v5066, 24
        %v5227 = vpop.permute.xlu0 %5226
        %5228 = vrot.lane.b32.xlu0 %v5067, 24
        %v5229 = vpop.permute.xlu0 %5228
        %5230 = vrot.lane.b32.xlu0 %v5068, 24
        %v5231 = vpop.permute.xlu0 %5230
        %5232 = vrot.lane.b32.xlu0 %v5069, 24
        %v5233 = vpop.permute.xlu0 %5232
        %5234 = vrot.lane.b32.xlu0 %v5070, 24
        %v5235 = vpop.permute.xlu0 %5234
        %5236 = vrot.lane.b32.xlu0 %v5071, 24
        %v5237 = vpop.permute.xlu0 %5236
        %5238 = vrot.lane.b32.xlu0 %v5072, 24
        %v5239 = vpop.permute.xlu0 %5238
        %5240 = vrot.lane.b32.xlu0 %v5073, 24
        %v5241 = vpop.permute.xlu0 %5240
        %vm5298 = vcmask 261312
        %5299 = vst.msk [vmem:[#allocation3] sm:$0xff] %vm5298, %v5131
        %5300 = vst.msk [vmem:[#allocation3 + $0x8] sm:$0xff] %vm5298, %v5133
        %5301 = vst.msk [vmem:[#allocation3 + $0x10] sm:$0xff] %vm5298, %v5135
        %5302 = vst.msk [vmem:[#allocation3 + $0x18] sm:$0xff] %vm5298, %v5137
        %5303 = vst.msk [vmem:[#allocation3 + $0x20] sm:$0xff] %vm5298, %v5139
        %5304 = vst.msk [vmem:[#allocation3 + $0x28] sm:$0xff] %vm5298, %v5141
        %5305 = vst.msk [vmem:[#allocation3 + $0x30] sm:$0xff] %vm5298, %v5143
        %5306 = vst.msk [vmem:[#allocation3 + $0x38] sm:$0xff] %vm5298, %v5145
        %5307 = vst.msk [vmem:[#allocation3 + $0x40] sm:$0xff] %vm5298, %v5147
        %5308 = vst.msk [vmem:[#allocation3 + $0x48] sm:$0xff] %vm5298, %v5149
        %5309 = vst.msk [vmem:[#allocation3 + $0x50] sm:$0xff] %vm5298, %v5151
        %5310 = vst.msk [vmem:[#allocation3 + $0x58] sm:$0xff] %vm5298, %v5153
        %5311 = vst.msk [vmem:[#allocation3 + $0x60] sm:$0xff] %vm5298, %v5155
        %5312 = vst.msk [vmem:[#allocation3 + $0x68] sm:$0xff] %vm5298, %v5157
        %5313 = vst.msk [vmem:[#allocation3 + $0x70] sm:$0xff] %vm5298, %v5159
        %5314 = vst.msk [vmem:[#allocation3 + $0x78] sm:$0xff] %vm5298, %v5161
        %5315 = vst.msk [vmem:[#allocation3 + $0x80] sm:$0xff] %vm5298, %v5163
        %5316 = vst.msk [vmem:[#allocation3 + $0x88] sm:$0xff] %vm5298, %v5165
        %5317 = vst.msk [vmem:[#allocation3 + $0x90] sm:$0xff] %vm5298, %v5167
        %5318 = vst.msk [vmem:[#allocation3 + $0x98] sm:$0xff] %vm5298, %v5169
        %5319 = vst.msk [vmem:[#allocation3 + $0xa0] sm:$0xff] %vm5298, %v5171
        %5320 = vst.msk [vmem:[#allocation3 + $0xa8] sm:$0xff] %vm5298, %v5173
        %5321 = vst.msk [vmem:[#allocation3 + $0xb0] sm:$0xff] %vm5298, %v5175
        %5322 = vst.msk [vmem:[#allocation3 + $0xb8] sm:$0xff] %vm5298, %v5177
        %5323 = vst.msk [vmem:[#allocation3 + $0xc0] sm:$0xff] %vm5298, %v5179
        %5324 = vst.msk [vmem:[#allocation3 + $0xc8] sm:$0xff] %vm5298, %v5181
        %5325 = vst.msk [vmem:[#allocation3 + $0xd0] sm:$0xff] %vm5298, %v5183
        %5326 = vst.msk [vmem:[#allocation3 + $0xd8] sm:$0xff] %vm5298, %v5185
        %5327 = vst.msk [vmem:[#allocation3 + $0xe0] sm:$0xff] %vm5298, %v5187
        %5328 = vst.msk [vmem:[#allocation3 + $0xe8] sm:$0xff] %vm5298, %v5189
        %5329 = vst.msk [vmem:[#allocation3 + $0xf0] sm:$0xff] %vm5298, %v5191
        %5330 = vst.msk [vmem:[#allocation3 + $0xf8] sm:$0xff] %vm5298, %v5193
        %5331 = vst.msk [vmem:[#allocation3 + $0x100] sm:$0xff] %vm5298, %v5195
        %5332 = vst.msk [vmem:[#allocation3 + $0x108] sm:$0xff] %vm5298, %v5197
        %5333 = vst.msk [vmem:[#allocation3 + $0x110] sm:$0xff] %vm5298, %v5199
        %5334 = vst.msk [vmem:[#allocation3 + $0x118] sm:$0xff] %vm5298, %v5201
        %5335 = vst.msk [vmem:[#allocation3 + $0x120] sm:$0xff] %vm5298, %v5203
        %5336 = vst.msk [vmem:[#allocation3 + $0x128] sm:$0xff] %vm5298, %v5205
        %5337 = vst.msk [vmem:[#allocation3 + $0x130] sm:$0xff] %vm5298, %v5207
        %5338 = vst.msk [vmem:[#allocation3 + $0x138] sm:$0xff] %vm5298, %v5209
        %5339 = vst.msk [vmem:[#allocation3 + $0x140] sm:$0xff] %vm5298, %v5211
        %5340 = vst.msk [vmem:[#allocation3 + $0x148] sm:$0xff] %vm5298, %v5213
        %5341 = vst.msk [vmem:[#allocation3 + $0x150] sm:$0xff] %vm5298, %v5215
        %5342 = vst.msk [vmem:[#allocation3 + $0x158] sm:$0xff] %vm5298, %v5217
        %5343 = vst.msk [vmem:[#allocation3 + $0x160] sm:$0xff] %vm5298, %v5219
        %5344 = vst.msk [vmem:[#allocation3 + $0x168] sm:$0xff] %vm5298, %v5221
        %5345 = vst.msk [vmem:[#allocation3 + $0x170] sm:$0xff] %vm5298, %v5223
        %5346 = vst.msk [vmem:[#allocation3 + $0x178] sm:$0xff] %vm5298, %v5225
        %5347 = vst.msk [vmem:[#allocation3 + $0x180] sm:$0xff] %vm5298, %v5227
        %5348 = vst.msk [vmem:[#allocation3 + $0x188] sm:$0xff] %vm5298, %v5229
        %5349 = vst.msk [vmem:[#allocation3 + $0x190] sm:$0xff] %vm5298, %v5231
        %5350 = vst.msk [vmem:[#allocation3 + $0x198] sm:$0xff] %vm5298, %v5233
        %5351 = vst.msk [vmem:[#allocation3 + $0x1a0] sm:$0xff] %vm5298, %v5235
        %5352 = vst.msk [vmem:[#allocation3 + $0x1a8] sm:$0xff] %vm5298, %v5237
        %5353 = vst.msk [vmem:[#allocation3 + $0x1b0] sm:$0xff] %vm5298, %v5239
        %5354 = vst.msk [vmem:[#allocation3 + $0x1b8] sm:$0xff] %vm5298, %v5241
        %v5355 = vld [vmem:[%s1710 + $0x1] sm:$0xff]
        %v5356 = vld [vmem:[%s1710 + $0x9] sm:$0xff]
        %v5357 = vld [vmem:[%s1710 + $0x19] sm:$0xff]
        %v5358 = vld [vmem:[%s1710 + $0x21] sm:$0xff]
        %v5359 = vld [vmem:[%s1710 + $0x31] sm:$0xff]
        %v5360 = vld [vmem:[%s1710 + $0x39] sm:$0xff]
        %v5361 = vld [vmem:[%s1710 + $0x49] sm:$0xff]
        %v5362 = vld [vmem:[%s1710 + $0x51] sm:$0xff]
        %v5363 = vld [vmem:[%s1710 + $0x61] sm:$0xff]
        %v5364 = vld [vmem:[%s1710 + $0x69] sm:$0xff]
        %v5365 = vld [vmem:[%s1710 + $0x79] sm:$0xff]
        %v5366 = vld [vmem:[%s1710 + $0x81] sm:$0xff]
        %v5367 = vld [vmem:[%s1710 + $0x91] sm:$0xff]
        %v5368 = vld [vmem:[%s1710 + $0x99] sm:$0xff]
        %v5369 = vld [vmem:[%s1710 + $0xa9] sm:$0xff]
        %v5370 = vld [vmem:[%s1710 + $0xb1] sm:$0xff]
        %v5371 = vld [vmem:[%s1710 + $0xc1] sm:$0xff]
        %v5372 = vld [vmem:[%s1710 + $0xc9] sm:$0xff]
        %v5373 = vld [vmem:[%s1710 + $0xd9] sm:$0xff]
        %v5374 = vld [vmem:[%s1710 + $0xe1] sm:$0xff]
        %v5375 = vld [vmem:[%s1710 + $0xf1] sm:$0xff]
        %v5376 = vld [vmem:[%s1710 + $0xf9] sm:$0xff]
        %v5377 = vld [vmem:[%s1710 + $0x109] sm:$0xff]
        %v5378 = vld [vmem:[%s1710 + $0x111] sm:$0xff]
        %v5379 = vld [vmem:[%s1710 + $0x121] sm:$0xff]
        %v5380 = vld [vmem:[%s1710 + $0x129] sm:$0xff]
        %v5381 = vld [vmem:[%s1710 + $0x139] sm:$0xff]
        %v5382 = vld [vmem:[%s1710 + $0x141] sm:$0xff]
        %v5383 = vld [vmem:[%s1710 + $0x181] sm:$0xff]
        %v5384 = vld [vmem:[%s1710 + $0x189] sm:$0xff]
        %v5385 = vld [vmem:[%s1710 + $0x199] sm:$0xff]
        %v5386 = vld [vmem:[%s1710 + $0x1a1] sm:$0xff]
        %v5387 = vld [vmem:[%s1710 + $0x1b1] sm:$0xff]
        %v5388 = vld [vmem:[%s1710 + $0x1b9] sm:$0xff]
        %v5389 = vld [vmem:[%s1710 + $0x1c9] sm:$0xff]
        %v5390 = vld [vmem:[%s1710 + $0x1d1] sm:$0xff]
        %v5391 = vld [vmem:[%s1710 + $0x1e1] sm:$0xff]
        %v5392 = vld [vmem:[%s1710 + $0x1e9] sm:$0xff]
        %v5393 = vld [vmem:[%s1710 + $0x1f9] sm:$0xff]
        %v5394 = vld [vmem:[%s1710 + $0x201] sm:$0xff]
        %v5395 = vld [vmem:[%s1710 + $0x211] sm:$0xff]
        %v5396 = vld [vmem:[%s1710 + $0x219] sm:$0xff]
        %v5397 = vld [vmem:[%s1710 + $0x229] sm:$0xff]
        %v5398 = vld [vmem:[%s1710 + $0x231] sm:$0xff]
        %v5399 = vld [vmem:[%s1710 + $0x241] sm:$0xff]
        %v5400 = vld [vmem:[%s1710 + $0x249] sm:$0xff]
        %v5401 = vld [vmem:[%s1710 + $0x259] sm:$0xff]
        %v5402 = vld [vmem:[%s1710 + $0x261] sm:$0xff]
        %v5403 = vld [vmem:[%s1710 + $0x271] sm:$0xff]
        %v5404 = vld [vmem:[%s1710 + $0x279] sm:$0xff]
        %v5405 = vld [vmem:[%s1710 + $0x289] sm:$0xff]
        %v5406 = vld [vmem:[%s1710 + $0x291] sm:$0xff]
        %v5407 = vld [vmem:[%s1710 + $0x2a1] sm:$0xff]
        %v5408 = vld [vmem:[%s1710 + $0x2a9] sm:$0xff]
        %v5409 = vld [vmem:[%s1710 + $0x2b9] sm:$0xff]
        %v5410 = vld [vmem:[%s1710 + $0x2c1] sm:$0xff]
        %5467 = vrot.lane.b32.xlu0 %v5355, 32
        %v5468 = vpop.permute.xlu0 %5467
        %5469 = vrot.lane.b32.xlu0 %v5356, 32
        %v5470 = vpop.permute.xlu0 %5469
        %5471 = vrot.lane.b32.xlu0 %v5357, 32
        %v5472 = vpop.permute.xlu0 %5471
        %5473 = vrot.lane.b32.xlu0 %v5358, 32
        %v5474 = vpop.permute.xlu0 %5473
        %5475 = vrot.lane.b32.xlu0 %v5359, 32
        %v5476 = vpop.permute.xlu0 %5475
        %5477 = vrot.lane.b32.xlu0 %v5360, 32
        %v5478 = vpop.permute.xlu0 %5477
        %5479 = vrot.lane.b32.xlu0 %v5361, 32
        %v5480 = vpop.permute.xlu0 %5479
        %5481 = vrot.lane.b32.xlu0 %v5362, 32
        %v5482 = vpop.permute.xlu0 %5481
        %5483 = vrot.lane.b32.xlu0 %v5363, 32
        %v5484 = vpop.permute.xlu0 %5483
        %5485 = vrot.lane.b32.xlu0 %v5364, 32
        %v5486 = vpop.permute.xlu0 %5485
        %5487 = vrot.lane.b32.xlu0 %v5365, 32
        %v5488 = vpop.permute.xlu0 %5487
        %5489 = vrot.lane.b32.xlu0 %v5366, 32
        %v5490 = vpop.permute.xlu0 %5489
        %5491 = vrot.lane.b32.xlu0 %v5367, 32
        %v5492 = vpop.permute.xlu0 %5491
        %5493 = vrot.lane.b32.xlu0 %v5368, 32
        %v5494 = vpop.permute.xlu0 %5493
        %5495 = vrot.lane.b32.xlu0 %v5369, 32
        %v5496 = vpop.permute.xlu0 %5495
        %5497 = vrot.lane.b32.xlu0 %v5370, 32
        %v5498 = vpop.permute.xlu0 %5497
        %5499 = vrot.lane.b32.xlu0 %v5371, 32
        %v5500 = vpop.permute.xlu0 %5499
        %5501 = vrot.lane.b32.xlu0 %v5372, 32
        %v5502 = vpop.permute.xlu0 %5501
        %5503 = vrot.lane.b32.xlu0 %v5373, 32
        %v5504 = vpop.permute.xlu0 %5503
        %5505 = vrot.lane.b32.xlu0 %v5374, 32
        %v5506 = vpop.permute.xlu0 %5505
        %5507 = vrot.lane.b32.xlu0 %v5375, 32
        %v5508 = vpop.permute.xlu0 %5507
        %5509 = vrot.lane.b32.xlu0 %v5376, 32
        %v5510 = vpop.permute.xlu0 %5509
        %5511 = vrot.lane.b32.xlu0 %v5377, 32
        %v5512 = vpop.permute.xlu0 %5511
        %5513 = vrot.lane.b32.xlu0 %v5378, 32
        %v5514 = vpop.permute.xlu0 %5513
        %5515 = vrot.lane.b32.xlu0 %v5379, 32
        %v5516 = vpop.permute.xlu0 %5515
        %5517 = vrot.lane.b32.xlu0 %v5380, 32
        %v5518 = vpop.permute.xlu0 %5517
        %5519 = vrot.lane.b32.xlu0 %v5381, 32
        %v5520 = vpop.permute.xlu0 %5519
        %5521 = vrot.lane.b32.xlu0 %v5382, 32
        %v5522 = vpop.permute.xlu0 %5521
        %5523 = vrot.lane.b32.xlu0 %v5383, 32
        %v5524 = vpop.permute.xlu0 %5523
        %5525 = vrot.lane.b32.xlu0 %v5384, 32
        %v5526 = vpop.permute.xlu0 %5525
        %5527 = vrot.lane.b32.xlu0 %v5385, 32
        %v5528 = vpop.permute.xlu0 %5527
        %5529 = vrot.lane.b32.xlu0 %v5386, 32
        %v5530 = vpop.permute.xlu0 %5529
        %5531 = vrot.lane.b32.xlu0 %v5387, 32
        %v5532 = vpop.permute.xlu0 %5531
        %5533 = vrot.lane.b32.xlu0 %v5388, 32
        %v5534 = vpop.permute.xlu0 %5533
        %5535 = vrot.lane.b32.xlu0 %v5389, 32
        %v5536 = vpop.permute.xlu0 %5535
        %5537 = vrot.lane.b32.xlu0 %v5390, 32
        %v5538 = vpop.permute.xlu0 %5537
        %5539 = vrot.lane.b32.xlu0 %v5391, 32
        %v5540 = vpop.permute.xlu0 %5539
        %5541 = vrot.lane.b32.xlu0 %v5392, 32
        %v5542 = vpop.permute.xlu0 %5541
        %5543 = vrot.lane.b32.xlu0 %v5393, 32
        %v5544 = vpop.permute.xlu0 %5543
        %5545 = vrot.lane.b32.xlu0 %v5394, 32
        %v5546 = vpop.permute.xlu0 %5545
        %5547 = vrot.lane.b32.xlu0 %v5395, 32
        %v5548 = vpop.permute.xlu0 %5547
        %5549 = vrot.lane.b32.xlu0 %v5396, 32
        %v5550 = vpop.permute.xlu0 %5549
        %5551 = vrot.lane.b32.xlu0 %v5397, 32
        %v5552 = vpop.permute.xlu0 %5551
        %5553 = vrot.lane.b32.xlu0 %v5398, 32
        %v5554 = vpop.permute.xlu0 %5553
        %5555 = vrot.lane.b32.xlu0 %v5399, 32
        %v5556 = vpop.permute.xlu0 %5555
        %5557 = vrot.lane.b32.xlu0 %v5400, 32
        %v5558 = vpop.permute.xlu0 %5557
        %5559 = vrot.lane.b32.xlu0 %v5401, 32
        %v5560 = vpop.permute.xlu0 %5559
        %5561 = vrot.lane.b32.xlu0 %v5402, 32
        %v5562 = vpop.permute.xlu0 %5561
        %5563 = vrot.lane.b32.xlu0 %v5403, 32
        %v5564 = vpop.permute.xlu0 %5563
        %5565 = vrot.lane.b32.xlu0 %v5404, 32
        %v5566 = vpop.permute.xlu0 %5565
        %5567 = vrot.lane.b32.xlu0 %v5405, 32
        %v5568 = vpop.permute.xlu0 %5567
        %5569 = vrot.lane.b32.xlu0 %v5406, 32
        %v5570 = vpop.permute.xlu0 %5569
        %5571 = vrot.lane.b32.xlu0 %v5407, 32
        %v5572 = vpop.permute.xlu0 %5571
        %5573 = vrot.lane.b32.xlu0 %v5408, 32
        %v5574 = vpop.permute.xlu0 %5573
        %5575 = vrot.lane.b32.xlu0 %v5409, 32
        %v5576 = vpop.permute.xlu0 %5575
        %5577 = vrot.lane.b32.xlu0 %v5410, 32
        %v5578 = vpop.permute.xlu0 %5577
        %vm5635 = vcmask 326912
        %5636 = vst.msk [vmem:[#allocation3] sm:$0xff] %vm5635, %v5468
        %5637 = vst.msk [vmem:[#allocation3 + $0x8] sm:$0xff] %vm5635, %v5470
        %5638 = vst.msk [vmem:[#allocation3 + $0x10] sm:$0xff] %vm5635, %v5472
        %5639 = vst.msk [vmem:[#allocation3 + $0x18] sm:$0xff] %vm5635, %v5474
        %5640 = vst.msk [vmem:[#allocation3 + $0x20] sm:$0xff] %vm5635, %v5476
        %5641 = vst.msk [vmem:[#allocation3 + $0x28] sm:$0xff] %vm5635, %v5478
        %5642 = vst.msk [vmem:[#allocation3 + $0x30] sm:$0xff] %vm5635, %v5480
        %5643 = vst.msk [vmem:[#allocation3 + $0x38] sm:$0xff] %vm5635, %v5482
        %5644 = vst.msk [vmem:[#allocation3 + $0x40] sm:$0xff] %vm5635, %v5484
        %5645 = vst.msk [vmem:[#allocation3 + $0x48] sm:$0xff] %vm5635, %v5486
        %5646 = vst.msk [vmem:[#allocation3 + $0x50] sm:$0xff] %vm5635, %v5488
        %5647 = vst.msk [vmem:[#allocation3 + $0x58] sm:$0xff] %vm5635, %v5490
        %5648 = vst.msk [vmem:[#allocation3 + $0x60] sm:$0xff] %vm5635, %v5492
        %5649 = vst.msk [vmem:[#allocation3 + $0x68] sm:$0xff] %vm5635, %v5494
        %5650 = vst.msk [vmem:[#allocation3 + $0x70] sm:$0xff] %vm5635, %v5496
        %5651 = vst.msk [vmem:[#allocation3 + $0x78] sm:$0xff] %vm5635, %v5498
        %5652 = vst.msk [vmem:[#allocation3 + $0x80] sm:$0xff] %vm5635, %v5500
        %5653 = vst.msk [vmem:[#allocation3 + $0x88] sm:$0xff] %vm5635, %v5502
        %5654 = vst.msk [vmem:[#allocation3 + $0x90] sm:$0xff] %vm5635, %v5504
        %5655 = vst.msk [vmem:[#allocation3 + $0x98] sm:$0xff] %vm5635, %v5506
        %5656 = vst.msk [vmem:[#allocation3 + $0xa0] sm:$0xff] %vm5635, %v5508
        %5657 = vst.msk [vmem:[#allocation3 + $0xa8] sm:$0xff] %vm5635, %v5510
        %5658 = vst.msk [vmem:[#allocation3 + $0xb0] sm:$0xff] %vm5635, %v5512
        %5659 = vst.msk [vmem:[#allocation3 + $0xb8] sm:$0xff] %vm5635, %v5514
        %5660 = vst.msk [vmem:[#allocation3 + $0xc0] sm:$0xff] %vm5635, %v5516
        %5661 = vst.msk [vmem:[#allocation3 + $0xc8] sm:$0xff] %vm5635, %v5518
        %5662 = vst.msk [vmem:[#allocation3 + $0xd0] sm:$0xff] %vm5635, %v5520
        %5663 = vst.msk [vmem:[#allocation3 + $0xd8] sm:$0xff] %vm5635, %v5522
        %5664 = vst.msk [vmem:[#allocation3 + $0xe0] sm:$0xff] %vm5635, %v5524
        %5665 = vst.msk [vmem:[#allocation3 + $0xe8] sm:$0xff] %vm5635, %v5526
        %5666 = vst.msk [vmem:[#allocation3 + $0xf0] sm:$0xff] %vm5635, %v5528
        %5667 = vst.msk [vmem:[#allocation3 + $0xf8] sm:$0xff] %vm5635, %v5530
        %5668 = vst.msk [vmem:[#allocation3 + $0x100] sm:$0xff] %vm5635, %v5532
        %5669 = vst.msk [vmem:[#allocation3 + $0x108] sm:$0xff] %vm5635, %v5534
        %5670 = vst.msk [vmem:[#allocation3 + $0x110] sm:$0xff] %vm5635, %v5536
        %5671 = vst.msk [vmem:[#allocation3 + $0x118] sm:$0xff] %vm5635, %v5538
        %5672 = vst.msk [vmem:[#allocation3 + $0x120] sm:$0xff] %vm5635, %v5540
        %5673 = vst.msk [vmem:[#allocation3 + $0x128] sm:$0xff] %vm5635, %v5542
        %5674 = vst.msk [vmem:[#allocation3 + $0x130] sm:$0xff] %vm5635, %v5544
        %5675 = vst.msk [vmem:[#allocation3 + $0x138] sm:$0xff] %vm5635, %v5546
        %5676 = vst.msk [vmem:[#allocation3 + $0x140] sm:$0xff] %vm5635, %v5548
        %5677 = vst.msk [vmem:[#allocation3 + $0x148] sm:$0xff] %vm5635, %v5550
        %5678 = vst.msk [vmem:[#allocation3 + $0x150] sm:$0xff] %vm5635, %v5552
        %5679 = vst.msk [vmem:[#allocation3 + $0x158] sm:$0xff] %vm5635, %v5554
        %5680 = vst.msk [vmem:[#allocation3 + $0x160] sm:$0xff] %vm5635, %v5556
        %5681 = vst.msk [vmem:[#allocation3 + $0x168] sm:$0xff] %vm5635, %v5558
        %5682 = vst.msk [vmem:[#allocation3 + $0x170] sm:$0xff] %vm5635, %v5560
        %5683 = vst.msk [vmem:[#allocation3 + $0x178] sm:$0xff] %vm5635, %v5562
        %5684 = vst.msk [vmem:[#allocation3 + $0x180] sm:$0xff] %vm5635, %v5564
        %5685 = vst.msk [vmem:[#allocation3 + $0x188] sm:$0xff] %vm5635, %v5566
        %5686 = vst.msk [vmem:[#allocation3 + $0x190] sm:$0xff] %vm5635, %v5568
        %5687 = vst.msk [vmem:[#allocation3 + $0x198] sm:$0xff] %vm5635, %v5570
        %5688 = vst.msk [vmem:[#allocation3 + $0x1a0] sm:$0xff] %vm5635, %v5572
        %5689 = vst.msk [vmem:[#allocation3 + $0x1a8] sm:$0xff] %vm5635, %v5574
        %5690 = vst.msk [vmem:[#allocation3 + $0x1b0] sm:$0xff] %vm5635, %v5576
        %5691 = vst.msk [vmem:[#allocation3 + $0x1b8] sm:$0xff] %vm5635, %v5578
        %v5692 = vld [vmem:[%s1710 + $0x2] sm:$0xff]
        %v5693 = vld [vmem:[%s1710 + $0xa] sm:$0xff]
        %v5694 = vld [vmem:[%s1710 + $0x1a] sm:$0xff]
        %v5695 = vld [vmem:[%s1710 + $0x22] sm:$0xff]
        %v5696 = vld [vmem:[%s1710 + $0x32] sm:$0xff]
        %v5697 = vld [vmem:[%s1710 + $0x3a] sm:$0xff]
        %v5698 = vld [vmem:[%s1710 + $0x4a] sm:$0xff]
        %v5699 = vld [vmem:[%s1710 + $0x52] sm:$0xff]
        %v5700 = vld [vmem:[%s1710 + $0x62] sm:$0xff]
        %v5701 = vld [vmem:[%s1710 + $0x6a] sm:$0xff]
        %v5702 = vld [vmem:[%s1710 + $0x7a] sm:$0xff]
        %v5703 = vld [vmem:[%s1710 + $0x82] sm:$0xff]
        %v5704 = vld [vmem:[%s1710 + $0x92] sm:$0xff]
        %v5705 = vld [vmem:[%s1710 + $0x9a] sm:$0xff]
        %v5706 = vld [vmem:[%s1710 + $0xaa] sm:$0xff]
        %v5707 = vld [vmem:[%s1710 + $0xb2] sm:$0xff]
        %v5708 = vld [vmem:[%s1710 + $0xc2] sm:$0xff]
        %v5709 = vld [vmem:[%s1710 + $0xca] sm:$0xff]
        %v5710 = vld [vmem:[%s1710 + $0xda] sm:$0xff]
        %v5711 = vld [vmem:[%s1710 + $0xe2] sm:$0xff]
        %v5712 = vld [vmem:[%s1710 + $0xf2] sm:$0xff]
        %v5713 = vld [vmem:[%s1710 + $0xfa] sm:$0xff]
        %v5714 = vld [vmem:[%s1710 + $0x10a] sm:$0xff]
        %v5715 = vld [vmem:[%s1710 + $0x112] sm:$0xff]
        %v5716 = vld [vmem:[%s1710 + $0x122] sm:$0xff]
        %v5717 = vld [vmem:[%s1710 + $0x12a] sm:$0xff]
        %v5718 = vld [vmem:[%s1710 + $0x13a] sm:$0xff]
        %v5719 = vld [vmem:[%s1710 + $0x142] sm:$0xff]
        %v5720 = vld [vmem:[%s1710 + $0x182] sm:$0xff]
        %v5721 = vld [vmem:[%s1710 + $0x18a] sm:$0xff]
        %v5722 = vld [vmem:[%s1710 + $0x19a] sm:$0xff]
        %v5723 = vld [vmem:[%s1710 + $0x1a2] sm:$0xff]
        %v5724 = vld [vmem:[%s1710 + $0x1b2] sm:$0xff]
        %v5725 = vld [vmem:[%s1710 + $0x1ba] sm:$0xff]
        %v5726 = vld [vmem:[%s1710 + $0x1ca] sm:$0xff]
        %v5727 = vld [vmem:[%s1710 + $0x1d2] sm:$0xff]
        %v5728 = vld [vmem:[%s1710 + $0x1e2] sm:$0xff]
        %v5729 = vld [vmem:[%s1710 + $0x1ea] sm:$0xff]
        %v5730 = vld [vmem:[%s1710 + $0x1fa] sm:$0xff]
        %v5731 = vld [vmem:[%s1710 + $0x202] sm:$0xff]
        %v5732 = vld [vmem:[%s1710 + $0x212] sm:$0xff]
        %v5733 = vld [vmem:[%s1710 + $0x21a] sm:$0xff]
        %v5734 = vld [vmem:[%s1710 + $0x22a] sm:$0xff]
        %v5735 = vld [vmem:[%s1710 + $0x232] sm:$0xff]
        %v5736 = vld [vmem:[%s1710 + $0x242] sm:$0xff]
        %v5737 = vld [vmem:[%s1710 + $0x24a] sm:$0xff]
        %v5738 = vld [vmem:[%s1710 + $0x25a] sm:$0xff]
        %v5739 = vld [vmem:[%s1710 + $0x262] sm:$0xff]
        %v5740 = vld [vmem:[%s1710 + $0x272] sm:$0xff]
        %v5741 = vld [vmem:[%s1710 + $0x27a] sm:$0xff]
        %v5742 = vld [vmem:[%s1710 + $0x28a] sm:$0xff]
        %v5743 = vld [vmem:[%s1710 + $0x292] sm:$0xff]
        %v5744 = vld [vmem:[%s1710 + $0x2a2] sm:$0xff]
        %v5745 = vld [vmem:[%s1710 + $0x2aa] sm:$0xff]
        %v5746 = vld [vmem:[%s1710 + $0x2ba] sm:$0xff]
        %v5747 = vld [vmem:[%s1710 + $0x2c2] sm:$0xff]
        %5804 = vrot.lane.b32.xlu0 %v5692, 40
        %v5805 = vpop.permute.xlu0 %5804
        %5806 = vrot.lane.b32.xlu0 %v5693, 40
        %v5807 = vpop.permute.xlu0 %5806
        %5808 = vrot.lane.b32.xlu0 %v5694, 40
        %v5809 = vpop.permute.xlu0 %5808
        %5810 = vrot.lane.b32.xlu0 %v5695, 40
        %v5811 = vpop.permute.xlu0 %5810
        %5812 = vrot.lane.b32.xlu0 %v5696, 40
        %v5813 = vpop.permute.xlu0 %5812
        %5814 = vrot.lane.b32.xlu0 %v5697, 40
        %v5815 = vpop.permute.xlu0 %5814
        %5816 = vrot.lane.b32.xlu0 %v5698, 40
        %v5817 = vpop.permute.xlu0 %5816
        %5818 = vrot.lane.b32.xlu0 %v5699, 40
        %v5819 = vpop.permute.xlu0 %5818
        %5820 = vrot.lane.b32.xlu0 %v5700, 40
        %v5821 = vpop.permute.xlu0 %5820
        %5822 = vrot.lane.b32.xlu0 %v5701, 40
        %v5823 = vpop.permute.xlu0 %5822
        %5824 = vrot.lane.b32.xlu0 %v5702, 40
        %v5825 = vpop.permute.xlu0 %5824
        %5826 = vrot.lane.b32.xlu0 %v5703, 40
        %v5827 = vpop.permute.xlu0 %5826
        %5828 = vrot.lane.b32.xlu0 %v5704, 40
        %v5829 = vpop.permute.xlu0 %5828
        %5830 = vrot.lane.b32.xlu0 %v5705, 40
        %v5831 = vpop.permute.xlu0 %5830
        %5832 = vrot.lane.b32.xlu0 %v5706, 40
        %v5833 = vpop.permute.xlu0 %5832
        %5834 = vrot.lane.b32.xlu0 %v5707, 40
        %v5835 = vpop.permute.xlu0 %5834
        %5836 = vrot.lane.b32.xlu0 %v5708, 40
        %v5837 = vpop.permute.xlu0 %5836
        %5838 = vrot.lane.b32.xlu0 %v5709, 40
        %v5839 = vpop.permute.xlu0 %5838
        %5840 = vrot.lane.b32.xlu0 %v5710, 40
        %v5841 = vpop.permute.xlu0 %5840
        %5842 = vrot.lane.b32.xlu0 %v5711, 40
        %v5843 = vpop.permute.xlu0 %5842
        %5844 = vrot.lane.b32.xlu0 %v5712, 40
        %v5845 = vpop.permute.xlu0 %5844
        %5846 = vrot.lane.b32.xlu0 %v5713, 40
        %v5847 = vpop.permute.xlu0 %5846
        %5848 = vrot.lane.b32.xlu0 %v5714, 40
        %v5849 = vpop.permute.xlu0 %5848
        %5850 = vrot.lane.b32.xlu0 %v5715, 40
        %v5851 = vpop.permute.xlu0 %5850
        %5852 = vrot.lane.b32.xlu0 %v5716, 40
        %v5853 = vpop.permute.xlu0 %5852
        %5854 = vrot.lane.b32.xlu0 %v5717, 40
        %v5855 = vpop.permute.xlu0 %5854
        %5856 = vrot.lane.b32.xlu0 %v5718, 40
        %v5857 = vpop.permute.xlu0 %5856
        %5858 = vrot.lane.b32.xlu0 %v5719, 40
        %v5859 = vpop.permute.xlu0 %5858
        %5860 = vrot.lane.b32.xlu0 %v5720, 40
        %v5861 = vpop.permute.xlu0 %5860
        %5862 = vrot.lane.b32.xlu0 %v5721, 40
        %v5863 = vpop.permute.xlu0 %5862
        %5864 = vrot.lane.b32.xlu0 %v5722, 40
        %v5865 = vpop.permute.xlu0 %5864
        %5866 = vrot.lane.b32.xlu0 %v5723, 40
        %v5867 = vpop.permute.xlu0 %5866
        %5868 = vrot.lane.b32.xlu0 %v5724, 40
        %v5869 = vpop.permute.xlu0 %5868
        %5870 = vrot.lane.b32.xlu0 %v5725, 40
        %v5871 = vpop.permute.xlu0 %5870
        %5872 = vrot.lane.b32.xlu0 %v5726, 40
        %v5873 = vpop.permute.xlu0 %5872
        %5874 = vrot.lane.b32.xlu0 %v5727, 40
        %v5875 = vpop.permute.xlu0 %5874
        %5876 = vrot.lane.b32.xlu0 %v5728, 40
        %v5877 = vpop.permute.xlu0 %5876
        %5878 = vrot.lane.b32.xlu0 %v5729, 40
        %v5879 = vpop.permute.xlu0 %5878
        %5880 = vrot.lane.b32.xlu0 %v5730, 40
        %v5881 = vpop.permute.xlu0 %5880
        %5882 = vrot.lane.b32.xlu0 %v5731, 40
        %v5883 = vpop.permute.xlu0 %5882
        %5884 = vrot.lane.b32.xlu0 %v5732, 40
        %v5885 = vpop.permute.xlu0 %5884
        %5886 = vrot.lane.b32.xlu0 %v5733, 40
        %v5887 = vpop.permute.xlu0 %5886
        %5888 = vrot.lane.b32.xlu0 %v5734, 40
        %v5889 = vpop.permute.xlu0 %5888
        %5890 = vrot.lane.b32.xlu0 %v5735, 40
        %v5891 = vpop.permute.xlu0 %5890
        %5892 = vrot.lane.b32.xlu0 %v5736, 40
        %v5893 = vpop.permute.xlu0 %5892
        %5894 = vrot.lane.b32.xlu0 %v5737, 40
        %v5895 = vpop.permute.xlu0 %5894
        %5896 = vrot.lane.b32.xlu0 %v5738, 40
        %v5897 = vpop.permute.xlu0 %5896
        %5898 = vrot.lane.b32.xlu0 %v5739, 40
        %v5899 = vpop.permute.xlu0 %5898
        %5900 = vrot.lane.b32.xlu0 %v5740, 40
        %v5901 = vpop.permute.xlu0 %5900
        %5902 = vrot.lane.b32.xlu0 %v5741, 40
        %v5903 = vpop.permute.xlu0 %5902
        %5904 = vrot.lane.b32.xlu0 %v5742, 40
        %v5905 = vpop.permute.xlu0 %5904
        %5906 = vrot.lane.b32.xlu0 %v5743, 40
        %v5907 = vpop.permute.xlu0 %5906
        %5908 = vrot.lane.b32.xlu0 %v5744, 40
        %v5909 = vpop.permute.xlu0 %5908
        %5910 = vrot.lane.b32.xlu0 %v5745, 40
        %v5911 = vpop.permute.xlu0 %5910
        %5912 = vrot.lane.b32.xlu0 %v5746, 40
        %v5913 = vpop.permute.xlu0 %5912
        %5914 = vrot.lane.b32.xlu0 %v5747, 40
        %v5915 = vpop.permute.xlu0 %5914
        %vm5972 = vcmask 392512
        %5973 = vst.msk [vmem:[#allocation3] sm:$0xff] %vm5972, %v5805
        %5974 = vst.msk [vmem:[#allocation3 + $0x8] sm:$0xff] %vm5972, %v5807
        %5975 = vst.msk [vmem:[#allocation3 + $0x10] sm:$0xff] %vm5972, %v5809
        %5976 = vst.msk [vmem:[#allocation3 + $0x18] sm:$0xff] %vm5972, %v5811
        %5977 = vst.msk [vmem:[#allocation3 + $0x20] sm:$0xff] %vm5972, %v5813
        %5978 = vst.msk [vmem:[#allocation3 + $0x28] sm:$0xff] %vm5972, %v5815
        %5979 = vst.msk [vmem:[#allocation3 + $0x30] sm:$0xff] %vm5972, %v5817
        %5980 = vst.msk [vmem:[#allocation3 + $0x38] sm:$0xff] %vm5972, %v5819
        %5981 = vst.msk [vmem:[#allocation3 + $0x40] sm:$0xff] %vm5972, %v5821
        %5982 = vst.msk [vmem:[#allocation3 + $0x48] sm:$0xff] %vm5972, %v5823
        %5983 = vst.msk [vmem:[#allocation3 + $0x50] sm:$0xff] %vm5972, %v5825
        %5984 = vst.msk [vmem:[#allocation3 + $0x58] sm:$0xff] %vm5972, %v5827
        %5985 = vst.msk [vmem:[#allocation3 + $0x60] sm:$0xff] %vm5972, %v5829
        %5986 = vst.msk [vmem:[#allocation3 + $0x68] sm:$0xff] %vm5972, %v5831
        %5987 = vst.msk [vmem:[#allocation3 + $0x70] sm:$0xff] %vm5972, %v5833
        %5988 = vst.msk [vmem:[#allocation3 + $0x78] sm:$0xff] %vm5972, %v5835
        %5989 = vst.msk [vmem:[#allocation3 + $0x80] sm:$0xff] %vm5972, %v5837
        %5990 = vst.msk [vmem:[#allocation3 + $0x88] sm:$0xff] %vm5972, %v5839
        %5991 = vst.msk [vmem:[#allocation3 + $0x90] sm:$0xff] %vm5972, %v5841
        %5992 = vst.msk [vmem:[#allocation3 + $0x98] sm:$0xff] %vm5972, %v5843
        %5993 = vst.msk [vmem:[#allocation3 + $0xa0] sm:$0xff] %vm5972, %v5845
        %5994 = vst.msk [vmem:[#allocation3 + $0xa8] sm:$0xff] %vm5972, %v5847
        %5995 = vst.msk [vmem:[#allocation3 + $0xb0] sm:$0xff] %vm5972, %v5849
        %5996 = vst.msk [vmem:[#allocation3 + $0xb8] sm:$0xff] %vm5972, %v5851
        %5997 = vst.msk [vmem:[#allocation3 + $0xc0] sm:$0xff] %vm5972, %v5853
        %5998 = vst.msk [vmem:[#allocation3 + $0xc8] sm:$0xff] %vm5972, %v5855
        %5999 = vst.msk [vmem:[#allocation3 + $0xd0] sm:$0xff] %vm5972, %v5857
        %6000 = vst.msk [vmem:[#allocation3 + $0xd8] sm:$0xff] %vm5972, %v5859
        %6001 = vst.msk [vmem:[#allocation3 + $0xe0] sm:$0xff] %vm5972, %v5861
        %6002 = vst.msk [vmem:[#allocation3 + $0xe8] sm:$0xff] %vm5972, %v5863
        %6003 = vst.msk [vmem:[#allocation3 + $0xf0] sm:$0xff] %vm5972, %v5865
        %6004 = vst.msk [vmem:[#allocation3 + $0xf8] sm:$0xff] %vm5972, %v5867
        %6005 = vst.msk [vmem:[#allocation3 + $0x100] sm:$0xff] %vm5972, %v5869
        %6006 = vst.msk [vmem:[#allocation3 + $0x108] sm:$0xff] %vm5972, %v5871
        %6007 = vst.msk [vmem:[#allocation3 + $0x110] sm:$0xff] %vm5972, %v5873
        %6008 = vst.msk [vmem:[#allocation3 + $0x118] sm:$0xff] %vm5972, %v5875
        %6009 = vst.msk [vmem:[#allocation3 + $0x120] sm:$0xff] %vm5972, %v5877
        %6010 = vst.msk [vmem:[#allocation3 + $0x128] sm:$0xff] %vm5972, %v5879
        %6011 = vst.msk [vmem:[#allocation3 + $0x130] sm:$0xff] %vm5972, %v5881
        %6012 = vst.msk [vmem:[#allocation3 + $0x138] sm:$0xff] %vm5972, %v5883
        %6013 = vst.msk [vmem:[#allocation3 + $0x140] sm:$0xff] %vm5972, %v5885
        %6014 = vst.msk [vmem:[#allocation3 + $0x148] sm:$0xff] %vm5972, %v5887
        %6015 = vst.msk [vmem:[#allocation3 + $0x150] sm:$0xff] %vm5972, %v5889
        %6016 = vst.msk [vmem:[#allocation3 + $0x158] sm:$0xff] %vm5972, %v5891
        %6017 = vst.msk [vmem:[#allocation3 + $0x160] sm:$0xff] %vm5972, %v5893
        %6018 = vst.msk [vmem:[#allocation3 + $0x168] sm:$0xff] %vm5972, %v5895
        %6019 = vst.msk [vmem:[#allocation3 + $0x170] sm:$0xff] %vm5972, %v5897
        %6020 = vst.msk [vmem:[#allocation3 + $0x178] sm:$0xff] %vm5972, %v5899
        %6021 = vst.msk [vmem:[#allocation3 + $0x180] sm:$0xff] %vm5972, %v5901
        %6022 = vst.msk [vmem:[#allocation3 + $0x188] sm:$0xff] %vm5972, %v5903
        %6023 = vst.msk [vmem:[#allocation3 + $0x190] sm:$0xff] %vm5972, %v5905
        %6024 = vst.msk [vmem:[#allocation3 + $0x198] sm:$0xff] %vm5972, %v5907
        %6025 = vst.msk [vmem:[#allocation3 + $0x1a0] sm:$0xff] %vm5972, %v5909
        %6026 = vst.msk [vmem:[#allocation3 + $0x1a8] sm:$0xff] %vm5972, %v5911
        %6027 = vst.msk [vmem:[#allocation3 + $0x1b0] sm:$0xff] %vm5972, %v5913
        %6028 = vst.msk [vmem:[#allocation3 + $0x1b8] sm:$0xff] %vm5972, %v5915
        %s6029 = scalar_lea.vmem [#allocation2], 48
        %v6030 = vld [vmem:[%s6029] sm:$0xff]
        %v6031 = vld [vmem:[%s6029 + $0x8] sm:$0xff]
        %v6032 = vld [vmem:[%s6029 + $0x18] sm:$0xff]
        %v6033 = vld [vmem:[%s6029 + $0x20] sm:$0xff]
        %v6034 = vld [vmem:[%s6029 + $0x30] sm:$0xff]
        %v6035 = vld [vmem:[%s6029 + $0x38] sm:$0xff]
        %v6036 = vld [vmem:[%s6029 + $0x48] sm:$0xff]
        %v6037 = vld [vmem:[%s6029 + $0x50] sm:$0xff]
        %v6038 = vld [vmem:[%s6029 + $0x60] sm:$0xff]
        %v6039 = vld [vmem:[%s6029 + $0x68] sm:$0xff]
        %v6040 = vld [vmem:[%s6029 + $0x78] sm:$0xff]
        %v6041 = vld [vmem:[%s6029 + $0x80] sm:$0xff]
        %v6042 = vld [vmem:[%s6029 + $0x90] sm:$0xff]
        %v6043 = vld [vmem:[%s6029 + $0x98] sm:$0xff]
        %v6044 = vld [vmem:[%s6029 + $0xa8] sm:$0xff]
        %v6045 = vld [vmem:[%s6029 + $0xb0] sm:$0xff]
        %v6046 = vld [vmem:[%s6029 + $0xc0] sm:$0xff]
        %v6047 = vld [vmem:[%s6029 + $0xc8] sm:$0xff]
        %v6048 = vld [vmem:[%s6029 + $0xd8] sm:$0xff]
        %v6049 = vld [vmem:[%s6029 + $0xe0] sm:$0xff]
        %v6050 = vld [vmem:[%s6029 + $0xf0] sm:$0xff]
        %v6051 = vld [vmem:[%s6029 + $0xf8] sm:$0xff]
        %v6052 = vld [vmem:[%s6029 + $0x108] sm:$0xff]
        %v6053 = vld [vmem:[%s6029 + $0x110] sm:$0xff]
        %v6054 = vld [vmem:[%s6029 + $0x120] sm:$0xff]
        %v6055 = vld [vmem:[%s6029 + $0x128] sm:$0xff]
        %v6056 = vld [vmem:[%s6029 + $0x138] sm:$0xff]
        %v6057 = vld [vmem:[%s6029 + $0x140] sm:$0xff]
        %v6058 = vld [vmem:[%s6029 + $0x180] sm:$0xff]
        %v6059 = vld [vmem:[%s6029 + $0x188] sm:$0xff]
        %v6060 = vld [vmem:[%s6029 + $0x198] sm:$0xff]
        %v6061 = vld [vmem:[%s6029 + $0x1a0] sm:$0xff]
        %v6062 = vld [vmem:[%s6029 + $0x1b0] sm:$0xff]
        %v6063 = vld [vmem:[%s6029 + $0x1b8] sm:$0xff]
        %v6064 = vld [vmem:[%s6029 + $0x1c8] sm:$0xff]
        %v6065 = vld [vmem:[%s6029 + $0x1d0] sm:$0xff]
        %v6066 = vld [vmem:[%s6029 + $0x1e0] sm:$0xff]
        %v6067 = vld [vmem:[%s6029 + $0x1e8] sm:$0xff]
        %v6068 = vld [vmem:[%s6029 + $0x1f8] sm:$0xff]
        %v6069 = vld [vmem:[%s6029 + $0x200] sm:$0xff]
        %v6070 = vld [vmem:[%s6029 + $0x210] sm:$0xff]
        %v6071 = vld [vmem:[%s6029 + $0x218] sm:$0xff]
        %v6072 = vld [vmem:[%s6029 + $0x228] sm:$0xff]
        %v6073 = vld [vmem:[%s6029 + $0x230] sm:$0xff]
        %v6074 = vld [vmem:[%s6029 + $0x240] sm:$0xff]
        %v6075 = vld [vmem:[%s6029 + $0x248] sm:$0xff]
        %v6076 = vld [vmem:[%s6029 + $0x258] sm:$0xff]
        %v6077 = vld [vmem:[%s6029 + $0x260] sm:$0xff]
        %v6078 = vld [vmem:[%s6029 + $0x270] sm:$0xff]
        %v6079 = vld [vmem:[%s6029 + $0x278] sm:$0xff]
        %v6080 = vld [vmem:[%s6029 + $0x288] sm:$0xff]
        %v6081 = vld [vmem:[%s6029 + $0x290] sm:$0xff]
        %v6082 = vld [vmem:[%s6029 + $0x2a0] sm:$0xff]
        %v6083 = vld [vmem:[%s6029 + $0x2a8] sm:$0xff]
        %v6084 = vld [vmem:[%s6029 + $0x2b8] sm:$0xff]
        %v6085 = vld [vmem:[%s6029 + $0x2c0] sm:$0xff]
        %6142 = vrot.lane.b32.xlu0 %v6030, 48
        %v6143 = vpop.permute.xlu0 %6142
        %6144 = vrot.lane.b32.xlu0 %v6031, 48
        %v6145 = vpop.permute.xlu0 %6144
        %6146 = vrot.lane.b32.xlu0 %v6032, 48
        %v6147 = vpop.permute.xlu0 %6146
        %6148 = vrot.lane.b32.xlu0 %v6033, 48
        %v6149 = vpop.permute.xlu0 %6148
        %6150 = vrot.lane.b32.xlu0 %v6034, 48
        %v6151 = vpop.permute.xlu0 %6150
        %6152 = vrot.lane.b32.xlu0 %v6035, 48
        %v6153 = vpop.permute.xlu0 %6152
        %6154 = vrot.lane.b32.xlu0 %v6036, 48
        %v6155 = vpop.permute.xlu0 %6154
        %6156 = vrot.lane.b32.xlu0 %v6037, 48
        %v6157 = vpop.permute.xlu0 %6156
        %6158 = vrot.lane.b32.xlu0 %v6038, 48
        %v6159 = vpop.permute.xlu0 %6158
        %6160 = vrot.lane.b32.xlu0 %v6039, 48
        %v6161 = vpop.permute.xlu0 %6160
        %6162 = vrot.lane.b32.xlu0 %v6040, 48
        %v6163 = vpop.permute.xlu0 %6162
        %6164 = vrot.lane.b32.xlu0 %v6041, 48
        %v6165 = vpop.permute.xlu0 %6164
        %6166 = vrot.lane.b32.xlu0 %v6042, 48
        %v6167 = vpop.permute.xlu0 %6166
        %6168 = vrot.lane.b32.xlu0 %v6043, 48
        %v6169 = vpop.permute.xlu0 %6168
        %6170 = vrot.lane.b32.xlu0 %v6044, 48
        %v6171 = vpop.permute.xlu0 %6170
        %6172 = vrot.lane.b32.xlu0 %v6045, 48
        %v6173 = vpop.permute.xlu0 %6172
        %6174 = vrot.lane.b32.xlu0 %v6046, 48
        %v6175 = vpop.permute.xlu0 %6174
        %6176 = vrot.lane.b32.xlu0 %v6047, 48
        %v6177 = vpop.permute.xlu0 %6176
        %6178 = vrot.lane.b32.xlu0 %v6048, 48
        %v6179 = vpop.permute.xlu0 %6178
        %6180 = vrot.lane.b32.xlu0 %v6049, 48
        %v6181 = vpop.permute.xlu0 %6180
        %6182 = vrot.lane.b32.xlu0 %v6050, 48
        %v6183 = vpop.permute.xlu0 %6182
        %6184 = vrot.lane.b32.xlu0 %v6051, 48
        %v6185 = vpop.permute.xlu0 %6184
        %6186 = vrot.lane.b32.xlu0 %v6052, 48
        %v6187 = vpop.permute.xlu0 %6186
        %6188 = vrot.lane.b32.xlu0 %v6053, 48
        %v6189 = vpop.permute.xlu0 %6188
        %6190 = vrot.lane.b32.xlu0 %v6054, 48
        %v6191 = vpop.permute.xlu0 %6190
        %6192 = vrot.lane.b32.xlu0 %v6055, 48
        %v6193 = vpop.permute.xlu0 %6192
        %6194 = vrot.lane.b32.xlu0 %v6056, 48
        %v6195 = vpop.permute.xlu0 %6194
        %6196 = vrot.lane.b32.xlu0 %v6057, 48
        %v6197 = vpop.permute.xlu0 %6196
        %6198 = vrot.lane.b32.xlu0 %v6058, 48
        %v6199 = vpop.permute.xlu0 %6198
        %6200 = vrot.lane.b32.xlu0 %v6059, 48
        %v6201 = vpop.permute.xlu0 %6200
        %6202 = vrot.lane.b32.xlu0 %v6060, 48
        %v6203 = vpop.permute.xlu0 %6202
        %6204 = vrot.lane.b32.xlu0 %v6061, 48
        %v6205 = vpop.permute.xlu0 %6204
        %6206 = vrot.lane.b32.xlu0 %v6062, 48
        %v6207 = vpop.permute.xlu0 %6206
        %6208 = vrot.lane.b32.xlu0 %v6063, 48
        %v6209 = vpop.permute.xlu0 %6208
        %6210 = vrot.lane.b32.xlu0 %v6064, 48
        %v6211 = vpop.permute.xlu0 %6210
        %6212 = vrot.lane.b32.xlu0 %v6065, 48
        %v6213 = vpop.permute.xlu0 %6212
        %6214 = vrot.lane.b32.xlu0 %v6066, 48
        %v6215 = vpop.permute.xlu0 %6214
        %6216 = vrot.lane.b32.xlu0 %v6067, 48
        %v6217 = vpop.permute.xlu0 %6216
        %6218 = vrot.lane.b32.xlu0 %v6068, 48
        %v6219 = vpop.permute.xlu0 %6218
        %6220 = vrot.lane.b32.xlu0 %v6069, 48
        %v6221 = vpop.permute.xlu0 %6220
        %6222 = vrot.lane.b32.xlu0 %v6070, 48
        %v6223 = vpop.permute.xlu0 %6222
        %6224 = vrot.lane.b32.xlu0 %v6071, 48
        %v6225 = vpop.permute.xlu0 %6224
        %6226 = vrot.lane.b32.xlu0 %v6072, 48
        %v6227 = vpop.permute.xlu0 %6226
        %6228 = vrot.lane.b32.xlu0 %v6073, 48
        %v6229 = vpop.permute.xlu0 %6228
        %6230 = vrot.lane.b32.xlu0 %v6074, 48
        %v6231 = vpop.permute.xlu0 %6230
        %6232 = vrot.lane.b32.xlu0 %v6075, 48
        %v6233 = vpop.permute.xlu0 %6232
        %6234 = vrot.lane.b32.xlu0 %v6076, 48
        %v6235 = vpop.permute.xlu0 %6234
        %6236 = vrot.lane.b32.xlu0 %v6077, 48
        %v6237 = vpop.permute.xlu0 %6236
        %6238 = vrot.lane.b32.xlu0 %v6078, 48
        %v6239 = vpop.permute.xlu0 %6238
        %6240 = vrot.lane.b32.xlu0 %v6079, 48
        %v6241 = vpop.permute.xlu0 %6240
        %6242 = vrot.lane.b32.xlu0 %v6080, 48
        %v6243 = vpop.permute.xlu0 %6242
        %6244 = vrot.lane.b32.xlu0 %v6081, 48
        %v6245 = vpop.permute.xlu0 %6244
        %6246 = vrot.lane.b32.xlu0 %v6082, 48
        %v6247 = vpop.permute.xlu0 %6246
        %6248 = vrot.lane.b32.xlu0 %v6083, 48
        %v6249 = vpop.permute.xlu0 %6248
        %6250 = vrot.lane.b32.xlu0 %v6084, 48
        %v6251 = vpop.permute.xlu0 %6250
        %6252 = vrot.lane.b32.xlu0 %v6085, 48
        %v6253 = vpop.permute.xlu0 %6252
        %vm6310 = vcmask 458112
        %6311 = vst.msk [vmem:[#allocation3] sm:$0xff] %vm6310, %v6143
        %6312 = vst.msk [vmem:[#allocation3 + $0x8] sm:$0xff] %vm6310, %v6145
        %6313 = vst.msk [vmem:[#allocation3 + $0x10] sm:$0xff] %vm6310, %v6147
        %6314 = vst.msk [vmem:[#allocation3 + $0x18] sm:$0xff] %vm6310, %v6149
        %6315 = vst.msk [vmem:[#allocation3 + $0x20] sm:$0xff] %vm6310, %v6151
        %6316 = vst.msk [vmem:[#allocation3 + $0x28] sm:$0xff] %vm6310, %v6153
        %6317 = vst.msk [vmem:[#allocation3 + $0x30] sm:$0xff] %vm6310, %v6155
        %6318 = vst.msk [vmem:[#allocation3 + $0x38] sm:$0xff] %vm6310, %v6157
        %6319 = vst.msk [vmem:[#allocation3 + $0x40] sm:$0xff] %vm6310, %v6159
        %6320 = vst.msk [vmem:[#allocation3 + $0x48] sm:$0xff] %vm6310, %v6161
        %6321 = vst.msk [vmem:[#allocation3 + $0x50] sm:$0xff] %vm6310, %v6163
        %6322 = vst.msk [vmem:[#allocation3 + $0x58] sm:$0xff] %vm6310, %v6165
        %6323 = vst.msk [vmem:[#allocation3 + $0x60] sm:$0xff] %vm6310, %v6167
        %6324 = vst.msk [vmem:[#allocation3 + $0x68] sm:$0xff] %vm6310, %v6169
        %6325 = vst.msk [vmem:[#allocation3 + $0x70] sm:$0xff] %vm6310, %v6171
        %6326 = vst.msk [vmem:[#allocation3 + $0x78] sm:$0xff] %vm6310, %v6173
        %6327 = vst.msk [vmem:[#allocation3 + $0x80] sm:$0xff] %vm6310, %v6175
        %6328 = vst.msk [vmem:[#allocation3 + $0x88] sm:$0xff] %vm6310, %v6177
        %6329 = vst.msk [vmem:[#allocation3 + $0x90] sm:$0xff] %vm6310, %v6179
        %6330 = vst.msk [vmem:[#allocation3 + $0x98] sm:$0xff] %vm6310, %v6181
        %6331 = vst.msk [vmem:[#allocation3 + $0xa0] sm:$0xff] %vm6310, %v6183
        %6332 = vst.msk [vmem:[#allocation3 + $0xa8] sm:$0xff] %vm6310, %v6185
        %6333 = vst.msk [vmem:[#allocation3 + $0xb0] sm:$0xff] %vm6310, %v6187
        %6334 = vst.msk [vmem:[#allocation3 + $0xb8] sm:$0xff] %vm6310, %v6189
        %6335 = vst.msk [vmem:[#allocation3 + $0xc0] sm:$0xff] %vm6310, %v6191
        %6336 = vst.msk [vmem:[#allocation3 + $0xc8] sm:$0xff] %vm6310, %v6193
        %6337 = vst.msk [vmem:[#allocation3 + $0xd0] sm:$0xff] %vm6310, %v6195
        %6338 = vst.msk [vmem:[#allocation3 + $0xd8] sm:$0xff] %vm6310, %v6197
        %6339 = vst.msk [vmem:[#allocation3 + $0xe0] sm:$0xff] %vm6310, %v6199
        %6340 = vst.msk [vmem:[#allocation3 + $0xe8] sm:$0xff] %vm6310, %v6201
        %6341 = vst.msk [vmem:[#allocation3 + $0xf0] sm:$0xff] %vm6310, %v6203
        %6342 = vst.msk [vmem:[#allocation3 + $0xf8] sm:$0xff] %vm6310, %v6205
        %6343 = vst.msk [vmem:[#allocation3 + $0x100] sm:$0xff] %vm6310, %v6207
        %6344 = vst.msk [vmem:[#allocation3 + $0x108] sm:$0xff] %vm6310, %v6209
        %6345 = vst.msk [vmem:[#allocation3 + $0x110] sm:$0xff] %vm6310, %v6211
        %6346 = vst.msk [vmem:[#allocation3 + $0x118] sm:$0xff] %vm6310, %v6213
        %6347 = vst.msk [vmem:[#allocation3 + $0x120] sm:$0xff] %vm6310, %v6215
        %6348 = vst.msk [vmem:[#allocation3 + $0x128] sm:$0xff] %vm6310, %v6217
        %6349 = vst.msk [vmem:[#allocation3 + $0x130] sm:$0xff] %vm6310, %v6219
        %6350 = vst.msk [vmem:[#allocation3 + $0x138] sm:$0xff] %vm6310, %v6221
        %6351 = vst.msk [vmem:[#allocation3 + $0x140] sm:$0xff] %vm6310, %v6223
        %6352 = vst.msk [vmem:[#allocation3 + $0x148] sm:$0xff] %vm6310, %v6225
        %6353 = vst.msk [vmem:[#allocation3 + $0x150] sm:$0xff] %vm6310, %v6227
        %6354 = vst.msk [vmem:[#allocation3 + $0x158] sm:$0xff] %vm6310, %v6229
        %6355 = vst.msk [vmem:[#allocation3 + $0x160] sm:$0xff] %vm6310, %v6231
        %6356 = vst.msk [vmem:[#allocation3 + $0x168] sm:$0xff] %vm6310, %v6233
        %6357 = vst.msk [vmem:[#allocation3 + $0x170] sm:$0xff] %vm6310, %v6235
        %6358 = vst.msk [vmem:[#allocation3 + $0x178] sm:$0xff] %vm6310, %v6237
        %6359 = vst.msk [vmem:[#allocation3 + $0x180] sm:$0xff] %vm6310, %v6239
        %6360 = vst.msk [vmem:[#allocation3 + $0x188] sm:$0xff] %vm6310, %v6241
        %6361 = vst.msk [vmem:[#allocation3 + $0x190] sm:$0xff] %vm6310, %v6243
        %6362 = vst.msk [vmem:[#allocation3 + $0x198] sm:$0xff] %vm6310, %v6245
        %6363 = vst.msk [vmem:[#allocation3 + $0x1a0] sm:$0xff] %vm6310, %v6247
        %6364 = vst.msk [vmem:[#allocation3 + $0x1a8] sm:$0xff] %vm6310, %v6249
        %6365 = vst.msk [vmem:[#allocation3 + $0x1b0] sm:$0xff] %vm6310, %v6251
        %6366 = vst.msk [vmem:[#allocation3 + $0x1b8] sm:$0xff] %vm6310, %v6253
        %v6367 = vld [vmem:[%s6029 + $0x1] sm:$0xff]
        %v6368 = vld [vmem:[%s6029 + $0x9] sm:$0xff]
        %v6369 = vld [vmem:[%s6029 + $0x19] sm:$0xff]
        %v6370 = vld [vmem:[%s6029 + $0x21] sm:$0xff]
        %v6371 = vld [vmem:[%s6029 + $0x31] sm:$0xff]
        %v6372 = vld [vmem:[%s6029 + $0x39] sm:$0xff]
        %v6373 = vld [vmem:[%s6029 + $0x49] sm:$0xff]
        %v6374 = vld [vmem:[%s6029 + $0x51] sm:$0xff]
        %v6375 = vld [vmem:[%s6029 + $0x61] sm:$0xff]
        %v6376 = vld [vmem:[%s6029 + $0x69] sm:$0xff]
        %v6377 = vld [vmem:[%s6029 + $0x79] sm:$0xff]
        %v6378 = vld [vmem:[%s6029 + $0x81] sm:$0xff]
        %v6379 = vld [vmem:[%s6029 + $0x91] sm:$0xff]
        %v6380 = vld [vmem:[%s6029 + $0x99] sm:$0xff]
        %v6381 = vld [vmem:[%s6029 + $0xa9] sm:$0xff]
        %v6382 = vld [vmem:[%s6029 + $0xb1] sm:$0xff]
        %v6383 = vld [vmem:[%s6029 + $0xc1] sm:$0xff]
        %v6384 = vld [vmem:[%s6029 + $0xc9] sm:$0xff]
        %v6385 = vld [vmem:[%s6029 + $0xd9] sm:$0xff]
        %v6386 = vld [vmem:[%s6029 + $0xe1] sm:$0xff]
        %v6387 = vld [vmem:[%s6029 + $0xf1] sm:$0xff]
        %v6388 = vld [vmem:[%s6029 + $0xf9] sm:$0xff]
        %v6389 = vld [vmem:[%s6029 + $0x109] sm:$0xff]
        %v6390 = vld [vmem:[%s6029 + $0x111] sm:$0xff]
        %v6391 = vld [vmem:[%s6029 + $0x121] sm:$0xff]
        %v6392 = vld [vmem:[%s6029 + $0x129] sm:$0xff]
        %v6393 = vld [vmem:[%s6029 + $0x139] sm:$0xff]
        %v6394 = vld [vmem:[%s6029 + $0x141] sm:$0xff]
        %v6395 = vld [vmem:[%s6029 + $0x181] sm:$0xff]
        %v6396 = vld [vmem:[%s6029 + $0x189] sm:$0xff]
        %v6397 = vld [vmem:[%s6029 + $0x199] sm:$0xff]
        %v6398 = vld [vmem:[%s6029 + $0x1a1] sm:$0xff]
        %v6399 = vld [vmem:[%s6029 + $0x1b1] sm:$0xff]
        %v6400 = vld [vmem:[%s6029 + $0x1b9] sm:$0xff]
        %v6401 = vld [vmem:[%s6029 + $0x1c9] sm:$0xff]
        %v6402 = vld [vmem:[%s6029 + $0x1d1] sm:$0xff]
        %v6403 = vld [vmem:[%s6029 + $0x1e1] sm:$0xff]
        %v6404 = vld [vmem:[%s6029 + $0x1e9] sm:$0xff]
        %v6405 = vld [vmem:[%s6029 + $0x1f9] sm:$0xff]
        %v6406 = vld [vmem:[%s6029 + $0x201] sm:$0xff]
        %v6407 = vld [vmem:[%s6029 + $0x211] sm:$0xff]
        %v6408 = vld [vmem:[%s6029 + $0x219] sm:$0xff]
        %v6409 = vld [vmem:[%s6029 + $0x229] sm:$0xff]
        %v6410 = vld [vmem:[%s6029 + $0x231] sm:$0xff]
        %v6411 = vld [vmem:[%s6029 + $0x241] sm:$0xff]
        %v6412 = vld [vmem:[%s6029 + $0x249] sm:$0xff]
        %v6413 = vld [vmem:[%s6029 + $0x259] sm:$0xff]
        %v6414 = vld [vmem:[%s6029 + $0x261] sm:$0xff]
        %v6415 = vld [vmem:[%s6029 + $0x271] sm:$0xff]
        %v6416 = vld [vmem:[%s6029 + $0x279] sm:$0xff]
        %v6417 = vld [vmem:[%s6029 + $0x289] sm:$0xff]
        %v6418 = vld [vmem:[%s6029 + $0x291] sm:$0xff]
        %v6419 = vld [vmem:[%s6029 + $0x2a1] sm:$0xff]
        %v6420 = vld [vmem:[%s6029 + $0x2a9] sm:$0xff]
        %v6421 = vld [vmem:[%s6029 + $0x2b9] sm:$0xff]
        %v6422 = vld [vmem:[%s6029 + $0x2c1] sm:$0xff]
        %6479 = vrot.lane.b32.xlu0 %v6367, 56
        %v6480 = vpop.permute.xlu0 %6479
        %6481 = vrot.lane.b32.xlu0 %v6368, 56
        %v6482 = vpop.permute.xlu0 %6481
        %6483 = vrot.lane.b32.xlu0 %v6369, 56
        %v6484 = vpop.permute.xlu0 %6483
        %6485 = vrot.lane.b32.xlu0 %v6370, 56
        %v6486 = vpop.permute.xlu0 %6485
        %6487 = vrot.lane.b32.xlu0 %v6371, 56
        %v6488 = vpop.permute.xlu0 %6487
        %6489 = vrot.lane.b32.xlu0 %v6372, 56
        %v6490 = vpop.permute.xlu0 %6489
        %6491 = vrot.lane.b32.xlu0 %v6373, 56
        %v6492 = vpop.permute.xlu0 %6491
        %6493 = vrot.lane.b32.xlu0 %v6374, 56
        %v6494 = vpop.permute.xlu0 %6493
        %6495 = vrot.lane.b32.xlu0 %v6375, 56
        %v6496 = vpop.permute.xlu0 %6495
        %6497 = vrot.lane.b32.xlu0 %v6376, 56
        %v6498 = vpop.permute.xlu0 %6497
        %6499 = vrot.lane.b32.xlu0 %v6377, 56
        %v6500 = vpop.permute.xlu0 %6499
        %6501 = vrot.lane.b32.xlu0 %v6378, 56
        %v6502 = vpop.permute.xlu0 %6501
        %6503 = vrot.lane.b32.xlu0 %v6379, 56
        %v6504 = vpop.permute.xlu0 %6503
        %6505 = vrot.lane.b32.xlu0 %v6380, 56
        %v6506 = vpop.permute.xlu0 %6505
        %6507 = vrot.lane.b32.xlu0 %v6381, 56
        %v6508 = vpop.permute.xlu0 %6507
        %6509 = vrot.lane.b32.xlu0 %v6382, 56
        %v6510 = vpop.permute.xlu0 %6509
        %6511 = vrot.lane.b32.xlu0 %v6383, 56
        %v6512 = vpop.permute.xlu0 %6511
        %6513 = vrot.lane.b32.xlu0 %v6384, 56
        %v6514 = vpop.permute.xlu0 %6513
        %6515 = vrot.lane.b32.xlu0 %v6385, 56
        %v6516 = vpop.permute.xlu0 %6515
        %6517 = vrot.lane.b32.xlu0 %v6386, 56
        %v6518 = vpop.permute.xlu0 %6517
        %6519 = vrot.lane.b32.xlu0 %v6387, 56
        %v6520 = vpop.permute.xlu0 %6519
        %6521 = vrot.lane.b32.xlu0 %v6388, 56
        %v6522 = vpop.permute.xlu0 %6521
        %6523 = vrot.lane.b32.xlu0 %v6389, 56
        %v6524 = vpop.permute.xlu0 %6523
        %6525 = vrot.lane.b32.xlu0 %v6390, 56
        %v6526 = vpop.permute.xlu0 %6525
        %6527 = vrot.lane.b32.xlu0 %v6391, 56
        %v6528 = vpop.permute.xlu0 %6527
        %6529 = vrot.lane.b32.xlu0 %v6392, 56
        %v6530 = vpop.permute.xlu0 %6529
        %6531 = vrot.lane.b32.xlu0 %v6393, 56
        %v6532 = vpop.permute.xlu0 %6531
        %6533 = vrot.lane.b32.xlu0 %v6394, 56
        %v6534 = vpop.permute.xlu0 %6533
        %6535 = vrot.lane.b32.xlu0 %v6395, 56
        %v6536 = vpop.permute.xlu0 %6535
        %6537 = vrot.lane.b32.xlu0 %v6396, 56
        %v6538 = vpop.permute.xlu0 %6537
        %6539 = vrot.lane.b32.xlu0 %v6397, 56
        %v6540 = vpop.permute.xlu0 %6539
        %6541 = vrot.lane.b32.xlu0 %v6398, 56
        %v6542 = vpop.permute.xlu0 %6541
        %6543 = vrot.lane.b32.xlu0 %v6399, 56
        %v6544 = vpop.permute.xlu0 %6543
        %6545 = vrot.lane.b32.xlu0 %v6400, 56
        %v6546 = vpop.permute.xlu0 %6545
        %6547 = vrot.lane.b32.xlu0 %v6401, 56
        %v6548 = vpop.permute.xlu0 %6547
        %6549 = vrot.lane.b32.xlu0 %v6402, 56
        %v6550 = vpop.permute.xlu0 %6549
        %6551 = vrot.lane.b32.xlu0 %v6403, 56
        %v6552 = vpop.permute.xlu0 %6551
        %6553 = vrot.lane.b32.xlu0 %v6404, 56
        %v6554 = vpop.permute.xlu0 %6553
        %6555 = vrot.lane.b32.xlu0 %v6405, 56
        %v6556 = vpop.permute.xlu0 %6555
        %6557 = vrot.lane.b32.xlu0 %v6406, 56
        %v6558 = vpop.permute.xlu0 %6557
        %6559 = vrot.lane.b32.xlu0 %v6407, 56
        %v6560 = vpop.permute.xlu0 %6559
        %6561 = vrot.lane.b32.xlu0 %v6408, 56
        %v6562 = vpop.permute.xlu0 %6561
        %6563 = vrot.lane.b32.xlu0 %v6409, 56
        %v6564 = vpop.permute.xlu0 %6563
        %6565 = vrot.lane.b32.xlu0 %v6410, 56
        %v6566 = vpop.permute.xlu0 %6565
        %6567 = vrot.lane.b32.xlu0 %v6411, 56
        %v6568 = vpop.permute.xlu0 %6567
        %6569 = vrot.lane.b32.xlu0 %v6412, 56
        %v6570 = vpop.permute.xlu0 %6569
        %6571 = vrot.lane.b32.xlu0 %v6413, 56
        %v6572 = vpop.permute.xlu0 %6571
        %6573 = vrot.lane.b32.xlu0 %v6414, 56
        %v6574 = vpop.permute.xlu0 %6573
        %6575 = vrot.lane.b32.xlu0 %v6415, 56
        %v6576 = vpop.permute.xlu0 %6575
        %6577 = vrot.lane.b32.xlu0 %v6416, 56
        %v6578 = vpop.permute.xlu0 %6577
        %6579 = vrot.lane.b32.xlu0 %v6417, 56
        %v6580 = vpop.permute.xlu0 %6579
        %6581 = vrot.lane.b32.xlu0 %v6418, 56
        %v6582 = vpop.permute.xlu0 %6581
        %6583 = vrot.lane.b32.xlu0 %v6419, 56
        %v6584 = vpop.permute.xlu0 %6583
        %6585 = vrot.lane.b32.xlu0 %v6420, 56
        %v6586 = vpop.permute.xlu0 %6585
        %6587 = vrot.lane.b32.xlu0 %v6421, 56
        %v6588 = vpop.permute.xlu0 %6587
        %6589 = vrot.lane.b32.xlu0 %v6422, 56
        %v6590 = vpop.permute.xlu0 %6589
        %vm6647 = vcmask 523712
        %6648 = vst.msk [vmem:[#allocation3] sm:$0xff] %vm6647, %v6480
        %6649 = vst.msk [vmem:[#allocation3 + $0x8] sm:$0xff] %vm6647, %v6482
        %6650 = vst.msk [vmem:[#allocation3 + $0x10] sm:$0xff] %vm6647, %v6484
        %6651 = vst.msk [vmem:[#allocation3 + $0x18] sm:$0xff] %vm6647, %v6486
        %6652 = vst.msk [vmem:[#allocation3 + $0x20] sm:$0xff] %vm6647, %v6488
        %6653 = vst.msk [vmem:[#allocation3 + $0x28] sm:$0xff] %vm6647, %v6490
        %6654 = vst.msk [vmem:[#allocation3 + $0x30] sm:$0xff] %vm6647, %v6492
        %6655 = vst.msk [vmem:[#allocation3 + $0x38] sm:$0xff] %vm6647, %v6494
        %6656 = vst.msk [vmem:[#allocation3 + $0x40] sm:$0xff] %vm6647, %v6496
        %6657 = vst.msk [vmem:[#allocation3 + $0x48] sm:$0xff] %vm6647, %v6498
        %6658 = vst.msk [vmem:[#allocation3 + $0x50] sm:$0xff] %vm6647, %v6500
        %6659 = vst.msk [vmem:[#allocation3 + $0x58] sm:$0xff] %vm6647, %v6502
        %6660 = vst.msk [vmem:[#allocation3 + $0x60] sm:$0xff] %vm6647, %v6504
        %6661 = vst.msk [vmem:[#allocation3 + $0x68] sm:$0xff] %vm6647, %v6506
        %6662 = vst.msk [vmem:[#allocation3 + $0x70] sm:$0xff] %vm6647, %v6508
        %6663 = vst.msk [vmem:[#allocation3 + $0x78] sm:$0xff] %vm6647, %v6510
        %6664 = vst.msk [vmem:[#allocation3 + $0x80] sm:$0xff] %vm6647, %v6512
        %6665 = vst.msk [vmem:[#allocation3 + $0x88] sm:$0xff] %vm6647, %v6514
        %6666 = vst.msk [vmem:[#allocation3 + $0x90] sm:$0xff] %vm6647, %v6516
        %6667 = vst.msk [vmem:[#allocation3 + $0x98] sm:$0xff] %vm6647, %v6518
        %6668 = vst.msk [vmem:[#allocation3 + $0xa0] sm:$0xff] %vm6647, %v6520
        %6669 = vst.msk [vmem:[#allocation3 + $0xa8] sm:$0xff] %vm6647, %v6522
        %6670 = vst.msk [vmem:[#allocation3 + $0xb0] sm:$0xff] %vm6647, %v6524
        %6671 = vst.msk [vmem:[#allocation3 + $0xb8] sm:$0xff] %vm6647, %v6526
        %6672 = vst.msk [vmem:[#allocation3 + $0xc0] sm:$0xff] %vm6647, %v6528
        %6673 = vst.msk [vmem:[#allocation3 + $0xc8] sm:$0xff] %vm6647, %v6530
        %6674 = vst.msk [vmem:[#allocation3 + $0xd0] sm:$0xff] %vm6647, %v6532
        %6675 = vst.msk [vmem:[#allocation3 + $0xd8] sm:$0xff] %vm6647, %v6534
        %6676 = vst.msk [vmem:[#allocation3 + $0xe0] sm:$0xff] %vm6647, %v6536
        %6677 = vst.msk [vmem:[#allocation3 + $0xe8] sm:$0xff] %vm6647, %v6538
        %6678 = vst.msk [vmem:[#allocation3 + $0xf0] sm:$0xff] %vm6647, %v6540
        %6679 = vst.msk [vmem:[#allocation3 + $0xf8] sm:$0xff] %vm6647, %v6542
        %6680 = vst.msk [vmem:[#allocation3 + $0x100] sm:$0xff] %vm6647, %v6544
        %6681 = vst.msk [vmem:[#allocation3 + $0x108] sm:$0xff] %vm6647, %v6546
        %6682 = vst.msk [vmem:[#allocation3 + $0x110] sm:$0xff] %vm6647, %v6548
        %6683 = vst.msk [vmem:[#allocation3 + $0x118] sm:$0xff] %vm6647, %v6550
        %6684 = vst.msk [vmem:[#allocation3 + $0x120] sm:$0xff] %vm6647, %v6552
        %6685 = vst.msk [vmem:[#allocation3 + $0x128] sm:$0xff] %vm6647, %v6554
        %6686 = vst.msk [vmem:[#allocation3 + $0x130] sm:$0xff] %vm6647, %v6556
        %6687 = vst.msk [vmem:[#allocation3 + $0x138] sm:$0xff] %vm6647, %v6558
        %6688 = vst.msk [vmem:[#allocation3 + $0x140] sm:$0xff] %vm6647, %v6560
        %6689 = vst.msk [vmem:[#allocation3 + $0x148] sm:$0xff] %vm6647, %v6562
        %6690 = vst.msk [vmem:[#allocation3 + $0x150] sm:$0xff] %vm6647, %v6564
        %6691 = vst.msk [vmem:[#allocation3 + $0x158] sm:$0xff] %vm6647, %v6566
        %6692 = vst.msk [vmem:[#allocation3 + $0x160] sm:$0xff] %vm6647, %v6568
        %6693 = vst.msk [vmem:[#allocation3 + $0x168] sm:$0xff] %vm6647, %v6570
        %6694 = vst.msk [vmem:[#allocation3 + $0x170] sm:$0xff] %vm6647, %v6572
        %6695 = vst.msk [vmem:[#allocation3 + $0x178] sm:$0xff] %vm6647, %v6574
        %6696 = vst.msk [vmem:[#allocation3 + $0x180] sm:$0xff] %vm6647, %v6576
        %6697 = vst.msk [vmem:[#allocation3 + $0x188] sm:$0xff] %vm6647, %v6578
        %6698 = vst.msk [vmem:[#allocation3 + $0x190] sm:$0xff] %vm6647, %v6580
        %6699 = vst.msk [vmem:[#allocation3 + $0x198] sm:$0xff] %vm6647, %v6582
        %6700 = vst.msk [vmem:[#allocation3 + $0x1a0] sm:$0xff] %vm6647, %v6584
        %6701 = vst.msk [vmem:[#allocation3 + $0x1a8] sm:$0xff] %vm6647, %v6586
        %6702 = vst.msk [vmem:[#allocation3 + $0x1b0] sm:$0xff] %vm6647, %v6588
        %6703 = vst.msk [vmem:[#allocation3 + $0x1b8] sm:$0xff] %vm6647, %v6590
        %v6704 = vld [vmem:[%s6029 + $0x2] sm:$0xff]
        %v6705 = vld [vmem:[%s6029 + $0xa] sm:$0xff]
        %v6706 = vld [vmem:[%s6029 + $0x1a] sm:$0xff]
        %v6707 = vld [vmem:[%s6029 + $0x22] sm:$0xff]
        %v6708 = vld [vmem:[%s6029 + $0x32] sm:$0xff]
        %v6709 = vld [vmem:[%s6029 + $0x3a] sm:$0xff]
        %v6710 = vld [vmem:[%s6029 + $0x4a] sm:$0xff]
        %v6711 = vld [vmem:[%s6029 + $0x52] sm:$0xff]
        %v6712 = vld [vmem:[%s6029 + $0x62] sm:$0xff]
        %v6713 = vld [vmem:[%s6029 + $0x6a] sm:$0xff]
        %v6714 = vld [vmem:[%s6029 + $0x7a] sm:$0xff]
        %v6715 = vld [vmem:[%s6029 + $0x82] sm:$0xff]
        %v6716 = vld [vmem:[%s6029 + $0x92] sm:$0xff]
        %v6717 = vld [vmem:[%s6029 + $0x9a] sm:$0xff]
        %v6718 = vld [vmem:[%s6029 + $0xaa] sm:$0xff]
        %v6719 = vld [vmem:[%s6029 + $0xb2] sm:$0xff]
        %v6720 = vld [vmem:[%s6029 + $0xc2] sm:$0xff]
        %v6721 = vld [vmem:[%s6029 + $0xca] sm:$0xff]
        %v6722 = vld [vmem:[%s6029 + $0xda] sm:$0xff]
        %v6723 = vld [vmem:[%s6029 + $0xe2] sm:$0xff]
        %v6724 = vld [vmem:[%s6029 + $0xf2] sm:$0xff]
        %v6725 = vld [vmem:[%s6029 + $0xfa] sm:$0xff]
        %v6726 = vld [vmem:[%s6029 + $0x10a] sm:$0xff]
        %v6727 = vld [vmem:[%s6029 + $0x112] sm:$0xff]
        %v6728 = vld [vmem:[%s6029 + $0x122] sm:$0xff]
        %v6729 = vld [vmem:[%s6029 + $0x12a] sm:$0xff]
        %v6730 = vld [vmem:[%s6029 + $0x13a] sm:$0xff]
        %v6731 = vld [vmem:[%s6029 + $0x142] sm:$0xff]
        %v6732 = vld [vmem:[%s6029 + $0x182] sm:$0xff]
        %v6733 = vld [vmem:[%s6029 + $0x18a] sm:$0xff]
        %v6734 = vld [vmem:[%s6029 + $0x19a] sm:$0xff]
        %v6735 = vld [vmem:[%s6029 + $0x1a2] sm:$0xff]
        %v6736 = vld [vmem:[%s6029 + $0x1b2] sm:$0xff]
        %v6737 = vld [vmem:[%s6029 + $0x1ba] sm:$0xff]
        %v6738 = vld [vmem:[%s6029 + $0x1ca] sm:$0xff]
        %v6739 = vld [vmem:[%s6029 + $0x1d2] sm:$0xff]
        %v6740 = vld [vmem:[%s6029 + $0x1e2] sm:$0xff]
        %v6741 = vld [vmem:[%s6029 + $0x1ea] sm:$0xff]
        %v6742 = vld [vmem:[%s6029 + $0x1fa] sm:$0xff]
        %v6743 = vld [vmem:[%s6029 + $0x202] sm:$0xff]
        %v6744 = vld [vmem:[%s6029 + $0x212] sm:$0xff]
        %v6745 = vld [vmem:[%s6029 + $0x21a] sm:$0xff]
        %v6746 = vld [vmem:[%s6029 + $0x22a] sm:$0xff]
        %v6747 = vld [vmem:[%s6029 + $0x232] sm:$0xff]
        %v6748 = vld [vmem:[%s6029 + $0x242] sm:$0xff]
        %v6749 = vld [vmem:[%s6029 + $0x24a] sm:$0xff]
        %v6750 = vld [vmem:[%s6029 + $0x25a] sm:$0xff]
        %v6751 = vld [vmem:[%s6029 + $0x262] sm:$0xff]
        %v6752 = vld [vmem:[%s6029 + $0x272] sm:$0xff]
        %v6753 = vld [vmem:[%s6029 + $0x27a] sm:$0xff]
        %v6754 = vld [vmem:[%s6029 + $0x28a] sm:$0xff]
        %v6755 = vld [vmem:[%s6029 + $0x292] sm:$0xff]
        %v6756 = vld [vmem:[%s6029 + $0x2a2] sm:$0xff]
        %v6757 = vld [vmem:[%s6029 + $0x2aa] sm:$0xff]
        %v6758 = vld [vmem:[%s6029 + $0x2ba] sm:$0xff]
        %v6759 = vld [vmem:[%s6029 + $0x2c2] sm:$0xff]
        %6816 = vrot.lane.b32.xlu0 %v6704, 64
        %v6817 = vpop.permute.xlu0 %6816
        %6818 = vrot.lane.b32.xlu0 %v6705, 64
        %v6819 = vpop.permute.xlu0 %6818
        %6820 = vrot.lane.b32.xlu0 %v6706, 64
        %v6821 = vpop.permute.xlu0 %6820
        %6822 = vrot.lane.b32.xlu0 %v6707, 64
        %v6823 = vpop.permute.xlu0 %6822
        %6824 = vrot.lane.b32.xlu0 %v6708, 64
        %v6825 = vpop.permute.xlu0 %6824
        %6826 = vrot.lane.b32.xlu0 %v6709, 64
        %v6827 = vpop.permute.xlu0 %6826
        %6828 = vrot.lane.b32.xlu0 %v6710, 64
        %v6829 = vpop.permute.xlu0 %6828
        %6830 = vrot.lane.b32.xlu0 %v6711, 64
        %v6831 = vpop.permute.xlu0 %6830
        %6832 = vrot.lane.b32.xlu0 %v6712, 64
        %v6833 = vpop.permute.xlu0 %6832
        %6834 = vrot.lane.b32.xlu0 %v6713, 64
        %v6835 = vpop.permute.xlu0 %6834
        %6836 = vrot.lane.b32.xlu0 %v6714, 64
        %v6837 = vpop.permute.xlu0 %6836
        %6838 = vrot.lane.b32.xlu0 %v6715, 64
        %v6839 = vpop.permute.xlu0 %6838
        %6840 = vrot.lane.b32.xlu0 %v6716, 64
        %v6841 = vpop.permute.xlu0 %6840
        %6842 = vrot.lane.b32.xlu0 %v6717, 64
        %v6843 = vpop.permute.xlu0 %6842
        %6844 = vrot.lane.b32.xlu0 %v6718, 64
        %v6845 = vpop.permute.xlu0 %6844
        %6846 = vrot.lane.b32.xlu0 %v6719, 64
        %v6847 = vpop.permute.xlu0 %6846
        %6848 = vrot.lane.b32.xlu0 %v6720, 64
        %v6849 = vpop.permute.xlu0 %6848
        %6850 = vrot.lane.b32.xlu0 %v6721, 64
        %v6851 = vpop.permute.xlu0 %6850
        %6852 = vrot.lane.b32.xlu0 %v6722, 64
        %v6853 = vpop.permute.xlu0 %6852
        %6854 = vrot.lane.b32.xlu0 %v6723, 64
        %v6855 = vpop.permute.xlu0 %6854
        %6856 = vrot.lane.b32.xlu0 %v6724, 64
        %v6857 = vpop.permute.xlu0 %6856
        %6858 = vrot.lane.b32.xlu0 %v6725, 64
        %v6859 = vpop.permute.xlu0 %6858
        %6860 = vrot.lane.b32.xlu0 %v6726, 64
        %v6861 = vpop.permute.xlu0 %6860
        %6862 = vrot.lane.b32.xlu0 %v6727, 64
        %v6863 = vpop.permute.xlu0 %6862
        %6864 = vrot.lane.b32.xlu0 %v6728, 64
        %v6865 = vpop.permute.xlu0 %6864
        %6866 = vrot.lane.b32.xlu0 %v6729, 64
        %v6867 = vpop.permute.xlu0 %6866
        %6868 = vrot.lane.b32.xlu0 %v6730, 64
        %v6869 = vpop.permute.xlu0 %6868
        %6870 = vrot.lane.b32.xlu0 %v6731, 64
        %v6871 = vpop.permute.xlu0 %6870
        %6872 = vrot.lane.b32.xlu0 %v6732, 64
        %v6873 = vpop.permute.xlu0 %6872
        %6874 = vrot.lane.b32.xlu0 %v6733, 64
        %v6875 = vpop.permute.xlu0 %6874
        %6876 = vrot.lane.b32.xlu0 %v6734, 64
        %v6877 = vpop.permute.xlu0 %6876
        %6878 = vrot.lane.b32.xlu0 %v6735, 64
        %v6879 = vpop.permute.xlu0 %6878
        %6880 = vrot.lane.b32.xlu0 %v6736, 64
        %v6881 = vpop.permute.xlu0 %6880
        %6882 = vrot.lane.b32.xlu0 %v6737, 64
        %v6883 = vpop.permute.xlu0 %6882
        %6884 = vrot.lane.b32.xlu0 %v6738, 64
        %v6885 = vpop.permute.xlu0 %6884
        %6886 = vrot.lane.b32.xlu0 %v6739, 64
        %v6887 = vpop.permute.xlu0 %6886
        %6888 = vrot.lane.b32.xlu0 %v6740, 64
        %v6889 = vpop.permute.xlu0 %6888
        %6890 = vrot.lane.b32.xlu0 %v6741, 64
        %v6891 = vpop.permute.xlu0 %6890
        %6892 = vrot.lane.b32.xlu0 %v6742, 64
        %v6893 = vpop.permute.xlu0 %6892
        %6894 = vrot.lane.b32.xlu0 %v6743, 64
        %v6895 = vpop.permute.xlu0 %6894
        %6896 = vrot.lane.b32.xlu0 %v6744, 64
        %v6897 = vpop.permute.xlu0 %6896
        %6898 = vrot.lane.b32.xlu0 %v6745, 64
        %v6899 = vpop.permute.xlu0 %6898
        %6900 = vrot.lane.b32.xlu0 %v6746, 64
        %v6901 = vpop.permute.xlu0 %6900
        %6902 = vrot.lane.b32.xlu0 %v6747, 64
        %v6903 = vpop.permute.xlu0 %6902
        %6904 = vrot.lane.b32.xlu0 %v6748, 64
        %v6905 = vpop.permute.xlu0 %6904
        %6906 = vrot.lane.b32.xlu0 %v6749, 64
        %v6907 = vpop.permute.xlu0 %6906
        %6908 = vrot.lane.b32.xlu0 %v6750, 64
        %v6909 = vpop.permute.xlu0 %6908
        %6910 = vrot.lane.b32.xlu0 %v6751, 64
        %v6911 = vpop.permute.xlu0 %6910
        %6912 = vrot.lane.b32.xlu0 %v6752, 64
        %v6913 = vpop.permute.xlu0 %6912
        %6914 = vrot.lane.b32.xlu0 %v6753, 64
        %v6915 = vpop.permute.xlu0 %6914
        %6916 = vrot.lane.b32.xlu0 %v6754, 64
        %v6917 = vpop.permute.xlu0 %6916
        %6918 = vrot.lane.b32.xlu0 %v6755, 64
        %v6919 = vpop.permute.xlu0 %6918
        %6920 = vrot.lane.b32.xlu0 %v6756, 64
        %v6921 = vpop.permute.xlu0 %6920
        %6922 = vrot.lane.b32.xlu0 %v6757, 64
        %v6923 = vpop.permute.xlu0 %6922
        %6924 = vrot.lane.b32.xlu0 %v6758, 64
        %v6925 = vpop.permute.xlu0 %6924
        %6926 = vrot.lane.b32.xlu0 %v6759, 64
        %v6927 = vpop.permute.xlu0 %6926
        %vm6984 = vcmask 589312
        %6985 = vst.msk [vmem:[#allocation3] sm:$0xff] %vm6984, %v6817
        %6986 = vst.msk [vmem:[#allocation3 + $0x8] sm:$0xff] %vm6984, %v6819
        %6987 = vst.msk [vmem:[#allocation3 + $0x10] sm:$0xff] %vm6984, %v6821
        %6988 = vst.msk [vmem:[#allocation3 + $0x18] sm:$0xff] %vm6984, %v6823
        %6989 = vst.msk [vmem:[#allocation3 + $0x20] sm:$0xff] %vm6984, %v6825
        %6990 = vst.msk [vmem:[#allocation3 + $0x28] sm:$0xff] %vm6984, %v6827
        %6991 = vst.msk [vmem:[#allocation3 + $0x30] sm:$0xff] %vm6984, %v6829
        %6992 = vst.msk [vmem:[#allocation3 + $0x38] sm:$0xff] %vm6984, %v6831
        %6993 = vst.msk [vmem:[#allocation3 + $0x40] sm:$0xff] %vm6984, %v6833
        %6994 = vst.msk [vmem:[#allocation3 + $0x48] sm:$0xff] %vm6984, %v6835
        %6995 = vst.msk [vmem:[#allocation3 + $0x50] sm:$0xff] %vm6984, %v6837
        %6996 = vst.msk [vmem:[#allocation3 + $0x58] sm:$0xff] %vm6984, %v6839
        %6997 = vst.msk [vmem:[#allocation3 + $0x60] sm:$0xff] %vm6984, %v6841
        %6998 = vst.msk [vmem:[#allocation3 + $0x68] sm:$0xff] %vm6984, %v6843
        %6999 = vst.msk [vmem:[#allocation3 + $0x70] sm:$0xff] %vm6984, %v6845
        %7000 = vst.msk [vmem:[#allocation3 + $0x78] sm:$0xff] %vm6984, %v6847
        %7001 = vst.msk [vmem:[#allocation3 + $0x80] sm:$0xff] %vm6984, %v6849
        %7002 = vst.msk [vmem:[#allocation3 + $0x88] sm:$0xff] %vm6984, %v6851
        %7003 = vst.msk [vmem:[#allocation3 + $0x90] sm:$0xff] %vm6984, %v6853
        %7004 = vst.msk [vmem:[#allocation3 + $0x98] sm:$0xff] %vm6984, %v6855
        %7005 = vst.msk [vmem:[#allocation3 + $0xa0] sm:$0xff] %vm6984, %v6857
        %7006 = vst.msk [vmem:[#allocation3 + $0xa8] sm:$0xff] %vm6984, %v6859
        %7007 = vst.msk [vmem:[#allocation3 + $0xb0] sm:$0xff] %vm6984, %v6861
        %7008 = vst.msk [vmem:[#allocation3 + $0xb8] sm:$0xff] %vm6984, %v6863
        %7009 = vst.msk [vmem:[#allocation3 + $0xc0] sm:$0xff] %vm6984, %v6865
        %7010 = vst.msk [vmem:[#allocation3 + $0xc8] sm:$0xff] %vm6984, %v6867
        %7011 = vst.msk [vmem:[#allocation3 + $0xd0] sm:$0xff] %vm6984, %v6869
        %7012 = vst.msk [vmem:[#allocation3 + $0xd8] sm:$0xff] %vm6984, %v6871
        %7013 = vst.msk [vmem:[#allocation3 + $0xe0] sm:$0xff] %vm6984, %v6873
        %7014 = vst.msk [vmem:[#allocation3 + $0xe8] sm:$0xff] %vm6984, %v6875
        %7015 = vst.msk [vmem:[#allocation3 + $0xf0] sm:$0xff] %vm6984, %v6877
        %7016 = vst.msk [vmem:[#allocation3 + $0xf8] sm:$0xff] %vm6984, %v6879
        %7017 = vst.msk [vmem:[#allocation3 + $0x100] sm:$0xff] %vm6984, %v6881
        %7018 = vst.msk [vmem:[#allocation3 + $0x108] sm:$0xff] %vm6984, %v6883
        %7019 = vst.msk [vmem:[#allocation3 + $0x110] sm:$0xff] %vm6984, %v6885
        %7020 = vst.msk [vmem:[#allocation3 + $0x118] sm:$0xff] %vm6984, %v6887
        %7021 = vst.msk [vmem:[#allocation3 + $0x120] sm:$0xff] %vm6984, %v6889
        %7022 = vst.msk [vmem:[#allocation3 + $0x128] sm:$0xff] %vm6984, %v6891
        %7023 = vst.msk [vmem:[#allocation3 + $0x130] sm:$0xff] %vm6984, %v6893
        %7024 = vst.msk [vmem:[#allocation3 + $0x138] sm:$0xff] %vm6984, %v6895
        %7025 = vst.msk [vmem:[#allocation3 + $0x140] sm:$0xff] %vm6984, %v6897
        %7026 = vst.msk [vmem:[#allocation3 + $0x148] sm:$0xff] %vm6984, %v6899
        %7027 = vst.msk [vmem:[#allocation3 + $0x150] sm:$0xff] %vm6984, %v6901
        %7028 = vst.msk [vmem:[#allocation3 + $0x158] sm:$0xff] %vm6984, %v6903
        %7029 = vst.msk [vmem:[#allocation3 + $0x160] sm:$0xff] %vm6984, %v6905
        %7030 = vst.msk [vmem:[#allocation3 + $0x168] sm:$0xff] %vm6984, %v6907
        %7031 = vst.msk [vmem:[#allocation3 + $0x170] sm:$0xff] %vm6984, %v6909
        %7032 = vst.msk [vmem:[#allocation3 + $0x178] sm:$0xff] %vm6984, %v6911
        %7033 = vst.msk [vmem:[#allocation3 + $0x180] sm:$0xff] %vm6984, %v6913
        %7034 = vst.msk [vmem:[#allocation3 + $0x188] sm:$0xff] %vm6984, %v6915
        %7035 = vst.msk [vmem:[#allocation3 + $0x190] sm:$0xff] %vm6984, %v6917
        %7036 = vst.msk [vmem:[#allocation3 + $0x198] sm:$0xff] %vm6984, %v6919
        %7037 = vst.msk [vmem:[#allocation3 + $0x1a0] sm:$0xff] %vm6984, %v6921
        %7038 = vst.msk [vmem:[#allocation3 + $0x1a8] sm:$0xff] %vm6984, %v6923
        %7039 = vst.msk [vmem:[#allocation3 + $0x1b0] sm:$0xff] %vm6984, %v6925
        %7040 = vst.msk [vmem:[#allocation3 + $0x1b8] sm:$0xff] %vm6984, %v6927
        %v7041 = vld [vmem:[#allocation3] sm:$0xff]
        %v7042 = vld [vmem:[#allocation3 + $0x8] sm:$0xff]
        %v7043 = vld [vmem:[#allocation3 + $0x10] sm:$0xff]
        %v7044 = vld [vmem:[#allocation3 + $0x18] sm:$0xff]
        %v7045 = vld [vmem:[#allocation3 + $0x20] sm:$0xff]
        %v7046 = vld [vmem:[#allocation3 + $0x28] sm:$0xff]
        %v7047 = vld [vmem:[#allocation3 + $0x30] sm:$0xff]
        %v7048 = vld [vmem:[#allocation3 + $0x38] sm:$0xff]
        %v7049 = vld [vmem:[#allocation3 + $0x40] sm:$0xff]
        %v7050 = vld [vmem:[#allocation3 + $0x48] sm:$0xff]
        %v7051 = vld [vmem:[#allocation3 + $0x50] sm:$0xff]
        %v7052 = vld [vmem:[#allocation3 + $0x58] sm:$0xff]
        %v7053 = vld [vmem:[#allocation3 + $0x60] sm:$0xff]
        %v7054 = vld [vmem:[#allocation3 + $0x68] sm:$0xff]
        %v7055 = vld [vmem:[#allocation3 + $0x70] sm:$0xff]
        %v7056 = vld [vmem:[#allocation3 + $0x78] sm:$0xff]
        %v7057 = vld [vmem:[#allocation3 + $0x80] sm:$0xff]
        %v7058 = vld [vmem:[#allocation3 + $0x88] sm:$0xff]
        %v7059 = vld [vmem:[#allocation3 + $0x90] sm:$0xff]
        %v7060 = vld [vmem:[#allocation3 + $0x98] sm:$0xff]
        %v7061 = vld [vmem:[#allocation3 + $0xa0] sm:$0xff]
        %v7062 = vld [vmem:[#allocation3 + $0xa8] sm:$0xff]
        %v7063 = vld [vmem:[#allocation3 + $0xb0] sm:$0xff]
        %v7064 = vld [vmem:[#allocation3 + $0xb8] sm:$0xff]
        %v7065 = vld [vmem:[#allocation3 + $0xc0] sm:$0xff]
        %v7066 = vld [vmem:[#allocation3 + $0xc8] sm:$0xff]
        %v7067 = vld [vmem:[#allocation3 + $0xd0] sm:$0xff]
        %v7068 = vld [vmem:[#allocation3 + $0xd8] sm:$0xff]
        %v7069 = vld [vmem:[#allocation3 + $0xe0] sm:$0xff]
        %v7070 = vld [vmem:[#allocation3 + $0xe8] sm:$0xff]
        %v7071 = vld [vmem:[#allocation3 + $0xf0] sm:$0xff]
        %v7072 = vld [vmem:[#allocation3 + $0xf8] sm:$0xff]
        %v7073 = vld [vmem:[#allocation3 + $0x100] sm:$0xff]
        %v7074 = vld [vmem:[#allocation3 + $0x108] sm:$0xff]
        %v7075 = vld [vmem:[#allocation3 + $0x110] sm:$0xff]
        %v7076 = vld [vmem:[#allocation3 + $0x118] sm:$0xff]
        %v7077 = vld [vmem:[#allocation3 + $0x120] sm:$0xff]
        %v7078 = vld [vmem:[#allocation3 + $0x128] sm:$0xff]
        %v7079 = vld [vmem:[#allocation3 + $0x130] sm:$0xff]
        %v7080 = vld [vmem:[#allocation3 + $0x138] sm:$0xff]
        %v7081 = vld [vmem:[#allocation3 + $0x140] sm:$0xff]
        %v7082 = vld [vmem:[#allocation3 + $0x148] sm:$0xff]
        %v7083 = vld [vmem:[#allocation3 + $0x150] sm:$0xff]
        %v7084 = vld [vmem:[#allocation3 + $0x158] sm:$0xff]
        %v7085 = vld [vmem:[#allocation3 + $0x160] sm:$0xff]
        %v7086 = vld [vmem:[#allocation3 + $0x168] sm:$0xff]
        %v7087 = vld [vmem:[#allocation3 + $0x170] sm:$0xff]
        %v7088 = vld [vmem:[#allocation3 + $0x178] sm:$0xff]
        %v7089 = vld [vmem:[#allocation3 + $0x180] sm:$0xff]
        %v7090 = vld [vmem:[#allocation3 + $0x188] sm:$0xff]
        %v7091 = vld [vmem:[#allocation3 + $0x190] sm:$0xff]
        %v7092 = vld [vmem:[#allocation3 + $0x198] sm:$0xff]
        %v7093 = vld [vmem:[#allocation3 + $0x1a0] sm:$0xff]
        %v7094 = vld [vmem:[#allocation3 + $0x1a8] sm:$0xff]
        %v7095 = vld [vmem:[#allocation3 + $0x1b0] sm:$0xff]
        %v7096 = vld [vmem:[#allocation3 + $0x1b8] sm:$0xff]
        %v7097 = vld [vmem:[%s3] sm:$0xff]
        %v7098 = vld [vmem:[%s3 + $0x8] sm:$0xff]
        %v7099 = vld [vmem:[%s3 + $0x10] sm:$0xff]
        %v7100 = vld [vmem:[%s3 + $0x18] sm:$0xff]
        %v7101 = vld [vmem:[%s3 + $0x20] sm:$0xff]
        %v7102 = vld [vmem:[%s3 + $0x28] sm:$0xff]
        %v7103 = vld [vmem:[%s3 + $0x30] sm:$0xff]
        %v7104 = vld [vmem:[%s3 + $0x38] sm:$0xff]
        %v7105 = vld [vmem:[%s3 + $0x40] sm:$0xff]
        %v7106 = vld [vmem:[%s4] sm:$0x1]
        %v7108 = vlaneseq
        %v7109 = vshrl.u32 %v7108, 7
        %v7110 = vsub.s32 0, %v7109
        %v7111 = vrot.slane %v7106, %v7110
        %vm7113 = vcmask 588800
        %v7115 = vsel %vm7113, %v7041, 0
        %v7118 = vsel %vm7113, %v7042, 0
        %v7121 = vsel %vm7113, %v7043, 0
        %v7124 = vsel %vm7113, %v7044, 0
        %v7127 = vsel %vm7113, %v7045, 0
        %v7130 = vsel %vm7113, %v7046, 0
        %v7133 = vsel %vm7113, %v7047, 0
        %v7136 = vsel %vm7113, %v7048, 0
        %v7139 = vsel %vm7113, %v7049, 0
        %v7142 = vsel %vm7113, %v7050, 0
        %v7145 = vsel %vm7113, %v7051, 0
        %v7148 = vsel %vm7113, %v7052, 0
        %v7151 = vsel %vm7113, %v7053, 0
        %v7154 = vsel %vm7113, %v7054, 0
        %v7157 = vsel %vm7113, %v7055, 0
        %v7160 = vsel %vm7113, %v7056, 0
        %v7163 = vsel %vm7113, %v7057, 0
        %v7166 = vsel %vm7113, %v7058, 0
        %v7169 = vsel %vm7113, %v7059, 0
        %v7172 = vsel %vm7113, %v7060, 0
        %v7175 = vsel %vm7113, %v7061, 0
        %v7178 = vsel %vm7113, %v7062, 0
        %v7181 = vsel %vm7113, %v7063, 0
        %v7184 = vsel %vm7113, %v7064, 0
        %v7187 = vsel %vm7113, %v7065, 0
        %v7190 = vsel %vm7113, %v7066, 0
        %v7193 = vsel %vm7113, %v7067, 0
        %v7196 = vsel %vm7113, %v7068, 0
        %v7199 = vsel %vm7113, %v7069, 0
        %v7202 = vsel %vm7113, %v7070, 0
        %v7205 = vsel %vm7113, %v7071, 0
        %v7208 = vsel %vm7113, %v7072, 0
        %v7211 = vsel %vm7113, %v7073, 0
        %v7214 = vsel %vm7113, %v7074, 0
        %v7217 = vsel %vm7113, %v7075, 0
        %v7220 = vsel %vm7113, %v7076, 0
        %v7223 = vsel %vm7113, %v7077, 0
        %v7226 = vsel %vm7113, %v7078, 0
        %v7229 = vsel %vm7113, %v7079, 0
        %v7232 = vsel %vm7113, %v7080, 0
        %v7235 = vsel %vm7113, %v7081, 0
        %v7238 = vsel %vm7113, %v7082, 0
        %v7241 = vsel %vm7113, %v7083, 0
        %v7244 = vsel %vm7113, %v7084, 0
        %v7247 = vsel %vm7113, %v7085, 0
        %v7250 = vsel %vm7113, %v7086, 0
        %v7253 = vsel %vm7113, %v7087, 0
        %v7256 = vsel %vm7113, %v7088, 0
        %v7259 = vsel %vm7113, %v7089, 0
        %v7262 = vsel %vm7113, %v7090, 0
        %v7265 = vsel %vm7113, %v7091, 0
        %v7268 = vsel %vm7113, %v7092, 0
        %v7271 = vsel %vm7113, %v7093, 0
        %v7274 = vsel %vm7113, %v7094, 0
        %v7277 = vsel %vm7113, %v7095, 0
        %v7280 = vsel %vm7113, %v7096, 0
        %7282 = vmatprep.subr.mxu0 0.0
        %7283 = vmatpush1.msra.mxu0 0.0
        %7284 = vmatprep.subr.mxu0 0.0
        %7285 = vmatpush1.msra.mxu0 0.0
        %7286 = vmatprep.subr.mxu0 0.0
        %7287 = vmatpush1.msra.mxu0 0.0
        %7288 = vmatprep.subr.mxu0 0.0
        %7289 = vmatpush1.msra.mxu0 0.0
        %7290 = vmatprep.subr.mxu0 0.0
        %7291 = vmatpush1.msra.mxu0 0.0
        %7292 = vmatprep.subr.mxu0 0.0
        %7293 = vmatpush1.msra.mxu0 0.0
        %7294 = vmatprep.subr.mxu0 0.0
        %7295 = vmatpush1.msra.mxu0 0.0
        %7296 = vmatprep.subr.mxu0 0.0
        %7297 = vmatpush1.msra.mxu0 %v7105
        %7298 = vmatprep.subr.mxu0 0.0
        %7299 = vmatpush1.msra.mxu0 %v7104
        %7300 = vmatprep.subr.mxu0 0.0
        %7301 = vmatpush1.msra.mxu0 %v7103
        %7302 = vmatprep.subr.mxu0 0.0
        %7303 = vmatpush1.msra.mxu0 %v7102
        %7304 = vmatprep.subr.mxu0 0.0
        %7305 = vmatpush1.msra.mxu0 %v7101
        %7306 = vmatprep.subr.mxu0 0.0
        %7307 = vmatpush1.msra.mxu0 %v7100
        %7308 = vmatprep.subr.mxu0 0.0
        %7309 = vmatpush1.msra.mxu0 %v7099
        %7310 = vmatprep.subr.mxu0 0.0
        %7311 = vmatpush1.msra.mxu0 %v7098
        %7312 = vmatprep.subr.mxu0 0.0
        %7313 = vmatpush1.msra.mxu0 %v7097
        %7314 = vmatprep.subr.mxu0 0.0
        %7315 = vmatpush2.msra.mxu0 0.0
        %7316 = vmatprep.subr.mxu0 0.0
        %7317 = vmatpush2.msra.mxu0 0.0
        %7318 = vmatprep.subr.mxu0 0.0
        %7319 = vmatpush2.msra.mxu0 0.0
        %7320 = vmatprep.subr.mxu0 0.0
        %7321 = vmatpush2.msra.mxu0 0.0
        %7322 = vmatprep.subr.mxu0 0.0
        %7323 = vmatpush2.msra.mxu0 0.0
        %7324 = vmatprep.subr.mxu0 0.0
        %7325 = vmatpush2.msra.mxu0 0.0
        %7326 = vmatprep.subr.mxu0 0.0
        %7327 = vmatpush2.msra.mxu0 0.0
        %7328 = vmatprep.subr.mxu0 0.0
        %7329 = vmatpush2.msra.mxu0 0.0
        %7330 = vmatprep.subr.mxu0 0.0
        %7331 = vmatpush2.msra.mxu0 0.0
        %7332 = vmatprep.subr.mxu0 0.0
        %7333 = vmatpush2.msra.mxu0 0.0
        %7334 = vmatprep.subr.mxu0 0.0
        %7335 = vmatpush2.msra.mxu0 0.0
        %7336 = vmatprep.subr.mxu0 0.0
        %7337 = vmatpush2.msra.mxu0 0.0
        %7338 = vmatprep.subr.mxu0 0.0
        %7339 = vmatpush2.msra.mxu0 0.0
        %7340 = vmatprep.subr.mxu0 0.0
        %7341 = vmatpush2.msra.mxu0 0.0
        %7342 = vmatprep.subr.mxu0 0.0
        %7343 = vmatpush2.msra.mxu0 0.0
        %7344 = vmatprep.subr.mxu0 0.0
        %7345 = vmatpush2.msra.mxu0 0.0
        %7346 = vmatprep.mubr.f32.mxu0 0.0
        %7347 = vmatmul.mubr.f32.gmra.mxu0 %v7115
        %v7348 = vpop.f32.mrf.mxu0
        %v7349 = vadd.f32 %v7111, %v7348
        %v7350 = vpop.f32.mrf.mxu0
        %7351 = vmatprep.mubr.f32.mxu0 0.0
        %7352 = vmatmul.mubr.f32.gmra.mxu0 %v7118
        %v7353 = vpop.f32.mrf.mxu0
        %v7354 = vadd.f32 %v7111, %v7353
        %v7355 = vpop.f32.mrf.mxu0
        %7356 = vmatprep.mubr.f32.mxu0 0.0
        %7357 = vmatmul.mubr.f32.gmra.mxu0 %v7121
        %v7358 = vpop.f32.mrf.mxu0
        %v7359 = vadd.f32 %v7111, %v7358
        %v7360 = vpop.f32.mrf.mxu0
        %7361 = vmatprep.mubr.f32.mxu0 0.0
        %7362 = vmatmul.mubr.f32.gmra.mxu0 %v7124
        %v7363 = vpop.f32.mrf.mxu0
        %v7364 = vadd.f32 %v7111, %v7363
        %v7365 = vpop.f32.mrf.mxu0
        %7366 = vmatprep.mubr.f32.mxu0 0.0
        %7367 = vmatmul.mubr.f32.gmra.mxu0 %v7127
        %v7368 = vpop.f32.mrf.mxu0
        %v7369 = vadd.f32 %v7111, %v7368
        %v7370 = vpop.f32.mrf.mxu0
        %7371 = vmatprep.mubr.f32.mxu0 0.0
        %7372 = vmatmul.mubr.f32.gmra.mxu0 %v7130
        %v7373 = vpop.f32.mrf.mxu0
        %v7374 = vadd.f32 %v7111, %v7373
        %v7375 = vpop.f32.mrf.mxu0
        %7376 = vmatprep.mubr.f32.mxu0 0.0
        %7377 = vmatmul.mubr.f32.gmra.mxu0 %v7133
        %v7378 = vpop.f32.mrf.mxu0
        %v7379 = vadd.f32 %v7111, %v7378
        %v7380 = vpop.f32.mrf.mxu0
        %7381 = vmatprep.mubr.f32.mxu0 0.0
        %7382 = vmatmul.mubr.f32.gmra.mxu0 %v7136
        %v7383 = vpop.f32.mrf.mxu0
        %v7384 = vadd.f32 %v7111, %v7383
        %v7385 = vpop.f32.mrf.mxu0
        %7386 = vmatprep.mubr.f32.mxu0 0.0
        %7387 = vmatmul.mubr.f32.gmra.mxu0 %v7139
        %v7388 = vpop.f32.mrf.mxu0
        %v7389 = vadd.f32 %v7111, %v7388
        %v7390 = vpop.f32.mrf.mxu0
        %7391 = vmatprep.mubr.f32.mxu0 0.0
        %7392 = vmatmul.mubr.f32.gmra.mxu0 %v7142
        %v7393 = vpop.f32.mrf.mxu0
        %v7394 = vadd.f32 %v7111, %v7393
        %v7395 = vpop.f32.mrf.mxu0
        %7396 = vmatprep.mubr.f32.mxu0 0.0
        %7397 = vmatmul.mubr.f32.gmra.mxu0 %v7145
        %v7398 = vpop.f32.mrf.mxu0
        %v7399 = vadd.f32 %v7111, %v7398
        %v7400 = vpop.f32.mrf.mxu0
        %7401 = vmatprep.mubr.f32.mxu0 0.0
        %7402 = vmatmul.mubr.f32.gmra.mxu0 %v7148
        %v7403 = vpop.f32.mrf.mxu0
        %v7404 = vadd.f32 %v7111, %v7403
        %v7405 = vpop.f32.mrf.mxu0
        %7406 = vmatprep.mubr.f32.mxu0 0.0
        %7407 = vmatmul.mubr.f32.gmra.mxu0 %v7151
        %v7408 = vpop.f32.mrf.mxu0
        %v7409 = vadd.f32 %v7111, %v7408
        %v7410 = vpop.f32.mrf.mxu0
        %7411 = vmatprep.mubr.f32.mxu0 0.0
        %7412 = vmatmul.mubr.f32.gmra.mxu0 %v7154
        %v7413 = vpop.f32.mrf.mxu0
        %v7414 = vadd.f32 %v7111, %v7413
        %v7415 = vpop.f32.mrf.mxu0
        %7416 = vmatprep.mubr.f32.mxu0 0.0
        %7417 = vmatmul.mubr.f32.gmra.mxu0 %v7157
        %v7418 = vpop.f32.mrf.mxu0
        %v7419 = vadd.f32 %v7111, %v7418
        %v7420 = vpop.f32.mrf.mxu0
        %7421 = vmatprep.mubr.f32.mxu0 0.0
        %7422 = vmatmul.mubr.f32.gmra.mxu0 %v7160
        %v7423 = vpop.f32.mrf.mxu0
        %v7424 = vadd.f32 %v7111, %v7423
        %v7425 = vpop.f32.mrf.mxu0
        %7426 = vmatprep.mubr.f32.mxu0 0.0
        %7427 = vmatmul.mubr.f32.gmra.mxu0 %v7163
        %v7428 = vpop.f32.mrf.mxu0
        %v7429 = vadd.f32 %v7111, %v7428
        %v7430 = vpop.f32.mrf.mxu0
        %7431 = vmatprep.mubr.f32.mxu0 0.0
        %7432 = vmatmul.mubr.f32.gmra.mxu0 %v7166
        %v7433 = vpop.f32.mrf.mxu0
        %v7434 = vadd.f32 %v7111, %v7433
        %v7435 = vpop.f32.mrf.mxu0
        %7436 = vmatprep.mubr.f32.mxu0 0.0
        %7437 = vmatmul.mubr.f32.gmra.mxu0 %v7169
        %v7438 = vpop.f32.mrf.mxu0
        %v7439 = vadd.f32 %v7111, %v7438
        %v7440 = vpop.f32.mrf.mxu0
        %7441 = vmatprep.mubr.f32.mxu0 0.0
        %7442 = vmatmul.mubr.f32.gmra.mxu0 %v7172
        %v7443 = vpop.f32.mrf.mxu0
        %v7444 = vadd.f32 %v7111, %v7443
        %v7445 = vpop.f32.mrf.mxu0
        %7446 = vmatprep.mubr.f32.mxu0 0.0
        %7447 = vmatmul.mubr.f32.gmra.mxu0 %v7175
        %v7448 = vpop.f32.mrf.mxu0
        %v7449 = vadd.f32 %v7111, %v7448
        %v7450 = vpop.f32.mrf.mxu0
        %7451 = vmatprep.mubr.f32.mxu0 0.0
        %7452 = vmatmul.mubr.f32.gmra.mxu0 %v7178
        %v7453 = vpop.f32.mrf.mxu0
        %v7454 = vadd.f32 %v7111, %v7453
        %v7455 = vpop.f32.mrf.mxu0
        %7456 = vmatprep.mubr.f32.mxu0 0.0
        %7457 = vmatmul.mubr.f32.gmra.mxu0 %v7181
        %v7458 = vpop.f32.mrf.mxu0
        %v7459 = vadd.f32 %v7111, %v7458
        %v7460 = vpop.f32.mrf.mxu0
        %7461 = vmatprep.mubr.f32.mxu0 0.0
        %7462 = vmatmul.mubr.f32.gmra.mxu0 %v7184
        %v7463 = vpop.f32.mrf.mxu0
        %v7464 = vadd.f32 %v7111, %v7463
        %v7465 = vpop.f32.mrf.mxu0
        %7466 = vmatprep.mubr.f32.mxu0 0.0
        %7467 = vmatmul.mubr.f32.gmra.mxu0 %v7187
        %v7468 = vpop.f32.mrf.mxu0
        %v7469 = vadd.f32 %v7111, %v7468
        %v7470 = vpop.f32.mrf.mxu0
        %7471 = vmatprep.mubr.f32.mxu0 0.0
        %7472 = vmatmul.mubr.f32.gmra.mxu0 %v7190
        %v7473 = vpop.f32.mrf.mxu0
        %v7474 = vadd.f32 %v7111, %v7473
        %v7475 = vpop.f32.mrf.mxu0
        %7476 = vmatprep.mubr.f32.mxu0 0.0
        %7477 = vmatmul.mubr.f32.gmra.mxu0 %v7193
        %v7478 = vpop.f32.mrf.mxu0
        %v7479 = vadd.f32 %v7111, %v7478
        %v7480 = vpop.f32.mrf.mxu0
        %7481 = vmatprep.mubr.f32.mxu0 0.0
        %7482 = vmatmul.mubr.f32.gmra.mxu0 %v7196
        %v7483 = vpop.f32.mrf.mxu0
        %v7484 = vadd.f32 %v7111, %v7483
        %v7485 = vpop.f32.mrf.mxu0
        %7486 = vmatprep.mubr.f32.mxu0 0.0
        %7487 = vmatmul.mubr.f32.gmra.mxu0 %v7199
        %v7488 = vpop.f32.mrf.mxu0
        %v7489 = vadd.f32 %v7111, %v7488
        %v7490 = vpop.f32.mrf.mxu0
        %7491 = vmatprep.mubr.f32.mxu0 0.0
        %7492 = vmatmul.mubr.f32.gmra.mxu0 %v7202
        %v7493 = vpop.f32.mrf.mxu0
        %v7494 = vadd.f32 %v7111, %v7493
        %v7495 = vpop.f32.mrf.mxu0
        %7496 = vmatprep.mubr.f32.mxu0 0.0
        %7497 = vmatmul.mubr.f32.gmra.mxu0 %v7205
        %v7498 = vpop.f32.mrf.mxu0
        %v7499 = vadd.f32 %v7111, %v7498
        %v7500 = vpop.f32.mrf.mxu0
        %7501 = vmatprep.mubr.f32.mxu0 0.0
        %7502 = vmatmul.mubr.f32.gmra.mxu0 %v7208
        %v7503 = vpop.f32.mrf.mxu0
        %v7504 = vadd.f32 %v7111, %v7503
        %v7505 = vpop.f32.mrf.mxu0
        %7506 = vmatprep.mubr.f32.mxu0 0.0
        %7507 = vmatmul.mubr.f32.gmra.mxu0 %v7211
        %v7508 = vpop.f32.mrf.mxu0
        %v7509 = vadd.f32 %v7111, %v7508
        %v7510 = vpop.f32.mrf.mxu0
        %7511 = vmatprep.mubr.f32.mxu0 0.0
        %7512 = vmatmul.mubr.f32.gmra.mxu0 %v7214
        %v7513 = vpop.f32.mrf.mxu0
        %v7514 = vadd.f32 %v7111, %v7513
        %v7515 = vpop.f32.mrf.mxu0
        %7516 = vmatprep.mubr.f32.mxu0 0.0
        %7517 = vmatmul.mubr.f32.gmra.mxu0 %v7217
        %v7518 = vpop.f32.mrf.mxu0
        %v7519 = vadd.f32 %v7111, %v7518
        %v7520 = vpop.f32.mrf.mxu0
        %7521 = vmatprep.mubr.f32.mxu0 0.0
        %7522 = vmatmul.mubr.f32.gmra.mxu0 %v7220
        %v7523 = vpop.f32.mrf.mxu0
        %v7524 = vadd.f32 %v7111, %v7523
        %v7525 = vpop.f32.mrf.mxu0
        %7526 = vmatprep.mubr.f32.mxu0 0.0
        %7527 = vmatmul.mubr.f32.gmra.mxu0 %v7223
        %v7528 = vpop.f32.mrf.mxu0
        %v7529 = vadd.f32 %v7111, %v7528
        %v7530 = vpop.f32.mrf.mxu0
        %7531 = vmatprep.mubr.f32.mxu0 0.0
        %7532 = vmatmul.mubr.f32.gmra.mxu0 %v7226
        %v7533 = vpop.f32.mrf.mxu0
        %v7534 = vadd.f32 %v7111, %v7533
        %v7535 = vpop.f32.mrf.mxu0
        %7536 = vmatprep.mubr.f32.mxu0 0.0
        %7537 = vmatmul.mubr.f32.gmra.mxu0 %v7229
        %v7538 = vpop.f32.mrf.mxu0
        %v7539 = vadd.f32 %v7111, %v7538
        %v7540 = vpop.f32.mrf.mxu0
        %7541 = vmatprep.mubr.f32.mxu0 0.0
        %7542 = vmatmul.mubr.f32.gmra.mxu0 %v7232
        %v7543 = vpop.f32.mrf.mxu0
        %v7544 = vadd.f32 %v7111, %v7543
        %v7545 = vpop.f32.mrf.mxu0
        %7546 = vmatprep.mubr.f32.mxu0 0.0
        %7547 = vmatmul.mubr.f32.gmra.mxu0 %v7235
        %v7548 = vpop.f32.mrf.mxu0
        %v7549 = vadd.f32 %v7111, %v7548
        %v7550 = vpop.f32.mrf.mxu0
        %7551 = vmatprep.mubr.f32.mxu0 0.0
        %7552 = vmatmul.mubr.f32.gmra.mxu0 %v7238
        %v7553 = vpop.f32.mrf.mxu0
        %v7554 = vadd.f32 %v7111, %v7553
        %v7555 = vpop.f32.mrf.mxu0
        %7556 = vmatprep.mubr.f32.mxu0 0.0
        %7557 = vmatmul.mubr.f32.gmra.mxu0 %v7241
        %v7558 = vpop.f32.mrf.mxu0
        %v7559 = vadd.f32 %v7111, %v7558
        %v7560 = vpop.f32.mrf.mxu0
        %7561 = vmatprep.mubr.f32.mxu0 0.0
        %7562 = vmatmul.mubr.f32.gmra.mxu0 %v7244
        %v7563 = vpop.f32.mrf.mxu0
        %v7564 = vadd.f32 %v7111, %v7563
        %v7565 = vpop.f32.mrf.mxu0
        %7566 = vmatprep.mubr.f32.mxu0 0.0
        %7567 = vmatmul.mubr.f32.gmra.mxu0 %v7247
        %v7568 = vpop.f32.mrf.mxu0
        %v7569 = vadd.f32 %v7111, %v7568
        %v7570 = vpop.f32.mrf.mxu0
        %7571 = vmatprep.mubr.f32.mxu0 0.0
        %7572 = vmatmul.mubr.f32.gmra.mxu0 %v7250
        %v7573 = vpop.f32.mrf.mxu0
        %v7574 = vadd.f32 %v7111, %v7573
        %v7575 = vpop.f32.mrf.mxu0
        %7576 = vmatprep.mubr.f32.mxu0 0.0
        %7577 = vmatmul.mubr.f32.gmra.mxu0 %v7253
        %v7578 = vpop.f32.mrf.mxu0
        %v7579 = vadd.f32 %v7111, %v7578
        %v7580 = vpop.f32.mrf.mxu0
        %7581 = vmatprep.mubr.f32.mxu0 0.0
        %7582 = vmatmul.mubr.f32.gmra.mxu0 %v7256
        %v7583 = vpop.f32.mrf.mxu0
        %v7584 = vadd.f32 %v7111, %v7583
        %v7585 = vpop.f32.mrf.mxu0
        %7586 = vmatprep.mubr.f32.mxu0 0.0
        %7587 = vmatmul.mubr.f32.gmra.mxu0 %v7259
        %v7588 = vpop.f32.mrf.mxu0
        %v7589 = vadd.f32 %v7111, %v7588
        %v7590 = vpop.f32.mrf.mxu0
        %7591 = vmatprep.mubr.f32.mxu0 0.0
        %7592 = vmatmul.mubr.f32.gmra.mxu0 %v7262
        %v7593 = vpop.f32.mrf.mxu0
        %v7594 = vadd.f32 %v7111, %v7593
        %v7595 = vpop.f32.mrf.mxu0
        %7596 = vmatprep.mubr.f32.mxu0 0.0
        %7597 = vmatmul.mubr.f32.gmra.mxu0 %v7265
        %v7598 = vpop.f32.mrf.mxu0
        %v7599 = vadd.f32 %v7111, %v7598
        %v7600 = vpop.f32.mrf.mxu0
        %7601 = vmatprep.mubr.f32.mxu0 0.0
        %7602 = vmatmul.mubr.f32.gmra.mxu0 %v7268
        %v7603 = vpop.f32.mrf.mxu0
        %v7604 = vadd.f32 %v7111, %v7603
        %v7605 = vpop.f32.mrf.mxu0
        %7606 = vmatprep.mubr.f32.mxu0 0.0
        %7607 = vmatmul.mubr.f32.gmra.mxu0 %v7271
        %v7608 = vpop.f32.mrf.mxu0
        %v7609 = vadd.f32 %v7111, %v7608
        %v7610 = vpop.f32.mrf.mxu0
        %7611 = vmatprep.mubr.f32.mxu0 0.0
        %7612 = vmatmul.mubr.f32.gmra.mxu0 %v7274
        %v7613 = vpop.f32.mrf.mxu0
        %v7614 = vadd.f32 %v7111, %v7613
        %v7615 = vpop.f32.mrf.mxu0
        %7616 = vmatprep.mubr.f32.mxu0 0.0
        %7617 = vmatmul.mubr.f32.gmra.mxu0 %v7277
        %v7618 = vpop.f32.mrf.mxu0
        %v7619 = vadd.f32 %v7111, %v7618
        %v7620 = vpop.f32.mrf.mxu0
        %7621 = vmatprep.mubr.f32.mxu0 0.0
        %7622 = vmatmul.mubr.f32.gmra.mxu0 %v7280
        %v7623 = vpop.f32.mrf.mxu0
        %v7624 = vadd.f32 %v7111, %v7623
        %v7625 = vpop.f32.mrf.mxu0
        %7626 = vdwg.mxu0
        %v7627 = vmax.f32 %v7349, 0.0
        %v7628 = vmax.f32 %v7354, 0.0
        %v7629 = vmax.f32 %v7359, 0.0
        %v7630 = vmax.f32 %v7364, 0.0
        %v7631 = vmax.f32 %v7369, 0.0
        %v7632 = vmax.f32 %v7374, 0.0
        %v7633 = vmax.f32 %v7379, 0.0
        %v7634 = vmax.f32 %v7384, 0.0
        %v7635 = vmax.f32 %v7389, 0.0
        %v7636 = vmax.f32 %v7394, 0.0
        %v7637 = vmax.f32 %v7399, 0.0
        %v7638 = vmax.f32 %v7404, 0.0
        %v7639 = vmax.f32 %v7409, 0.0
        %v7640 = vmax.f32 %v7414, 0.0
        %v7641 = vmax.f32 %v7419, 0.0
        %v7642 = vmax.f32 %v7424, 0.0
        %v7643 = vmax.f32 %v7429, 0.0
        %v7644 = vmax.f32 %v7434, 0.0
        %v7645 = vmax.f32 %v7439, 0.0
        %v7646 = vmax.f32 %v7444, 0.0
        %v7647 = vmax.f32 %v7449, 0.0
        %v7648 = vmax.f32 %v7454, 0.0
        %v7649 = vmax.f32 %v7459, 0.0
        %v7650 = vmax.f32 %v7464, 0.0
        %v7651 = vmax.f32 %v7469, 0.0
        %v7652 = vmax.f32 %v7474, 0.0
        %v7653 = vmax.f32 %v7479, 0.0
        %v7654 = vmax.f32 %v7484, 0.0
        %v7655 = vmax.f32 %v7489, 0.0
        %v7656 = vmax.f32 %v7494, 0.0
        %v7657 = vmax.f32 %v7499, 0.0
        %v7658 = vmax.f32 %v7504, 0.0
        %v7659 = vmax.f32 %v7509, 0.0
        %v7660 = vmax.f32 %v7514, 0.0
        %v7661 = vmax.f32 %v7519, 0.0
        %v7662 = vmax.f32 %v7524, 0.0
        %v7663 = vmax.f32 %v7529, 0.0
        %v7664 = vmax.f32 %v7534, 0.0
        %v7665 = vmax.f32 %v7539, 0.0
        %v7666 = vmax.f32 %v7544, 0.0
        %v7667 = vmax.f32 %v7549, 0.0
        %v7668 = vmax.f32 %v7554, 0.0
        %v7669 = vmax.f32 %v7559, 0.0
        %v7670 = vmax.f32 %v7564, 0.0
        %v7671 = vmax.f32 %v7569, 0.0
        %v7672 = vmax.f32 %v7574, 0.0
        %v7673 = vmax.f32 %v7579, 0.0
        %v7674 = vmax.f32 %v7584, 0.0
        %v7675 = vmax.f32 %v7589, 0.0
        %v7676 = vmax.f32 %v7594, 0.0
        %v7677 = vmax.f32 %v7599, 0.0
        %v7678 = vmax.f32 %v7604, 0.0
        %v7679 = vmax.f32 %v7609, 0.0
        %v7680 = vmax.f32 %v7614, 0.0
        %v7681 = vmax.f32 %v7619, 0.0
        %v7682 = vmax.f32 %v7624, 0.0
        %v7683 = vmax.f32 %v7627, %v7629
        %v7684 = vmax.f32 %v7628, %v7630
        %v7685 = vmax.f32 %v7631, %v7633
        %v7686 = vmax.f32 %v7632, %v7634
        %v7687 = vmax.f32 %v7635, %v7637
        %v7688 = vmax.f32 %v7636, %v7638
        %v7689 = vmax.f32 %v7639, %v7641
        %v7690 = vmax.f32 %v7640, %v7642
        %v7691 = vmax.f32 %v7643, %v7645
        %v7692 = vmax.f32 %v7644, %v7646
        %v7693 = vmax.f32 %v7647, %v7649
        %v7694 = vmax.f32 %v7648, %v7650
        %v7695 = vmax.f32 %v7651, %v7653
        %v7696 = vmax.f32 %v7652, %v7654
        %v7697 = vmax.f32 %v7655, %v7657
        %v7698 = vmax.f32 %v7656, %v7658
        %v7699 = vmax.f32 %v7659, %v7661
        %v7700 = vmax.f32 %v7660, %v7662
        %v7701 = vmax.f32 %v7663, %v7665
        %v7702 = vmax.f32 %v7664, %v7666
        %v7703 = vmax.f32 %v7667, %v7669
        %v7704 = vmax.f32 %v7668, %v7670
        %v7705 = vmax.f32 %v7671, %v7673
        %v7706 = vmax.f32 %v7672, %v7674
        %v7707 = vmax.f32 %v7675, %v7677
        %v7708 = vmax.f32 %v7676, %v7678
        %v7709 = vmax.f32 %v7679, %v7681
        %v7710 = vmax.f32 %v7680, %v7682
        %v7739 = vcombine.high %v7683, %v7683
        %v7741 = vunpack.c.l.s4 1983009808
        %v7742 = vunpack.c.0.s8 %v7741
        %v7743 = vlaneseq
        %v7744 = vshrl.u32 %v7743, 7
        %v7745 = vsub.s32 %v7742, %v7744
        %v7746 = vrot.slane %v7683, %v7745
        %v7748 = vunpack.c.l.s4 1983009808
        %v7749 = vunpack.c.0.s8 %v7748
        %v7750 = vlaneseq
        %v7751 = vshrl.u32 %v7750, 7
        %v7752 = vsub.s32 %v7749, %v7751
        %v7753 = vrot.slane %v7739, %v7752
        %v7754 = vcombine.high %v7746, %v7746
        %v7755 = vcombine.high %v7753, %v7753
        %v7756 = vcombine.high %v7684, %v7684
        %v7758 = vunpack.c.l.s4 1983009808
        %v7759 = vunpack.c.0.s8 %v7758
        %v7760 = vlaneseq
        %v7761 = vshrl.u32 %v7760, 7
        %v7762 = vsub.s32 %v7759, %v7761
        %v7763 = vrot.slane %v7684, %v7762
        %v7765 = vunpack.c.l.s4 1983009808
        %v7766 = vunpack.c.0.s8 %v7765
        %v7767 = vlaneseq
        %v7768 = vshrl.u32 %v7767, 7
        %v7769 = vsub.s32 %v7766, %v7768
        %v7770 = vrot.slane %v7756, %v7769
        %v7771 = vcombine.high %v7763, %v7763
        %v7772 = vcombine.high %v7685, %v7685
        %v7774 = vunpack.c.l.s4 1983009808
        %v7775 = vunpack.c.0.s8 %v7774
        %v7776 = vlaneseq
        %v7777 = vshrl.u32 %v7776, 7
        %v7778 = vsub.s32 %v7775, %v7777
        %v7779 = vrot.slane %v7685, %v7778
        %v7781 = vunpack.c.l.s4 1983009808
        %v7782 = vunpack.c.0.s8 %v7781
        %v7783 = vlaneseq
        %v7784 = vshrl.u32 %v7783, 7
        %v7785 = vsub.s32 %v7782, %v7784
        %v7786 = vrot.slane %v7772, %v7785
        %v7787 = vcombine.high %v7779, %v7779
        %v7788 = vcombine.high %v7786, %v7786
        %v7789 = vcombine.high %v7686, %v7686
        %v7791 = vunpack.c.l.s4 1983009808
        %v7792 = vunpack.c.0.s8 %v7791
        %v7793 = vlaneseq
        %v7794 = vshrl.u32 %v7793, 7
        %v7795 = vsub.s32 %v7792, %v7794
        %v7796 = vrot.slane %v7686, %v7795
        %v7798 = vunpack.c.l.s4 1983009808
        %v7799 = vunpack.c.0.s8 %v7798
        %v7800 = vlaneseq
        %v7801 = vshrl.u32 %v7800, 7
        %v7802 = vsub.s32 %v7799, %v7801
        %v7803 = vrot.slane %v7789, %v7802
        %v7804 = vcombine.high %v7796, %v7796
        %v7805 = vcombine.high %v7687, %v7687
        %v7807 = vunpack.c.l.s4 1983009808
        %v7808 = vunpack.c.0.s8 %v7807
        %v7809 = vlaneseq
        %v7810 = vshrl.u32 %v7809, 7
        %v7811 = vsub.s32 %v7808, %v7810
        %v7812 = vrot.slane %v7687, %v7811
        %v7814 = vunpack.c.l.s4 1983009808
        %v7815 = vunpack.c.0.s8 %v7814
        %v7816 = vlaneseq
        %v7817 = vshrl.u32 %v7816, 7
        %v7818 = vsub.s32 %v7815, %v7817
        %v7819 = vrot.slane %v7805, %v7818
        %v7820 = vcombine.high %v7812, %v7812
        %v7821 = vcombine.high %v7819, %v7819
        %v7822 = vcombine.high %v7688, %v7688
        %v7824 = vunpack.c.l.s4 1983009808
        %v7825 = vunpack.c.0.s8 %v7824
        %v7826 = vlaneseq
        %v7827 = vshrl.u32 %v7826, 7
        %v7828 = vsub.s32 %v7825, %v7827
        %v7829 = vrot.slane %v7688, %v7828
        %v7831 = vunpack.c.l.s4 1983009808
        %v7832 = vunpack.c.0.s8 %v7831
        %v7833 = vlaneseq
        %v7834 = vshrl.u32 %v7833, 7
        %v7835 = vsub.s32 %v7832, %v7834
        %v7836 = vrot.slane %v7822, %v7835
        %v7837 = vcombine.high %v7829, %v7829
        %v7838 = vcombine.high %v7689, %v7689
        %v7840 = vunpack.c.l.s4 1983009808
        %v7841 = vunpack.c.0.s8 %v7840
        %v7842 = vlaneseq
        %v7843 = vshrl.u32 %v7842, 7
        %v7844 = vsub.s32 %v7841, %v7843
        %v7845 = vrot.slane %v7689, %v7844
        %v7847 = vunpack.c.l.s4 1983009808
        %v7848 = vunpack.c.0.s8 %v7847
        %v7849 = vlaneseq
        %v7850 = vshrl.u32 %v7849, 7
        %v7851 = vsub.s32 %v7848, %v7850
        %v7852 = vrot.slane %v7838, %v7851
        %v7853 = vcombine.high %v7845, %v7845
        %v7854 = vcombine.high %v7852, %v7852
        %v7855 = vcombine.high %v7690, %v7690
        %v7857 = vunpack.c.l.s4 1983009808
        %v7858 = vunpack.c.0.s8 %v7857
        %v7859 = vlaneseq
        %v7860 = vshrl.u32 %v7859, 7
        %v7861 = vsub.s32 %v7858, %v7860
        %v7862 = vrot.slane %v7690, %v7861
        %v7864 = vunpack.c.l.s4 1983009808
        %v7865 = vunpack.c.0.s8 %v7864
        %v7866 = vlaneseq
        %v7867 = vshrl.u32 %v7866, 7
        %v7868 = vsub.s32 %v7865, %v7867
        %v7869 = vrot.slane %v7855, %v7868
        %v7870 = vcombine.high %v7862, %v7862
        %v7871 = vcombine.high %v7691, %v7691
        %v7873 = vunpack.c.l.s4 1983009808
        %v7874 = vunpack.c.0.s8 %v7873
        %v7875 = vlaneseq
        %v7876 = vshrl.u32 %v7875, 7
        %v7877 = vsub.s32 %v7874, %v7876
        %v7878 = vrot.slane %v7691, %v7877
        %v7880 = vunpack.c.l.s4 1983009808
        %v7881 = vunpack.c.0.s8 %v7880
        %v7882 = vlaneseq
        %v7883 = vshrl.u32 %v7882, 7
        %v7884 = vsub.s32 %v7881, %v7883
        %v7885 = vrot.slane %v7871, %v7884
        %v7886 = vcombine.high %v7878, %v7878
        %v7887 = vcombine.high %v7885, %v7885
        %v7888 = vcombine.high %v7692, %v7692
        %v7890 = vunpack.c.l.s4 1983009808
        %v7891 = vunpack.c.0.s8 %v7890
        %v7892 = vlaneseq
        %v7893 = vshrl.u32 %v7892, 7
        %v7894 = vsub.s32 %v7891, %v7893
        %v7895 = vrot.slane %v7692, %v7894
        %v7897 = vunpack.c.l.s4 1983009808
        %v7898 = vunpack.c.0.s8 %v7897
        %v7899 = vlaneseq
        %v7900 = vshrl.u32 %v7899, 7
        %v7901 = vsub.s32 %v7898, %v7900
        %v7902 = vrot.slane %v7888, %v7901
        %v7903 = vcombine.high %v7895, %v7895
        %v7904 = vcombine.high %v7693, %v7693
        %v7906 = vunpack.c.l.s4 1983009808
        %v7907 = vunpack.c.0.s8 %v7906
        %v7908 = vlaneseq
        %v7909 = vshrl.u32 %v7908, 7
        %v7910 = vsub.s32 %v7907, %v7909
        %v7911 = vrot.slane %v7693, %v7910
        %v7913 = vunpack.c.l.s4 1983009808
        %v7914 = vunpack.c.0.s8 %v7913
        %v7915 = vlaneseq
        %v7916 = vshrl.u32 %v7915, 7
        %v7917 = vsub.s32 %v7914, %v7916
        %v7918 = vrot.slane %v7904, %v7917
        %v7919 = vcombine.high %v7911, %v7911
        %v7920 = vcombine.high %v7918, %v7918
        %v7921 = vcombine.high %v7694, %v7694
        %v7923 = vunpack.c.l.s4 1983009808
        %v7924 = vunpack.c.0.s8 %v7923
        %v7925 = vlaneseq
        %v7926 = vshrl.u32 %v7925, 7
        %v7927 = vsub.s32 %v7924, %v7926
        %v7928 = vrot.slane %v7694, %v7927
        %v7930 = vunpack.c.l.s4 1983009808
        %v7931 = vunpack.c.0.s8 %v7930
        %v7932 = vlaneseq
        %v7933 = vshrl.u32 %v7932, 7
        %v7934 = vsub.s32 %v7931, %v7933
        %v7935 = vrot.slane %v7921, %v7934
        %v7936 = vcombine.high %v7928, %v7928
        %v7937 = vcombine.high %v7695, %v7695
        %v7939 = vunpack.c.l.s4 1983009808
        %v7940 = vunpack.c.0.s8 %v7939
        %v7941 = vlaneseq
        %v7942 = vshrl.u32 %v7941, 7
        %v7943 = vsub.s32 %v7940, %v7942
        %v7944 = vrot.slane %v7695, %v7943
        %v7946 = vunpack.c.l.s4 1983009808
        %v7947 = vunpack.c.0.s8 %v7946
        %v7948 = vlaneseq
        %v7949 = vshrl.u32 %v7948, 7
        %v7950 = vsub.s32 %v7947, %v7949
        %v7951 = vrot.slane %v7937, %v7950
        %v7952 = vcombine.high %v7944, %v7944
        %v7953 = vcombine.high %v7951, %v7951
        %v7954 = vcombine.high %v7696, %v7696
        %v7956 = vunpack.c.l.s4 1983009808
        %v7957 = vunpack.c.0.s8 %v7956
        %v7958 = vlaneseq
        %v7959 = vshrl.u32 %v7958, 7
        %v7960 = vsub.s32 %v7957, %v7959
        %v7961 = vrot.slane %v7696, %v7960
        %v7963 = vunpack.c.l.s4 1983009808
        %v7964 = vunpack.c.0.s8 %v7963
        %v7965 = vlaneseq
        %v7966 = vshrl.u32 %v7965, 7
        %v7967 = vsub.s32 %v7964, %v7966
        %v7968 = vrot.slane %v7954, %v7967
        %v7969 = vcombine.high %v7961, %v7961
        %v7970 = vcombine.high %v7697, %v7697
        %v7972 = vunpack.c.l.s4 1983009808
        %v7973 = vunpack.c.0.s8 %v7972
        %v7974 = vlaneseq
        %v7975 = vshrl.u32 %v7974, 7
        %v7976 = vsub.s32 %v7973, %v7975
        %v7977 = vrot.slane %v7697, %v7976
        %v7979 = vunpack.c.l.s4 1983009808
        %v7980 = vunpack.c.0.s8 %v7979
        %v7981 = vlaneseq
        %v7982 = vshrl.u32 %v7981, 7
        %v7983 = vsub.s32 %v7980, %v7982
        %v7984 = vrot.slane %v7970, %v7983
        %v7985 = vcombine.high %v7977, %v7977
        %v7986 = vcombine.high %v7984, %v7984
        %v7987 = vcombine.high %v7698, %v7698
        %v7989 = vunpack.c.l.s4 1983009808
        %v7990 = vunpack.c.0.s8 %v7989
        %v7991 = vlaneseq
        %v7992 = vshrl.u32 %v7991, 7
        %v7993 = vsub.s32 %v7990, %v7992
        %v7994 = vrot.slane %v7698, %v7993
        %v7996 = vunpack.c.l.s4 1983009808
        %v7997 = vunpack.c.0.s8 %v7996
        %v7998 = vlaneseq
        %v7999 = vshrl.u32 %v7998, 7
        %v8000 = vsub.s32 %v7997, %v7999
        %v8001 = vrot.slane %v7987, %v8000
        %v8002 = vcombine.high %v7994, %v7994
        %v8003 = vcombine.high %v7699, %v7699
        %v8005 = vunpack.c.l.s4 1983009808
        %v8006 = vunpack.c.0.s8 %v8005
        %v8007 = vlaneseq
        %v8008 = vshrl.u32 %v8007, 7
        %v8009 = vsub.s32 %v8006, %v8008
        %v8010 = vrot.slane %v7699, %v8009
        %v8012 = vunpack.c.l.s4 1983009808
        %v8013 = vunpack.c.0.s8 %v8012
        %v8014 = vlaneseq
        %v8015 = vshrl.u32 %v8014, 7
        %v8016 = vsub.s32 %v8013, %v8015
        %v8017 = vrot.slane %v8003, %v8016
        %v8018 = vcombine.high %v8010, %v8010
        %v8019 = vcombine.high %v8017, %v8017
        %v8020 = vcombine.high %v7700, %v7700
        %v8022 = vunpack.c.l.s4 1983009808
        %v8023 = vunpack.c.0.s8 %v8022
        %v8024 = vlaneseq
        %v8025 = vshrl.u32 %v8024, 7
        %v8026 = vsub.s32 %v8023, %v8025
        %v8027 = vrot.slane %v7700, %v8026
        %v8029 = vunpack.c.l.s4 1983009808
        %v8030 = vunpack.c.0.s8 %v8029
        %v8031 = vlaneseq
        %v8032 = vshrl.u32 %v8031, 7
        %v8033 = vsub.s32 %v8030, %v8032
        %v8034 = vrot.slane %v8020, %v8033
        %v8035 = vcombine.high %v8027, %v8027
        %v8036 = vcombine.high %v7701, %v7701
        %v8038 = vunpack.c.l.s4 1983009808
        %v8039 = vunpack.c.0.s8 %v8038
        %v8040 = vlaneseq
        %v8041 = vshrl.u32 %v8040, 7
        %v8042 = vsub.s32 %v8039, %v8041
        %v8043 = vrot.slane %v7701, %v8042
        %v8045 = vunpack.c.l.s4 1983009808
        %v8046 = vunpack.c.0.s8 %v8045
        %v8047 = vlaneseq
        %v8048 = vshrl.u32 %v8047, 7
        %v8049 = vsub.s32 %v8046, %v8048
        %v8050 = vrot.slane %v8036, %v8049
        %v8051 = vcombine.high %v8043, %v8043
        %v8052 = vcombine.high %v8050, %v8050
        %v8053 = vcombine.high %v7702, %v7702
        %v8055 = vunpack.c.l.s4 1983009808
        %v8056 = vunpack.c.0.s8 %v8055
        %v8057 = vlaneseq
        %v8058 = vshrl.u32 %v8057, 7
        %v8059 = vsub.s32 %v8056, %v8058
        %v8060 = vrot.slane %v7702, %v8059
        %v8062 = vunpack.c.l.s4 1983009808
        %v8063 = vunpack.c.0.s8 %v8062
        %v8064 = vlaneseq
        %v8065 = vshrl.u32 %v8064, 7
        %v8066 = vsub.s32 %v8063, %v8065
        %v8067 = vrot.slane %v8053, %v8066
        %v8068 = vcombine.high %v8060, %v8060
        %v8069 = vcombine.high %v7703, %v7703
        %v8071 = vunpack.c.l.s4 1983009808
        %v8072 = vunpack.c.0.s8 %v8071
        %v8073 = vlaneseq
        %v8074 = vshrl.u32 %v8073, 7
        %v8075 = vsub.s32 %v8072, %v8074
        %v8076 = vrot.slane %v7703, %v8075
        %v8078 = vunpack.c.l.s4 1983009808
        %v8079 = vunpack.c.0.s8 %v8078
        %v8080 = vlaneseq
        %v8081 = vshrl.u32 %v8080, 7
        %v8082 = vsub.s32 %v8079, %v8081
        %v8083 = vrot.slane %v8069, %v8082
        %v8084 = vcombine.high %v8076, %v8076
        %v8085 = vcombine.high %v8083, %v8083
        %v8086 = vcombine.high %v7704, %v7704
        %v8088 = vunpack.c.l.s4 1983009808
        %v8089 = vunpack.c.0.s8 %v8088
        %v8090 = vlaneseq
        %v8091 = vshrl.u32 %v8090, 7
        %v8092 = vsub.s32 %v8089, %v8091
        %v8093 = vrot.slane %v7704, %v8092
        %v8095 = vunpack.c.l.s4 1983009808
        %v8096 = vunpack.c.0.s8 %v8095
        %v8097 = vlaneseq
        %v8098 = vshrl.u32 %v8097, 7
        %v8099 = vsub.s32 %v8096, %v8098
        %v8100 = vrot.slane %v8086, %v8099
        %v8101 = vcombine.high %v8093, %v8093
        %v8102 = vcombine.high %v7705, %v7705
        %v8104 = vunpack.c.l.s4 1983009808
        %v8105 = vunpack.c.0.s8 %v8104
        %v8106 = vlaneseq
        %v8107 = vshrl.u32 %v8106, 7
        %v8108 = vsub.s32 %v8105, %v8107
        %v8109 = vrot.slane %v7705, %v8108
        %v8111 = vunpack.c.l.s4 1983009808
        %v8112 = vunpack.c.0.s8 %v8111
        %v8113 = vlaneseq
        %v8114 = vshrl.u32 %v8113, 7
        %v8115 = vsub.s32 %v8112, %v8114
        %v8116 = vrot.slane %v8102, %v8115
        %v8117 = vcombine.high %v8109, %v8109
        %v8118 = vcombine.high %v8116, %v8116
        %v8119 = vcombine.high %v7706, %v7706
        %v8121 = vunpack.c.l.s4 1983009808
        %v8122 = vunpack.c.0.s8 %v8121
        %v8123 = vlaneseq
        %v8124 = vshrl.u32 %v8123, 7
        %v8125 = vsub.s32 %v8122, %v8124
        %v8126 = vrot.slane %v7706, %v8125
        %v8128 = vunpack.c.l.s4 1983009808
        %v8129 = vunpack.c.0.s8 %v8128
        %v8130 = vlaneseq
        %v8131 = vshrl.u32 %v8130, 7
        %v8132 = vsub.s32 %v8129, %v8131
        %v8133 = vrot.slane %v8119, %v8132
        %v8134 = vcombine.high %v8126, %v8126
        %v8135 = vcombine.high %v7707, %v7707
        %v8137 = vunpack.c.l.s4 1983009808
        %v8138 = vunpack.c.0.s8 %v8137
        %v8139 = vlaneseq
        %v8140 = vshrl.u32 %v8139, 7
        %v8141 = vsub.s32 %v8138, %v8140
        %v8142 = vrot.slane %v7707, %v8141
        %v8144 = vunpack.c.l.s4 1983009808
        %v8145 = vunpack.c.0.s8 %v8144
        %v8146 = vlaneseq
        %v8147 = vshrl.u32 %v8146, 7
        %v8148 = vsub.s32 %v8145, %v8147
        %v8149 = vrot.slane %v8135, %v8148
        %v8150 = vcombine.high %v8142, %v8142
        %v8151 = vcombine.high %v8149, %v8149
        %v8152 = vcombine.high %v7708, %v7708
        %v8154 = vunpack.c.l.s4 1983009808
        %v8155 = vunpack.c.0.s8 %v8154
        %v8156 = vlaneseq
        %v8157 = vshrl.u32 %v8156, 7
        %v8158 = vsub.s32 %v8155, %v8157
        %v8159 = vrot.slane %v7708, %v8158
        %v8161 = vunpack.c.l.s4 1983009808
        %v8162 = vunpack.c.0.s8 %v8161
        %v8163 = vlaneseq
        %v8164 = vshrl.u32 %v8163, 7
        %v8165 = vsub.s32 %v8162, %v8164
        %v8166 = vrot.slane %v8152, %v8165
        %v8167 = vcombine.high %v8159, %v8159
        %v8168 = vcombine.high %v7709, %v7709
        %v8170 = vunpack.c.l.s4 1983009808
        %v8171 = vunpack.c.0.s8 %v8170
        %v8172 = vlaneseq
        %v8173 = vshrl.u32 %v8172, 7
        %v8174 = vsub.s32 %v8171, %v8173
        %v8175 = vrot.slane %v7709, %v8174
        %v8177 = vunpack.c.l.s4 1983009808
        %v8178 = vunpack.c.0.s8 %v8177
        %v8179 = vlaneseq
        %v8180 = vshrl.u32 %v8179, 7
        %v8181 = vsub.s32 %v8178, %v8180
        %v8182 = vrot.slane %v8168, %v8181
        %v8183 = vcombine.high %v8175, %v8175
        %v8184 = vcombine.high %v8182, %v8182
        %v8185 = vcombine.high %v7710, %v7710
        %v8187 = vunpack.c.l.s4 1983009808
        %v8188 = vunpack.c.0.s8 %v8187
        %v8189 = vlaneseq
        %v8190 = vshrl.u32 %v8189, 7
        %v8191 = vsub.s32 %v8188, %v8190
        %v8192 = vrot.slane %v7710, %v8191
        %v8194 = vunpack.c.l.s4 1983009808
        %v8195 = vunpack.c.0.s8 %v8194
        %v8196 = vlaneseq
        %v8197 = vshrl.u32 %v8196, 7
        %v8198 = vsub.s32 %v8195, %v8197
        %v8199 = vrot.slane %v8185, %v8198
        %v8200 = vcombine.high %v8192, %v8192
        %v8299 = vrot.slane %v7746, 7
        %v8300 = vrot.slane %v8299, 2
        %v8301 = vrot.slane %v7754, 7
        %v8302 = vrot.slane %v8301, 2
        %v8303 = vrot.slane %v7753, 7
        %v8304 = vrot.slane %v8303, 2
        %v8305 = vrot.slane %v7755, 7
        %v8306 = vrot.slane %v8305, 2
        %v8307 = vrot.slane %v7763, 7
        %v8308 = vrot.slane %v8307, 2
        %v8309 = vrot.slane %v7771, 7
        %v8310 = vrot.slane %v8309, 2
        %v8311 = vrot.slane %v7770, 7
        %v8312 = vrot.slane %v8311, 2
        %v8313 = vrot.slane %v7779, 7
        %v8314 = vrot.slane %v8313, 2
        %v8315 = vrot.slane %v7787, 7
        %v8316 = vrot.slane %v8315, 2
        %v8317 = vrot.slane %v7786, 7
        %v8318 = vrot.slane %v8317, 2
        %v8319 = vrot.slane %v7788, 7
        %v8320 = vrot.slane %v8319, 2
        %v8321 = vrot.slane %v7796, 7
        %v8322 = vrot.slane %v8321, 2
        %v8323 = vrot.slane %v7804, 7
        %v8324 = vrot.slane %v8323, 2
        %v8325 = vrot.slane %v7803, 7
        %v8326 = vrot.slane %v8325, 2
        %v8327 = vrot.slane %v7812, 7
        %v8328 = vrot.slane %v8327, 2
        %v8329 = vrot.slane %v7820, 7
        %v8330 = vrot.slane %v8329, 2
        %v8331 = vrot.slane %v7819, 7
        %v8332 = vrot.slane %v8331, 2
        %v8333 = vrot.slane %v7821, 7
        %v8334 = vrot.slane %v8333, 2
        %v8335 = vrot.slane %v7829, 7
        %v8336 = vrot.slane %v8335, 2
        %v8337 = vrot.slane %v7837, 7
        %v8338 = vrot.slane %v8337, 2
        %v8339 = vrot.slane %v7836, 7
        %v8340 = vrot.slane %v8339, 2
        %v8341 = vrot.slane %v7845, 7
        %v8342 = vrot.slane %v8341, 2
        %v8343 = vrot.slane %v7853, 7
        %v8344 = vrot.slane %v8343, 2
        %v8345 = vrot.slane %v7852, 7
        %v8346 = vrot.slane %v8345, 2
        %v8347 = vrot.slane %v7854, 7
        %v8348 = vrot.slane %v8347, 2
        %v8349 = vrot.slane %v7862, 7
        %v8350 = vrot.slane %v8349, 2
        %v8351 = vrot.slane %v7870, 7
        %v8352 = vrot.slane %v8351, 2
        %v8353 = vrot.slane %v7869, 7
        %v8354 = vrot.slane %v8353, 2
        %v8355 = vrot.slane %v7878, 7
        %v8356 = vrot.slane %v8355, 2
        %v8357 = vrot.slane %v7886, 7
        %v8358 = vrot.slane %v8357, 2
        %v8359 = vrot.slane %v7885, 7
        %v8360 = vrot.slane %v8359, 2
        %v8361 = vrot.slane %v7887, 7
        %v8362 = vrot.slane %v8361, 2
        %v8363 = vrot.slane %v7895, 7
        %v8364 = vrot.slane %v8363, 2
        %v8365 = vrot.slane %v7903, 7
        %v8366 = vrot.slane %v8365, 2
        %v8367 = vrot.slane %v7902, 7
        %v8368 = vrot.slane %v8367, 2
        %v8369 = vrot.slane %v7911, 7
        %v8370 = vrot.slane %v8369, 2
        %v8371 = vrot.slane %v7919, 7
        %v8372 = vrot.slane %v8371, 2
        %v8373 = vrot.slane %v7918, 7
        %v8374 = vrot.slane %v8373, 2
        %v8375 = vrot.slane %v7920, 7
        %v8376 = vrot.slane %v8375, 2
        %v8377 = vrot.slane %v7928, 7
        %v8378 = vrot.slane %v8377, 2
        %v8379 = vrot.slane %v7936, 7
        %v8380 = vrot.slane %v8379, 2
        %v8381 = vrot.slane %v7935, 7
        %v8382 = vrot.slane %v8381, 2
        %v8383 = vrot.slane %v7944, 7
        %v8384 = vrot.slane %v8383, 2
        %v8385 = vrot.slane %v7952, 7
        %v8386 = vrot.slane %v8385, 2
        %v8387 = vrot.slane %v7951, 7
        %v8388 = vrot.slane %v8387, 2
        %v8389 = vrot.slane %v7953, 7
        %v8390 = vrot.slane %v8389, 2
        %v8391 = vrot.slane %v7961, 7
        %v8392 = vrot.slane %v8391, 2
        %v8393 = vrot.slane %v7969, 7
        %v8394 = vrot.slane %v8393, 2
        %v8395 = vrot.slane %v7968, 7
        %v8396 = vrot.slane %v8395, 2
        %v8397 = vrot.slane %v7977, 7
        %v8398 = vrot.slane %v8397, 2
        %v8399 = vrot.slane %v7985, 7
        %v8400 = vrot.slane %v8399, 2
        %v8401 = vrot.slane %v7984, 7
        %v8402 = vrot.slane %v8401, 2
        %v8403 = vrot.slane %v7986, 7
        %v8404 = vrot.slane %v8403, 2
        %v8405 = vrot.slane %v7994, 7
        %v8406 = vrot.slane %v8405, 2
        %v8407 = vrot.slane %v8002, 7
        %v8408 = vrot.slane %v8407, 2
        %v8409 = vrot.slane %v8001, 7
        %v8410 = vrot.slane %v8409, 2
        %v8411 = vrot.slane %v8010, 7
        %v8412 = vrot.slane %v8411, 2
        %v8413 = vrot.slane %v8018, 7
        %v8414 = vrot.slane %v8413, 2
        %v8415 = vrot.slane %v8017, 7
        %v8416 = vrot.slane %v8415, 2
        %v8417 = vrot.slane %v8019, 7
        %v8418 = vrot.slane %v8417, 2
        %v8419 = vrot.slane %v8027, 7
        %v8420 = vrot.slane %v8419, 2
        %v8421 = vrot.slane %v8035, 7
        %v8422 = vrot.slane %v8421, 2
        %v8423 = vrot.slane %v8034, 7
        %v8424 = vrot.slane %v8423, 2
        %v8425 = vrot.slane %v8043, 7
        %v8426 = vrot.slane %v8425, 2
        %v8427 = vrot.slane %v8051, 7
        %v8428 = vrot.slane %v8427, 2
        %v8429 = vrot.slane %v8050, 7
        %v8430 = vrot.slane %v8429, 2
        %v8431 = vrot.slane %v8052, 7
        %v8432 = vrot.slane %v8431, 2
        %v8433 = vrot.slane %v8060, 7
        %v8434 = vrot.slane %v8433, 2
        %v8435 = vrot.slane %v8068, 7
        %v8436 = vrot.slane %v8435, 2
        %v8437 = vrot.slane %v8067, 7
        %v8438 = vrot.slane %v8437, 2
        %v8439 = vrot.slane %v8076, 7
        %v8440 = vrot.slane %v8439, 2
        %v8441 = vrot.slane %v8084, 7
        %v8442 = vrot.slane %v8441, 2
        %v8443 = vrot.slane %v8083, 7
        %v8444 = vrot.slane %v8443, 2
        %v8445 = vrot.slane %v8085, 7
        %v8446 = vrot.slane %v8445, 2
        %v8447 = vrot.slane %v8093, 7
        %v8448 = vrot.slane %v8447, 2
        %v8449 = vrot.slane %v8101, 7
        %v8450 = vrot.slane %v8449, 2
        %v8451 = vrot.slane %v8100, 7
        %v8452 = vrot.slane %v8451, 2
        %v8453 = vrot.slane %v8109, 7
        %v8454 = vrot.slane %v8453, 2
        %v8455 = vrot.slane %v8117, 7
        %v8456 = vrot.slane %v8455, 2
        %v8457 = vrot.slane %v8116, 7
        %v8458 = vrot.slane %v8457, 2
        %v8459 = vrot.slane %v8118, 7
        %v8460 = vrot.slane %v8459, 2
        %v8461 = vrot.slane %v8126, 7
        %v8462 = vrot.slane %v8461, 2
        %v8463 = vrot.slane %v8134, 7
        %v8464 = vrot.slane %v8463, 2
        %v8465 = vrot.slane %v8133, 7
        %v8466 = vrot.slane %v8465, 2
        %v8467 = vrot.slane %v8142, 7
        %v8468 = vrot.slane %v8467, 2
        %v8469 = vrot.slane %v8150, 7
        %v8470 = vrot.slane %v8469, 2
        %v8471 = vrot.slane %v8149, 7
        %v8472 = vrot.slane %v8471, 2
        %v8473 = vrot.slane %v8151, 7
        %v8474 = vrot.slane %v8473, 2
        %v8475 = vrot.slane %v8159, 7
        %v8476 = vrot.slane %v8475, 2
        %v8477 = vrot.slane %v8167, 7
        %v8478 = vrot.slane %v8477, 2
        %v8479 = vrot.slane %v8166, 7
        %v8480 = vrot.slane %v8479, 2
        %v8481 = vrot.slane %v8175, 7
        %v8482 = vrot.slane %v8481, 2
        %v8483 = vrot.slane %v8183, 7
        %v8484 = vrot.slane %v8483, 2
        %v8485 = vrot.slane %v8182, 7
        %v8486 = vrot.slane %v8485, 2
        %v8487 = vrot.slane %v8184, 7
        %v8488 = vrot.slane %v8487, 2
        %v8489 = vrot.slane %v8192, 7
        %v8490 = vrot.slane %v8489, 2
        %v8491 = vrot.slane %v8200, 7
        %v8492 = vrot.slane %v8491, 2
        %v8493 = vrot.slane %v8199, 7
        %v8494 = vrot.slane %v8493, 2
        %v8593 = vmax.f32 %v7746, %v8300
        %v8594 = vmax.f32 %v7754, %v8302
        %v8595 = vmax.f32 %v7753, %v8304
        %v8596 = vmax.f32 %v7755, %v8306
        %v8597 = vmax.f32 %v7763, %v8308
        %v8598 = vmax.f32 %v7771, %v8310
        %v8599 = vmax.f32 %v7770, %v8312
        %v8600 = vmax.f32 %v7779, %v8314
        %v8601 = vmax.f32 %v7787, %v8316
        %v8602 = vmax.f32 %v7786, %v8318
        %v8603 = vmax.f32 %v7788, %v8320
        %v8604 = vmax.f32 %v7796, %v8322
        %v8605 = vmax.f32 %v7804, %v8324
        %v8606 = vmax.f32 %v7803, %v8326
        %v8607 = vmax.f32 %v7812, %v8328
        %v8608 = vmax.f32 %v7820, %v8330
        %v8609 = vmax.f32 %v7819, %v8332
        %v8610 = vmax.f32 %v7821, %v8334
        %v8611 = vmax.f32 %v7829, %v8336
        %v8612 = vmax.f32 %v7837, %v8338
        %v8613 = vmax.f32 %v7836, %v8340
        %v8614 = vmax.f32 %v7845, %v8342
        %v8615 = vmax.f32 %v7853, %v8344
        %v8616 = vmax.f32 %v7852, %v8346
        %v8617 = vmax.f32 %v7854, %v8348
        %v8618 = vmax.f32 %v7862, %v8350
        %v8619 = vmax.f32 %v7870, %v8352
        %v8620 = vmax.f32 %v7869, %v8354
        %v8621 = vmax.f32 %v7878, %v8356
        %v8622 = vmax.f32 %v7886, %v8358
        %v8623 = vmax.f32 %v7885, %v8360
        %v8624 = vmax.f32 %v7887, %v8362
        %v8625 = vmax.f32 %v7895, %v8364
        %v8626 = vmax.f32 %v7903, %v8366
        %v8627 = vmax.f32 %v7902, %v8368
        %v8628 = vmax.f32 %v7911, %v8370
        %v8629 = vmax.f32 %v7919, %v8372
        %v8630 = vmax.f32 %v7918, %v8374
        %v8631 = vmax.f32 %v7920, %v8376
        %v8632 = vmax.f32 %v7928, %v8378
        %v8633 = vmax.f32 %v7936, %v8380
        %v8634 = vmax.f32 %v7935, %v8382
        %v8635 = vmax.f32 %v7944, %v8384
        %v8636 = vmax.f32 %v7952, %v8386
        %v8637 = vmax.f32 %v7951, %v8388
        %v8638 = vmax.f32 %v7953, %v8390
        %v8639 = vmax.f32 %v7961, %v8392
        %v8640 = vmax.f32 %v7969, %v8394
        %v8641 = vmax.f32 %v7968, %v8396
        %v8642 = vmax.f32 %v7977, %v8398
        %v8643 = vmax.f32 %v7985, %v8400
        %v8644 = vmax.f32 %v7984, %v8402
        %v8645 = vmax.f32 %v7986, %v8404
        %v8646 = vmax.f32 %v7994, %v8406
        %v8647 = vmax.f32 %v8002, %v8408
        %v8648 = vmax.f32 %v8001, %v8410
        %v8649 = vmax.f32 %v8010, %v8412
        %v8650 = vmax.f32 %v8018, %v8414
        %v8651 = vmax.f32 %v8017, %v8416
        %v8652 = vmax.f32 %v8019, %v8418
        %v8653 = vmax.f32 %v8027, %v8420
        %v8654 = vmax.f32 %v8035, %v8422
        %v8655 = vmax.f32 %v8034, %v8424
        %v8656 = vmax.f32 %v8043, %v8426
        %v8657 = vmax.f32 %v8051, %v8428
        %v8658 = vmax.f32 %v8050, %v8430
        %v8659 = vmax.f32 %v8052, %v8432
        %v8660 = vmax.f32 %v8060, %v8434
        %v8661 = vmax.f32 %v8068, %v8436
        %v8662 = vmax.f32 %v8067, %v8438
        %v8663 = vmax.f32 %v8076, %v8440
        %v8664 = vmax.f32 %v8084, %v8442
        %v8665 = vmax.f32 %v8083, %v8444
        %v8666 = vmax.f32 %v8085, %v8446
        %v8667 = vmax.f32 %v8093, %v8448
        %v8668 = vmax.f32 %v8101, %v8450
        %v8669 = vmax.f32 %v8100, %v8452
        %v8670 = vmax.f32 %v8109, %v8454
        %v8671 = vmax.f32 %v8117, %v8456
        %v8672 = vmax.f32 %v8116, %v8458
        %v8673 = vmax.f32 %v8118, %v8460
        %v8674 = vmax.f32 %v8126, %v8462
        %v8675 = vmax.f32 %v8134, %v8464
        %v8676 = vmax.f32 %v8133, %v8466
        %v8677 = vmax.f32 %v8142, %v8468
        %v8678 = vmax.f32 %v8150, %v8470
        %v8679 = vmax.f32 %v8149, %v8472
        %v8680 = vmax.f32 %v8151, %v8474
        %v8681 = vmax.f32 %v8159, %v8476
        %v8682 = vmax.f32 %v8167, %v8478
        %v8683 = vmax.f32 %v8166, %v8480
        %v8684 = vmax.f32 %v8175, %v8482
        %v8685 = vmax.f32 %v8183, %v8484
        %v8686 = vmax.f32 %v8182, %v8486
        %v8687 = vmax.f32 %v8184, %v8488
        %v8688 = vmax.f32 %v8192, %v8490
        %v8689 = vmax.f32 %v8200, %v8492
        %v8690 = vmax.f32 %v8199, %v8494
        %v8693 = vlaneseq
        %v8694 = vshrl.u32 %v8693, 7
        %v8695 = vsub.s32 0, %v8694
        %v8696 = vrot.slane %v8593, %v8695
        %v8697 = vlaneseq
        %v8698 = vshrl.u32 %v8697, 7
        %v8699 = vsub.s32 0, %v8698
        %v8700 = vrot.slane %v8642, %v8699
        %vm8701 = vcmask 1041409
        %v8702 = vsel %vm8701, %v8700, %v8696
        %v8706 = vlaneseq
        %v8707 = vshrl.u32 %v8706, 7
        %v8708 = vsub.s32 0, %v8707
        %v8709 = vrot.slane %v8594, %v8708
        %v8710 = vlaneseq
        %v8711 = vshrl.u32 %v8710, 7
        %v8712 = vsub.s32 0, %v8711
        %v8713 = vrot.slane %v8643, %v8712
        %v8714 = vsel %vm8701, %v8713, %v8709
        %8715 = vrot.lane.b32.xlu0 %v8714, 16
        %v8716 = vpop.permute.xlu0 %8715
        %v8720 = vlaneseq
        %v8721 = vshrl.u32 %v8720, 7
        %v8722 = vsub.s32 0, %v8721
        %v8723 = vrot.slane %v8595, %v8722
        %v8724 = vlaneseq
        %v8725 = vshrl.u32 %v8724, 7
        %v8726 = vsub.s32 0, %v8725
        %v8727 = vrot.slane %v8644, %v8726
        %v8728 = vsel %vm8701, %v8727, %v8723
        %8729 = vrot.lane.b32.xlu0 %v8728, 32
        %v8730 = vpop.permute.xlu0 %8729
        %v8734 = vlaneseq
        %v8735 = vshrl.u32 %v8734, 7
        %v8736 = vsub.s32 0, %v8735
        %v8737 = vrot.slane %v8596, %v8736
        %v8738 = vlaneseq
        %v8739 = vshrl.u32 %v8738, 7
        %v8740 = vsub.s32 0, %v8739
        %v8741 = vrot.slane %v8645, %v8740
        %v8742 = vsel %vm8701, %v8741, %v8737
        %8743 = vrot.lane.b32.xlu0 %v8742, 48
        %v8744 = vpop.permute.xlu0 %8743
        %v8748 = vlaneseq
        %v8749 = vshrl.u32 %v8748, 7
        %v8750 = vsub.s32 0, %v8749
        %v8751 = vrot.slane %v8597, %v8750
        %v8752 = vlaneseq
        %v8753 = vshrl.u32 %v8752, 7
        %v8754 = vsub.s32 0, %v8753
        %v8755 = vrot.slane %v8646, %v8754
        %v8756 = vsel %vm8701, %v8755, %v8751
        %8757 = vrot.lane.b32.xlu0 %v8756, 64
        %v8758 = vpop.permute.xlu0 %8757
        %v8762 = vlaneseq
        %v8763 = vshrl.u32 %v8762, 7
        %v8764 = vsub.s32 0, %v8763
        %v8765 = vrot.slane %v8598, %v8764
        %v8766 = vlaneseq
        %v8767 = vshrl.u32 %v8766, 7
        %v8768 = vsub.s32 0, %v8767
        %v8769 = vrot.slane %v8647, %v8768
        %v8770 = vsel %vm8701, %v8769, %v8765
        %8771 = vrot.lane.b32.xlu0 %v8770, 80
        %v8772 = vpop.permute.xlu0 %8771
        %v8776 = vlaneseq
        %v8777 = vshrl.u32 %v8776, 7
        %v8778 = vsub.s32 0, %v8777
        %v8779 = vrot.slane %v8599, %v8778
        %v8780 = vlaneseq
        %v8781 = vshrl.u32 %v8780, 7
        %v8782 = vsub.s32 0, %v8781
        %v8783 = vrot.slane %v8648, %v8782
        %v8784 = vsel %vm8701, %v8783, %v8779
        %8785 = vrot.lane.b32.xlu0 %v8784, 96
        %v8786 = vpop.permute.xlu0 %8785
        %v8790 = vlaneseq
        %v8791 = vshrl.u32 %v8790, 7
        %v8792 = vsub.s32 0, %v8791
        %v8793 = vrot.slane %v8600, %v8792
        %v8794 = vlaneseq
        %v8795 = vshrl.u32 %v8794, 7
        %v8796 = vsub.s32 0, %v8795
        %v8797 = vrot.slane %v8649, %v8796
        %v8798 = vsel %vm8701, %v8797, %v8793
        %8799 = vrot.lane.b32.xlu0 %v8798, 112
        %v8800 = vpop.permute.xlu0 %8799
        %v8804 = vlaneseq
        %v8805 = vshrl.u32 %v8804, 7
        %v8806 = vsub.s32 0, %v8805
        %v8807 = vrot.slane %v8601, %v8806
        %v8808 = vlaneseq
        %v8809 = vshrl.u32 %v8808, 7
        %v8810 = vsub.s32 0, %v8809
        %v8811 = vrot.slane %v8650, %v8810
        %v8812 = vsel %vm8701, %v8811, %v8807
        %v8816 = vlaneseq
        %v8817 = vshrl.u32 %v8816, 7
        %v8818 = vsub.s32 0, %v8817
        %v8819 = vrot.slane %v8602, %v8818
        %v8820 = vlaneseq
        %v8821 = vshrl.u32 %v8820, 7
        %v8822 = vsub.s32 0, %v8821
        %v8823 = vrot.slane %v8651, %v8822
        %v8824 = vsel %vm8701, %v8823, %v8819
        %8825 = vrot.lane.b32.xlu0 %v8824, 16
        %v8826 = vpop.permute.xlu0 %8825
        %v8830 = vlaneseq
        %v8831 = vshrl.u32 %v8830, 7
        %v8832 = vsub.s32 0, %v8831
        %v8833 = vrot.slane %v8603, %v8832
        %v8834 = vlaneseq
        %v8835 = vshrl.u32 %v8834, 7
        %v8836 = vsub.s32 0, %v8835
        %v8837 = vrot.slane %v8652, %v8836
        %v8838 = vsel %vm8701, %v8837, %v8833
        %8839 = vrot.lane.b32.xlu0 %v8838, 32
        %v8840 = vpop.permute.xlu0 %8839
        %v8844 = vlaneseq
        %v8845 = vshrl.u32 %v8844, 7
        %v8846 = vsub.s32 0, %v8845
        %v8847 = vrot.slane %v8604, %v8846
        %v8848 = vlaneseq
        %v8849 = vshrl.u32 %v8848, 7
        %v8850 = vsub.s32 0, %v8849
        %v8851 = vrot.slane %v8653, %v8850
        %v8852 = vsel %vm8701, %v8851, %v8847
        %8853 = vrot.lane.b32.xlu0 %v8852, 48
        %v8854 = vpop.permute.xlu0 %8853
        %v8858 = vlaneseq
        %v8859 = vshrl.u32 %v8858, 7
        %v8860 = vsub.s32 0, %v8859
        %v8861 = vrot.slane %v8605, %v8860
        %v8862 = vlaneseq
        %v8863 = vshrl.u32 %v8862, 7
        %v8864 = vsub.s32 0, %v8863
        %v8865 = vrot.slane %v8654, %v8864
        %v8866 = vsel %vm8701, %v8865, %v8861
        %8867 = vrot.lane.b32.xlu0 %v8866, 64
        %v8868 = vpop.permute.xlu0 %8867
        %v8872 = vlaneseq
        %v8873 = vshrl.u32 %v8872, 7
        %v8874 = vsub.s32 0, %v8873
        %v8875 = vrot.slane %v8606, %v8874
        %v8876 = vlaneseq
        %v8877 = vshrl.u32 %v8876, 7
        %v8878 = vsub.s32 0, %v8877
        %v8879 = vrot.slane %v8655, %v8878
        %v8880 = vsel %vm8701, %v8879, %v8875
        %8881 = vrot.lane.b32.xlu0 %v8880, 80
        %v8882 = vpop.permute.xlu0 %8881
        %v8886 = vlaneseq
        %v8887 = vshrl.u32 %v8886, 7
        %v8888 = vsub.s32 0, %v8887
        %v8889 = vrot.slane %v8607, %v8888
        %v8890 = vlaneseq
        %v8891 = vshrl.u32 %v8890, 7
        %v8892 = vsub.s32 0, %v8891
        %v8893 = vrot.slane %v8656, %v8892
        %v8894 = vsel %vm8701, %v8893, %v8889
        %8895 = vrot.lane.b32.xlu0 %v8894, 96
        %v8896 = vpop.permute.xlu0 %8895
        %v8900 = vlaneseq
        %v8901 = vshrl.u32 %v8900, 7
        %v8902 = vsub.s32 0, %v8901
        %v8903 = vrot.slane %v8608, %v8902
        %v8904 = vlaneseq
        %v8905 = vshrl.u32 %v8904, 7
        %v8906 = vsub.s32 0, %v8905
        %v8907 = vrot.slane %v8657, %v8906
        %v8908 = vsel %vm8701, %v8907, %v8903
        %8909 = vrot.lane.b32.xlu0 %v8908, 112
        %v8910 = vpop.permute.xlu0 %8909
        %vm8912 = vcmask 130048
        %v8913 = vsel %vm8912, %v8702, %v8716
        %vm8914 = vcmask 261120
        %v8915 = vsel %vm8914, %v8913, %v8730
        %vm8916 = vcmask 392192
        %v8917 = vsel %vm8916, %v8915, %v8744
        %vm8918 = vcmask 523264
        %v8919 = vsel %vm8918, %v8917, %v8758
        %vm8920 = vcmask 654336
        %v8921 = vsel %vm8920, %v8919, %v8772
        %vm8922 = vcmask 785408
        %v8923 = vsel %vm8922, %v8921, %v8786
        %vm8924 = vcmask 916480
        %v8925 = vsel %vm8924, %v8923, %v8800
        %v8926 = vsel %vm8912, %v8812, %v8826
        %v8927 = vsel %vm8914, %v8926, %v8840
        %v8928 = vsel %vm8916, %v8927, %v8854
        %v8929 = vsel %vm8918, %v8928, %v8868
        %v8930 = vsel %vm8920, %v8929, %v8882
        %v8931 = vsel %vm8922, %v8930, %v8896
        %v8932 = vsel %vm8924, %v8931, %v8910
        %v8935 = vlaneseq
        %v8936 = vshrl.u32 %v8935, 7
        %v8937 = vsub.s32 0, %v8936
        %v8938 = vrot.slane %v8609, %v8937
        %v8939 = vlaneseq
        %v8940 = vshrl.u32 %v8939, 7
        %v8941 = vsub.s32 0, %v8940
        %v8942 = vrot.slane %v8658, %v8941
        %v8943 = vsel %vm8701, %v8942, %v8938
        %v8947 = vlaneseq
        %v8948 = vshrl.u32 %v8947, 7
        %v8949 = vsub.s32 0, %v8948
        %v8950 = vrot.slane %v8610, %v8949
        %v8951 = vlaneseq
        %v8952 = vshrl.u32 %v8951, 7
        %v8953 = vsub.s32 0, %v8952
        %v8954 = vrot.slane %v8659, %v8953
        %v8955 = vsel %vm8701, %v8954, %v8950
        %8956 = vrot.lane.b32.xlu0 %v8955, 16
        %v8957 = vpop.permute.xlu0 %8956
        %v8961 = vlaneseq
        %v8962 = vshrl.u32 %v8961, 7
        %v8963 = vsub.s32 0, %v8962
        %v8964 = vrot.slane %v8611, %v8963
        %v8965 = vlaneseq
        %v8966 = vshrl.u32 %v8965, 7
        %v8967 = vsub.s32 0, %v8966
        %v8968 = vrot.slane %v8660, %v8967
        %v8969 = vsel %vm8701, %v8968, %v8964
        %8970 = vrot.lane.b32.xlu0 %v8969, 32
        %v8971 = vpop.permute.xlu0 %8970
        %v8975 = vlaneseq
        %v8976 = vshrl.u32 %v8975, 7
        %v8977 = vsub.s32 0, %v8976
        %v8978 = vrot.slane %v8612, %v8977
        %v8979 = vlaneseq
        %v8980 = vshrl.u32 %v8979, 7
        %v8981 = vsub.s32 0, %v8980
        %v8982 = vrot.slane %v8661, %v8981
        %v8983 = vsel %vm8701, %v8982, %v8978
        %8984 = vrot.lane.b32.xlu0 %v8983, 48
        %v8985 = vpop.permute.xlu0 %8984
        %v8989 = vlaneseq
        %v8990 = vshrl.u32 %v8989, 7
        %v8991 = vsub.s32 0, %v8990
        %v8992 = vrot.slane %v8613, %v8991
        %v8993 = vlaneseq
        %v8994 = vshrl.u32 %v8993, 7
        %v8995 = vsub.s32 0, %v8994
        %v8996 = vrot.slane %v8662, %v8995
        %v8997 = vsel %vm8701, %v8996, %v8992
        %8998 = vrot.lane.b32.xlu0 %v8997, 64
        %v8999 = vpop.permute.xlu0 %8998
        %v9003 = vlaneseq
        %v9004 = vshrl.u32 %v9003, 7
        %v9005 = vsub.s32 0, %v9004
        %v9006 = vrot.slane %v8614, %v9005
        %v9007 = vlaneseq
        %v9008 = vshrl.u32 %v9007, 7
        %v9009 = vsub.s32 0, %v9008
        %v9010 = vrot.slane %v8663, %v9009
        %v9011 = vsel %vm8701, %v9010, %v9006
        %9012 = vrot.lane.b32.xlu0 %v9011, 80
        %v9013 = vpop.permute.xlu0 %9012
        %v9017 = vlaneseq
        %v9018 = vshrl.u32 %v9017, 7
        %v9019 = vsub.s32 0, %v9018
        %v9020 = vrot.slane %v8615, %v9019
        %v9021 = vlaneseq
        %v9022 = vshrl.u32 %v9021, 7
        %v9023 = vsub.s32 0, %v9022
        %v9024 = vrot.slane %v8664, %v9023
        %v9025 = vsel %vm8701, %v9024, %v9020
        %9026 = vrot.lane.b32.xlu0 %v9025, 96
        %v9027 = vpop.permute.xlu0 %9026
        %v9031 = vlaneseq
        %v9032 = vshrl.u32 %v9031, 7
        %v9033 = vsub.s32 0, %v9032
        %v9034 = vrot.slane %v8616, %v9033
        %v9035 = vlaneseq
        %v9036 = vshrl.u32 %v9035, 7
        %v9037 = vsub.s32 0, %v9036
        %v9038 = vrot.slane %v8665, %v9037
        %v9039 = vsel %vm8701, %v9038, %v9034
        %9040 = vrot.lane.b32.xlu0 %v9039, 112
        %v9041 = vpop.permute.xlu0 %9040
        %v9045 = vlaneseq
        %v9046 = vshrl.u32 %v9045, 7
        %v9047 = vsub.s32 0, %v9046
        %v9048 = vrot.slane %v8617, %v9047
        %v9049 = vlaneseq
        %v9050 = vshrl.u32 %v9049, 7
        %v9051 = vsub.s32 0, %v9050
        %v9052 = vrot.slane %v8666, %v9051
        %v9053 = vsel %vm8701, %v9052, %v9048
        %v9057 = vlaneseq
        %v9058 = vshrl.u32 %v9057, 7
        %v9059 = vsub.s32 0, %v9058
        %v9060 = vrot.slane %v8618, %v9059
        %v9061 = vlaneseq
        %v9062 = vshrl.u32 %v9061, 7
        %v9063 = vsub.s32 0, %v9062
        %v9064 = vrot.slane %v8667, %v9063
        %v9065 = vsel %vm8701, %v9064, %v9060
        %9066 = vrot.lane.b32.xlu0 %v9065, 16
        %v9067 = vpop.permute.xlu0 %9066
        %v9071 = vlaneseq
        %v9072 = vshrl.u32 %v9071, 7
        %v9073 = vsub.s32 0, %v9072
        %v9074 = vrot.slane %v8619, %v9073
        %v9075 = vlaneseq
        %v9076 = vshrl.u32 %v9075, 7
        %v9077 = vsub.s32 0, %v9076
        %v9078 = vrot.slane %v8668, %v9077
        %v9079 = vsel %vm8701, %v9078, %v9074
        %9080 = vrot.lane.b32.xlu0 %v9079, 32
        %v9081 = vpop.permute.xlu0 %9080
        %v9085 = vlaneseq
        %v9086 = vshrl.u32 %v9085, 7
        %v9087 = vsub.s32 0, %v9086
        %v9088 = vrot.slane %v8620, %v9087
        %v9089 = vlaneseq
        %v9090 = vshrl.u32 %v9089, 7
        %v9091 = vsub.s32 0, %v9090
        %v9092 = vrot.slane %v8669, %v9091
        %v9093 = vsel %vm8701, %v9092, %v9088
        %9094 = vrot.lane.b32.xlu0 %v9093, 48
        %v9095 = vpop.permute.xlu0 %9094
        %v9099 = vlaneseq
        %v9100 = vshrl.u32 %v9099, 7
        %v9101 = vsub.s32 0, %v9100
        %v9102 = vrot.slane %v8621, %v9101
        %v9103 = vlaneseq
        %v9104 = vshrl.u32 %v9103, 7
        %v9105 = vsub.s32 0, %v9104
        %v9106 = vrot.slane %v8670, %v9105
        %v9107 = vsel %vm8701, %v9106, %v9102
        %9108 = vrot.lane.b32.xlu0 %v9107, 64
        %v9109 = vpop.permute.xlu0 %9108
        %v9113 = vlaneseq
        %v9114 = vshrl.u32 %v9113, 7
        %v9115 = vsub.s32 0, %v9114
        %v9116 = vrot.slane %v8622, %v9115
        %v9117 = vlaneseq
        %v9118 = vshrl.u32 %v9117, 7
        %v9119 = vsub.s32 0, %v9118
        %v9120 = vrot.slane %v8671, %v9119
        %v9121 = vsel %vm8701, %v9120, %v9116
        %9122 = vrot.lane.b32.xlu0 %v9121, 80
        %v9123 = vpop.permute.xlu0 %9122
        %v9127 = vlaneseq
        %v9128 = vshrl.u32 %v9127, 7
        %v9129 = vsub.s32 0, %v9128
        %v9130 = vrot.slane %v8623, %v9129
        %v9131 = vlaneseq
        %v9132 = vshrl.u32 %v9131, 7
        %v9133 = vsub.s32 0, %v9132
        %v9134 = vrot.slane %v8672, %v9133
        %v9135 = vsel %vm8701, %v9134, %v9130
        %9136 = vrot.lane.b32.xlu0 %v9135, 96
        %v9137 = vpop.permute.xlu0 %9136
        %v9141 = vlaneseq
        %v9142 = vshrl.u32 %v9141, 7
        %v9143 = vsub.s32 0, %v9142
        %v9144 = vrot.slane %v8624, %v9143
        %v9145 = vlaneseq
        %v9146 = vshrl.u32 %v9145, 7
        %v9147 = vsub.s32 0, %v9146
        %v9148 = vrot.slane %v8673, %v9147
        %v9149 = vsel %vm8701, %v9148, %v9144
        %9150 = vrot.lane.b32.xlu0 %v9149, 112
        %v9151 = vpop.permute.xlu0 %9150
        %v9153 = vsel %vm8912, %v8943, %v8957
        %v9154 = vsel %vm8914, %v9153, %v8971
        %v9155 = vsel %vm8916, %v9154, %v8985
        %v9156 = vsel %vm8918, %v9155, %v8999
        %v9157 = vsel %vm8920, %v9156, %v9013
        %v9158 = vsel %vm8922, %v9157, %v9027
        %v9159 = vsel %vm8924, %v9158, %v9041
        %v9160 = vsel %vm8912, %v9053, %v9067
        %v9161 = vsel %vm8914, %v9160, %v9081
        %v9162 = vsel %vm8916, %v9161, %v9095
        %v9163 = vsel %vm8918, %v9162, %v9109
        %v9164 = vsel %vm8920, %v9163, %v9123
        %v9165 = vsel %vm8922, %v9164, %v9137
        %v9166 = vsel %vm8924, %v9165, %v9151
        %v9169 = vlaneseq
        %v9170 = vshrl.u32 %v9169, 7
        %v9171 = vsub.s32 0, %v9170
        %v9172 = vrot.slane %v8625, %v9171
        %v9173 = vlaneseq
        %v9174 = vshrl.u32 %v9173, 7
        %v9175 = vsub.s32 0, %v9174
        %v9176 = vrot.slane %v8674, %v9175
        %v9177 = vsel %vm8701, %v9176, %v9172
        %v9181 = vlaneseq
        %v9182 = vshrl.u32 %v9181, 7
        %v9183 = vsub.s32 0, %v9182
        %v9184 = vrot.slane %v8626, %v9183
        %v9185 = vlaneseq
        %v9186 = vshrl.u32 %v9185, 7
        %v9187 = vsub.s32 0, %v9186
        %v9188 = vrot.slane %v8675, %v9187
        %v9189 = vsel %vm8701, %v9188, %v9184
        %9190 = vrot.lane.b32.xlu0 %v9189, 16
        %v9191 = vpop.permute.xlu0 %9190
        %v9195 = vlaneseq
        %v9196 = vshrl.u32 %v9195, 7
        %v9197 = vsub.s32 0, %v9196
        %v9198 = vrot.slane %v8627, %v9197
        %v9199 = vlaneseq
        %v9200 = vshrl.u32 %v9199, 7
        %v9201 = vsub.s32 0, %v9200
        %v9202 = vrot.slane %v8676, %v9201
        %v9203 = vsel %vm8701, %v9202, %v9198
        %9204 = vrot.lane.b32.xlu0 %v9203, 32
        %v9205 = vpop.permute.xlu0 %9204
        %v9209 = vlaneseq
        %v9210 = vshrl.u32 %v9209, 7
        %v9211 = vsub.s32 0, %v9210
        %v9212 = vrot.slane %v8628, %v9211
        %v9213 = vlaneseq
        %v9214 = vshrl.u32 %v9213, 7
        %v9215 = vsub.s32 0, %v9214
        %v9216 = vrot.slane %v8677, %v9215
        %v9217 = vsel %vm8701, %v9216, %v9212
        %9218 = vrot.lane.b32.xlu0 %v9217, 48
        %v9219 = vpop.permute.xlu0 %9218
        %v9223 = vlaneseq
        %v9224 = vshrl.u32 %v9223, 7
        %v9225 = vsub.s32 0, %v9224
        %v9226 = vrot.slane %v8629, %v9225
        %v9227 = vlaneseq
        %v9228 = vshrl.u32 %v9227, 7
        %v9229 = vsub.s32 0, %v9228
        %v9230 = vrot.slane %v8678, %v9229
        %v9231 = vsel %vm8701, %v9230, %v9226
        %9232 = vrot.lane.b32.xlu0 %v9231, 64
        %v9233 = vpop.permute.xlu0 %9232
        %v9237 = vlaneseq
        %v9238 = vshrl.u32 %v9237, 7
        %v9239 = vsub.s32 0, %v9238
        %v9240 = vrot.slane %v8630, %v9239
        %v9241 = vlaneseq
        %v9242 = vshrl.u32 %v9241, 7
        %v9243 = vsub.s32 0, %v9242
        %v9244 = vrot.slane %v8679, %v9243
        %v9245 = vsel %vm8701, %v9244, %v9240
        %9246 = vrot.lane.b32.xlu0 %v9245, 80
        %v9247 = vpop.permute.xlu0 %9246
        %v9251 = vlaneseq
        %v9252 = vshrl.u32 %v9251, 7
        %v9253 = vsub.s32 0, %v9252
        %v9254 = vrot.slane %v8631, %v9253
        %v9255 = vlaneseq
        %v9256 = vshrl.u32 %v9255, 7
        %v9257 = vsub.s32 0, %v9256
        %v9258 = vrot.slane %v8680, %v9257
        %v9259 = vsel %vm8701, %v9258, %v9254
        %9260 = vrot.lane.b32.xlu0 %v9259, 96
        %v9261 = vpop.permute.xlu0 %9260
        %v9265 = vlaneseq
        %v9266 = vshrl.u32 %v9265, 7
        %v9267 = vsub.s32 0, %v9266
        %v9268 = vrot.slane %v8632, %v9267
        %v9269 = vlaneseq
        %v9270 = vshrl.u32 %v9269, 7
        %v9271 = vsub.s32 0, %v9270
        %v9272 = vrot.slane %v8681, %v9271
        %v9273 = vsel %vm8701, %v9272, %v9268
        %9274 = vrot.lane.b32.xlu0 %v9273, 112
        %v9275 = vpop.permute.xlu0 %9274
        %v9279 = vlaneseq
        %v9280 = vshrl.u32 %v9279, 7
        %v9281 = vsub.s32 0, %v9280
        %v9282 = vrot.slane %v8633, %v9281
        %v9283 = vlaneseq
        %v9284 = vshrl.u32 %v9283, 7
        %v9285 = vsub.s32 0, %v9284
        %v9286 = vrot.slane %v8682, %v9285
        %v9287 = vsel %vm8701, %v9286, %v9282
        %v9291 = vlaneseq
        %v9292 = vshrl.u32 %v9291, 7
        %v9293 = vsub.s32 0, %v9292
        %v9294 = vrot.slane %v8634, %v9293
        %v9295 = vlaneseq
        %v9296 = vshrl.u32 %v9295, 7
        %v9297 = vsub.s32 0, %v9296
        %v9298 = vrot.slane %v8683, %v9297
        %v9299 = vsel %vm8701, %v9298, %v9294
        %9300 = vrot.lane.b32.xlu0 %v9299, 16
        %v9301 = vpop.permute.xlu0 %9300
        %v9305 = vlaneseq
        %v9306 = vshrl.u32 %v9305, 7
        %v9307 = vsub.s32 0, %v9306
        %v9308 = vrot.slane %v8635, %v9307
        %v9309 = vlaneseq
        %v9310 = vshrl.u32 %v9309, 7
        %v9311 = vsub.s32 0, %v9310
        %v9312 = vrot.slane %v8684, %v9311
        %v9313 = vsel %vm8701, %v9312, %v9308
        %9314 = vrot.lane.b32.xlu0 %v9313, 32
        %v9315 = vpop.permute.xlu0 %9314
        %v9319 = vlaneseq
        %v9320 = vshrl.u32 %v9319, 7
        %v9321 = vsub.s32 0, %v9320
        %v9322 = vrot.slane %v8636, %v9321
        %v9323 = vlaneseq
        %v9324 = vshrl.u32 %v9323, 7
        %v9325 = vsub.s32 0, %v9324
        %v9326 = vrot.slane %v8685, %v9325
        %v9327 = vsel %vm8701, %v9326, %v9322
        %9328 = vrot.lane.b32.xlu0 %v9327, 48
        %v9329 = vpop.permute.xlu0 %9328
        %v9333 = vlaneseq
        %v9334 = vshrl.u32 %v9333, 7
        %v9335 = vsub.s32 0, %v9334
        %v9336 = vrot.slane %v8637, %v9335
        %v9337 = vlaneseq
        %v9338 = vshrl.u32 %v9337, 7
        %v9339 = vsub.s32 0, %v9338
        %v9340 = vrot.slane %v8686, %v9339
        %v9341 = vsel %vm8701, %v9340, %v9336
        %9342 = vrot.lane.b32.xlu0 %v9341, 64
        %v9343 = vpop.permute.xlu0 %9342
        %v9347 = vlaneseq
        %v9348 = vshrl.u32 %v9347, 7
        %v9349 = vsub.s32 0, %v9348
        %v9350 = vrot.slane %v8638, %v9349
        %v9351 = vlaneseq
        %v9352 = vshrl.u32 %v9351, 7
        %v9353 = vsub.s32 0, %v9352
        %v9354 = vrot.slane %v8687, %v9353
        %v9355 = vsel %vm8701, %v9354, %v9350
        %9356 = vrot.lane.b32.xlu0 %v9355, 80
        %v9357 = vpop.permute.xlu0 %9356
        %v9361 = vlaneseq
        %v9362 = vshrl.u32 %v9361, 7
        %v9363 = vsub.s32 0, %v9362
        %v9364 = vrot.slane %v8639, %v9363
        %v9365 = vlaneseq
        %v9366 = vshrl.u32 %v9365, 7
        %v9367 = vsub.s32 0, %v9366
        %v9368 = vrot.slane %v8688, %v9367
        %v9369 = vsel %vm8701, %v9368, %v9364
        %9370 = vrot.lane.b32.xlu0 %v9369, 96
        %v9371 = vpop.permute.xlu0 %9370
        %v9375 = vlaneseq
        %v9376 = vshrl.u32 %v9375, 7
        %v9377 = vsub.s32 0, %v9376
        %v9378 = vrot.slane %v8640, %v9377
        %v9379 = vlaneseq
        %v9380 = vshrl.u32 %v9379, 7
        %v9381 = vsub.s32 0, %v9380
        %v9382 = vrot.slane %v8689, %v9381
        %v9383 = vsel %vm8701, %v9382, %v9378
        %9384 = vrot.lane.b32.xlu0 %v9383, 112
        %v9385 = vpop.permute.xlu0 %9384
        %v9387 = vsel %vm8912, %v9177, %v9191
        %v9388 = vsel %vm8914, %v9387, %v9205
        %v9389 = vsel %vm8916, %v9388, %v9219
        %v9390 = vsel %vm8918, %v9389, %v9233
        %v9391 = vsel %vm8920, %v9390, %v9247
        %v9392 = vsel %vm8922, %v9391, %v9261
        %v9393 = vsel %vm8924, %v9392, %v9275
        %v9394 = vsel %vm8912, %v9287, %v9301
        %v9395 = vsel %vm8914, %v9394, %v9315
        %v9396 = vsel %vm8916, %v9395, %v9329
        %v9397 = vsel %vm8918, %v9396, %v9343
        %v9398 = vsel %vm8920, %v9397, %v9357
        %v9399 = vsel %vm8922, %v9398, %v9371
        %v9400 = vsel %vm8924, %v9399, %v9385
        %v9403 = vlaneseq
        %v9404 = vshrl.u32 %v9403, 7
        %v9405 = vsub.s32 0, %v9404
        %v9406 = vrot.slane %v8641, %v9405
        %v9407 = vlaneseq
        %v9408 = vshrl.u32 %v9407, 7
        %v9409 = vsub.s32 0, %v9408
        %v9410 = vrot.slane %v8690, %v9409
        %v9411 = vsel %vm8701, %v9410, %v9406
        %v9412 = vld [vmem:[%s5] sm:$0xff]
        %v9413 = vld [vmem:[%s5 + $0x8] sm:$0xff]
        %v9414 = vld [vmem:[%s5 + $0x10] sm:$0xff]
        %v9415 = vld [vmem:[%s5 + $0x18] sm:$0xff]
        %v9416 = vld [vmem:[%s5 + $0x20] sm:$0xff]
        %v9417 = vld [vmem:[%s5 + $0x28] sm:$0xff]
        %v9418 = vld [vmem:[%s5 + $0x30] sm:$0xff]
        %v9419 = vld [vmem:[%s5 + $0x38] sm:$0xff]
        %v9420 = vld [vmem:[%s5 + $0x40] sm:$0xff]
        %v9421 = vld [vmem:[%s5 + $0x48] sm:$0xff]
        %v9422 = vld [vmem:[%s5 + $0x50] sm:$0xff]
        %v9423 = vld [vmem:[%s5 + $0x58] sm:$0xff]
        %v9424 = vld [vmem:[%s5 + $0x60] sm:$0xff]
        %v9425 = vld [vmem:[%s5 + $0x68] sm:$0xff]
        %v9426 = vld [vmem:[%s5 + $0x70] sm:$0xff]
        %v9427 = vld [vmem:[%s5 + $0x78] sm:$0xff]
        %v9428 = vld [vmem:[%s5 + $0x80] sm:$0xff]
        %v9429 = vld [vmem:[%s5 + $0x88] sm:$0xff]
        %v9430 = vld [vmem:[%s5 + $0x90] sm:$0xff]
        %v9431 = vld [vmem:[%s5 + $0x98] sm:$0xff]
        %v9432 = vld [vmem:[%s5 + $0xa0] sm:$0xff]
        %v9433 = vld [vmem:[%s5 + $0xa8] sm:$0xff]
        %v9434 = vld [vmem:[%s5 + $0xb0] sm:$0xff]
        %v9435 = vld [vmem:[%s5 + $0xb8] sm:$0xff]
        %v9436 = vld [vmem:[%s5 + $0xc0] sm:$0xff]
        %v9437 = vld [vmem:[%s5 + $0xc8] sm:$0xff]
        %v9438 = vld [vmem:[%s5 + $0xd0] sm:$0xff]
        %v9439 = vld [vmem:[%s5 + $0xd8] sm:$0xff]
        %v9440 = vld [vmem:[%s5 + $0xe0] sm:$0xff]
        %v9441 = vld [vmem:[%s5 + $0xe8] sm:$0xff]
        %v9442 = vld [vmem:[%s5 + $0xf0] sm:$0xff]
        %v9443 = vld [vmem:[%s5 + $0xf8] sm:$0xff]
        %v9444 = vld [vmem:[%s5 + $0x100] sm:$0xff]
        %v9445 = vld [vmem:[%s5 + $0x108] sm:$0xff]
        %v9446 = vld [vmem:[%s5 + $0x110] sm:$0xff]
        %v9447 = vld [vmem:[%s5 + $0x118] sm:$0xff]
        %v9448 = vld [vmem:[%s5 + $0x120] sm:$0xff]
        %v9449 = vld [vmem:[%s5 + $0x128] sm:$0xff]
        %v9450 = vld [vmem:[%s5 + $0x130] sm:$0xff]
        %v9451 = vld [vmem:[%s5 + $0x138] sm:$0xff]
        %v9452 = vld [vmem:[%s5 + $0x140] sm:$0xff]
        %v9453 = vld [vmem:[%s5 + $0x148] sm:$0xff]
        %v9454 = vld [vmem:[%s5 + $0x150] sm:$0xff]
        %v9455 = vld [vmem:[%s5 + $0x158] sm:$0xff]
        %v9456 = vld [vmem:[%s5 + $0x160] sm:$0xff]
        %v9457 = vld [vmem:[%s5 + $0x168] sm:$0xff]
        %v9458 = vld [vmem:[%s5 + $0x170] sm:$0xff]
        %v9459 = vld [vmem:[%s5 + $0x178] sm:$0xff]
        %v9460 = vld [vmem:[%s5 + $0x180] sm:$0xff]
        %v9461 = vld [vmem:[%s5 + $0x188] sm:$0xff]
        %v9462 = vld [vmem:[%s5 + $0x190] sm:$0xff]
        %v9463 = vld [vmem:[%s5 + $0x198] sm:$0xff]
        %v9464 = vld [vmem:[%s5 + $0x1a0] sm:$0xff]
        %v9465 = vld [vmem:[%s5 + $0x1a8] sm:$0xff]
        %v9466 = vld [vmem:[%s5 + $0x1b0] sm:$0xff]
        %v9467 = vld [vmem:[%s5 + $0x1b8] sm:$0xff]
        %v9468 = vld [vmem:[%s5 + $0x1c0] sm:$0xff]
        %v9469 = vld [vmem:[%s5 + $0x1c8] sm:$0xff]
        %v9470 = vld [vmem:[%s5 + $0x1d0] sm:$0xff]
        %v9471 = vld [vmem:[%s5 + $0x1d8] sm:$0xff]
        %v9472 = vld [vmem:[%s5 + $0x1e0] sm:$0xff]
        %v9473 = vld [vmem:[%s5 + $0x1e8] sm:$0xff]
        %v9474 = vld [vmem:[%s5 + $0x1f0] sm:$0xff]
        %v9475 = vld [vmem:[%s5 + $0x1f8] sm:$0xff]
        %v9476 = vld [vmem:[%s5 + $0x200] sm:$0xff]
        %v9477 = vld [vmem:[%s5 + $0x208] sm:$0xff]
        %v9478 = vld [vmem:[%s5 + $0x210] sm:$0xff]
        %v9479 = vld [vmem:[%s5 + $0x218] sm:$0xff]
        %v9480 = vld [vmem:[%s5 + $0x220] sm:$0xff]
        %v9481 = vld [vmem:[%s5 + $0x228] sm:$0xff]
        %v9482 = vld [vmem:[%s5 + $0x230] sm:$0xff]
        %v9483 = vld [vmem:[%s5 + $0x238] sm:$0xff]
        %v9484 = vld [vmem:[%s5 + $0x240] sm:$0xff]
        %v9485 = vld [vmem:[%s5 + $0x248] sm:$0xff]
        %v9486 = vld [vmem:[%s5 + $0x250] sm:$0xff]
        %v9487 = vld [vmem:[%s5 + $0x258] sm:$0xff]
        %v9488 = vld [vmem:[%s5 + $0x260] sm:$0xff]
        %v9489 = vld [vmem:[%s5 + $0x268] sm:$0xff]
        %v9490 = vld [vmem:[%s5 + $0x270] sm:$0xff]
        %v9491 = vld [vmem:[%s5 + $0x278] sm:$0xff]
        %v9492 = vld [vmem:[%s5 + $0x280] sm:$0xff]
        %v9493 = vld [vmem:[%s5 + $0x288] sm:$0xff]
        %v9494 = vld [vmem:[%s5 + $0x290] sm:$0xff]
        %v9495 = vld [vmem:[%s5 + $0x298] sm:$0xff]
        %v9496 = vld [vmem:[%s5 + $0x2a0] sm:$0xff]
        %v9497 = vld [vmem:[%s5 + $0x2a8] sm:$0xff]
        %v9498 = vld [vmem:[%s5 + $0x2b0] sm:$0xff]
        %v9499 = vld [vmem:[%s5 + $0x2b8] sm:$0xff]
        %v9500 = vld [vmem:[%s5 + $0x2c0] sm:$0xff]
        %v9501 = vld [vmem:[%s5 + $0x2c8] sm:$0xff]
        %v9502 = vld [vmem:[%s5 + $0x2d0] sm:$0xff]
        %v9503 = vld [vmem:[%s5 + $0x2d8] sm:$0xff]
        %v9504 = vld [vmem:[%s5 + $0x2e0] sm:$0xff]
        %v9505 = vld [vmem:[%s5 + $0x2e8] sm:$0xff]
        %v9506 = vld [vmem:[%s5 + $0x2f0] sm:$0xff]
        %v9507 = vld [vmem:[%s5 + $0x2f8] sm:$0xff]
        %v9508 = vld [vmem:[%s5 + $0x300] sm:$0xff]
        %v9509 = vld [vmem:[%s5 + $0x308] sm:$0xff]
        %v9510 = vld [vmem:[%s6] sm:$0x1]
        %v9512 = vlaneseq
        %v9513 = vshrl.u32 %v9512, 7
        %v9514 = vsub.s32 0, %v9513
        %v9515 = vrot.slane %v9510, %v9514
        %v9517 = vsel %vm8912, %v9411, 0
        %9519 = vmatprep.subr.mxu0 0.0
        %9520 = vmatpush1.msra.mxu0 %v9427
        %9521 = vmatprep.subr.mxu0 0.0
        %9522 = vmatpush1.msra.mxu0 %v9426
        %9523 = vmatprep.subr.mxu0 0.0
        %9524 = vmatpush1.msra.mxu0 %v9425
        %9525 = vmatprep.subr.mxu0 0.0
        %9526 = vmatpush1.msra.mxu0 %v9424
        %9527 = vmatprep.subr.mxu0 0.0
        %9528 = vmatpush1.msra.mxu0 %v9423
        %9529 = vmatprep.subr.mxu0 0.0
        %9530 = vmatpush1.msra.mxu0 %v9422
        %9531 = vmatprep.subr.mxu0 0.0
        %9532 = vmatpush1.msra.mxu0 %v9421
        %9533 = vmatprep.subr.mxu0 0.0
        %9534 = vmatpush1.msra.mxu0 %v9420
        %9535 = vmatprep.subr.mxu0 0.0
        %9536 = vmatpush1.msra.mxu0 %v9419
        %9537 = vmatprep.subr.mxu0 0.0
        %9538 = vmatpush1.msra.mxu0 %v9418
        %9539 = vmatprep.subr.mxu0 0.0
        %9540 = vmatpush1.msra.mxu0 %v9417
        %9541 = vmatprep.subr.mxu0 0.0
        %9542 = vmatpush1.msra.mxu0 %v9416
        %9543 = vmatprep.subr.mxu0 0.0
        %9544 = vmatpush1.msra.mxu0 %v9415
        %9545 = vmatprep.subr.mxu0 0.0
        %9546 = vmatpush1.msra.mxu0 %v9414
        %9547 = vmatprep.subr.mxu0 0.0
        %9548 = vmatpush1.msra.mxu0 %v9413
        %9549 = vmatprep.subr.mxu0 0.0
        %9550 = vmatpush1.msra.mxu0 %v9412
        %9551 = vmatprep.subr.mxu0 0.0
        %9552 = vmatpush2.msra.mxu0 %v9443
        %9553 = vmatprep.subr.mxu0 0.0
        %9554 = vmatpush2.msra.mxu0 %v9442
        %9555 = vmatprep.subr.mxu0 0.0
        %9556 = vmatpush2.msra.mxu0 %v9441
        %9557 = vmatprep.subr.mxu0 0.0
        %9558 = vmatpush2.msra.mxu0 %v9440
        %9559 = vmatprep.subr.mxu0 0.0
        %9560 = vmatpush2.msra.mxu0 %v9439
        %9561 = vmatprep.subr.mxu0 0.0
        %9562 = vmatpush2.msra.mxu0 %v9438
        %9563 = vmatprep.subr.mxu0 0.0
        %9564 = vmatpush2.msra.mxu0 %v9437
        %9565 = vmatprep.subr.mxu0 0.0
        %9566 = vmatpush2.msra.mxu0 %v9436
        %9567 = vmatprep.subr.mxu0 0.0
        %9568 = vmatpush2.msra.mxu0 %v9435
        %9569 = vmatprep.subr.mxu0 0.0
        %9570 = vmatpush2.msra.mxu0 %v9434
        %9571 = vmatprep.subr.mxu0 0.0
        %9572 = vmatpush2.msra.mxu0 %v9433
        %9573 = vmatprep.subr.mxu0 0.0
        %9574 = vmatpush2.msra.mxu0 %v9432
        %9575 = vmatprep.subr.mxu0 0.0
        %9576 = vmatpush2.msra.mxu0 %v9431
        %9577 = vmatprep.subr.mxu0 0.0
        %9578 = vmatpush2.msra.mxu0 %v9430
        %9579 = vmatprep.subr.mxu0 0.0
        %9580 = vmatpush2.msra.mxu0 %v9429
        %9581 = vmatprep.subr.mxu0 0.0
        %9582 = vmatpush2.msra.mxu0 %v9428
        %9583 = vmatprep.mubr.f32.mxu0 %v8932
        %9584 = vmatmul.mubr.f32.gmra.mxu0 %v8925
        %v9585 = vpop.f32.mrf.mxu0
        %v9586 = vadd.f32 %v9515, %v9585
        %v9587 = vpop.f32.mrf.mxu0
        %9588 = vdwg.mxu0
        %9589 = vmatprep.subr.mxu0 0.0
        %9590 = vmatpush1.msra.mxu0 %v9459
        %9591 = vmatprep.subr.mxu0 0.0
        %9592 = vmatpush1.msra.mxu0 %v9458
        %9593 = vmatprep.subr.mxu0 0.0
        %9594 = vmatpush1.msra.mxu0 %v9457
        %9595 = vmatprep.subr.mxu0 0.0
        %9596 = vmatpush1.msra.mxu0 %v9456
        %9597 = vmatprep.subr.mxu0 0.0
        %9598 = vmatpush1.msra.mxu0 %v9455
        %9599 = vmatprep.subr.mxu0 0.0
        %9600 = vmatpush1.msra.mxu0 %v9454
        %9601 = vmatprep.subr.mxu0 0.0
        %9602 = vmatpush1.msra.mxu0 %v9453
        %9603 = vmatprep.subr.mxu0 0.0
        %9604 = vmatpush1.msra.mxu0 %v9452
        %9605 = vmatprep.subr.mxu0 0.0
        %9606 = vmatpush1.msra.mxu0 %v9451
        %9607 = vmatprep.subr.mxu0 0.0
        %9608 = vmatpush1.msra.mxu0 %v9450
        %9609 = vmatprep.subr.mxu0 0.0
        %9610 = vmatpush1.msra.mxu0 %v9449
        %9611 = vmatprep.subr.mxu0 0.0
        %9612 = vmatpush1.msra.mxu0 %v9448
        %9613 = vmatprep.subr.mxu0 0.0
        %9614 = vmatpush1.msra.mxu0 %v9447
        %9615 = vmatprep.subr.mxu0 0.0
        %9616 = vmatpush1.msra.mxu0 %v9446
        %9617 = vmatprep.subr.mxu0 0.0
        %9618 = vmatpush1.msra.mxu0 %v9445
        %9619 = vmatprep.subr.mxu0 0.0
        %9620 = vmatpush1.msra.mxu0 %v9444
        %9621 = vmatprep.subr.mxu0 0.0
        %9622 = vmatpush2.msra.mxu0 %v9475
        %9623 = vmatprep.subr.mxu0 0.0
        %9624 = vmatpush2.msra.mxu0 %v9474
        %9625 = vmatprep.subr.mxu0 0.0
        %9626 = vmatpush2.msra.mxu0 %v9473
        %9627 = vmatprep.subr.mxu0 0.0
        %9628 = vmatpush2.msra.mxu0 %v9472
        %9629 = vmatprep.subr.mxu0 0.0
        %9630 = vmatpush2.msra.mxu0 %v9471
        %9631 = vmatprep.subr.mxu0 0.0
        %9632 = vmatpush2.msra.mxu0 %v9470
        %9633 = vmatprep.subr.mxu0 0.0
        %9634 = vmatpush2.msra.mxu0 %v9469
        %9635 = vmatprep.subr.mxu0 0.0
        %9636 = vmatpush2.msra.mxu0 %v9468
        %9637 = vmatprep.subr.mxu0 0.0
        %9638 = vmatpush2.msra.mxu0 %v9467
        %9639 = vmatprep.subr.mxu0 0.0
        %9640 = vmatpush2.msra.mxu0 %v9466
        %9641 = vmatprep.subr.mxu0 0.0
        %9642 = vmatpush2.msra.mxu0 %v9465
        %9643 = vmatprep.subr.mxu0 0.0
        %9644 = vmatpush2.msra.mxu0 %v9464
        %9645 = vmatprep.subr.mxu0 0.0
        %9646 = vmatpush2.msra.mxu0 %v9463
        %9647 = vmatprep.subr.mxu0 0.0
        %9648 = vmatpush2.msra.mxu0 %v9462
        %9649 = vmatprep.subr.mxu0 0.0
        %9650 = vmatpush2.msra.mxu0 %v9461
        %9651 = vmatprep.subr.mxu0 0.0
        %9652 = vmatpush2.msra.mxu0 %v9460
        %9653 = vmatprep.mubr.f32.mxu0 %v9166
        %9654 = vmatmul.mubr.f32.gmra.mxu0 %v9159
        %v9655 = vpop.f32.mrf.mxu0
        %v9656 = vadd.f32 %v9586, %v9655
        %v9657 = vpop.f32.mrf.mxu0
        %9658 = vdwg.mxu0
        %9659 = vmatprep.subr.mxu0 0.0
        %9660 = vmatpush1.msra.mxu0 %v9491
        %9661 = vmatprep.subr.mxu0 0.0
        %9662 = vmatpush1.msra.mxu0 %v9490
        %9663 = vmatprep.subr.mxu0 0.0
        %9664 = vmatpush1.msra.mxu0 %v9489
        %9665 = vmatprep.subr.mxu0 0.0
        %9666 = vmatpush1.msra.mxu0 %v9488
        %9667 = vmatprep.subr.mxu0 0.0
        %9668 = vmatpush1.msra.mxu0 %v9487
        %9669 = vmatprep.subr.mxu0 0.0
        %9670 = vmatpush1.msra.mxu0 %v9486
        %9671 = vmatprep.subr.mxu0 0.0
        %9672 = vmatpush1.msra.mxu0 %v9485
        %9673 = vmatprep.subr.mxu0 0.0
        %9674 = vmatpush1.msra.mxu0 %v9484
        %9675 = vmatprep.subr.mxu0 0.0
        %9676 = vmatpush1.msra.mxu0 %v9483
        %9677 = vmatprep.subr.mxu0 0.0
        %9678 = vmatpush1.msra.mxu0 %v9482
        %9679 = vmatprep.subr.mxu0 0.0
        %9680 = vmatpush1.msra.mxu0 %v9481
        %9681 = vmatprep.subr.mxu0 0.0
        %9682 = vmatpush1.msra.mxu0 %v9480
        %9683 = vmatprep.subr.mxu0 0.0
        %9684 = vmatpush1.msra.mxu0 %v9479
        %9685 = vmatprep.subr.mxu0 0.0
        %9686 = vmatpush1.msra.mxu0 %v9478
        %9687 = vmatprep.subr.mxu0 0.0
        %9688 = vmatpush1.msra.mxu0 %v9477
        %9689 = vmatprep.subr.mxu0 0.0
        %9690 = vmatpush1.msra.mxu0 %v9476
        %9691 = vmatprep.subr.mxu0 0.0
        %9692 = vmatpush2.msra.mxu0 %v9507
        %9693 = vmatprep.subr.mxu0 0.0
        %9694 = vmatpush2.msra.mxu0 %v9506
        %9695 = vmatprep.subr.mxu0 0.0
        %9696 = vmatpush2.msra.mxu0 %v9505
        %9697 = vmatprep.subr.mxu0 0.0
        %9698 = vmatpush2.msra.mxu0 %v9504
        %9699 = vmatprep.subr.mxu0 0.0
        %9700 = vmatpush2.msra.mxu0 %v9503
        %9701 = vmatprep.subr.mxu0 0.0
        %9702 = vmatpush2.msra.mxu0 %v9502
        %9703 = vmatprep.subr.mxu0 0.0
        %9704 = vmatpush2.msra.mxu0 %v9501
        %9705 = vmatprep.subr.mxu0 0.0
        %9706 = vmatpush2.msra.mxu0 %v9500
        %9707 = vmatprep.subr.mxu0 0.0
        %9708 = vmatpush2.msra.mxu0 %v9499
        %9709 = vmatprep.subr.mxu0 0.0
        %9710 = vmatpush2.msra.mxu0 %v9498
        %9711 = vmatprep.subr.mxu0 0.0
        %9712 = vmatpush2.msra.mxu0 %v9497
        %9713 = vmatprep.subr.mxu0 0.0
        %9714 = vmatpush2.msra.mxu0 %v9496
        %9715 = vmatprep.subr.mxu0 0.0
        %9716 = vmatpush2.msra.mxu0 %v9495
        %9717 = vmatprep.subr.mxu0 0.0
        %9718 = vmatpush2.msra.mxu0 %v9494
        %9719 = vmatprep.subr.mxu0 0.0
        %9720 = vmatpush2.msra.mxu0 %v9493
        %9721 = vmatprep.subr.mxu0 0.0
        %9722 = vmatpush2.msra.mxu0 %v9492
        %9723 = vmatprep.mubr.f32.mxu0 %v9400
        %9724 = vmatmul.mubr.f32.gmra.mxu0 %v9393
        %v9725 = vpop.f32.mrf.mxu0
        %v9726 = vadd.f32 %v9656, %v9725
        %v9727 = vpop.f32.mrf.mxu0
        %9728 = vdwg.mxu0
        %9729 = vmatprep.subr.mxu0 0.0
        %9730 = vmatpush1.msra.mxu0 0.0
        %9731 = vmatprep.subr.mxu0 0.0
        %9732 = vmatpush1.msra.mxu0 0.0
        %9733 = vmatprep.subr.mxu0 0.0
        %9734 = vmatpush1.msra.mxu0 0.0
        %9735 = vmatprep.subr.mxu0 0.0
        %9736 = vmatpush1.msra.mxu0 0.0
        %9737 = vmatprep.subr.mxu0 0.0
        %9738 = vmatpush1.msra.mxu0 0.0
        %9739 = vmatprep.subr.mxu0 0.0
        %9740 = vmatpush1.msra.mxu0 0.0
        %9741 = vmatprep.subr.mxu0 0.0
        %9742 = vmatpush1.msra.mxu0 0.0
        %9743 = vmatprep.subr.mxu0 0.0
        %9744 = vmatpush1.msra.mxu0 0.0
        %9745 = vmatprep.subr.mxu0 0.0
        %9746 = vmatpush1.msra.mxu0 0.0
        %9747 = vmatprep.subr.mxu0 0.0
        %9748 = vmatpush1.msra.mxu0 0.0
        %9749 = vmatprep.subr.mxu0 0.0
        %9750 = vmatpush1.msra.mxu0 0.0
        %9751 = vmatprep.subr.mxu0 0.0
        %9752 = vmatpush1.msra.mxu0 0.0
        %9753 = vmatprep.subr.mxu0 0.0
        %9754 = vmatpush1.msra.mxu0 0.0
        %9755 = vmatprep.subr.mxu0 0.0
        %9756 = vmatpush1.msra.mxu0 0.0
        %9757 = vmatprep.subr.mxu0 0.0
        %9758 = vmatpush1.msra.mxu0 %v9509
        %9759 = vmatprep.subr.mxu0 0.0
        %9760 = vmatpush1.msra.mxu0 %v9508
        %9761 = vmatprep.subr.mxu0 0.0
        %9762 = vmatpush2.msra.mxu0 0.0
        %9763 = vmatprep.subr.mxu0 0.0
        %9764 = vmatpush2.msra.mxu0 0.0
        %9765 = vmatprep.subr.mxu0 0.0
        %9766 = vmatpush2.msra.mxu0 0.0
        %9767 = vmatprep.subr.mxu0 0.0
        %9768 = vmatpush2.msra.mxu0 0.0
        %9769 = vmatprep.subr.mxu0 0.0
        %9770 = vmatpush2.msra.mxu0 0.0
        %9771 = vmatprep.subr.mxu0 0.0
        %9772 = vmatpush2.msra.mxu0 0.0
        %9773 = vmatprep.subr.mxu0 0.0
        %9774 = vmatpush2.msra.mxu0 0.0
        %9775 = vmatprep.subr.mxu0 0.0
        %9776 = vmatpush2.msra.mxu0 0.0
        %9777 = vmatprep.subr.mxu0 0.0
        %9778 = vmatpush2.msra.mxu0 0.0
        %9779 = vmatprep.subr.mxu0 0.0
        %9780 = vmatpush2.msra.mxu0 0.0
        %9781 = vmatprep.subr.mxu0 0.0
        %9782 = vmatpush2.msra.mxu0 0.0
        %9783 = vmatprep.subr.mxu0 0.0
        %9784 = vmatpush2.msra.mxu0 0.0
        %9785 = vmatprep.subr.mxu0 0.0
        %9786 = vmatpush2.msra.mxu0 0.0
        %9787 = vmatprep.subr.mxu0 0.0
        %9788 = vmatpush2.msra.mxu0 0.0
        %9789 = vmatprep.subr.mxu0 0.0
        %9790 = vmatpush2.msra.mxu0 0.0
        %9791 = vmatprep.subr.mxu0 0.0
        %9792 = vmatpush2.msra.mxu0 0.0
        %9793 = vmatprep.mubr.f32.mxu0 0.0
        %9794 = vmatmul.mubr.f32.gmra.mxu0 %v9517
        %v9795 = vpop.f32.mrf.mxu0
        %v9796 = vadd.f32 %v9726, %v9795
        %v9797 = vpop.f32.mrf.mxu0
        %9798 = vdwg.mxu0
        %vm9799 = vcmask 74752
        %9800 = vst.msk [vmem:[%s274] sm:$0x3] %vm9799, %v9796
        %s9801 = sand.u32 %s181, 1
        %s9802 = scalar_lea.sflag [#allocation5], %s9801
        %s9803 = sand.u32 %s181, 1
        %s9804 = smul.addr %s9803, 2
        %s9805 = scalar_lea.vmem [#allocation4], %s9804
        // Predicated region
        $region49: #{cnn_forward_prepared.1} parent=47 // pred_check
          %p9806 = pneg %p191
        $region50: #{cnn_forward_prepared.1} parent=47 // pred_check_branch
          %9808 = sbr.rel (%p9806) target = $region52
        $region51: #{cnn_forward_prepared.1} parent=47 // pred_region
          %s9810 = ssub.s32 32, 32
          %9811 = vsyncadd %s9802, %s9810
          %s9812 = smul.addr %s21, 32
          %s9813 = scalar_lea.hbm %s7, %s9812
          %s9815 = sshll.u32 %s9805, 4
          %s9816 = int_to_ptr.vmem [resolvable:$true] %s9815
          %9818 = dma.vmem_to_hbm [thread:$0]  %s9816, 32, %s9813, %s9802
        $region52: #{cnn_forward_prepared.1} parent=47 // pred_fallthru
          _
      $region48: #{cnn_forward_prepared.1} parent=5 // pred_fallthru
        _
      %p9819 = scmp.le.s32.totalorder 2, %s16
      // Predicated region
      $region53: #{cnn_forward_prepared.1} parent=5 // pred_check
        %p9820 = pneg %p9819
      $region54: #{cnn_forward_prepared.1} parent=5 // pred_check_branch
        %9822 = sbr.rel (%p9820) target = $region56
      $region55: #{cnn_forward_prepared.1} parent=5 // pred_region
        %s9823 = ssub.s32 %s16, 2
        // Predicated region
        $region57: #{cnn_forward_prepared.1} parent=55 // pred_check
          %p9824 = pneg %p197
        $region58: #{cnn_forward_prepared.1} parent=55 // pred_check_branch
          %9826 = sbr.rel (%p9824) target = $region60
        $region59: #{cnn_forward_prepared.1} parent=55 // pred_region
          %s9827 = sand.u32 %s182, 1
          %s9828 = scalar_lea.sflag [#allocation5], %s9827
          %s9829 = sand.u32 %s182, 1
          %s9830 = smul.addr %s9829, 2
          %s9831 = scalar_lea.vmem [#allocation4], %s9830
          %9832 = dma.done %s9828, 32
        $region60: #{cnn_forward_prepared.1} parent=55 // pred_fallthru
          _
      $region56: #{cnn_forward_prepared.1} parent=5 // pred_fallthru
        _
    $region6: #{cnn_forward_prepared.1} parent=1 // loop_footer
      %s20 = sadd.s32 1, %s16
    $region7: #{cnn_forward_prepared.1} parent=1 // loop_footer_branch
      %15 = sbr.rel target = $region3
    $region8: #{cnn_forward_prepared.1} parent=1 // loop_exit
      _
    %9833 = vsyncpa [#allocation5], 1
    %s9834 = scalar_lea.sflag [#allocation5], 1
    %9835 = vsyncpa %s9834, 1

</llo_original>
